<compile_context>
chip_gen: v5e
topology: v5e:2x2
jax: 0.10.0
libtpu: 0.0.40
codegen_flags: <defaults>
</compile_context>

<pallas_src>
import functools
import math

import jax
import jax.numpy as jnp
from jax.experimental import pallas as pl
from jax.experimental.pallas import tpu as pltpu

_MXU_DTYPE = jnp.bfloat16   # MXU operand dtype (accumulation stays f32).
_MAX_PAD = 4                # largest conv padding used (the 9x9 conv).


# ------------------------------ in-kernel im2col ----------------------------

def _im2col_cm(act, masks, kh, kw, pad, img_w):
    """Channel-major im2col for a stride-1 'same' conv.

    act:   (Ch, H*W) bf16 activation; channels on sublanes, pixels on lanes.
    masks: (2*_MAX_PAD+1, H*W) bf16 0/1 masks; row (s+_MAX_PAD) zeroes pixels
           whose horizontal shift by s wraps across an image row.
    Returns (kh*kw*Ch, H*W) bf16 patches, row index = (di*kw + dj)*Ch + c.

    Vertical out-of-range taps land in the flat zero padding automatically;
    only the horizontal wrap-around needs the VPU mask.
    """
    assert pad <= _MAX_PAD
    ch, L = act.shape
    P = pad * img_w + pad
    z = jnp.zeros((ch, P), act.dtype)
    flat = jnp.concatenate([z, act, z], axis=1)          # (Ch, L + 2P)
    taps = []
    for di in range(kh):
        for dj in range(kw):
            win = flat[:, di * img_w + dj: di * img_w + dj + L]
            s = dj - pad
            if s != 0:                                   # center column never wraps
                win = win * masks[s + _MAX_PAD: s + _MAX_PAD + 1, :]
            taps.append(win)
    return jnp.concatenate(taps, axis=0)                 # (kh*kw*Ch, L)


# --------------------------------- kernel -----------------------------------

def _hyperrecon_kernel(x_ref, mask_ref,
                       sw0, sb0, sw1, sb1, sw2, sb2,
                       w9, b9, r9, w11, b11, r11, w5, b5,
                       o_ref, *, H, W):
    """Whole HyperReconNet forward for one image, channel-major."""
    masks = mask_ref[...]                                # (9, H*W) bf16

    def conv(act_bf16, w_ref, b_ref, kh, kw, pad):
        patches = _im2col_cm(act_bf16, masks, kh, kw, pad, W)
        y = jnp.dot(w_ref[...], patches, preferred_element_type=jnp.float32)
        return y + b_ref[...]                            # bias (Cout, 1) broadcast

    # ---- spatial stage: 3x (3x3 conv + ReLU) ----
    a = x_ref[0].astype(_MXU_DTYPE)                      # (Cin, H*W)
    y = jnp.maximum(conv(a, sw0, sb0, 3, 3, 1), 0.0)     # (C, H*W) f32
    y = jnp.maximum(conv(y.astype(_MXU_DTYPE), sw1, sb1, 3, 3, 1), 0.0)
    y = jnp.maximum(conv(y.astype(_MXU_DTYPE), sw2, sb2, 3, 3, 1), 0.0)
    x_spatial = y                                        # residual, kept f32
    xb = y.astype(_MXU_DTYPE)

    # ---- spectral stage (all G branches fused) ----
    # 9x9: patches built once, one wide matmul over all branches (Cout = G*F).
    y1 = conv(xb, w9, b9, 9, 9, 4)                       # (G*F, H*W) f32
    y1 = jnp.where(r9[...] > 0.0, jnp.maximum(y1, 0.0), y1)   # middle branches only
    # 1x1: single block-diagonal matmul (G*F2, G*F) @ (G*F, H*W).
    y2 = jnp.dot(w11[...], y1.astype(_MXU_DTYPE),
                 preferred_element_type=jnp.float32) + b11[...]
    y2 = jnp.where(r11[...] > 0.0, jnp.maximum(y2, 0.0), y2)
    # 5x5 grouped (F2 -> 1 per branch), batched over branches -> (G, H*W).
    y3 = conv(y2.astype(_MXU_DTYPE), w5, b5, 5, 5, 2)

    # Residual add (f32) + one lane-dense channel-major store.
    out = x_spatial + y3                                 # (C, H*W)
    o_ref[...] = out[None].astype(o_ref.dtype)


# --------------------------------- wrapper ----------------------------------

def _full_spec(a):
    nd = a.ndim
    return pl.BlockSpec(a.shape, lambda b, _nd=nd: (0,) * _nd)


@jax.jit
def hyperreconnet_forward(p, x_nchw):
    B, Cin, H, W = x_nchw.shape
    C = p["sb0"].shape[0]
    L = H * W
    x_flat = x_nchw.reshape(B, Cin, L).astype(jnp.float32)   # free reshape

    names = ["sw0", "sb0", "sw1", "sb1", "sw2", "sb2",
             "w9", "b9", "r9", "w11", "b11", "r11", "w5", "b5"]
    weights = [p[n] for n in names]

    out = pl.pallas_call(
        functools.partial(_hyperrecon_kernel, H=H, W=W),
        out_shape=jax.ShapeDtypeStruct((B, C, L), jnp.float32),
        grid_spec=pltpu.PrefetchScalarGridSpec(
            num_scalar_prefetch=0,
            grid=(B,),
            in_specs=[pl.BlockSpec((1, Cin, L), lambda b: (b, 0, 0)),
                      _full_spec(p["mask"])]
                     + [_full_spec(w) for w in weights],
            out_specs=pl.BlockSpec((1, C, L), lambda b: (b, 0, 0)),
        ),
        compiler_params=pltpu.CompilerParams(
            dimension_semantics=("parallel",),        # one image per core on v7x
            vmem_limit_bytes=32 * 1024 * 1024),
    )(x_flat, p["mask"], *weights)
    return out.reshape(B, C, H, W)                    # free reshape -> NCHW


# --------------------------- parameter construction -------------------------

def _init_conv(key, kh, kw, cin, cout):
    # PyTorch Conv2d default init: U(-k, k) with k = 1/sqrt(Cin*KH*KW).
    k_w, k_b = jax.random.split(key)
    bound = 1.0 / math.sqrt(cin * kh * kw)
    w = jax.random.uniform(k_w, (kh, kw, cin, cout), jnp.float32, -bound, bound)
    b = jax.random.uniform(k_b, (cout,), jnp.float32, -bound, bound)
    return w, b


def init_params(key, input_ch, output_ch, feature):
    n_keys = 1 + 2 + 3 + 3 * (output_ch - 2) + 3
    keys = iter(jax.random.split(key, n_keys))
    params = {}
    params["start_spatial"] = _init_conv(next(keys), 3, 3, input_ch, output_ch)
    params["spatial"] = [_init_conv(next(keys), 3, 3, output_ch, output_ch)
                         for _ in range(2)]

    def spectral_block(cin):
        return [_init_conv(next(keys), 9, 9, cin, feature),
                _init_conv(next(keys), 1, 1, feature, feature // 2),
                _init_conv(next(keys), 5, 5, feature // 2, 1)]

    params["start_spectral"] = spectral_block(2)
    params["spectral"] = [spectral_block(3) for _ in range(output_ch - 2)]
    params["last_spectral"] = spectral_block(2)
    return params


def pack_params(params, output_ch, feature, height, width):
    """Repack per-layer conv weights into the fused channel-major layout."""
    C, F, F2 = output_ch, feature, feature // 2
    L = height * width

    def lhs(w):          # (KH, KW, Cin, Cout) -> (Cout, KH*KW*Cin)
        kh, kw, ci, co = w.shape
        return w.transpose(3, 0, 1, 2).reshape(co, kh * kw * ci)

    p = {}
    # ---- spatial stage (3x 3x3 conv) ----
    for name, (w, b) in zip("012",
                            [params["start_spatial"]] + list(params["spatial"])):
        p["sw" + name] = lhs(w).astype(_MXU_DTYPE)
        p["sb" + name] = b.reshape(-1, 1).astype(jnp.float32)

    # ---- spectral stage ----
    # Reference quirk (reproduced): the branch count is driven by the spatial
    # WIDTH (NCHW dim -1) and zip() truncates to the available middle blocks;
    # the residual add only typechecks when the count equals output_ch.
    n_mid = min(width - 2, C - 2)
    G = 2 + n_mid
    assert G == C, ("spectral branch count (width-dependent reference quirk) "
                    "must equal output_ch for the residual add")

    blocks = ([params["start_spectral"]] + params["spectral"][:n_mid]
              + [params["last_spectral"]])
    starts = [0] + list(range(n_mid)) + [C - 2]      # first real input channel
    relu = jnp.asarray([0.0] + [1.0] * n_mid + [0.0], jnp.float32)

    # 9x9 weights: zero-pad Cin (2 or 3) up to C and concat branches on Cout.
    # NOTE: at large C switch to per-branch contiguous-slice matmuls instead
    # (the padding inflates K / weight bytes by ~C/3); at C=6 it is 2x on a
    # tiny layer and buys one wide MXU matmul over a shared patch matrix.
    w9 = jnp.zeros((G, F, 9, 9, C), jnp.float32)
    w11 = jnp.zeros((G, F2, G, F), jnp.float32)       # block-diagonal 1x1
    w5 = jnp.zeros((G, 5, 5, G, F2), jnp.float32)     # grouped 5x5, Cout=1/branch
    b9, b11, b5 = [], [], []
    for g, ((wa, ba), (wb, bb), (wc, bc)) in enumerate(blocks):
        cin = wa.shape[2]
        w9 = w9.at[g, :, :, :, starts[g]:starts[g] + cin].set(
            wa.transpose(3, 0, 1, 2))
        w11 = w11.at[g, :, g, :].set(wb.reshape(F, F2).T)
        w5 = w5.at[g, :, :, g, :].set(wc[:, :, :, 0])
        b9.append(ba); b11.append(bb); b5.append(bc)

    p["w9"] = w9.reshape(G * F, 81 * C).astype(_MXU_DTYPE)
    p["b9"] = jnp.concatenate(b9).reshape(G * F, 1).astype(jnp.float32)
    p["r9"] = jnp.repeat(relu, F).reshape(G * F, 1)
    p["w11"] = w11.reshape(G * F2, G * F).astype(_MXU_DTYPE)
    p["b11"] = jnp.concatenate(b11).reshape(G * F2, 1).astype(jnp.float32)
    p["r11"] = jnp.repeat(relu, F2).reshape(G * F2, 1)
    p["w5"] = w5.reshape(G, 25 * G * F2).astype(_MXU_DTYPE)
    p["b5"] = jnp.concatenate(b5).reshape(G, 1).astype(jnp.float32)

    # Horizontal wrap-around lane masks, one per shift s in [-4, 4].
    col = jnp.arange(L) % width
    p["mask"] = jnp.stack(
        [((col + s >= 0) & (col + s < width))
         for s in range(-_MAX_PAD, _MAX_PAD + 1)]).astype(_MXU_DTYPE)
    return p


# ----------------------------------- main ------------------------------------

if __name__ == "__main__":
    B, INPUT_CH, OUTPUT_CH, H, W = 2, 4, 6, 16, 16
    FEATURE = 16  # kwargs.get('feature'); small for the test (default is 64)

    key = jax.random.PRNGKey(0)
    k_param, k_x = jax.random.split(key)
    params = init_params(k_param, INPUT_CH, OUTPUT_CH, FEATURE)
    packed = pack_params(params, OUTPUT_CH, FEATURE, H, W)
    x = jax.random.normal(k_x, (B, INPUT_CH, H, W), jnp.float32)

    out = hyperreconnet_forward(packed, x)
    jax.block_until_ready(out)
    assert out.shape == (B, OUTPUT_CH, H, W), out.shape
    print("KERNEL_OK")
</pallas_src>

<mosaic_0001>
module attributes {stable_mosaic.version = 11 : i64} {
  func.func @_hyperrecon_kernel(%arg0: i32, %arg1: memref<1x4x256xf32, #tpu.memory_space<vmem>>, %arg2: memref<9x256xbf16, #tpu.memory_space<vmem>>, %arg3: memref<6x36xbf16, #tpu.memory_space<vmem>>, %arg4: memref<6x1xf32, #tpu.memory_space<vmem>>, %arg5: memref<6x54xbf16, #tpu.memory_space<vmem>>, %arg6: memref<6x1xf32, #tpu.memory_space<vmem>>, %arg7: memref<6x54xbf16, #tpu.memory_space<vmem>>, %arg8: memref<6x1xf32, #tpu.memory_space<vmem>>, %arg9: memref<96x486xbf16, #tpu.memory_space<vmem>>, %arg10: memref<96x1xf32, #tpu.memory_space<vmem>>, %arg11: memref<96x1xf32, #tpu.memory_space<vmem>>, %arg12: memref<48x96xbf16, #tpu.memory_space<vmem>>, %arg13: memref<48x1xf32, #tpu.memory_space<vmem>>, %arg14: memref<48x1xf32, #tpu.memory_space<vmem>>, %arg15: memref<6x1200xbf16, #tpu.memory_space<vmem>>, %arg16: memref<6x1xf32, #tpu.memory_space<vmem>>, %arg17: memref<1x6x256xf32, #tpu.memory_space<vmem>>) attributes {dimension_semantics = [#tpu.dimension_semantics<parallel>], iteration_bounds = array<i64: 2>, scalar_prefetch = 0 : i64, scratch_operands = 0 : i64, tpu.core_type = #tpu.core_type<tc>, window_params = [{transform_indices = @transform_0, window_bounds = array<i64: 1, 4, 256>}, {pipeline_mode = #tpu.pipeline_mode<synchronous>, transform_indices = @transform_1, window_bounds = array<i64: 9, 256>}, {pipeline_mode = #tpu.pipeline_mode<synchronous>, transform_indices = @transform_2, window_bounds = array<i64: 6, 36>}, {pipeline_mode = #tpu.pipeline_mode<synchronous>, transform_indices = @transform_3, window_bounds = array<i64: 6, 1>}, {pipeline_mode = #tpu.pipeline_mode<synchronous>, transform_indices = @transform_4, window_bounds = array<i64: 6, 54>}, {pipeline_mode = #tpu.pipeline_mode<synchronous>, transform_indices = @transform_5, window_bounds = array<i64: 6, 1>}, {pipeline_mode = #tpu.pipeline_mode<synchronous>, transform_indices = @transform_6, window_bounds = array<i64: 6, 54>}, {pipeline_mode = #tpu.pipeline_mode<synchronous>, transform_indices = @transform_7, window_bounds = array<i64: 6, 1>}, {pipeline_mode = #tpu.pipeline_mode<synchronous>, transform_indices = @transform_8, window_bounds = array<i64: 96, 486>}, {pipeline_mode = #tpu.pipeline_mode<synchronous>, transform_indices = @transform_9, window_bounds = array<i64: 96, 1>}, {pipeline_mode = #tpu.pipeline_mode<synchronous>, transform_indices = @transform_10, window_bounds = array<i64: 96, 1>}, {pipeline_mode = #tpu.pipeline_mode<synchronous>, transform_indices = @transform_11, window_bounds = array<i64: 48, 96>}, {pipeline_mode = #tpu.pipeline_mode<synchronous>, transform_indices = @transform_12, window_bounds = array<i64: 48, 1>}, {pipeline_mode = #tpu.pipeline_mode<synchronous>, transform_indices = @transform_13, window_bounds = array<i64: 48, 1>}, {pipeline_mode = #tpu.pipeline_mode<synchronous>, transform_indices = @transform_14, window_bounds = array<i64: 6, 1200>}, {pipeline_mode = #tpu.pipeline_mode<synchronous>, transform_indices = @transform_15, window_bounds = array<i64: 6, 1>}, {transform_indices = @transform_16, window_bounds = array<i64: 1, 6, 256>}]} {
    %c0 = arith.constant 0 : index
    %c0_0 = arith.constant 0 : index
    %0 = vector.load %arg2[%c0, %c0_0] : memref<9x256xbf16, #tpu.memory_space<vmem>>, vector<9x256xbf16>
    %c0_1 = arith.constant 0 : index
    %c0_2 = arith.constant 0 : index
    %c0_3 = arith.constant 0 : index
    %1 = vector.load %arg1[%c0_1, %c0_2, %c0_3] : memref<1x4x256xf32, #tpu.memory_space<vmem>>, vector<1x4x256xf32>
    %2 = vector.shape_cast %1 : vector<1x4x256xf32> to vector<4x256xf32>
    %3 = arith.truncf %2 : vector<4x256xf32> to vector<4x256xbf16>
    %cst = arith.constant 0.000000e+00 : bf16
    %4 = vector.broadcast %cst : bf16 to vector<4x17xbf16>
    %5 = tpu.concatenate %4, %3, %4 in 1 : vector<4x17xbf16>, vector<4x256xbf16>, vector<4x17xbf16> -> vector<4x290xbf16>
    %6 = vector.extract_strided_slice %5 {offsets = [0, 0], sizes = [4, 256], strides = [1, 1]} : vector<4x290xbf16> to vector<4x256xbf16>
    %7 = vector.extract_strided_slice %0 {offsets = [3, 0], sizes = [1, 256], strides = [1, 1]} : vector<9x256xbf16> to vector<1x256xbf16>
    %8 = vector.broadcast %7 : vector<1x256xbf16> to vector<4x256xbf16>
    %9 = arith.mulf %6, %8 : vector<4x256xbf16>
    %10 = vector.extract_strided_slice %5 {offsets = [0, 1], sizes = [4, 256], strides = [1, 1]} : vector<4x290xbf16> to vector<4x256xbf16>
    %11 = vector.extract_strided_slice %5 {offsets = [0, 2], sizes = [4, 256], strides = [1, 1]} : vector<4x290xbf16> to vector<4x256xbf16>
    %12 = vector.extract_strided_slice %0 {offsets = [5, 0], sizes = [1, 256], strides = [1, 1]} : vector<9x256xbf16> to vector<1x256xbf16>
    %13 = vector.broadcast %12 : vector<1x256xbf16> to vector<4x256xbf16>
    %14 = arith.mulf %11, %13 : vector<4x256xbf16>
    %15 = vector.extract_strided_slice %5 {offsets = [0, 16], sizes = [4, 256], strides = [1, 1]} : vector<4x290xbf16> to vector<4x256xbf16>
    %16 = vector.extract_strided_slice %0 {offsets = [3, 0], sizes = [1, 256], strides = [1, 1]} : vector<9x256xbf16> to vector<1x256xbf16>
    %17 = vector.broadcast %16 : vector<1x256xbf16> to vector<4x256xbf16>
    %18 = arith.mulf %15, %17 : vector<4x256xbf16>
    %19 = vector.extract_strided_slice %5 {offsets = [0, 17], sizes = [4, 256], strides = [1, 1]} : vector<4x290xbf16> to vector<4x256xbf16>
    %20 = vector.extract_strided_slice %5 {offsets = [0, 18], sizes = [4, 256], strides = [1, 1]} : vector<4x290xbf16> to vector<4x256xbf16>
    %21 = vector.extract_strided_slice %0 {offsets = [5, 0], sizes = [1, 256], strides = [1, 1]} : vector<9x256xbf16> to vector<1x256xbf16>
    %22 = vector.broadcast %21 : vector<1x256xbf16> to vector<4x256xbf16>
    %23 = arith.mulf %20, %22 : vector<4x256xbf16>
    %24 = vector.extract_strided_slice %5 {offsets = [0, 32], sizes = [4, 256], strides = [1, 1]} : vector<4x290xbf16> to vector<4x256xbf16>
    %25 = vector.extract_strided_slice %0 {offsets = [3, 0], sizes = [1, 256], strides = [1, 1]} : vector<9x256xbf16> to vector<1x256xbf16>
    %26 = vector.broadcast %25 : vector<1x256xbf16> to vector<4x256xbf16>
    %27 = arith.mulf %24, %26 : vector<4x256xbf16>
    %28 = vector.extract_strided_slice %5 {offsets = [0, 33], sizes = [4, 256], strides = [1, 1]} : vector<4x290xbf16> to vector<4x256xbf16>
    %29 = vector.extract_strided_slice %5 {offsets = [0, 34], sizes = [4, 256], strides = [1, 1]} : vector<4x290xbf16> to vector<4x256xbf16>
    %30 = vector.extract_strided_slice %0 {offsets = [5, 0], sizes = [1, 256], strides = [1, 1]} : vector<9x256xbf16> to vector<1x256xbf16>
    %31 = vector.broadcast %30 : vector<1x256xbf16> to vector<4x256xbf16>
    %32 = arith.mulf %29, %31 : vector<4x256xbf16>
    %33 = tpu.concatenate %9, %10, %14, %18, %19, %23, %27, %28, %32 in 0 : vector<4x256xbf16>, vector<4x256xbf16>, vector<4x256xbf16>, vector<4x256xbf16>, vector<4x256xbf16>, vector<4x256xbf16>, vector<4x256xbf16>, vector<4x256xbf16>, vector<4x256xbf16> -> vector<36x256xbf16>
    %c0_4 = arith.constant 0 : index
    %c0_5 = arith.constant 0 : index
    %34 = vector.load %arg3[%c0_4, %c0_5] : memref<6x36xbf16, #tpu.memory_space<vmem>>, vector<6x36xbf16>
    %cst_6 = arith.constant dense<0.000000e+00> : vector<6x256xf32>
    %35 = tpu.matmul %34, %33, %cst_6 {dimension_numbers = #tpu.dot_dimension_numbers<[1], [0], [0], [1], [0, 0, 1, 1], [], []>} : vector<6x36xbf16>, vector<36x256xbf16>, vector<6x256xf32> -> vector<6x256xf32>
    %c0_7 = arith.constant 0 : index
    %c0_8 = arith.constant 0 : index
    %36 = vector.load %arg4[%c0_7, %c0_8] : memref<6x1xf32, #tpu.memory_space<vmem>>, vector<6x1xf32>
    %37 = vector.broadcast %36 : vector<6x1xf32> to vector<6x256xf32>
    %38 = arith.addf %35, %37 : vector<6x256xf32>
    %cst_9 = arith.constant 0.000000e+00 : f32
    %39 = vector.broadcast %cst_9 : f32 to vector<6x256xf32>
    %40 = arith.maximumf %38, %39 : vector<6x256xf32>
    %41 = arith.truncf %40 : vector<6x256xf32> to vector<6x256xbf16>
    %cst_10 = arith.constant 0.000000e+00 : bf16
    %42 = vector.broadcast %cst_10 : bf16 to vector<6x17xbf16>
    %43 = tpu.concatenate %42, %41, %42 in 1 : vector<6x17xbf16>, vector<6x256xbf16>, vector<6x17xbf16> -> vector<6x290xbf16>
    %44 = vector.extract_strided_slice %43 {offsets = [0, 0], sizes = [6, 256], strides = [1, 1]} : vector<6x290xbf16> to vector<6x256xbf16>
    %45 = vector.extract_strided_slice %0 {offsets = [3, 0], sizes = [1, 256], strides = [1, 1]} : vector<9x256xbf16> to vector<1x256xbf16>
    %46 = vector.broadcast %45 : vector<1x256xbf16> to vector<6x256xbf16>
    %47 = arith.mulf %44, %46 : vector<6x256xbf16>
    %48 = vector.extract_strided_slice %43 {offsets = [0, 1], sizes = [6, 256], strides = [1, 1]} : vector<6x290xbf16> to vector<6x256xbf16>
    %49 = vector.extract_strided_slice %43 {offsets = [0, 2], sizes = [6, 256], strides = [1, 1]} : vector<6x290xbf16> to vector<6x256xbf16>
    %50 = vector.extract_strided_slice %0 {offsets = [5, 0], sizes = [1, 256], strides = [1, 1]} : vector<9x256xbf16> to vector<1x256xbf16>
    %51 = vector.broadcast %50 : vector<1x256xbf16> to vector<6x256xbf16>
    %52 = arith.mulf %49, %51 : vector<6x256xbf16>
    %53 = vector.extract_strided_slice %43 {offsets = [0, 16], sizes = [6, 256], strides = [1, 1]} : vector<6x290xbf16> to vector<6x256xbf16>
    %54 = vector.extract_strided_slice %0 {offsets = [3, 0], sizes = [1, 256], strides = [1, 1]} : vector<9x256xbf16> to vector<1x256xbf16>
    %55 = vector.broadcast %54 : vector<1x256xbf16> to vector<6x256xbf16>
    %56 = arith.mulf %53, %55 : vector<6x256xbf16>
    %57 = vector.extract_strided_slice %43 {offsets = [0, 17], sizes = [6, 256], strides = [1, 1]} : vector<6x290xbf16> to vector<6x256xbf16>
    %58 = vector.extract_strided_slice %43 {offsets = [0, 18], sizes = [6, 256], strides = [1, 1]} : vector<6x290xbf16> to vector<6x256xbf16>
    %59 = vector.extract_strided_slice %0 {offsets = [5, 0], sizes = [1, 256], strides = [1, 1]} : vector<9x256xbf16> to vector<1x256xbf16>
    %60 = vector.broadcast %59 : vector<1x256xbf16> to vector<6x256xbf16>
    %61 = arith.mulf %58, %60 : vector<6x256xbf16>
    %62 = vector.extract_strided_slice %43 {offsets = [0, 32], sizes = [6, 256], strides = [1, 1]} : vector<6x290xbf16> to vector<6x256xbf16>
    %63 = vector.extract_strided_slice %0 {offsets = [3, 0], sizes = [1, 256], strides = [1, 1]} : vector<9x256xbf16> to vector<1x256xbf16>
    %64 = vector.broadcast %63 : vector<1x256xbf16> to vector<6x256xbf16>
    %65 = arith.mulf %62, %64 : vector<6x256xbf16>
    %66 = vector.extract_strided_slice %43 {offsets = [0, 33], sizes = [6, 256], strides = [1, 1]} : vector<6x290xbf16> to vector<6x256xbf16>
    %67 = vector.extract_strided_slice %43 {offsets = [0, 34], sizes = [6, 256], strides = [1, 1]} : vector<6x290xbf16> to vector<6x256xbf16>
    %68 = vector.extract_strided_slice %0 {offsets = [5, 0], sizes = [1, 256], strides = [1, 1]} : vector<9x256xbf16> to vector<1x256xbf16>
    %69 = vector.broadcast %68 : vector<1x256xbf16> to vector<6x256xbf16>
    %70 = arith.mulf %67, %69 : vector<6x256xbf16>
    %71 = tpu.concatenate %47, %48, %52, %56, %57, %61, %65, %66, %70 in 0 : vector<6x256xbf16>, vector<6x256xbf16>, vector<6x256xbf16>, vector<6x256xbf16>, vector<6x256xbf16>, vector<6x256xbf16>, vector<6x256xbf16>, vector<6x256xbf16>, vector<6x256xbf16> -> vector<54x256xbf16>
    %c0_11 = arith.constant 0 : index
    %c0_12 = arith.constant 0 : index
    %72 = vector.load %arg5[%c0_11, %c0_12] : memref<6x54xbf16, #tpu.memory_space<vmem>>, vector<6x54xbf16>
    %cst_13 = arith.constant dense<0.000000e+00> : vector<6x256xf32>
    %73 = tpu.matmul %72, %71, %cst_13 {dimension_numbers = #tpu.dot_dimension_numbers<[1], [0], [0], [1], [0, 0, 1, 1], [], []>} : vector<6x54xbf16>, vector<54x256xbf16>, vector<6x256xf32> -> vector<6x256xf32>
    %c0_14 = arith.constant 0 : index
    %c0_15 = arith.constant 0 : index
    %74 = vector.load %arg6[%c0_14, %c0_15] : memref<6x1xf32, #tpu.memory_space<vmem>>, vector<6x1xf32>
    %75 = vector.broadcast %74 : vector<6x1xf32> to vector<6x256xf32>
    %76 = arith.addf %73, %75 : vector<6x256xf32>
    %cst_16 = arith.constant 0.000000e+00 : f32
    %77 = vector.broadcast %cst_16 : f32 to vector<6x256xf32>
    %78 = arith.maximumf %76, %77 : vector<6x256xf32>
    %79 = arith.truncf %78 : vector<6x256xf32> to vector<6x256xbf16>
    %cst_17 = arith.constant 0.000000e+00 : bf16
    %80 = vector.broadcast %cst_17 : bf16 to vector<6x17xbf16>
    %81 = tpu.concatenate %80, %79, %80 in 1 : vector<6x17xbf16>, vector<6x256xbf16>, vector<6x17xbf16> -> vector<6x290xbf16>
    %82 = vector.extract_strided_slice %81 {offsets = [0, 0], sizes = [6, 256], strides = [1, 1]} : vector<6x290xbf16> to vector<6x256xbf16>
    %83 = vector.extract_strided_slice %0 {offsets = [3, 0], sizes = [1, 256], strides = [1, 1]} : vector<9x256xbf16> to vector<1x256xbf16>
    %84 = vector.broadcast %83 : vector<1x256xbf16> to vector<6x256xbf16>
    %85 = arith.mulf %82, %84 : vector<6x256xbf16>
    %86 = vector.extract_strided_slice %81 {offsets = [0, 1], sizes = [6, 256], strides = [1, 1]} : vector<6x290xbf16> to vector<6x256xbf16>
    %87 = vector.extract_strided_slice %81 {offsets = [0, 2], sizes = [6, 256], strides = [1, 1]} : vector<6x290xbf16> to vector<6x256xbf16>
    %88 = vector.extract_strided_slice %0 {offsets = [5, 0], sizes = [1, 256], strides = [1, 1]} : vector<9x256xbf16> to vector<1x256xbf16>
    %89 = vector.broadcast %88 : vector<1x256xbf16> to vector<6x256xbf16>
    %90 = arith.mulf %87, %89 : vector<6x256xbf16>
    %91 = vector.extract_strided_slice %81 {offsets = [0, 16], sizes = [6, 256], strides = [1, 1]} : vector<6x290xbf16> to vector<6x256xbf16>
    %92 = vector.extract_strided_slice %0 {offsets = [3, 0], sizes = [1, 256], strides = [1, 1]} : vector<9x256xbf16> to vector<1x256xbf16>
    %93 = vector.broadcast %92 : vector<1x256xbf16> to vector<6x256xbf16>
    %94 = arith.mulf %91, %93 : vector<6x256xbf16>
    %95 = vector.extract_strided_slice %81 {offsets = [0, 17], sizes = [6, 256], strides = [1, 1]} : vector<6x290xbf16> to vector<6x256xbf16>
    %96 = vector.extract_strided_slice %81 {offsets = [0, 18], sizes = [6, 256], strides = [1, 1]} : vector<6x290xbf16> to vector<6x256xbf16>
    %97 = vector.extract_strided_slice %0 {offsets = [5, 0], sizes = [1, 256], strides = [1, 1]} : vector<9x256xbf16> to vector<1x256xbf16>
    %98 = vector.broadcast %97 : vector<1x256xbf16> to vector<6x256xbf16>
    %99 = arith.mulf %96, %98 : vector<6x256xbf16>
    %100 = vector.extract_strided_slice %81 {offsets = [0, 32], sizes = [6, 256], strides = [1, 1]} : vector<6x290xbf16> to vector<6x256xbf16>
    %101 = vector.extract_strided_slice %0 {offsets = [3, 0], sizes = [1, 256], strides = [1, 1]} : vector<9x256xbf16> to vector<1x256xbf16>
    %102 = vector.broadcast %101 : vector<1x256xbf16> to vector<6x256xbf16>
    %103 = arith.mulf %100, %102 : vector<6x256xbf16>
    %104 = vector.extract_strided_slice %81 {offsets = [0, 33], sizes = [6, 256], strides = [1, 1]} : vector<6x290xbf16> to vector<6x256xbf16>
    %105 = vector.extract_strided_slice %81 {offsets = [0, 34], sizes = [6, 256], strides = [1, 1]} : vector<6x290xbf16> to vector<6x256xbf16>
    %106 = vector.extract_strided_slice %0 {offsets = [5, 0], sizes = [1, 256], strides = [1, 1]} : vector<9x256xbf16> to vector<1x256xbf16>
    %107 = vector.broadcast %106 : vector<1x256xbf16> to vector<6x256xbf16>
    %108 = arith.mulf %105, %107 : vector<6x256xbf16>
    %109 = tpu.concatenate %85, %86, %90, %94, %95, %99, %103, %104, %108 in 0 : vector<6x256xbf16>, vector<6x256xbf16>, vector<6x256xbf16>, vector<6x256xbf16>, vector<6x256xbf16>, vector<6x256xbf16>, vector<6x256xbf16>, vector<6x256xbf16>, vector<6x256xbf16> -> vector<54x256xbf16>
    %c0_18 = arith.constant 0 : index
    %c0_19 = arith.constant 0 : index
    %110 = vector.load %arg7[%c0_18, %c0_19] : memref<6x54xbf16, #tpu.memory_space<vmem>>, vector<6x54xbf16>
    %cst_20 = arith.constant dense<0.000000e+00> : vector<6x256xf32>
    %111 = tpu.matmul %110, %109, %cst_20 {dimension_numbers = #tpu.dot_dimension_numbers<[1], [0], [0], [1], [0, 0, 1, 1], [], []>} : vector<6x54xbf16>, vector<54x256xbf16>, vector<6x256xf32> -> vector<6x256xf32>
    %c0_21 = arith.constant 0 : index
    %c0_22 = arith.constant 0 : index
    %112 = vector.load %arg8[%c0_21, %c0_22] : memref<6x1xf32, #tpu.memory_space<vmem>>, vector<6x1xf32>
    %113 = vector.broadcast %112 : vector<6x1xf32> to vector<6x256xf32>
    %114 = arith.addf %111, %113 : vector<6x256xf32>
    %cst_23 = arith.constant 0.000000e+00 : f32
    %115 = vector.broadcast %cst_23 : f32 to vector<6x256xf32>
    %116 = arith.maximumf %114, %115 : vector<6x256xf32>
    %117 = arith.truncf %116 : vector<6x256xf32> to vector<6x256xbf16>
    %cst_24 = arith.constant 0.000000e+00 : bf16
    %118 = vector.broadcast %cst_24 : bf16 to vector<6x68xbf16>
    %119 = tpu.concatenate %118, %117, %118 in 1 : vector<6x68xbf16>, vector<6x256xbf16>, vector<6x68xbf16> -> vector<6x392xbf16>
    %120 = vector.extract_strided_slice %119 {offsets = [0, 0], sizes = [6, 256], strides = [1, 1]} : vector<6x392xbf16> to vector<6x256xbf16>
    %121 = vector.extract_strided_slice %0 {offsets = [0, 0], sizes = [1, 256], strides = [1, 1]} : vector<9x256xbf16> to vector<1x256xbf16>
    %122 = vector.broadcast %121 : vector<1x256xbf16> to vector<6x256xbf16>
    %123 = arith.mulf %120, %122 : vector<6x256xbf16>
    %124 = vector.extract_strided_slice %119 {offsets = [0, 1], sizes = [6, 256], strides = [1, 1]} : vector<6x392xbf16> to vector<6x256xbf16>
    %125 = vector.extract_strided_slice %0 {offsets = [1, 0], sizes = [1, 256], strides = [1, 1]} : vector<9x256xbf16> to vector<1x256xbf16>
    %126 = vector.broadcast %125 : vector<1x256xbf16> to vector<6x256xbf16>
    %127 = arith.mulf %124, %126 : vector<6x256xbf16>
    %128 = vector.extract_strided_slice %119 {offsets = [0, 2], sizes = [6, 256], strides = [1, 1]} : vector<6x392xbf16> to vector<6x256xbf16>
    %129 = vector.extract_strided_slice %0 {offsets = [2, 0], sizes = [1, 256], strides = [1, 1]} : vector<9x256xbf16> to vector<1x256xbf16>
    %130 = vector.broadcast %129 : vector<1x256xbf16> to vector<6x256xbf16>
    %131 = arith.mulf %128, %130 : vector<6x256xbf16>
    %132 = vector.extract_strided_slice %119 {offsets = [0, 3], sizes = [6, 256], strides = [1, 1]} : vector<6x392xbf16> to vector<6x256xbf16>
    %133 = vector.extract_strided_slice %0 {offsets = [3, 0], sizes = [1, 256], strides = [1, 1]} : vector<9x256xbf16> to vector<1x256xbf16>
    %134 = vector.broadcast %133 : vector<1x256xbf16> to vector<6x256xbf16>
    %135 = arith.mulf %132, %134 : vector<6x256xbf16>
    %136 = vector.extract_strided_slice %119 {offsets = [0, 4], sizes = [6, 256], strides = [1, 1]} : vector<6x392xbf16> to vector<6x256xbf16>
    %137 = vector.extract_strided_slice %119 {offsets = [0, 5], sizes = [6, 256], strides = [1, 1]} : vector<6x392xbf16> to vector<6x256xbf16>
    %138 = vector.extract_strided_slice %0 {offsets = [5, 0], sizes = [1, 256], strides = [1, 1]} : vector<9x256xbf16> to vector<1x256xbf16>
    %139 = vector.broadcast %138 : vector<1x256xbf16> to vector<6x256xbf16>
    %140 = arith.mulf %137, %139 : vector<6x256xbf16>
    %141 = vector.extract_strided_slice %119 {offsets = [0, 6], sizes = [6, 256], strides = [1, 1]} : vector<6x392xbf16> to vector<6x256xbf16>
    %142 = vector.extract_strided_slice %0 {offsets = [6, 0], sizes = [1, 256], strides = [1, 1]} : vector<9x256xbf16> to vector<1x256xbf16>
    %143 = vector.broadcast %142 : vector<1x256xbf16> to vector<6x256xbf16>
    %144 = arith.mulf %141, %143 : vector<6x256xbf16>
    %145 = vector.extract_strided_slice %119 {offsets = [0, 7], sizes = [6, 256], strides = [1, 1]} : vector<6x392xbf16> to vector<6x256xbf16>
    %146 = vector.extract_strided_slice %0 {offsets = [7, 0], sizes = [1, 256], strides = [1, 1]} : vector<9x256xbf16> to vector<1x256xbf16>
    %147 = vector.broadcast %146 : vector<1x256xbf16> to vector<6x256xbf16>
    %148 = arith.mulf %145, %147 : vector<6x256xbf16>
    %149 = vector.extract_strided_slice %119 {offsets = [0, 8], sizes = [6, 256], strides = [1, 1]} : vector<6x392xbf16> to vector<6x256xbf16>
    %150 = vector.extract_strided_slice %0 {offsets = [8, 0], sizes = [1, 256], strides = [1, 1]} : vector<9x256xbf16> to vector<1x256xbf16>
    %151 = vector.broadcast %150 : vector<1x256xbf16> to vector<6x256xbf16>
    %152 = arith.mulf %149, %151 : vector<6x256xbf16>
    %153 = vector.extract_strided_slice %119 {offsets = [0, 16], sizes = [6, 256], strides = [1, 1]} : vector<6x392xbf16> to vector<6x256xbf16>
    %154 = vector.extract_strided_slice %0 {offsets = [0, 0], sizes = [1, 256], strides = [1, 1]} : vector<9x256xbf16> to vector<1x256xbf16>
    %155 = vector.broadcast %154 : vector<1x256xbf16> to vector<6x256xbf16>
    %156 = arith.mulf %153, %155 : vector<6x256xbf16>
    %157 = vector.extract_strided_slice %119 {offsets = [0, 17], sizes = [6, 256], strides = [1, 1]} : vector<6x392xbf16> to vector<6x256xbf16>
    %158 = vector.extract_strided_slice %0 {offsets = [1, 0], sizes = [1, 256], strides = [1, 1]} : vector<9x256xbf16> to vector<1x256xbf16>
    %159 = vector.broadcast %158 : vector<1x256xbf16> to vector<6x256xbf16>
    %160 = arith.mulf %157, %159 : vector<6x256xbf16>
    %161 = vector.extract_strided_slice %119 {offsets = [0, 18], sizes = [6, 256], strides = [1, 1]} : vector<6x392xbf16> to vector<6x256xbf16>
    %162 = vector.extract_strided_slice %0 {offsets = [2, 0], sizes = [1, 256], strides = [1, 1]} : vector<9x256xbf16> to vector<1x256xbf16>
    %163 = vector.broadcast %162 : vector<1x256xbf16> to vector<6x256xbf16>
    %164 = arith.mulf %161, %163 : vector<6x256xbf16>
    %165 = vector.extract_strided_slice %119 {offsets = [0, 19], sizes = [6, 256], strides = [1, 1]} : vector<6x392xbf16> to vector<6x256xbf16>
    %166 = vector.extract_strided_slice %0 {offsets = [3, 0], sizes = [1, 256], strides = [1, 1]} : vector<9x256xbf16> to vector<1x256xbf16>
    %167 = vector.broadcast %166 : vector<1x256xbf16> to vector<6x256xbf16>
    %168 = arith.mulf %165, %167 : vector<6x256xbf16>
    %169 = vector.extract_strided_slice %119 {offsets = [0, 20], sizes = [6, 256], strides = [1, 1]} : vector<6x392xbf16> to vector<6x256xbf16>
    %170 = vector.extract_strided_slice %119 {offsets = [0, 21], sizes = [6, 256], strides = [1, 1]} : vector<6x392xbf16> to vector<6x256xbf16>
    %171 = vector.extract_strided_slice %0 {offsets = [5, 0], sizes = [1, 256], strides = [1, 1]} : vector<9x256xbf16> to vector<1x256xbf16>
    %172 = vector.broadcast %171 : vector<1x256xbf16> to vector<6x256xbf16>
    %173 = arith.mulf %170, %172 : vector<6x256xbf16>
    %174 = vector.extract_strided_slice %119 {offsets = [0, 22], sizes = [6, 256], strides = [1, 1]} : vector<6x392xbf16> to vector<6x256xbf16>
    %175 = vector.extract_strided_slice %0 {offsets = [6, 0], sizes = [1, 256], strides = [1, 1]} : vector<9x256xbf16> to vector<1x256xbf16>
    %176 = vector.broadcast %175 : vector<1x256xbf16> to vector<6x256xbf16>
    %177 = arith.mulf %174, %176 : vector<6x256xbf16>
    %178 = vector.extract_strided_slice %119 {offsets = [0, 23], sizes = [6, 256], strides = [1, 1]} : vector<6x392xbf16> to vector<6x256xbf16>
    %179 = vector.extract_strided_slice %0 {offsets = [7, 0], sizes = [1, 256], strides = [1, 1]} : vector<9x256xbf16> to vector<1x256xbf16>
    %180 = vector.broadcast %179 : vector<1x256xbf16> to vector<6x256xbf16>
    %181 = arith.mulf %178, %180 : vector<6x256xbf16>
    %182 = vector.extract_strided_slice %119 {offsets = [0, 24], sizes = [6, 256], strides = [1, 1]} : vector<6x392xbf16> to vector<6x256xbf16>
    %183 = vector.extract_strided_slice %0 {offsets = [8, 0], sizes = [1, 256], strides = [1, 1]} : vector<9x256xbf16> to vector<1x256xbf16>
    %184 = vector.broadcast %183 : vector<1x256xbf16> to vector<6x256xbf16>
    %185 = arith.mulf %182, %184 : vector<6x256xbf16>
    %186 = vector.extract_strided_slice %119 {offsets = [0, 32], sizes = [6, 256], strides = [1, 1]} : vector<6x392xbf16> to vector<6x256xbf16>
    %187 = vector.extract_strided_slice %0 {offsets = [0, 0], sizes = [1, 256], strides = [1, 1]} : vector<9x256xbf16> to vector<1x256xbf16>
    %188 = vector.broadcast %187 : vector<1x256xbf16> to vector<6x256xbf16>
    %189 = arith.mulf %186, %188 : vector<6x256xbf16>
    %190 = vector.extract_strided_slice %119 {offsets = [0, 33], sizes = [6, 256], strides = [1, 1]} : vector<6x392xbf16> to vector<6x256xbf16>
    %191 = vector.extract_strided_slice %0 {offsets = [1, 0], sizes = [1, 256], strides = [1, 1]} : vector<9x256xbf16> to vector<1x256xbf16>
    %192 = vector.broadcast %191 : vector<1x256xbf16> to vector<6x256xbf16>
    %193 = arith.mulf %190, %192 : vector<6x256xbf16>
    %194 = vector.extract_strided_slice %119 {offsets = [0, 34], sizes = [6, 256], strides = [1, 1]} : vector<6x392xbf16> to vector<6x256xbf16>
    %195 = vector.extract_strided_slice %0 {offsets = [2, 0], sizes = [1, 256], strides = [1, 1]} : vector<9x256xbf16> to vector<1x256xbf16>
    %196 = vector.broadcast %195 : vector<1x256xbf16> to vector<6x256xbf16>
    %197 = arith.mulf %194, %196 : vector<6x256xbf16>
    %198 = vector.extract_strided_slice %119 {offsets = [0, 35], sizes = [6, 256], strides = [1, 1]} : vector<6x392xbf16> to vector<6x256xbf16>
    %199 = vector.extract_strided_slice %0 {offsets = [3, 0], sizes = [1, 256], strides = [1, 1]} : vector<9x256xbf16> to vector<1x256xbf16>
    %200 = vector.broadcast %199 : vector<1x256xbf16> to vector<6x256xbf16>
    %201 = arith.mulf %198, %200 : vector<6x256xbf16>
    %202 = vector.extract_strided_slice %119 {offsets = [0, 36], sizes = [6, 256], strides = [1, 1]} : vector<6x392xbf16> to vector<6x256xbf16>
    %203 = vector.extract_strided_slice %119 {offsets = [0, 37], sizes = [6, 256], strides = [1, 1]} : vector<6x392xbf16> to vector<6x256xbf16>
    %204 = vector.extract_strided_slice %0 {offsets = [5, 0], sizes = [1, 256], strides = [1, 1]} : vector<9x256xbf16> to vector<1x256xbf16>
    %205 = vector.broadcast %204 : vector<1x256xbf16> to vector<6x256xbf16>
    %206 = arith.mulf %203, %205 : vector<6x256xbf16>
    %207 = vector.extract_strided_slice %119 {offsets = [0, 38], sizes = [6, 256], strides = [1, 1]} : vector<6x392xbf16> to vector<6x256xbf16>
    %208 = vector.extract_strided_slice %0 {offsets = [6, 0], sizes = [1, 256], strides = [1, 1]} : vector<9x256xbf16> to vector<1x256xbf16>
    %209 = vector.broadcast %208 : vector<1x256xbf16> to vector<6x256xbf16>
    %210 = arith.mulf %207, %209 : vector<6x256xbf16>
    %211 = vector.extract_strided_slice %119 {offsets = [0, 39], sizes = [6, 256], strides = [1, 1]} : vector<6x392xbf16> to vector<6x256xbf16>
    %212 = vector.extract_strided_slice %0 {offsets = [7, 0], sizes = [1, 256], strides = [1, 1]} : vector<9x256xbf16> to vector<1x256xbf16>
    %213 = vector.broadcast %212 : vector<1x256xbf16> to vector<6x256xbf16>
    %214 = arith.mulf %211, %213 : vector<6x256xbf16>
    %215 = vector.extract_strided_slice %119 {offsets = [0, 40], sizes = [6, 256], strides = [1, 1]} : vector<6x392xbf16> to vector<6x256xbf16>
    %216 = vector.extract_strided_slice %0 {offsets = [8, 0], sizes = [1, 256], strides = [1, 1]} : vector<9x256xbf16> to vector<1x256xbf16>
    %217 = vector.broadcast %216 : vector<1x256xbf16> to vector<6x256xbf16>
    %218 = arith.mulf %215, %217 : vector<6x256xbf16>
    %219 = vector.extract_strided_slice %119 {offsets = [0, 48], sizes = [6, 256], strides = [1, 1]} : vector<6x392xbf16> to vector<6x256xbf16>
    %220 = vector.extract_strided_slice %0 {offsets = [0, 0], sizes = [1, 256], strides = [1, 1]} : vector<9x256xbf16> to vector<1x256xbf16>
    %221 = vector.broadcast %220 : vector<1x256xbf16> to vector<6x256xbf16>
    %222 = arith.mulf %219, %221 : vector<6x256xbf16>
    %223 = vector.extract_strided_slice %119 {offsets = [0, 49], sizes = [6, 256], strides = [1, 1]} : vector<6x392xbf16> to vector<6x256xbf16>
    %224 = vector.extract_strided_slice %0 {offsets = [1, 0], sizes = [1, 256], strides = [1, 1]} : vector<9x256xbf16> to vector<1x256xbf16>
    %225 = vector.broadcast %224 : vector<1x256xbf16> to vector<6x256xbf16>
    %226 = arith.mulf %223, %225 : vector<6x256xbf16>
    %227 = vector.extract_strided_slice %119 {offsets = [0, 50], sizes = [6, 256], strides = [1, 1]} : vector<6x392xbf16> to vector<6x256xbf16>
    %228 = vector.extract_strided_slice %0 {offsets = [2, 0], sizes = [1, 256], strides = [1, 1]} : vector<9x256xbf16> to vector<1x256xbf16>
    %229 = vector.broadcast %228 : vector<1x256xbf16> to vector<6x256xbf16>
    %230 = arith.mulf %227, %229 : vector<6x256xbf16>
    %231 = vector.extract_strided_slice %119 {offsets = [0, 51], sizes = [6, 256], strides = [1, 1]} : vector<6x392xbf16> to vector<6x256xbf16>
    %232 = vector.extract_strided_slice %0 {offsets = [3, 0], sizes = [1, 256], strides = [1, 1]} : vector<9x256xbf16> to vector<1x256xbf16>
    %233 = vector.broadcast %232 : vector<1x256xbf16> to vector<6x256xbf16>
    %234 = arith.mulf %231, %233 : vector<6x256xbf16>
    %235 = vector.extract_strided_slice %119 {offsets = [0, 52], sizes = [6, 256], strides = [1, 1]} : vector<6x392xbf16> to vector<6x256xbf16>
    %236 = vector.extract_strided_slice %119 {offsets = [0, 53], sizes = [6, 256], strides = [1, 1]} : vector<6x392xbf16> to vector<6x256xbf16>
    %237 = vector.extract_strided_slice %0 {offsets = [5, 0], sizes = [1, 256], strides = [1, 1]} : vector<9x256xbf16> to vector<1x256xbf16>
    %238 = vector.broadcast %237 : vector<1x256xbf16> to vector<6x256xbf16>
    %239 = arith.mulf %236, %238 : vector<6x256xbf16>
    %240 = vector.extract_strided_slice %119 {offsets = [0, 54], sizes = [6, 256], strides = [1, 1]} : vector<6x392xbf16> to vector<6x256xbf16>
    %241 = vector.extract_strided_slice %0 {offsets = [6, 0], sizes = [1, 256], strides = [1, 1]} : vector<9x256xbf16> to vector<1x256xbf16>
    %242 = vector.broadcast %241 : vector<1x256xbf16> to vector<6x256xbf16>
    %243 = arith.mulf %240, %242 : vector<6x256xbf16>
    %244 = vector.extract_strided_slice %119 {offsets = [0, 55], sizes = [6, 256], strides = [1, 1]} : vector<6x392xbf16> to vector<6x256xbf16>
    %245 = vector.extract_strided_slice %0 {offsets = [7, 0], sizes = [1, 256], strides = [1, 1]} : vector<9x256xbf16> to vector<1x256xbf16>
    %246 = vector.broadcast %245 : vector<1x256xbf16> to vector<6x256xbf16>
    %247 = arith.mulf %244, %246 : vector<6x256xbf16>
    %248 = vector.extract_strided_slice %119 {offsets = [0, 56], sizes = [6, 256], strides = [1, 1]} : vector<6x392xbf16> to vector<6x256xbf16>
    %249 = vector.extract_strided_slice %0 {offsets = [8, 0], sizes = [1, 256], strides = [1, 1]} : vector<9x256xbf16> to vector<1x256xbf16>
    %250 = vector.broadcast %249 : vector<1x256xbf16> to vector<6x256xbf16>
    %251 = arith.mulf %248, %250 : vector<6x256xbf16>
    %252 = vector.extract_strided_slice %119 {offsets = [0, 64], sizes = [6, 256], strides = [1, 1]} : vector<6x392xbf16> to vector<6x256xbf16>
    %253 = vector.extract_strided_slice %0 {offsets = [0, 0], sizes = [1, 256], strides = [1, 1]} : vector<9x256xbf16> to vector<1x256xbf16>
    %254 = vector.broadcast %253 : vector<1x256xbf16> to vector<6x256xbf16>
    %255 = arith.mulf %252, %254 : vector<6x256xbf16>
    %256 = vector.extract_strided_slice %119 {offsets = [0, 65], sizes = [6, 256], strides = [1, 1]} : vector<6x392xbf16> to vector<6x256xbf16>
    %257 = vector.extract_strided_slice %0 {offsets = [1, 0], sizes = [1, 256], strides = [1, 1]} : vector<9x256xbf16> to vector<1x256xbf16>
    %258 = vector.broadcast %257 : vector<1x256xbf16> to vector<6x256xbf16>
    %259 = arith.mulf %256, %258 : vector<6x256xbf16>
    %260 = vector.extract_strided_slice %119 {offsets = [0, 66], sizes = [6, 256], strides = [1, 1]} : vector<6x392xbf16> to vector<6x256xbf16>
    %261 = vector.extract_strided_slice %0 {offsets = [2, 0], sizes = [1, 256], strides = [1, 1]} : vector<9x256xbf16> to vector<1x256xbf16>
    %262 = vector.broadcast %261 : vector<1x256xbf16> to vector<6x256xbf16>
    %263 = arith.mulf %260, %262 : vector<6x256xbf16>
    %264 = vector.extract_strided_slice %119 {offsets = [0, 67], sizes = [6, 256], strides = [1, 1]} : vector<6x392xbf16> to vector<6x256xbf16>
    %265 = vector.extract_strided_slice %0 {offsets = [3, 0], sizes = [1, 256], strides = [1, 1]} : vector<9x256xbf16> to vector<1x256xbf16>
    %266 = vector.broadcast %265 : vector<1x256xbf16> to vector<6x256xbf16>
    %267 = arith.mulf %264, %266 : vector<6x256xbf16>
    %268 = vector.extract_strided_slice %119 {offsets = [0, 68], sizes = [6, 256], strides = [1, 1]} : vector<6x392xbf16> to vector<6x256xbf16>
    %269 = vector.extract_strided_slice %119 {offsets = [0, 69], sizes = [6, 256], strides = [1, 1]} : vector<6x392xbf16> to vector<6x256xbf16>
    %270 = vector.extract_strided_slice %0 {offsets = [5, 0], sizes = [1, 256], strides = [1, 1]} : vector<9x256xbf16> to vector<1x256xbf16>
    %271 = vector.broadcast %270 : vector<1x256xbf16> to vector<6x256xbf16>
    %272 = arith.mulf %269, %271 : vector<6x256xbf16>
    %273 = vector.extract_strided_slice %119 {offsets = [0, 70], sizes = [6, 256], strides = [1, 1]} : vector<6x392xbf16> to vector<6x256xbf16>
    %274 = vector.extract_strided_slice %0 {offsets = [6, 0], sizes = [1, 256], strides = [1, 1]} : vector<9x256xbf16> to vector<1x256xbf16>
    %275 = vector.broadcast %274 : vector<1x256xbf16> to vector<6x256xbf16>
    %276 = arith.mulf %273, %275 : vector<6x256xbf16>
    %277 = vector.extract_strided_slice %119 {offsets = [0, 71], sizes = [6, 256], strides = [1, 1]} : vector<6x392xbf16> to vector<6x256xbf16>
    %278 = vector.extract_strided_slice %0 {offsets = [7, 0], sizes = [1, 256], strides = [1, 1]} : vector<9x256xbf16> to vector<1x256xbf16>
    %279 = vector.broadcast %278 : vector<1x256xbf16> to vector<6x256xbf16>
    %280 = arith.mulf %277, %279 : vector<6x256xbf16>
    %281 = vector.extract_strided_slice %119 {offsets = [0, 72], sizes = [6, 256], strides = [1, 1]} : vector<6x392xbf16> to vector<6x256xbf16>
    %282 = vector.extract_strided_slice %0 {offsets = [8, 0], sizes = [1, 256], strides = [1, 1]} : vector<9x256xbf16> to vector<1x256xbf16>
    %283 = vector.broadcast %282 : vector<1x256xbf16> to vector<6x256xbf16>
    %284 = arith.mulf %281, %283 : vector<6x256xbf16>
    %285 = vector.extract_strided_slice %119 {offsets = [0, 80], sizes = [6, 256], strides = [1, 1]} : vector<6x392xbf16> to vector<6x256xbf16>
    %286 = vector.extract_strided_slice %0 {offsets = [0, 0], sizes = [1, 256], strides = [1, 1]} : vector<9x256xbf16> to vector<1x256xbf16>
    %287 = vector.broadcast %286 : vector<1x256xbf16> to vector<6x256xbf16>
    %288 = arith.mulf %285, %287 : vector<6x256xbf16>
    %289 = vector.extract_strided_slice %119 {offsets = [0, 81], sizes = [6, 256], strides = [1, 1]} : vector<6x392xbf16> to vector<6x256xbf16>
    %290 = vector.extract_strided_slice %0 {offsets = [1, 0], sizes = [1, 256], strides = [1, 1]} : vector<9x256xbf16> to vector<1x256xbf16>
    %291 = vector.broadcast %290 : vector<1x256xbf16> to vector<6x256xbf16>
    %292 = arith.mulf %289, %291 : vector<6x256xbf16>
    %293 = vector.extract_strided_slice %119 {offsets = [0, 82], sizes = [6, 256], strides = [1, 1]} : vector<6x392xbf16> to vector<6x256xbf16>
    %294 = vector.extract_strided_slice %0 {offsets = [2, 0], sizes = [1, 256], strides = [1, 1]} : vector<9x256xbf16> to vector<1x256xbf16>
    %295 = vector.broadcast %294 : vector<1x256xbf16> to vector<6x256xbf16>
    %296 = arith.mulf %293, %295 : vector<6x256xbf16>
    %297 = vector.extract_strided_slice %119 {offsets = [0, 83], sizes = [6, 256], strides = [1, 1]} : vector<6x392xbf16> to vector<6x256xbf16>
    %298 = vector.extract_strided_slice %0 {offsets = [3, 0], sizes = [1, 256], strides = [1, 1]} : vector<9x256xbf16> to vector<1x256xbf16>
    %299 = vector.broadcast %298 : vector<1x256xbf16> to vector<6x256xbf16>
    %300 = arith.mulf %297, %299 : vector<6x256xbf16>
    %301 = vector.extract_strided_slice %119 {offsets = [0, 84], sizes = [6, 256], strides = [1, 1]} : vector<6x392xbf16> to vector<6x256xbf16>
    %302 = vector.extract_strided_slice %119 {offsets = [0, 85], sizes = [6, 256], strides = [1, 1]} : vector<6x392xbf16> to vector<6x256xbf16>
    %303 = vector.extract_strided_slice %0 {offsets = [5, 0], sizes = [1, 256], strides = [1, 1]} : vector<9x256xbf16> to vector<1x256xbf16>
    %304 = vector.broadcast %303 : vector<1x256xbf16> to vector<6x256xbf16>
    %305 = arith.mulf %302, %304 : vector<6x256xbf16>
    %306 = vector.extract_strided_slice %119 {offsets = [0, 86], sizes = [6, 256], strides = [1, 1]} : vector<6x392xbf16> to vector<6x256xbf16>
    %307 = vector.extract_strided_slice %0 {offsets = [6, 0], sizes = [1, 256], strides = [1, 1]} : vector<9x256xbf16> to vector<1x256xbf16>
    %308 = vector.broadcast %307 : vector<1x256xbf16> to vector<6x256xbf16>
    %309 = arith.mulf %306, %308 : vector<6x256xbf16>
    %310 = vector.extract_strided_slice %119 {offsets = [0, 87], sizes = [6, 256], strides = [1, 1]} : vector<6x392xbf16> to vector<6x256xbf16>
    %311 = vector.extract_strided_slice %0 {offsets = [7, 0], sizes = [1, 256], strides = [1, 1]} : vector<9x256xbf16> to vector<1x256xbf16>
    %312 = vector.broadcast %311 : vector<1x256xbf16> to vector<6x256xbf16>
    %313 = arith.mulf %310, %312 : vector<6x256xbf16>
    %314 = vector.extract_strided_slice %119 {offsets = [0, 88], sizes = [6, 256], strides = [1, 1]} : vector<6x392xbf16> to vector<6x256xbf16>
    %315 = vector.extract_strided_slice %0 {offsets = [8, 0], sizes = [1, 256], strides = [1, 1]} : vector<9x256xbf16> to vector<1x256xbf16>
    %316 = vector.broadcast %315 : vector<1x256xbf16> to vector<6x256xbf16>
    %317 = arith.mulf %314, %316 : vector<6x256xbf16>
    %318 = vector.extract_strided_slice %119 {offsets = [0, 96], sizes = [6, 256], strides = [1, 1]} : vector<6x392xbf16> to vector<6x256xbf16>
    %319 = vector.extract_strided_slice %0 {offsets = [0, 0], sizes = [1, 256], strides = [1, 1]} : vector<9x256xbf16> to vector<1x256xbf16>
    %320 = vector.broadcast %319 : vector<1x256xbf16> to vector<6x256xbf16>
    %321 = arith.mulf %318, %320 : vector<6x256xbf16>
    %322 = vector.extract_strided_slice %119 {offsets = [0, 97], sizes = [6, 256], strides = [1, 1]} : vector<6x392xbf16> to vector<6x256xbf16>
    %323 = vector.extract_strided_slice %0 {offsets = [1, 0], sizes = [1, 256], strides = [1, 1]} : vector<9x256xbf16> to vector<1x256xbf16>
    %324 = vector.broadcast %323 : vector<1x256xbf16> to vector<6x256xbf16>
    %325 = arith.mulf %322, %324 : vector<6x256xbf16>
    %326 = vector.extract_strided_slice %119 {offsets = [0, 98], sizes = [6, 256], strides = [1, 1]} : vector<6x392xbf16> to vector<6x256xbf16>
    %327 = vector.extract_strided_slice %0 {offsets = [2, 0], sizes = [1, 256], strides = [1, 1]} : vector<9x256xbf16> to vector<1x256xbf16>
    %328 = vector.broadcast %327 : vector<1x256xbf16> to vector<6x256xbf16>
    %329 = arith.mulf %326, %328 : vector<6x256xbf16>
    %330 = vector.extract_strided_slice %119 {offsets = [0, 99], sizes = [6, 256], strides = [1, 1]} : vector<6x392xbf16> to vector<6x256xbf16>
    %331 = vector.extract_strided_slice %0 {offsets = [3, 0], sizes = [1, 256], strides = [1, 1]} : vector<9x256xbf16> to vector<1x256xbf16>
    %332 = vector.broadcast %331 : vector<1x256xbf16> to vector<6x256xbf16>
    %333 = arith.mulf %330, %332 : vector<6x256xbf16>
    %334 = vector.extract_strided_slice %119 {offsets = [0, 100], sizes = [6, 256], strides = [1, 1]} : vector<6x392xbf16> to vector<6x256xbf16>
    %335 = vector.extract_strided_slice %119 {offsets = [0, 101], sizes = [6, 256], strides = [1, 1]} : vector<6x392xbf16> to vector<6x256xbf16>
    %336 = vector.extract_strided_slice %0 {offsets = [5, 0], sizes = [1, 256], strides = [1, 1]} : vector<9x256xbf16> to vector<1x256xbf16>
    %337 = vector.broadcast %336 : vector<1x256xbf16> to vector<6x256xbf16>
    %338 = arith.mulf %335, %337 : vector<6x256xbf16>
    %339 = vector.extract_strided_slice %119 {offsets = [0, 102], sizes = [6, 256], strides = [1, 1]} : vector<6x392xbf16> to vector<6x256xbf16>
    %340 = vector.extract_strided_slice %0 {offsets = [6, 0], sizes = [1, 256], strides = [1, 1]} : vector<9x256xbf16> to vector<1x256xbf16>
    %341 = vector.broadcast %340 : vector<1x256xbf16> to vector<6x256xbf16>
    %342 = arith.mulf %339, %341 : vector<6x256xbf16>
    %343 = vector.extract_strided_slice %119 {offsets = [0, 103], sizes = [6, 256], strides = [1, 1]} : vector<6x392xbf16> to vector<6x256xbf16>
    %344 = vector.extract_strided_slice %0 {offsets = [7, 0], sizes = [1, 256], strides = [1, 1]} : vector<9x256xbf16> to vector<1x256xbf16>
    %345 = vector.broadcast %344 : vector<1x256xbf16> to vector<6x256xbf16>
    %346 = arith.mulf %343, %345 : vector<6x256xbf16>
    %347 = vector.extract_strided_slice %119 {offsets = [0, 104], sizes = [6, 256], strides = [1, 1]} : vector<6x392xbf16> to vector<6x256xbf16>
    %348 = vector.extract_strided_slice %0 {offsets = [8, 0], sizes = [1, 256], strides = [1, 1]} : vector<9x256xbf16> to vector<1x256xbf16>
    %349 = vector.broadcast %348 : vector<1x256xbf16> to vector<6x256xbf16>
    %350 = arith.mulf %347, %349 : vector<6x256xbf16>
    %351 = vector.extract_strided_slice %119 {offsets = [0, 112], sizes = [6, 256], strides = [1, 1]} : vector<6x392xbf16> to vector<6x256xbf16>
    %352 = vector.extract_strided_slice %0 {offsets = [0, 0], sizes = [1, 256], strides = [1, 1]} : vector<9x256xbf16> to vector<1x256xbf16>
    %353 = vector.broadcast %352 : vector<1x256xbf16> to vector<6x256xbf16>
    %354 = arith.mulf %351, %353 : vector<6x256xbf16>
    %355 = vector.extract_strided_slice %119 {offsets = [0, 113], sizes = [6, 256], strides = [1, 1]} : vector<6x392xbf16> to vector<6x256xbf16>
    %356 = vector.extract_strided_slice %0 {offsets = [1, 0], sizes = [1, 256], strides = [1, 1]} : vector<9x256xbf16> to vector<1x256xbf16>
    %357 = vector.broadcast %356 : vector<1x256xbf16> to vector<6x256xbf16>
    %358 = arith.mulf %355, %357 : vector<6x256xbf16>
    %359 = vector.extract_strided_slice %119 {offsets = [0, 114], sizes = [6, 256], strides = [1, 1]} : vector<6x392xbf16> to vector<6x256xbf16>
    %360 = vector.extract_strided_slice %0 {offsets = [2, 0], sizes = [1, 256], strides = [1, 1]} : vector<9x256xbf16> to vector<1x256xbf16>
    %361 = vector.broadcast %360 : vector<1x256xbf16> to vector<6x256xbf16>
    %362 = arith.mulf %359, %361 : vector<6x256xbf16>
    %363 = vector.extract_strided_slice %119 {offsets = [0, 115], sizes = [6, 256], strides = [1, 1]} : vector<6x392xbf16> to vector<6x256xbf16>
    %364 = vector.extract_strided_slice %0 {offsets = [3, 0], sizes = [1, 256], strides = [1, 1]} : vector<9x256xbf16> to vector<1x256xbf16>
    %365 = vector.broadcast %364 : vector<1x256xbf16> to vector<6x256xbf16>
    %366 = arith.mulf %363, %365 : vector<6x256xbf16>
    %367 = vector.extract_strided_slice %119 {offsets = [0, 116], sizes = [6, 256], strides = [1, 1]} : vector<6x392xbf16> to vector<6x256xbf16>
    %368 = vector.extract_strided_slice %119 {offsets = [0, 117], sizes = [6, 256], strides = [1, 1]} : vector<6x392xbf16> to vector<6x256xbf16>
    %369 = vector.extract_strided_slice %0 {offsets = [5, 0], sizes = [1, 256], strides = [1, 1]} : vector<9x256xbf16> to vector<1x256xbf16>
    %370 = vector.broadcast %369 : vector<1x256xbf16> to vector<6x256xbf16>
    %371 = arith.mulf %368, %370 : vector<6x256xbf16>
    %372 = vector.extract_strided_slice %119 {offsets = [0, 118], sizes = [6, 256], strides = [1, 1]} : vector<6x392xbf16> to vector<6x256xbf16>
    %373 = vector.extract_strided_slice %0 {offsets = [6, 0], sizes = [1, 256], strides = [1, 1]} : vector<9x256xbf16> to vector<1x256xbf16>
    %374 = vector.broadcast %373 : vector<1x256xbf16> to vector<6x256xbf16>
    %375 = arith.mulf %372, %374 : vector<6x256xbf16>
    %376 = vector.extract_strided_slice %119 {offsets = [0, 119], sizes = [6, 256], strides = [1, 1]} : vector<6x392xbf16> to vector<6x256xbf16>
    %377 = vector.extract_strided_slice %0 {offsets = [7, 0], sizes = [1, 256], strides = [1, 1]} : vector<9x256xbf16> to vector<1x256xbf16>
    %378 = vector.broadcast %377 : vector<1x256xbf16> to vector<6x256xbf16>
    %379 = arith.mulf %376, %378 : vector<6x256xbf16>
    %380 = vector.extract_strided_slice %119 {offsets = [0, 120], sizes = [6, 256], strides = [1, 1]} : vector<6x392xbf16> to vector<6x256xbf16>
    %381 = vector.extract_strided_slice %0 {offsets = [8, 0], sizes = [1, 256], strides = [1, 1]} : vector<9x256xbf16> to vector<1x256xbf16>
    %382 = vector.broadcast %381 : vector<1x256xbf16> to vector<6x256xbf16>
    %383 = arith.mulf %380, %382 : vector<6x256xbf16>
    %384 = vector.extract_strided_slice %119 {offsets = [0, 128], sizes = [6, 256], strides = [1, 1]} : vector<6x392xbf16> to vector<6x256xbf16>
    %385 = vector.extract_strided_slice %0 {offsets = [0, 0], sizes = [1, 256], strides = [1, 1]} : vector<9x256xbf16> to vector<1x256xbf16>
    %386 = vector.broadcast %385 : vector<1x256xbf16> to vector<6x256xbf16>
    %387 = arith.mulf %384, %386 : vector<6x256xbf16>
    %388 = vector.extract_strided_slice %119 {offsets = [0, 129], sizes = [6, 256], strides = [1, 1]} : vector<6x392xbf16> to vector<6x256xbf16>
    %389 = vector.extract_strided_slice %0 {offsets = [1, 0], sizes = [1, 256], strides = [1, 1]} : vector<9x256xbf16> to vector<1x256xbf16>
    %390 = vector.broadcast %389 : vector<1x256xbf16> to vector<6x256xbf16>
    %391 = arith.mulf %388, %390 : vector<6x256xbf16>
    %392 = vector.extract_strided_slice %119 {offsets = [0, 130], sizes = [6, 256], strides = [1, 1]} : vector<6x392xbf16> to vector<6x256xbf16>
    %393 = vector.extract_strided_slice %0 {offsets = [2, 0], sizes = [1, 256], strides = [1, 1]} : vector<9x256xbf16> to vector<1x256xbf16>
    %394 = vector.broadcast %393 : vector<1x256xbf16> to vector<6x256xbf16>
    %395 = arith.mulf %392, %394 : vector<6x256xbf16>
    %396 = vector.extract_strided_slice %119 {offsets = [0, 131], sizes = [6, 256], strides = [1, 1]} : vector<6x392xbf16> to vector<6x256xbf16>
    %397 = vector.extract_strided_slice %0 {offsets = [3, 0], sizes = [1, 256], strides = [1, 1]} : vector<9x256xbf16> to vector<1x256xbf16>
    %398 = vector.broadcast %397 : vector<1x256xbf16> to vector<6x256xbf16>
    %399 = arith.mulf %396, %398 : vector<6x256xbf16>
    %400 = vector.extract_strided_slice %119 {offsets = [0, 132], sizes = [6, 256], strides = [1, 1]} : vector<6x392xbf16> to vector<6x256xbf16>
    %401 = vector.extract_strided_slice %119 {offsets = [0, 133], sizes = [6, 256], strides = [1, 1]} : vector<6x392xbf16> to vector<6x256xbf16>
    %402 = vector.extract_strided_slice %0 {offsets = [5, 0], sizes = [1, 256], strides = [1, 1]} : vector<9x256xbf16> to vector<1x256xbf16>
    %403 = vector.broadcast %402 : vector<1x256xbf16> to vector<6x256xbf16>
    %404 = arith.mulf %401, %403 : vector<6x256xbf16>
    %405 = vector.extract_strided_slice %119 {offsets = [0, 134], sizes = [6, 256], strides = [1, 1]} : vector<6x392xbf16> to vector<6x256xbf16>
    %406 = vector.extract_strided_slice %0 {offsets = [6, 0], sizes = [1, 256], strides = [1, 1]} : vector<9x256xbf16> to vector<1x256xbf16>
    %407 = vector.broadcast %406 : vector<1x256xbf16> to vector<6x256xbf16>
    %408 = arith.mulf %405, %407 : vector<6x256xbf16>
    %409 = vector.extract_strided_slice %119 {offsets = [0, 135], sizes = [6, 256], strides = [1, 1]} : vector<6x392xbf16> to vector<6x256xbf16>
    %410 = vector.extract_strided_slice %0 {offsets = [7, 0], sizes = [1, 256], strides = [1, 1]} : vector<9x256xbf16> to vector<1x256xbf16>
    %411 = vector.broadcast %410 : vector<1x256xbf16> to vector<6x256xbf16>
    %412 = arith.mulf %409, %411 : vector<6x256xbf16>
    %413 = vector.extract_strided_slice %119 {offsets = [0, 136], sizes = [6, 256], strides = [1, 1]} : vector<6x392xbf16> to vector<6x256xbf16>
    %414 = vector.extract_strided_slice %0 {offsets = [8, 0], sizes = [1, 256], strides = [1, 1]} : vector<9x256xbf16> to vector<1x256xbf16>
    %415 = vector.broadcast %414 : vector<1x256xbf16> to vector<6x256xbf16>
    %416 = arith.mulf %413, %415 : vector<6x256xbf16>
    %417 = tpu.concatenate %123, %127, %131, %135, %136, %140, %144, %148, %152, %156, %160, %164, %168, %169, %173, %177 in 0 : vector<6x256xbf16>, vector<6x256xbf16>, vector<6x256xbf16>, vector<6x256xbf16>, vector<6x256xbf16>, vector<6x256xbf16>, vector<6x256xbf16>, vector<6x256xbf16>, vector<6x256xbf16>, vector<6x256xbf16>, vector<6x256xbf16>, vector<6x256xbf16>, vector<6x256xbf16>, vector<6x256xbf16>, vector<6x256xbf16>, vector<6x256xbf16> -> vector<96x256xbf16>
    %418 = tpu.concatenate %181, %185, %189, %193, %197, %201, %202, %206, %210, %214, %218, %222, %226, %230, %234, %235 in 0 : vector<6x256xbf16>, vector<6x256xbf16>, vector<6x256xbf16>, vector<6x256xbf16>, vector<6x256xbf16>, vector<6x256xbf16>, vector<6x256xbf16>, vector<6x256xbf16>, vector<6x256xbf16>, vector<6x256xbf16>, vector<6x256xbf16>, vector<6x256xbf16>, vector<6x256xbf16>, vector<6x256xbf16>, vector<6x256xbf16>, vector<6x256xbf16> -> vector<96x256xbf16>
    %419 = tpu.concatenate %239, %243, %247, %251, %255, %259, %263, %267, %268, %272, %276, %280, %284, %288, %292, %296 in 0 : vector<6x256xbf16>, vector<6x256xbf16>, vector<6x256xbf16>, vector<6x256xbf16>, vector<6x256xbf16>, vector<6x256xbf16>, vector<6x256xbf16>, vector<6x256xbf16>, vector<6x256xbf16>, vector<6x256xbf16>, vector<6x256xbf16>, vector<6x256xbf16>, vector<6x256xbf16>, vector<6x256xbf16>, vector<6x256xbf16>, vector<6x256xbf16> -> vector<96x256xbf16>
    %420 = tpu.concatenate %300, %301, %305, %309, %313, %317, %321, %325, %329, %333, %334, %338, %342, %346, %350, %354 in 0 : vector<6x256xbf16>, vector<6x256xbf16>, vector<6x256xbf16>, vector<6x256xbf16>, vector<6x256xbf16>, vector<6x256xbf16>, vector<6x256xbf16>, vector<6x256xbf16>, vector<6x256xbf16>, vector<6x256xbf16>, vector<6x256xbf16>, vector<6x256xbf16>, vector<6x256xbf16>, vector<6x256xbf16>, vector<6x256xbf16>, vector<6x256xbf16> -> vector<96x256xbf16>
    %421 = tpu.concatenate %358, %362, %366, %367, %371, %375, %379, %383, %387, %391, %395, %399, %400, %404, %408, %412 in 0 : vector<6x256xbf16>, vector<6x256xbf16>, vector<6x256xbf16>, vector<6x256xbf16>, vector<6x256xbf16>, vector<6x256xbf16>, vector<6x256xbf16>, vector<6x256xbf16>, vector<6x256xbf16>, vector<6x256xbf16>, vector<6x256xbf16>, vector<6x256xbf16>, vector<6x256xbf16>, vector<6x256xbf16>, vector<6x256xbf16>, vector<6x256xbf16> -> vector<96x256xbf16>
    %422 = tpu.concatenate %417, %418, %419, %420, %421, %416 in 0 : vector<96x256xbf16>, vector<96x256xbf16>, vector<96x256xbf16>, vector<96x256xbf16>, vector<96x256xbf16>, vector<6x256xbf16> -> vector<486x256xbf16>
    %c0_25 = arith.constant 0 : index
    %c0_26 = arith.constant 0 : index
    %423 = vector.load %arg9[%c0_25, %c0_26] : memref<96x486xbf16, #tpu.memory_space<vmem>>, vector<96x486xbf16>
    %cst_27 = arith.constant dense<0.000000e+00> : vector<96x256xf32>
    %424 = tpu.matmul %423, %422, %cst_27 {dimension_numbers = #tpu.dot_dimension_numbers<[1], [0], [0], [1], [0, 0, 1, 1], [], []>} : vector<96x486xbf16>, vector<486x256xbf16>, vector<96x256xf32> -> vector<96x256xf32>
    %c0_28 = arith.constant 0 : index
    %c0_29 = arith.constant 0 : index
    %425 = vector.load %arg10[%c0_28, %c0_29] : memref<96x1xf32, #tpu.memory_space<vmem>>, vector<96x1xf32>
    %426 = vector.broadcast %425 : vector<96x1xf32> to vector<96x256xf32>
    %427 = arith.addf %424, %426 : vector<96x256xf32>
    %c0_30 = arith.constant 0 : index
    %c0_31 = arith.constant 0 : index
    %428 = vector.load %arg11[%c0_30, %c0_31] : memref<96x1xf32, #tpu.memory_space<vmem>>, vector<96x1xf32>
    %cst_32 = arith.constant 0.000000e+00 : f32
    %429 = vector.broadcast %cst_32 : f32 to vector<96x1xf32>
    %430 = arith.cmpf ogt, %428, %429 : vector<96x1xf32>
    %cst_33 = arith.constant 0.000000e+00 : f32
    %431 = vector.broadcast %cst_33 : f32 to vector<96x256xf32>
    %432 = arith.maximumf %427, %431 : vector<96x256xf32>
    %433 = vector.shape_cast %430 : vector<96x1xi1> to vector<96x1xi1>
    %434 = vector.broadcast %433 : vector<96x1xi1> to vector<96x256xi1>
    %435 = arith.select %434, %432, %427 : vector<96x256xi1>, vector<96x256xf32>
    %c0_34 = arith.constant 0 : index
    %c0_35 = arith.constant 0 : index
    %436 = vector.load %arg12[%c0_34, %c0_35] : memref<48x96xbf16, #tpu.memory_space<vmem>>, vector<48x96xbf16>
    %437 = arith.truncf %435 : vector<96x256xf32> to vector<96x256xbf16>
    %cst_36 = arith.constant dense<0.000000e+00> : vector<48x256xf32>
    %438 = tpu.matmul %436, %437, %cst_36 {dimension_numbers = #tpu.dot_dimension_numbers<[1], [0], [0], [1], [0, 0, 1, 1], [], []>} : vector<48x96xbf16>, vector<96x256xbf16>, vector<48x256xf32> -> vector<48x256xf32>
    %c0_37 = arith.constant 0 : index
    %c0_38 = arith.constant 0 : index
    %439 = vector.load %arg13[%c0_37, %c0_38] : memref<48x1xf32, #tpu.memory_space<vmem>>, vector<48x1xf32>
    %440 = vector.broadcast %439 : vector<48x1xf32> to vector<48x256xf32>
    %441 = arith.addf %438, %440 : vector<48x256xf32>
    %c0_39 = arith.constant 0 : index
    %c0_40 = arith.constant 0 : index
    %442 = vector.load %arg14[%c0_39, %c0_40] : memref<48x1xf32, #tpu.memory_space<vmem>>, vector<48x1xf32>
    %cst_41 = arith.constant 0.000000e+00 : f32
    %443 = vector.broadcast %cst_41 : f32 to vector<48x1xf32>
    %444 = arith.cmpf ogt, %442, %443 : vector<48x1xf32>
    %cst_42 = arith.constant 0.000000e+00 : f32
    %445 = vector.broadcast %cst_42 : f32 to vector<48x256xf32>
    %446 = arith.maximumf %441, %445 : vector<48x256xf32>
    %447 = vector.shape_cast %444 : vector<48x1xi1> to vector<48x1xi1>
    %448 = vector.broadcast %447 : vector<48x1xi1> to vector<48x256xi1>
    %449 = arith.select %448, %446, %441 : vector<48x256xi1>, vector<48x256xf32>
    %450 = arith.truncf %449 : vector<48x256xf32> to vector<48x256xbf16>
    %cst_43 = arith.constant 0.000000e+00 : bf16
    %451 = vector.broadcast %cst_43 : bf16 to vector<48x34xbf16>
    %452 = tpu.concatenate %451, %450, %451 in 1 : vector<48x34xbf16>, vector<48x256xbf16>, vector<48x34xbf16> -> vector<48x324xbf16>
    %453 = vector.extract_strided_slice %452 {offsets = [0, 0], sizes = [48, 256], strides = [1, 1]} : vector<48x324xbf16> to vector<48x256xbf16>
    %454 = vector.extract_strided_slice %0 {offsets = [2, 0], sizes = [1, 256], strides = [1, 1]} : vector<9x256xbf16> to vector<1x256xbf16>
    %455 = vector.broadcast %454 : vector<1x256xbf16> to vector<48x256xbf16>
    %456 = arith.mulf %453, %455 : vector<48x256xbf16>
    %457 = vector.extract_strided_slice %452 {offsets = [0, 1], sizes = [48, 256], strides = [1, 1]} : vector<48x324xbf16> to vector<48x256xbf16>
    %458 = vector.extract_strided_slice %0 {offsets = [3, 0], sizes = [1, 256], strides = [1, 1]} : vector<9x256xbf16> to vector<1x256xbf16>
    %459 = vector.broadcast %458 : vector<1x256xbf16> to vector<48x256xbf16>
    %460 = arith.mulf %457, %459 : vector<48x256xbf16>
    %461 = vector.extract_strided_slice %452 {offsets = [0, 2], sizes = [48, 256], strides = [1, 1]} : vector<48x324xbf16> to vector<48x256xbf16>
    %462 = vector.extract_strided_slice %452 {offsets = [0, 3], sizes = [48, 256], strides = [1, 1]} : vector<48x324xbf16> to vector<48x256xbf16>
    %463 = vector.extract_strided_slice %0 {offsets = [5, 0], sizes = [1, 256], strides = [1, 1]} : vector<9x256xbf16> to vector<1x256xbf16>
    %464 = vector.broadcast %463 : vector<1x256xbf16> to vector<48x256xbf16>
    %465 = arith.mulf %462, %464 : vector<48x256xbf16>
    %466 = vector.extract_strided_slice %452 {offsets = [0, 4], sizes = [48, 256], strides = [1, 1]} : vector<48x324xbf16> to vector<48x256xbf16>
    %467 = vector.extract_strided_slice %0 {offsets = [6, 0], sizes = [1, 256], strides = [1, 1]} : vector<9x256xbf16> to vector<1x256xbf16>
    %468 = vector.broadcast %467 : vector<1x256xbf16> to vector<48x256xbf16>
    %469 = arith.mulf %466, %468 : vector<48x256xbf16>
    %470 = vector.extract_strided_slice %452 {offsets = [0, 16], sizes = [48, 256], strides = [1, 1]} : vector<48x324xbf16> to vector<48x256xbf16>
    %471 = vector.extract_strided_slice %0 {offsets = [2, 0], sizes = [1, 256], strides = [1, 1]} : vector<9x256xbf16> to vector<1x256xbf16>
    %472 = vector.broadcast %471 : vector<1x256xbf16> to vector<48x256xbf16>
    %473 = arith.mulf %470, %472 : vector<48x256xbf16>
    %474 = vector.extract_strided_slice %452 {offsets = [0, 17], sizes = [48, 256], strides = [1, 1]} : vector<48x324xbf16> to vector<48x256xbf16>
    %475 = vector.extract_strided_slice %0 {offsets = [3, 0], sizes = [1, 256], strides = [1, 1]} : vector<9x256xbf16> to vector<1x256xbf16>
    %476 = vector.broadcast %475 : vector<1x256xbf16> to vector<48x256xbf16>
    %477 = arith.mulf %474, %476 : vector<48x256xbf16>
    %478 = vector.extract_strided_slice %452 {offsets = [0, 18], sizes = [48, 256], strides = [1, 1]} : vector<48x324xbf16> to vector<48x256xbf16>
    %479 = vector.extract_strided_slice %452 {offsets = [0, 19], sizes = [48, 256], strides = [1, 1]} : vector<48x324xbf16> to vector<48x256xbf16>
    %480 = vector.extract_strided_slice %0 {offsets = [5, 0], sizes = [1, 256], strides = [1, 1]} : vector<9x256xbf16> to vector<1x256xbf16>
    %481 = vector.broadcast %480 : vector<1x256xbf16> to vector<48x256xbf16>
    %482 = arith.mulf %479, %481 : vector<48x256xbf16>
    %483 = vector.extract_strided_slice %452 {offsets = [0, 20], sizes = [48, 256], strides = [1, 1]} : vector<48x324xbf16> to vector<48x256xbf16>
    %484 = vector.extract_strided_slice %0 {offsets = [6, 0], sizes = [1, 256], strides = [1, 1]} : vector<9x256xbf16> to vector<1x256xbf16>
    %485 = vector.broadcast %484 : vector<1x256xbf16> to vector<48x256xbf16>
    %486 = arith.mulf %483, %485 : vector<48x256xbf16>
    %487 = vector.extract_strided_slice %452 {offsets = [0, 32], sizes = [48, 256], strides = [1, 1]} : vector<48x324xbf16> to vector<48x256xbf16>
    %488 = vector.extract_strided_slice %0 {offsets = [2, 0], sizes = [1, 256], strides = [1, 1]} : vector<9x256xbf16> to vector<1x256xbf16>
    %489 = vector.broadcast %488 : vector<1x256xbf16> to vector<48x256xbf16>
    %490 = arith.mulf %487, %489 : vector<48x256xbf16>
    %491 = vector.extract_strided_slice %452 {offsets = [0, 33], sizes = [48, 256], strides = [1, 1]} : vector<48x324xbf16> to vector<48x256xbf16>
    %492 = vector.extract_strided_slice %0 {offsets = [3, 0], sizes = [1, 256], strides = [1, 1]} : vector<9x256xbf16> to vector<1x256xbf16>
    %493 = vector.broadcast %492 : vector<1x256xbf16> to vector<48x256xbf16>
    %494 = arith.mulf %491, %493 : vector<48x256xbf16>
    %495 = vector.extract_strided_slice %452 {offsets = [0, 34], sizes = [48, 256], strides = [1, 1]} : vector<48x324xbf16> to vector<48x256xbf16>
    %496 = vector.extract_strided_slice %452 {offsets = [0, 35], sizes = [48, 256], strides = [1, 1]} : vector<48x324xbf16> to vector<48x256xbf16>
    %497 = vector.extract_strided_slice %0 {offsets = [5, 0], sizes = [1, 256], strides = [1, 1]} : vector<9x256xbf16> to vector<1x256xbf16>
    %498 = vector.broadcast %497 : vector<1x256xbf16> to vector<48x256xbf16>
    %499 = arith.mulf %496, %498 : vector<48x256xbf16>
    %500 = vector.extract_strided_slice %452 {offsets = [0, 36], sizes = [48, 256], strides = [1, 1]} : vector<48x324xbf16> to vector<48x256xbf16>
    %501 = vector.extract_strided_slice %0 {offsets = [6, 0], sizes = [1, 256], strides = [1, 1]} : vector<9x256xbf16> to vector<1x256xbf16>
    %502 = vector.broadcast %501 : vector<1x256xbf16> to vector<48x256xbf16>
    %503 = arith.mulf %500, %502 : vector<48x256xbf16>
    %504 = vector.extract_strided_slice %452 {offsets = [0, 48], sizes = [48, 256], strides = [1, 1]} : vector<48x324xbf16> to vector<48x256xbf16>
    %505 = vector.extract_strided_slice %0 {offsets = [2, 0], sizes = [1, 256], strides = [1, 1]} : vector<9x256xbf16> to vector<1x256xbf16>
    %506 = vector.broadcast %505 : vector<1x256xbf16> to vector<48x256xbf16>
    %507 = arith.mulf %504, %506 : vector<48x256xbf16>
    %508 = vector.extract_strided_slice %452 {offsets = [0, 49], sizes = [48, 256], strides = [1, 1]} : vector<48x324xbf16> to vector<48x256xbf16>
    %509 = vector.extract_strided_slice %0 {offsets = [3, 0], sizes = [1, 256], strides = [1, 1]} : vector<9x256xbf16> to vector<1x256xbf16>
    %510 = vector.broadcast %509 : vector<1x256xbf16> to vector<48x256xbf16>
    %511 = arith.mulf %508, %510 : vector<48x256xbf16>
    %512 = vector.extract_strided_slice %452 {offsets = [0, 50], sizes = [48, 256], strides = [1, 1]} : vector<48x324xbf16> to vector<48x256xbf16>
    %513 = vector.extract_strided_slice %452 {offsets = [0, 51], sizes = [48, 256], strides = [1, 1]} : vector<48x324xbf16> to vector<48x256xbf16>
    %514 = vector.extract_strided_slice %0 {offsets = [5, 0], sizes = [1, 256], strides = [1, 1]} : vector<9x256xbf16> to vector<1x256xbf16>
    %515 = vector.broadcast %514 : vector<1x256xbf16> to vector<48x256xbf16>
    %516 = arith.mulf %513, %515 : vector<48x256xbf16>
    %517 = vector.extract_strided_slice %452 {offsets = [0, 52], sizes = [48, 256], strides = [1, 1]} : vector<48x324xbf16> to vector<48x256xbf16>
    %518 = vector.extract_strided_slice %0 {offsets = [6, 0], sizes = [1, 256], strides = [1, 1]} : vector<9x256xbf16> to vector<1x256xbf16>
    %519 = vector.broadcast %518 : vector<1x256xbf16> to vector<48x256xbf16>
    %520 = arith.mulf %517, %519 : vector<48x256xbf16>
    %521 = vector.extract_strided_slice %452 {offsets = [0, 64], sizes = [48, 256], strides = [1, 1]} : vector<48x324xbf16> to vector<48x256xbf16>
    %522 = vector.extract_strided_slice %0 {offsets = [2, 0], sizes = [1, 256], strides = [1, 1]} : vector<9x256xbf16> to vector<1x256xbf16>
    %523 = vector.broadcast %522 : vector<1x256xbf16> to vector<48x256xbf16>
    %524 = arith.mulf %521, %523 : vector<48x256xbf16>
    %525 = vector.extract_strided_slice %452 {offsets = [0, 65], sizes = [48, 256], strides = [1, 1]} : vector<48x324xbf16> to vector<48x256xbf16>
    %526 = vector.extract_strided_slice %0 {offsets = [3, 0], sizes = [1, 256], strides = [1, 1]} : vector<9x256xbf16> to vector<1x256xbf16>
    %527 = vector.broadcast %526 : vector<1x256xbf16> to vector<48x256xbf16>
    %528 = arith.mulf %525, %527 : vector<48x256xbf16>
    %529 = vector.extract_strided_slice %452 {offsets = [0, 66], sizes = [48, 256], strides = [1, 1]} : vector<48x324xbf16> to vector<48x256xbf16>
    %530 = vector.extract_strided_slice %452 {offsets = [0, 67], sizes = [48, 256], strides = [1, 1]} : vector<48x324xbf16> to vector<48x256xbf16>
    %531 = vector.extract_strided_slice %0 {offsets = [5, 0], sizes = [1, 256], strides = [1, 1]} : vector<9x256xbf16> to vector<1x256xbf16>
    %532 = vector.broadcast %531 : vector<1x256xbf16> to vector<48x256xbf16>
    %533 = arith.mulf %530, %532 : vector<48x256xbf16>
    %534 = vector.extract_strided_slice %452 {offsets = [0, 68], sizes = [48, 256], strides = [1, 1]} : vector<48x324xbf16> to vector<48x256xbf16>
    %535 = vector.extract_strided_slice %0 {offsets = [6, 0], sizes = [1, 256], strides = [1, 1]} : vector<9x256xbf16> to vector<1x256xbf16>
    %536 = vector.broadcast %535 : vector<1x256xbf16> to vector<48x256xbf16>
    %537 = arith.mulf %534, %536 : vector<48x256xbf16>
    %538 = tpu.concatenate %456, %460, %461, %465, %469, %473, %477, %478, %482, %486, %490, %494, %495, %499, %503, %507 in 0 : vector<48x256xbf16>, vector<48x256xbf16>, vector<48x256xbf16>, vector<48x256xbf16>, vector<48x256xbf16>, vector<48x256xbf16>, vector<48x256xbf16>, vector<48x256xbf16>, vector<48x256xbf16>, vector<48x256xbf16>, vector<48x256xbf16>, vector<48x256xbf16>, vector<48x256xbf16>, vector<48x256xbf16>, vector<48x256xbf16>, vector<48x256xbf16> -> vector<768x256xbf16>
    %539 = tpu.concatenate %511, %512, %516, %520, %524, %528, %529, %533, %537 in 0 : vector<48x256xbf16>, vector<48x256xbf16>, vector<48x256xbf16>, vector<48x256xbf16>, vector<48x256xbf16>, vector<48x256xbf16>, vector<48x256xbf16>, vector<48x256xbf16>, vector<48x256xbf16> -> vector<432x256xbf16>
    %540 = tpu.concatenate %538, %539 in 0 : vector<768x256xbf16>, vector<432x256xbf16> -> vector<1200x256xbf16>
    %c0_44 = arith.constant 0 : index
    %c0_45 = arith.constant 0 : index
    %541 = vector.load %arg15[%c0_44, %c0_45] : memref<6x1200xbf16, #tpu.memory_space<vmem>>, vector<6x1200xbf16>
    %cst_46 = arith.constant dense<0.000000e+00> : vector<6x256xf32>
    %542 = tpu.matmul %541, %540, %cst_46 {dimension_numbers = #tpu.dot_dimension_numbers<[1], [0], [0], [1], [0, 0, 1, 1], [], []>} : vector<6x1200xbf16>, vector<1200x256xbf16>, vector<6x256xf32> -> vector<6x256xf32>
    %c0_47 = arith.constant 0 : index
    %c0_48 = arith.constant 0 : index
    %543 = vector.load %arg16[%c0_47, %c0_48] : memref<6x1xf32, #tpu.memory_space<vmem>>, vector<6x1xf32>
    %544 = vector.broadcast %543 : vector<6x1xf32> to vector<6x256xf32>
    %545 = arith.addf %542, %544 : vector<6x256xf32>
    %546 = arith.addf %116, %545 : vector<6x256xf32>
    %547 = vector.shape_cast %546 : vector<6x256xf32> to vector<1x6x256xf32>
    %c0_49 = arith.constant 0 : index
    %c0_50 = arith.constant 0 : index
    %c0_51 = arith.constant 0 : index
    %548 = vector.load %arg17[%c0_49, %c0_50, %c0_51] : memref<1x6x256xf32, #tpu.memory_space<vmem>>, vector<1x6x256xf32>
    tpu.vector_store %arg17[%c0_49, %c0_50, %c0_51], %547 {strides = array<i32>} : memref<1x6x256xf32, #tpu.memory_space<vmem>>, vector<1x6x256xf32>,
    return
  }
  func.func @transform_0(%arg0: i32) -> (i32, i32, i32) {
    %c0_i32 = arith.constant 0 : i32
    %c0_i32_0 = arith.constant 0 : i32
    %c0_i32_1 = arith.constant 0 : i32
    return %arg0, %c0_i32, %c0_i32_0 : i32, i32, i32
  }
  func.func @transform_1(%arg0: i32) -> (i32, i32) {
    %c0_i32 = arith.constant 0 : i32
    %c0_i32_0 = arith.constant 0 : i32
    %c0_i32_1 = arith.constant 0 : i32
    return %c0_i32, %c0_i32_0 : i32, i32
  }
  func.func @transform_2(%arg0: i32) -> (i32, i32) {
    %c0_i32 = arith.constant 0 : i32
    %c0_i32_0 = arith.constant 0 : i32
    %c0_i32_1 = arith.constant 0 : i32
    return %c0_i32, %c0_i32_0 : i32, i32
  }
  func.func @transform_3(%arg0: i32) -> (i32, i32) {
    %c0_i32 = arith.constant 0 : i32
    %c0_i32_0 = arith.constant 0 : i32
    %c0_i32_1 = arith.constant 0 : i32
    return %c0_i32, %c0_i32_0 : i32, i32
  }
  func.func @transform_4(%arg0: i32) -> (i32, i32) {
    %c0_i32 = arith.constant 0 : i32
    %c0_i32_0 = arith.constant 0 : i32
    %c0_i32_1 = arith.constant 0 : i32
    return %c0_i32, %c0_i32_0 : i32, i32
  }
  func.func @transform_5(%arg0: i32) -> (i32, i32) {
    %c0_i32 = arith.constant 0 : i32
    %c0_i32_0 = arith.constant 0 : i32
    %c0_i32_1 = arith.constant 0 : i32
    return %c0_i32, %c0_i32_0 : i32, i32
  }
  func.func @transform_6(%arg0: i32) -> (i32, i32) {
    %c0_i32 = arith.constant 0 : i32
    %c0_i32_0 = arith.constant 0 : i32
    %c0_i32_1 = arith.constant 0 : i32
    return %c0_i32, %c0_i32_0 : i32, i32
  }
  func.func @transform_7(%arg0: i32) -> (i32, i32) {
    %c0_i32 = arith.constant 0 : i32
    %c0_i32_0 = arith.constant 0 : i32
    %c0_i32_1 = arith.constant 0 : i32
    return %c0_i32, %c0_i32_0 : i32, i32
  }
  func.func @transform_8(%arg0: i32) -> (i32, i32) {
    %c0_i32 = arith.constant 0 : i32
    %c0_i32_0 = arith.constant 0 : i32
    %c0_i32_1 = arith.constant 0 : i32
    return %c0_i32, %c0_i32_0 : i32, i32
  }
  func.func @transform_9(%arg0: i32) -> (i32, i32) {
    %c0_i32 = arith.constant 0 : i32
    %c0_i32_0 = arith.constant 0 : i32
    %c0_i32_1 = arith.constant 0 : i32
    return %c0_i32, %c0_i32_0 : i32, i32
  }
  func.func @transform_10(%arg0: i32) -> (i32, i32) {
    %c0_i32 = arith.constant 0 : i32
    %c0_i32_0 = arith.constant 0 : i32
    %c0_i32_1 = arith.constant 0 : i32
    return %c0_i32, %c0_i32_0 : i32, i32
  }
  func.func @transform_11(%arg0: i32) -> (i32, i32) {
    %c0_i32 = arith.constant 0 : i32
    %c0_i32_0 = arith.constant 0 : i32
    %c0_i32_1 = arith.constant 0 : i32
    return %c0_i32, %c0_i32_0 : i32, i32
  }
  func.func @transform_12(%arg0: i32) -> (i32, i32) {
    %c0_i32 = arith.constant 0 : i32
    %c0_i32_0 = arith.constant 0 : i32
    %c0_i32_1 = arith.constant 0 : i32
    return %c0_i32, %c0_i32_0 : i32, i32
  }
  func.func @transform_13(%arg0: i32) -> (i32, i32) {
    %c0_i32 = arith.constant 0 : i32
    %c0_i32_0 = arith.constant 0 : i32
    %c0_i32_1 = arith.constant 0 : i32
    return %c0_i32, %c0_i32_0 : i32, i32
  }
  func.func @transform_14(%arg0: i32) -> (i32, i32) {
    %c0_i32 = arith.constant 0 : i32
    %c0_i32_0 = arith.constant 0 : i32
    %c0_i32_1 = arith.constant 0 : i32
    return %c0_i32, %c0_i32_0 : i32, i32
  }
  func.func @transform_15(%arg0: i32) -> (i32, i32) {
    %c0_i32 = arith.constant 0 : i32
    %c0_i32_0 = arith.constant 0 : i32
    %c0_i32_1 = arith.constant 0 : i32
    return %c0_i32, %c0_i32_0 : i32, i32
  }
  func.func @transform_16(%arg0: i32) -> (i32, i32, i32) {
    %c0_i32 = arith.constant 0 : i32
    %c0_i32_0 = arith.constant 0 : i32
    %c0_i32_1 = arith.constant 0 : i32
    return %arg0, %c0_i32, %c0_i32_0 : i32, i32, i32
  }
}

</mosaic_0001>

<llo_original>
// kernel: hyperreconnet_forward.1
$region0: #{hyperreconnet_forward.1}
  #allocation0 [shape = 'u32[]', space=smem, size = 0x4, offset = 0x4, fixed_abs, tag = 'smem constant byte address 0x4 - core index']
  #allocation1 [shape = 'u32[72,128]{1,0:T(1,128)}', space=vmem, size = 0x9000, scoped, tag = 'internal scratch']
  %s0 = inlined_call_operand.vmem [shape: f32[2,4,256], index: 0, kind: input, shape index: {}]
  %s1 = inlined_call_operand.vmem [shape: bf16[9,256], index: 1, kind: input, shape index: {}]
  %s2 = inlined_call_operand.vmem [shape: bf16[6,36], index: 2, kind: input, shape index: {}]
  %s3 = inlined_call_operand.vmem [shape: f32[6,1], index: 3, kind: input, shape index: {}]
  %s4 = inlined_call_operand.vmem [shape: bf16[6,54], index: 4, kind: input, shape index: {}]
  %s5 = inlined_call_operand.vmem [shape: f32[6,1], index: 5, kind: input, shape index: {}]
  %s6 = inlined_call_operand.vmem [shape: bf16[6,54], index: 6, kind: input, shape index: {}]
  %s7 = inlined_call_operand.vmem [shape: f32[6,1], index: 7, kind: input, shape index: {}]
  %s8 = inlined_call_operand.vmem [shape: bf16[96,486], index: 8, kind: input, shape index: {}]
  %s9 = inlined_call_operand.vmem [shape: f32[96,1], index: 9, kind: input, shape index: {}]
  %s10 = inlined_call_operand.vmem [shape: f32[96,1], index: 10, kind: input, shape index: {}]
  %s11 = inlined_call_operand.vmem [shape: bf16[48,96], index: 11, kind: input, shape index: {}]
  %s12 = inlined_call_operand.vmem [shape: f32[48,1], index: 12, kind: input, shape index: {}]
  %s13 = inlined_call_operand.vmem [shape: f32[48,1], index: 13, kind: input, shape index: {}]
  %s14 = inlined_call_operand.vmem [shape: bf16[6,1200], index: 14, kind: input, shape index: {}]
  %s15 = inlined_call_operand.vmem [shape: f32[6,1], index: 15, kind: input, shape index: {}]
  %s16 = inlined_call_operand.vmem [shape: f32[2,6,256], index: 16, kind: output, shape index: {}]
  %s17 = sld [smem:[#allocation0]]
  $region97: #{hyperreconnet_forward.1} parent=0
    _
  %s19 = ssub.s32 1, %s17
  %s20 = scalar_select 0, %s19, %s17
  loop: start=0, step=1, limit=4
  $region2: #{hyperreconnet_forward.1} parent=0 // loop_pre_header
    _
  $region3: #{hyperreconnet_forward.1} parent=0 // loop_header
    %s22 = sphi 0, %s26
    %p23 = scmp.ge.s32.totalorder %s22, 4
    %s32 = sphi 0, %s34
    %s35 = sphi 0, %s32
    %s36 = sphi 0, %s35
    %s52 = sphi 0, %s36
    %s56 = sphi 0, %s56
    %s58 = sphi 0, %s56
    %s59 = sphi 0, %s58
    %s73 = sphi 0, %s59
    %s77 = sphi 0, %s77
    %s79 = sphi 0, %s77
    %s80 = sphi 0, %s79
    %s94 = sphi 0, %s80
    %s98 = sphi 0, %s98
    %s100 = sphi 0, %s98
    %s101 = sphi 0, %s100
    %s115 = sphi 0, %s101
    %s119 = sphi 0, %s119
    %s121 = sphi 0, %s119
    %s122 = sphi 0, %s121
    %s136 = sphi 0, %s122
    %s140 = sphi 0, %s140
    %s142 = sphi 0, %s140
    %s143 = sphi 0, %s142
    %s157 = sphi 0, %s143
    %s161 = sphi 0, %s161
    %s163 = sphi 0, %s161
    %s164 = sphi 0, %s163
    %s178 = sphi 0, %s164
    %s182 = sphi 0, %s182
    %s184 = sphi 0, %s182
    %s185 = sphi 0, %s184
    %s199 = sphi 0, %s185
    %s203 = sphi 0, %s203
    %s205 = sphi 0, %s203
    %s206 = sphi 0, %s205
    %s220 = sphi 0, %s206
    %s224 = sphi 0, %s224
    %s226 = sphi 0, %s224
    %s227 = sphi 0, %s226
    %s241 = sphi 0, %s227
    %s245 = sphi 0, %s245
    %s247 = sphi 0, %s245
    %s248 = sphi 0, %s247
    %s262 = sphi 0, %s248
    %s266 = sphi 0, %s266
    %s268 = sphi 0, %s266
    %s269 = sphi 0, %s268
    %s283 = sphi 0, %s269
    %s287 = sphi 0, %s287
    %s289 = sphi 0, %s287
    %s290 = sphi 0, %s289
    %s304 = sphi 0, %s290
    %s308 = sphi 0, %s308
    %s310 = sphi 0, %s308
    %s311 = sphi 0, %s310
    %s325 = sphi 0, %s311
    %s329 = sphi 0, %s329
    %s331 = sphi 0, %s329
    %s332 = sphi 0, %s331
    %s346 = sphi 0, %s332
    %s350 = sphi 0, %s350
    %s352 = sphi 0, %s350
    %s353 = sphi 0, %s352
    %s367 = sphi 0, %s353
    %s373 = sphi 0, %s375
    %s376 = sphi 0, %s373
    %s377 = sphi 0, %s376
    %s393 = sphi 0, %s377
  $region4: #{hyperreconnet_forward.1} parent=0 // loop_header_branch
    %25 = sbr.rel (%p23) target = $region8
  $region5: #{hyperreconnet_forward.1} parent=0 // loop_body
    %s27 = ssub.s32 %s22, 1
    %s28 = ssub.s32 %s22, 2
    %s29 = sadd.s32 %s22, 1
    %s30 = ssub.s32 %s22, %s29
    %p31 = scmp.eq.s32.totalorder %s30, 0
    %s33 = sadd.s32 %s32, 1
    %s34 = scalar_select %p31, %s32, %s33
    %p37 = pneg %p31
    %p38 = scmp.eq.s32.totalorder %s22, 1
    %p39 = por %p37, %p38
    %p40 = scmp.ne.s32.totalorder %s32, %s35
    %p41 = scmp.eq.s32.totalorder %s22, 0
    %p42 = por %p40, %p41
    %p43 = scmp.ne.s32.totalorder %s32, %s35
    %p44 = scmp.eq.s32.totalorder %s27, 1
    %p45 = por %p43, %p44
    %p46 = scmp.ne.s32.totalorder %s35, %s36
    %p47 = scmp.eq.s32.totalorder %s27, 0
    %p48 = por %p46, %p47
    %p49 = scmp.ne.s32.totalorder %s35, %s36
    %p50 = scmp.eq.s32.totalorder %s28, 1
    %p51 = por %p49, %p50
    %p53 = scmp.ne.s32.totalorder %s36, %s52
    %p54 = scmp.eq.s32.totalorder %s28, 0
    %p55 = por %p53, %p54
    %s57 = sadd.s32 %s56, 1
    %p60 = scmp.eq.s32.totalorder %s22, 1
    %p61 = scmp.ne.s32.totalorder %s56, %s58
    %p62 = scmp.eq.s32.totalorder %s22, 0
    %p63 = por %p61, %p62
    %p64 = scmp.ne.s32.totalorder %s56, %s58
    %p65 = scmp.eq.s32.totalorder %s27, 1
    %p66 = por %p64, %p65
    %p67 = scmp.ne.s32.totalorder %s58, %s59
    %p68 = scmp.eq.s32.totalorder %s27, 0
    %p69 = por %p67, %p68
    %p70 = scmp.ne.s32.totalorder %s58, %s59
    %p71 = scmp.eq.s32.totalorder %s28, 1
    %p72 = por %p70, %p71
    %p74 = scmp.ne.s32.totalorder %s59, %s73
    %p75 = scmp.eq.s32.totalorder %s28, 0
    %p76 = por %p74, %p75
    %s78 = sadd.s32 %s77, 1
    %p81 = scmp.eq.s32.totalorder %s22, 1
    %p82 = scmp.ne.s32.totalorder %s77, %s79
    %p83 = scmp.eq.s32.totalorder %s22, 0
    %p84 = por %p82, %p83
    %p85 = scmp.ne.s32.totalorder %s77, %s79
    %p86 = scmp.eq.s32.totalorder %s27, 1
    %p87 = por %p85, %p86
    %p88 = scmp.ne.s32.totalorder %s79, %s80
    %p89 = scmp.eq.s32.totalorder %s27, 0
    %p90 = por %p88, %p89
    %p91 = scmp.ne.s32.totalorder %s79, %s80
    %p92 = scmp.eq.s32.totalorder %s28, 1
    %p93 = por %p91, %p92
    %p95 = scmp.ne.s32.totalorder %s80, %s94
    %p96 = scmp.eq.s32.totalorder %s28, 0
    %p97 = por %p95, %p96
    %s99 = sadd.s32 %s98, 1
    %p102 = scmp.eq.s32.totalorder %s22, 1
    %p103 = scmp.ne.s32.totalorder %s98, %s100
    %p104 = scmp.eq.s32.totalorder %s22, 0
    %p105 = por %p103, %p104
    %p106 = scmp.ne.s32.totalorder %s98, %s100
    %p107 = scmp.eq.s32.totalorder %s27, 1
    %p108 = por %p106, %p107
    %p109 = scmp.ne.s32.totalorder %s100, %s101
    %p110 = scmp.eq.s32.totalorder %s27, 0
    %p111 = por %p109, %p110
    %p112 = scmp.ne.s32.totalorder %s100, %s101
    %p113 = scmp.eq.s32.totalorder %s28, 1
    %p114 = por %p112, %p113
    %p116 = scmp.ne.s32.totalorder %s101, %s115
    %p117 = scmp.eq.s32.totalorder %s28, 0
    %p118 = por %p116, %p117
    %s120 = sadd.s32 %s119, 1
    %p123 = scmp.eq.s32.totalorder %s22, 1
    %p124 = scmp.ne.s32.totalorder %s119, %s121
    %p125 = scmp.eq.s32.totalorder %s22, 0
    %p126 = por %p124, %p125
    %p127 = scmp.ne.s32.totalorder %s119, %s121
    %p128 = scmp.eq.s32.totalorder %s27, 1
    %p129 = por %p127, %p128
    %p130 = scmp.ne.s32.totalorder %s121, %s122
    %p131 = scmp.eq.s32.totalorder %s27, 0
    %p132 = por %p130, %p131
    %p133 = scmp.ne.s32.totalorder %s121, %s122
    %p134 = scmp.eq.s32.totalorder %s28, 1
    %p135 = por %p133, %p134
    %p137 = scmp.ne.s32.totalorder %s122, %s136
    %p138 = scmp.eq.s32.totalorder %s28, 0
    %p139 = por %p137, %p138
    %s141 = sadd.s32 %s140, 1
    %p144 = scmp.eq.s32.totalorder %s22, 1
    %p145 = scmp.ne.s32.totalorder %s140, %s142
    %p146 = scmp.eq.s32.totalorder %s22, 0
    %p147 = por %p145, %p146
    %p148 = scmp.ne.s32.totalorder %s140, %s142
    %p149 = scmp.eq.s32.totalorder %s27, 1
    %p150 = por %p148, %p149
    %p151 = scmp.ne.s32.totalorder %s142, %s143
    %p152 = scmp.eq.s32.totalorder %s27, 0
    %p153 = por %p151, %p152
    %p154 = scmp.ne.s32.totalorder %s142, %s143
    %p155 = scmp.eq.s32.totalorder %s28, 1
    %p156 = por %p154, %p155
    %p158 = scmp.ne.s32.totalorder %s143, %s157
    %p159 = scmp.eq.s32.totalorder %s28, 0
    %p160 = por %p158, %p159
    %s162 = sadd.s32 %s161, 1
    %p165 = scmp.eq.s32.totalorder %s22, 1
    %p166 = scmp.ne.s32.totalorder %s161, %s163
    %p167 = scmp.eq.s32.totalorder %s22, 0
    %p168 = por %p166, %p167
    %p169 = scmp.ne.s32.totalorder %s161, %s163
    %p170 = scmp.eq.s32.totalorder %s27, 1
    %p171 = por %p169, %p170
    %p172 = scmp.ne.s32.totalorder %s163, %s164
    %p173 = scmp.eq.s32.totalorder %s27, 0
    %p174 = por %p172, %p173
    %p175 = scmp.ne.s32.totalorder %s163, %s164
    %p176 = scmp.eq.s32.totalorder %s28, 1
    %p177 = por %p175, %p176
    %p179 = scmp.ne.s32.totalorder %s164, %s178
    %p180 = scmp.eq.s32.totalorder %s28, 0
    %p181 = por %p179, %p180
    %s183 = sadd.s32 %s182, 1
    %p186 = scmp.eq.s32.totalorder %s22, 1
    %p187 = scmp.ne.s32.totalorder %s182, %s184
    %p188 = scmp.eq.s32.totalorder %s22, 0
    %p189 = por %p187, %p188
    %p190 = scmp.ne.s32.totalorder %s182, %s184
    %p191 = scmp.eq.s32.totalorder %s27, 1
    %p192 = por %p190, %p191
    %p193 = scmp.ne.s32.totalorder %s184, %s185
    %p194 = scmp.eq.s32.totalorder %s27, 0
    %p195 = por %p193, %p194
    %p196 = scmp.ne.s32.totalorder %s184, %s185
    %p197 = scmp.eq.s32.totalorder %s28, 1
    %p198 = por %p196, %p197
    %p200 = scmp.ne.s32.totalorder %s185, %s199
    %p201 = scmp.eq.s32.totalorder %s28, 0
    %p202 = por %p200, %p201
    %s204 = sadd.s32 %s203, 1
    %p207 = scmp.eq.s32.totalorder %s22, 1
    %p208 = scmp.ne.s32.totalorder %s203, %s205
    %p209 = scmp.eq.s32.totalorder %s22, 0
    %p210 = por %p208, %p209
    %p211 = scmp.ne.s32.totalorder %s203, %s205
    %p212 = scmp.eq.s32.totalorder %s27, 1
    %p213 = por %p211, %p212
    %p214 = scmp.ne.s32.totalorder %s205, %s206
    %p215 = scmp.eq.s32.totalorder %s27, 0
    %p216 = por %p214, %p215
    %p217 = scmp.ne.s32.totalorder %s205, %s206
    %p218 = scmp.eq.s32.totalorder %s28, 1
    %p219 = por %p217, %p218
    %p221 = scmp.ne.s32.totalorder %s206, %s220
    %p222 = scmp.eq.s32.totalorder %s28, 0
    %p223 = por %p221, %p222
    %s225 = sadd.s32 %s224, 1
    %p228 = scmp.eq.s32.totalorder %s22, 1
    %p229 = scmp.ne.s32.totalorder %s224, %s226
    %p230 = scmp.eq.s32.totalorder %s22, 0
    %p231 = por %p229, %p230
    %p232 = scmp.ne.s32.totalorder %s224, %s226
    %p233 = scmp.eq.s32.totalorder %s27, 1
    %p234 = por %p232, %p233
    %p235 = scmp.ne.s32.totalorder %s226, %s227
    %p236 = scmp.eq.s32.totalorder %s27, 0
    %p237 = por %p235, %p236
    %p238 = scmp.ne.s32.totalorder %s226, %s227
    %p239 = scmp.eq.s32.totalorder %s28, 1
    %p240 = por %p238, %p239
    %p242 = scmp.ne.s32.totalorder %s227, %s241
    %p243 = scmp.eq.s32.totalorder %s28, 0
    %p244 = por %p242, %p243
    %s246 = sadd.s32 %s245, 1
    %p249 = scmp.eq.s32.totalorder %s22, 1
    %p250 = scmp.ne.s32.totalorder %s245, %s247
    %p251 = scmp.eq.s32.totalorder %s22, 0
    %p252 = por %p250, %p251
    %p253 = scmp.ne.s32.totalorder %s245, %s247
    %p254 = scmp.eq.s32.totalorder %s27, 1
    %p255 = por %p253, %p254
    %p256 = scmp.ne.s32.totalorder %s247, %s248
    %p257 = scmp.eq.s32.totalorder %s27, 0
    %p258 = por %p256, %p257
    %p259 = scmp.ne.s32.totalorder %s247, %s248
    %p260 = scmp.eq.s32.totalorder %s28, 1
    %p261 = por %p259, %p260
    %p263 = scmp.ne.s32.totalorder %s248, %s262
    %p264 = scmp.eq.s32.totalorder %s28, 0
    %p265 = por %p263, %p264
    %s267 = sadd.s32 %s266, 1
    %p270 = scmp.eq.s32.totalorder %s22, 1
    %p271 = scmp.ne.s32.totalorder %s266, %s268
    %p272 = scmp.eq.s32.totalorder %s22, 0
    %p273 = por %p271, %p272
    %p274 = scmp.ne.s32.totalorder %s266, %s268
    %p275 = scmp.eq.s32.totalorder %s27, 1
    %p276 = por %p274, %p275
    %p277 = scmp.ne.s32.totalorder %s268, %s269
    %p278 = scmp.eq.s32.totalorder %s27, 0
    %p279 = por %p277, %p278
    %p280 = scmp.ne.s32.totalorder %s268, %s269
    %p281 = scmp.eq.s32.totalorder %s28, 1
    %p282 = por %p280, %p281
    %p284 = scmp.ne.s32.totalorder %s269, %s283
    %p285 = scmp.eq.s32.totalorder %s28, 0
    %p286 = por %p284, %p285
    %s288 = sadd.s32 %s287, 1
    %p291 = scmp.eq.s32.totalorder %s22, 1
    %p292 = scmp.ne.s32.totalorder %s287, %s289
    %p293 = scmp.eq.s32.totalorder %s22, 0
    %p294 = por %p292, %p293
    %p295 = scmp.ne.s32.totalorder %s287, %s289
    %p296 = scmp.eq.s32.totalorder %s27, 1
    %p297 = por %p295, %p296
    %p298 = scmp.ne.s32.totalorder %s289, %s290
    %p299 = scmp.eq.s32.totalorder %s27, 0
    %p300 = por %p298, %p299
    %p301 = scmp.ne.s32.totalorder %s289, %s290
    %p302 = scmp.eq.s32.totalorder %s28, 1
    %p303 = por %p301, %p302
    %p305 = scmp.ne.s32.totalorder %s290, %s304
    %p306 = scmp.eq.s32.totalorder %s28, 0
    %p307 = por %p305, %p306
    %s309 = sadd.s32 %s308, 1
    %p312 = scmp.eq.s32.totalorder %s22, 1
    %p313 = scmp.ne.s32.totalorder %s308, %s310
    %p314 = scmp.eq.s32.totalorder %s22, 0
    %p315 = por %p313, %p314
    %p316 = scmp.ne.s32.totalorder %s308, %s310
    %p317 = scmp.eq.s32.totalorder %s27, 1
    %p318 = por %p316, %p317
    %p319 = scmp.ne.s32.totalorder %s310, %s311
    %p320 = scmp.eq.s32.totalorder %s27, 0
    %p321 = por %p319, %p320
    %p322 = scmp.ne.s32.totalorder %s310, %s311
    %p323 = scmp.eq.s32.totalorder %s28, 1
    %p324 = por %p322, %p323
    %p326 = scmp.ne.s32.totalorder %s311, %s325
    %p327 = scmp.eq.s32.totalorder %s28, 0
    %p328 = por %p326, %p327
    %s330 = sadd.s32 %s329, 1
    %p333 = scmp.eq.s32.totalorder %s22, 1
    %p334 = scmp.ne.s32.totalorder %s329, %s331
    %p335 = scmp.eq.s32.totalorder %s22, 0
    %p336 = por %p334, %p335
    %p337 = scmp.ne.s32.totalorder %s329, %s331
    %p338 = scmp.eq.s32.totalorder %s27, 1
    %p339 = por %p337, %p338
    %p340 = scmp.ne.s32.totalorder %s331, %s332
    %p341 = scmp.eq.s32.totalorder %s27, 0
    %p342 = por %p340, %p341
    %p343 = scmp.ne.s32.totalorder %s331, %s332
    %p344 = scmp.eq.s32.totalorder %s28, 1
    %p345 = por %p343, %p344
    %p347 = scmp.ne.s32.totalorder %s332, %s346
    %p348 = scmp.eq.s32.totalorder %s28, 0
    %p349 = por %p347, %p348
    %s351 = sadd.s32 %s350, 1
    %p354 = scmp.eq.s32.totalorder %s22, 1
    %p355 = scmp.ne.s32.totalorder %s350, %s352
    %p356 = scmp.eq.s32.totalorder %s22, 0
    %p357 = por %p355, %p356
    %p358 = scmp.ne.s32.totalorder %s350, %s352
    %p359 = scmp.eq.s32.totalorder %s27, 1
    %p360 = por %p358, %p359
    %p361 = scmp.ne.s32.totalorder %s352, %s353
    %p362 = scmp.eq.s32.totalorder %s27, 0
    %p363 = por %p361, %p362
    %p364 = scmp.ne.s32.totalorder %s352, %s353
    %p365 = scmp.eq.s32.totalorder %s28, 1
    %p366 = por %p364, %p365
    %p368 = scmp.ne.s32.totalorder %s353, %s367
    %p369 = scmp.eq.s32.totalorder %s28, 0
    %p370 = por %p368, %p369
    %s371 = ssub.s32 %s22, %s29
    %p372 = scmp.eq.s32.totalorder %s371, 0
    %s374 = sadd.s32 %s373, 1
    %s375 = scalar_select %p372, %s373, %s374
    %p378 = pneg %p372
    %p379 = scmp.eq.s32.totalorder %s22, 1
    %p380 = por %p378, %p379
    %p381 = scmp.ne.s32.totalorder %s373, %s376
    %p382 = scmp.eq.s32.totalorder %s22, 0
    %p383 = por %p381, %p382
    %p384 = scmp.ne.s32.totalorder %s373, %s376
    %p385 = scmp.eq.s32.totalorder %s27, 1
    %p386 = por %p384, %p385
    %p387 = scmp.ne.s32.totalorder %s376, %s377
    %p388 = scmp.eq.s32.totalorder %s27, 0
    %p389 = por %p387, %p388
    %p390 = scmp.ne.s32.totalorder %s376, %s377
    %p391 = scmp.eq.s32.totalorder %s28, 1
    %p392 = por %p390, %p391
    %p394 = scmp.ne.s32.totalorder %s377, %s393
    %p395 = scmp.eq.s32.totalorder %s28, 0
    %p396 = por %p394, %p395
    %p397 = scmp.le.s32.totalorder 1, %s22
    %p398 = scmp.lt.s32.totalorder %s22, 3
    %p399 = pnand %p397, %p398
    %p400 = pneg %p399
    // Predicated region
    $region9: #{hyperreconnet_forward.1} parent=5 // pred_check
      _
    $region10: #{hyperreconnet_forward.1} parent=5 // pred_check_branch
      %402 = sbr.rel (%p399) target = $region12
    $region11: #{hyperreconnet_forward.1} parent=5 // pred_region
      %s403 = ssub.s32 %s22, 1
      // Predicated region
      $region13: #{hyperreconnet_forward.1} parent=11 // pred_check
        %p404 = pneg %p69
      $region14: #{hyperreconnet_forward.1} parent=11 // pred_check_branch
        %406 = sbr.rel (%p404) target = $region16
      $region15: #{hyperreconnet_forward.1} parent=11 // pred_region
        _
      $region16: #{hyperreconnet_forward.1} parent=11 // pred_fallthru
        _
      // Predicated region
      $region17: #{hyperreconnet_forward.1} parent=11 // pred_check
        %p407 = pneg %p90
      $region18: #{hyperreconnet_forward.1} parent=11 // pred_check_branch
        %409 = sbr.rel (%p407) target = $region20
      $region19: #{hyperreconnet_forward.1} parent=11 // pred_region
        _
      $region20: #{hyperreconnet_forward.1} parent=11 // pred_fallthru
        _
      // Predicated region
      $region21: #{hyperreconnet_forward.1} parent=11 // pred_check
        %p410 = pneg %p111
      $region22: #{hyperreconnet_forward.1} parent=11 // pred_check_branch
        %412 = sbr.rel (%p410) target = $region24
      $region23: #{hyperreconnet_forward.1} parent=11 // pred_region
        _
      $region24: #{hyperreconnet_forward.1} parent=11 // pred_fallthru
        _
      // Predicated region
      $region25: #{hyperreconnet_forward.1} parent=11 // pred_check
        %p413 = pneg %p132
      $region26: #{hyperreconnet_forward.1} parent=11 // pred_check_branch
        %415 = sbr.rel (%p413) target = $region28
      $region27: #{hyperreconnet_forward.1} parent=11 // pred_region
        _
      $region28: #{hyperreconnet_forward.1} parent=11 // pred_fallthru
        _
      // Predicated region
      $region29: #{hyperreconnet_forward.1} parent=11 // pred_check
        %p416 = pneg %p153
      $region30: #{hyperreconnet_forward.1} parent=11 // pred_check_branch
        %418 = sbr.rel (%p416) target = $region32
      $region31: #{hyperreconnet_forward.1} parent=11 // pred_region
        _
      $region32: #{hyperreconnet_forward.1} parent=11 // pred_fallthru
        _
      // Predicated region
      $region33: #{hyperreconnet_forward.1} parent=11 // pred_check
        %p419 = pneg %p174
      $region34: #{hyperreconnet_forward.1} parent=11 // pred_check_branch
        %421 = sbr.rel (%p419) target = $region36
      $region35: #{hyperreconnet_forward.1} parent=11 // pred_region
        _
      $region36: #{hyperreconnet_forward.1} parent=11 // pred_fallthru
        _
      // Predicated region
      $region37: #{hyperreconnet_forward.1} parent=11 // pred_check
        %p422 = pneg %p195
      $region38: #{hyperreconnet_forward.1} parent=11 // pred_check_branch
        %424 = sbr.rel (%p422) target = $region40
      $region39: #{hyperreconnet_forward.1} parent=11 // pred_region
        _
      $region40: #{hyperreconnet_forward.1} parent=11 // pred_fallthru
        _
      // Predicated region
      $region41: #{hyperreconnet_forward.1} parent=11 // pred_check
        %p425 = pneg %p216
      $region42: #{hyperreconnet_forward.1} parent=11 // pred_check_branch
        %427 = sbr.rel (%p425) target = $region44
      $region43: #{hyperreconnet_forward.1} parent=11 // pred_region
        _
      $region44: #{hyperreconnet_forward.1} parent=11 // pred_fallthru
        _
      // Predicated region
      $region45: #{hyperreconnet_forward.1} parent=11 // pred_check
        %p428 = pneg %p237
      $region46: #{hyperreconnet_forward.1} parent=11 // pred_check_branch
        %430 = sbr.rel (%p428) target = $region48
      $region47: #{hyperreconnet_forward.1} parent=11 // pred_region
        _
      $region48: #{hyperreconnet_forward.1} parent=11 // pred_fallthru
        _
      // Predicated region
      $region49: #{hyperreconnet_forward.1} parent=11 // pred_check
        %p431 = pneg %p258
      $region50: #{hyperreconnet_forward.1} parent=11 // pred_check_branch
        %433 = sbr.rel (%p431) target = $region52
      $region51: #{hyperreconnet_forward.1} parent=11 // pred_region
        _
      $region52: #{hyperreconnet_forward.1} parent=11 // pred_fallthru
        _
      // Predicated region
      $region53: #{hyperreconnet_forward.1} parent=11 // pred_check
        %p434 = pneg %p279
      $region54: #{hyperreconnet_forward.1} parent=11 // pred_check_branch
        %436 = sbr.rel (%p434) target = $region56
      $region55: #{hyperreconnet_forward.1} parent=11 // pred_region
        _
      $region56: #{hyperreconnet_forward.1} parent=11 // pred_fallthru
        _
      // Predicated region
      $region57: #{hyperreconnet_forward.1} parent=11 // pred_check
        %p437 = pneg %p300
      $region58: #{hyperreconnet_forward.1} parent=11 // pred_check_branch
        %439 = sbr.rel (%p437) target = $region60
      $region59: #{hyperreconnet_forward.1} parent=11 // pred_region
        _
      $region60: #{hyperreconnet_forward.1} parent=11 // pred_fallthru
        _
      // Predicated region
      $region61: #{hyperreconnet_forward.1} parent=11 // pred_check
        %p440 = pneg %p321
      $region62: #{hyperreconnet_forward.1} parent=11 // pred_check_branch
        %442 = sbr.rel (%p440) target = $region64
      $region63: #{hyperreconnet_forward.1} parent=11 // pred_region
        _
      $region64: #{hyperreconnet_forward.1} parent=11 // pred_fallthru
        _
      // Predicated region
      $region65: #{hyperreconnet_forward.1} parent=11 // pred_check
        %p443 = pneg %p342
      $region66: #{hyperreconnet_forward.1} parent=11 // pred_check_branch
        %445 = sbr.rel (%p443) target = $region68
      $region67: #{hyperreconnet_forward.1} parent=11 // pred_region
        _
      $region68: #{hyperreconnet_forward.1} parent=11 // pred_fallthru
        _
      // Predicated region
      $region69: #{hyperreconnet_forward.1} parent=11 // pred_check
        %p446 = pneg %p363
      $region70: #{hyperreconnet_forward.1} parent=11 // pred_check_branch
        %448 = sbr.rel (%p446) target = $region72
      $region71: #{hyperreconnet_forward.1} parent=11 // pred_region
        _
      $region72: #{hyperreconnet_forward.1} parent=11 // pred_fallthru
        _
    $region12: #{hyperreconnet_forward.1} parent=5 // pred_fallthru
      _
    %p449 = scmp.lt.s32.totalorder %s22, 2
    // Predicated region
    $region73: #{hyperreconnet_forward.1} parent=5 // pred_check
      %p450 = pneg %p449
    $region74: #{hyperreconnet_forward.1} parent=5 // pred_check_branch
      %452 = sbr.rel (%p450) target = $region76
    $region75: #{hyperreconnet_forward.1} parent=5 // pred_region
      // Predicated region
      $region77: #{hyperreconnet_forward.1} parent=75 // pred_check
        %p453 = pneg %p42
      $region78: #{hyperreconnet_forward.1} parent=75 // pred_check_branch
        %455 = sbr.rel (%p453) target = $region80
      $region79: #{hyperreconnet_forward.1} parent=75 // pred_region
        %p456 = scmp.lt.s32.totalorder %s22, 1
        %s457 = scalar_select %p456, %s22, 1
        %s458 = smul.addr %s457, 2
        %s459 = smul.addr %s458, 4
        %s460 = scalar_lea.vmem %s0, %s459
      $region80: #{hyperreconnet_forward.1} parent=75 // pred_fallthru
        _
    $region76: #{hyperreconnet_forward.1} parent=5 // pred_fallthru
      _
    %p461 = scmp.le.s32.totalorder 1, %s22
    %p462 = scmp.lt.s32.totalorder %s22, 3
    %p463 = pnand %p461, %p462
    %p464 = pneg %p463
    // Predicated region
    $region81: #{hyperreconnet_forward.1} parent=5 // pred_check
      _
    $region82: #{hyperreconnet_forward.1} parent=5 // pred_check_branch
      %466 = sbr.rel (%p463) target = $region84
    $region83: #{hyperreconnet_forward.1} parent=5 // pred_region
      %s467 = ssub.s32 %s22, 1
      %p468 = scmp.lt.s32.totalorder %s27, 1
      %s469 = scalar_select %p468, %s27, 1
      %s470 = smul.addr %s469, 2
      %s471 = smul.addr %s470, 4
      %s472 = scalar_lea.vmem %s0, %s471
      %p473 = pneg %p48
      %p474 = pneg %p45
      %p475 = pneg %p69
      %p476 = pneg %p66
      %p477 = pneg %p90
      %p478 = pneg %p87
      %p479 = pneg %p111
      %p480 = pneg %p108
      %p481 = pneg %p132
      %p482 = pneg %p129
      %p483 = pneg %p153
      %p484 = pneg %p150
      %p485 = pneg %p174
      %p486 = pneg %p171
      %p487 = pneg %p195
      %p488 = pneg %p192
      %p489 = pneg %p216
      %p490 = pneg %p213
      %p491 = pneg %p237
      %p492 = pneg %p234
      %p493 = pneg %p258
      %p494 = pneg %p255
      %p495 = pneg %p279
      %p496 = pneg %p276
      %p497 = pneg %p300
      %p498 = pneg %p297
      %p499 = pneg %p321
      %p500 = pneg %p318
      %p501 = pneg %p342
      %p502 = pneg %p339
      %p503 = pneg %p363
      %p504 = pneg %p360
      %p505 = pneg %p389
      %p506 = pneg %p386
      %p507 = scmp.lt.s32.totalorder %s27, 1
      %s508 = scalar_select %p507, %s27, 1
      %s509 = smul.addr %s508, 2
      %s510 = smul.addr %s509, 8
      %s511 = scalar_lea.vmem %s16, %s510
      %p512 = scmp.lt.s32.totalorder %s27, 1
      %s513 = scalar_select %p512, %s27, 1
      %s514 = smul.addr %s513, 2
      %s515 = smul.addr %s514, 4
      %s516 = scalar_lea.vmem %s0, %s515
      %p517 = scmp.lt.s32.totalorder %s27, 1
      %s518 = scalar_select %p517, %s27, 1
      %s519 = smul.addr %s518, 2
      %s520 = smul.addr %s519, 8
      %s521 = scalar_lea.vmem %s16, %s520
      %v523 = vld [vmem:[%s1] sm:$0xff]
      %v524 = vld [vmem:[%s1 + $0x8] sm:$0x11]
      %v525 = vld [vmem:[%s516] sm:$0xff]
      %527 = vst [vmem:[#allocation1] ss:$2 sm:$0xff] %v525
      %v528 = vld.sshfl [vmem:[#allocation1] sm:$0xff pattern:$0x75316420]
      %v529 = vld.sshfl [vmem:[#allocation1 + $0x8] sm:$0xff pattern:$0x75316420]
      %v532 = vpack.c.bf16 %v529, %v528
      %v534 = vunpack.c.l.b16 %v532
      %v535 = vunpack.c.h.b16 %v532
      %v536 = vpack.c.b16 %v534, %v534
      %v537 = vpack.c.b16 %v535, %v535
      %538 = vrot.lane.b32.xlu0 %v536, 17
      %v539 = vpop.permute.xlu0 %538
      %540 = vrot.lane.b32.xlu0 %v537, 17
      %v541 = vpop.permute.xlu0 %540
      %vm542 = vcmask 138240
      %v543 = vsel %vm542, %v539, %v541
      %vm545 = vcmask 138240
      %v548 = vsel %vm545, 0, %v539
      %v551 = vsel %vm545, %v541, 0
      %v554 = vunpack.c.l.b16 %v523
      %v555 = vunpack.c.h.b16 %v523
      %v556 = vpack.c.b16 %v554, %v554
      %v557 = vpack.c.b16 %v555, %v555
      %v559 = vshrl.u32 %v556, 16
      %v560 = vpack.i.b16 %v559, %v559
      %v562 = vperm.slane %v560, 1
      %v564 = vshrl.u32 %v557, 16
      %v565 = vpack.i.b16 %v564, %v564
      %v567 = vperm.slane %v565, 1
      %v568 = vunpack.c.l.bf16 %v548
      %v569 = vunpack.c.l.bf16 %v543
      %v570 = vunpack.c.l.bf16 %v562
      %v571 = vunpack.c.l.bf16 %v567
      %v572 = vmul.f32 %v568, %v570
      %v573 = vmul.f32 %v569, %v571
      %v574 = vpack.c.bf16 %v573, %v572
      %v575 = vperm.slane %v560, 2
      %v576 = vperm.slane %v565, 2
      %v577 = vunpack.c.l.bf16 %v551
      %v578 = vunpack.c.l.bf16 %v575
      %v579 = vunpack.c.l.bf16 %v576
      %582 = vrot.lane.b32.xlu0 %v578, 2
      %v583 = vpop.permute.xlu0 %582
      %584 = vrot.lane.b32.xlu0 %v579, 2
      %v585 = vpop.permute.xlu0 %584
      %vm586 = vcmask 15360
      %v587 = vsel %vm586, %v583, %v585
      %v591 = vmul.f32 %v568, %v583
      %v592 = vmul.f32 %v569, %v587
      %v593 = vmul.f32 %v577, %v585
      %v594 = vpack.c.bf16 %v592, %v591
      %v595 = vpack.c.bf16 %v593, %v593
      %598 = vrot.lane.b32.xlu0 %v570, 16
      %v599 = vpop.permute.xlu0 %598
      %600 = vrot.lane.b32.xlu0 %v571, 16
      %v601 = vpop.permute.xlu0 %600
      %vm602 = vcmask 130048
      %v603 = vsel %vm602, %v599, %v601
      %v607 = vmul.f32 %v568, %v599
      %v608 = vmul.f32 %v569, %v603
      %v609 = vmul.f32 %v577, %v601
      %v610 = vpack.c.bf16 %v608, %v607
      %v611 = vpack.c.bf16 %v609, %v609
      %612 = vrot.lane.b32.xlu0 %v578, 18
      %v613 = vpop.permute.xlu0 %612
      %614 = vrot.lane.b32.xlu0 %v579, 18
      %v615 = vpop.permute.xlu0 %614
      %vm616 = vcmask 146432
      %v617 = vsel %vm616, %v613, %v615
      %v621 = vmul.f32 %v568, %v613
      %v622 = vmul.f32 %v569, %v617
      %v623 = vmul.f32 %v577, %v615
      %v624 = vpack.c.bf16 %v622, %v621
      %v625 = vpack.c.bf16 %v623, %v623
      %626 = vrot.lane.b32.xlu0 %v570, 32
      %v627 = vpop.permute.xlu0 %626
      %628 = vrot.lane.b32.xlu0 %v571, 32
      %v629 = vpop.permute.xlu0 %628
      %vm630 = vcmask 261120
      %v631 = vsel %vm630, %v627, %v629
      %v635 = vmul.f32 %v568, %v627
      %v636 = vmul.f32 %v569, %v631
      %v637 = vmul.f32 %v577, %v629
      %v638 = vpack.c.bf16 %v636, %v635
      %v639 = vpack.c.bf16 %v637, %v637
      %640 = vrot.lane.b32.xlu0 %v578, 34
      %v641 = vpop.permute.xlu0 %640
      %642 = vrot.lane.b32.xlu0 %v579, 34
      %v643 = vpop.permute.xlu0 %642
      %vm644 = vcmask 277504
      %v645 = vsel %vm644, %v641, %v643
      %v649 = vmul.f32 %v568, %v641
      %v650 = vmul.f32 %v569, %v645
      %v651 = vmul.f32 %v577, %v643
      %v652 = vpack.c.bf16 %v650, %v649
      %v653 = vpack.c.bf16 %v651, %v651
      %v655 = vunpack.c.l.b16 %v574
      %v656 = vunpack.c.h.b16 %v574
      %v657 = vpack.c.b16 %v655, %v655
      %v658 = vpack.c.b16 %v656, %v656
      %v661 = vrot.slane %v548, 6
      %v662 = vrot.slane %v543, 6
      %v663 = vrot.slane %v551, 6
      %664 = vrot.lane.b32.xlu0 %v661, 127
      %v665 = vpop.permute.xlu0 %664
      %666 = vrot.lane.b32.xlu0 %v662, 127
      %v667 = vpop.permute.xlu0 %666
      %668 = vrot.lane.b32.xlu0 %v663, 127
      %v669 = vpop.permute.xlu0 %668
      %vm670 = vcmask 1039360
      %v671 = vsel %vm670, %v665, %v667
      %v672 = vsel %vm670, %v667, %v669
      %v675 = vunpack.c.l.b16 %v594
      %v676 = vunpack.c.h.b16 %v594
      %v677 = vunpack.c.l.b16 %v595
      %v678 = vpack.c.b16 %v675, %v675
      %v679 = vpack.c.b16 %v676, %v676
      %v680 = vpack.c.b16 %v677, %v677
      %681 = vrot.lane.b32.xlu0 %v678, 126
      %v682 = vpop.permute.xlu0 %681
      %683 = vrot.lane.b32.xlu0 %v679, 126
      %v684 = vpop.permute.xlu0 %683
      %685 = vrot.lane.b32.xlu0 %v680, 126
      %v686 = vpop.permute.xlu0 %685
      %vm687 = vcmask 1031168
      %v688 = vsel %vm687, %v682, %v684
      %v689 = vsel %vm687, %v684, %v686
      %v692 = vunpack.c.l.b16 %v610
      %v693 = vunpack.c.h.b16 %v610
      %v694 = vunpack.c.l.b16 %v611
      %v695 = vpack.c.b16 %v692, %v692
      %v696 = vpack.c.b16 %v693, %v693
      %v697 = vpack.c.b16 %v694, %v694
      %v698 = vrot.slane %v695, 2
      %v699 = vrot.slane %v696, 2
      %v700 = vrot.slane %v697, 2
      %701 = vrot.lane.b32.xlu0 %v698, 112
      %v702 = vpop.permute.xlu0 %701
      %703 = vrot.lane.b32.xlu0 %v699, 112
      %v704 = vpop.permute.xlu0 %703
      %705 = vrot.lane.b32.xlu0 %v700, 112
      %v706 = vpop.permute.xlu0 %705
      %vm707 = vcmask 916480
      %v708 = vsel %vm707, %v702, %v704
      %v709 = vsel %vm707, %v704, %v706
      %710 = vrot.lane.b32.xlu0 %v548, 111
      %v711 = vpop.permute.xlu0 %710
      %712 = vrot.lane.b32.xlu0 %v543, 111
      %v713 = vpop.permute.xlu0 %712
      %714 = vrot.lane.b32.xlu0 %v551, 111
      %v715 = vpop.permute.xlu0 %714
      %vm716 = vcmask 908288
      %v717 = vsel %vm716, %v711, %v713
      %v718 = vsel %vm716, %v713, %v715
      %v721 = vunpack.c.l.b16 %v624
      %v722 = vunpack.c.h.b16 %v624
      %v723 = vunpack.c.l.b16 %v625
      %v724 = vpack.c.b16 %v721, %v721
      %v725 = vpack.c.b16 %v722, %v722
      %v726 = vpack.c.b16 %v723, %v723
      %v727 = vrot.slane %v724, 6
      %v728 = vrot.slane %v725, 6
      %v729 = vrot.slane %v726, 6
      %730 = vrot.lane.b32.xlu0 %v727, 110
      %v731 = vpop.permute.xlu0 %730
      %732 = vrot.lane.b32.xlu0 %v728, 110
      %v733 = vpop.permute.xlu0 %732
      %734 = vrot.lane.b32.xlu0 %v729, 110
      %v735 = vpop.permute.xlu0 %734
      %vm736 = vcmask 900096
      %v737 = vsel %vm736, %v731, %v733
      %v738 = vsel %vm736, %v733, %v735
      %v741 = vunpack.c.l.b16 %v638
      %v742 = vunpack.c.h.b16 %v638
      %v743 = vunpack.c.l.b16 %v639
      %v744 = vpack.c.b16 %v741, %v741
      %v745 = vpack.c.b16 %v742, %v742
      %v746 = vpack.c.b16 %v743, %v743
      %747 = vrot.lane.b32.xlu0 %v744, 96
      %v748 = vpop.permute.xlu0 %747
      %749 = vrot.lane.b32.xlu0 %v745, 96
      %v750 = vpop.permute.xlu0 %749
      %751 = vrot.lane.b32.xlu0 %v746, 96
      %v752 = vpop.permute.xlu0 %751
      %vm753 = vcmask 785408
      %v754 = vsel %vm753, %v748, %v750
      %v755 = vsel %vm753, %v750, %v752
      %v756 = vrot.slane %v548, 2
      %v757 = vrot.slane %v543, 2
      %v758 = vrot.slane %v551, 2
      %759 = vrot.lane.b32.xlu0 %v756, 95
      %v760 = vpop.permute.xlu0 %759
      %761 = vrot.lane.b32.xlu0 %v757, 95
      %v762 = vpop.permute.xlu0 %761
      %763 = vrot.lane.b32.xlu0 %v758, 95
      %v764 = vpop.permute.xlu0 %763
      %vm765 = vcmask 777216
      %v766 = vsel %vm765, %v760, %v762
      %v767 = vsel %vm765, %v762, %v764
      %v770 = vunpack.c.l.b16 %v652
      %v771 = vunpack.c.h.b16 %v652
      %v772 = vunpack.c.l.b16 %v653
      %v773 = vpack.c.b16 %v770, %v770
      %v774 = vpack.c.b16 %v771, %v771
      %v775 = vpack.c.b16 %v772, %v772
      %776 = vrot.lane.b32.xlu0 %v773, 94
      %v777 = vpop.permute.xlu0 %776
      %778 = vrot.lane.b32.xlu0 %v774, 94
      %v779 = vpop.permute.xlu0 %778
      %780 = vrot.lane.b32.xlu0 %v775, 94
      %v781 = vpop.permute.xlu0 %780
      %vm782 = vcmask 769024
      %v783 = vsel %vm782, %v777, %v779
      %v784 = vsel %vm782, %v779, %v781
      %vm785 = vcmask 1041408
      %v788 = vsel %vm785, %v657, %v671
      %v791 = vsel %vm785, %v658, %v672
      %vm792 = vcmask 1043456
      %v794 = vsel %vm792, %v788, %v688
      %v796 = vsel %vm792, %v791, %v689
      %vm797 = vcmask 1045504
      %v799 = vsel %vm797, %v794, %v708
      %v802 = vsel %vm797, %v796, %v709
      %v806 = vsel %vm785, %v717, %v737
      %v809 = vsel %vm785, %v718, %v738
      %v811 = vsel %vm792, %v806, %v754
      %v813 = vsel %vm792, %v809, %v755
      %v815 = vsel %vm797, %v811, %v766
      %v818 = vsel %vm797, %v813, %v767
      %v820 = vld [vmem:[%s2] sm:$0x7]
      %v821 = vld [vmem:[%s3] sm:$0x3f]
      %823 = vset.pattern.permute.xlu0 0
      %824 = vperm.xlu0 %823, %v821
      %v825 = vpop.permute.xlu0 %824
      %vm827 = vcmask 293888
      %v829 = vsel %vm827, %v820, 0
      %v832 = vsel %vm785, %v783, 0
      %v835 = vsel %vm785, %v784, 0
      %837 = vmatpush.bf16.msra.mxu0 0
      %838 = vmatpush.bf16.msra.mxu0 0
      %839 = vmatpush.bf16.msra.mxu0 0
      %840 = vmatpush.bf16.msra.mxu0 0
      %841 = vmatpush.bf16.msra.mxu0 0
      %842 = vmatpush.bf16.msra.mxu0 %v832
      %843 = vmatpush.bf16.msra.mxu0 %v815
      %844 = vmatpush.bf16.msra.mxu0 %v799
      %845 = vmatmul.bf16.gmra.mxu0 %v829
      %v846 = vpop.f32.mrf.mxu0
      %v847 = vadd.f32 %v825, %v846
      %v848 = vpop.f32.mrf.mxu0
      %849 = vdwg.mxu0
      %850 = vmatpush.bf16.msra.mxu0 0
      %851 = vmatpush.bf16.msra.mxu0 0
      %852 = vmatpush.bf16.msra.mxu0 0
      %853 = vmatpush.bf16.msra.mxu0 0
      %854 = vmatpush.bf16.msra.mxu0 0
      %855 = vmatpush.bf16.msra.mxu0 %v835
      %856 = vmatpush.bf16.msra.mxu0 %v818
      %857 = vmatpush.bf16.msra.mxu0 %v802
      %858 = vmatmul.bf16.gmra.mxu0 %v829
      %v859 = vpop.f32.mrf.mxu0
      %v860 = vadd.f32 %v825, %v859
      %v861 = vpop.f32.mrf.mxu0
      %862 = vdwg.mxu0
      %v863 = vmax.f32 %v847, 0.0
      %v864 = vmax.f32 %v860, 0.0
      %v865 = vpack.c.bf16 %v864, %v863
      %v867 = vunpack.c.l.b16 %v865
      %v868 = vunpack.c.h.b16 %v865
      %v869 = vpack.c.b16 %v867, %v867
      %v870 = vpack.c.b16 %v868, %v868
      %871 = vrot.lane.b32.xlu0 %v869, 17
      %v872 = vpop.permute.xlu0 %871
      %873 = vrot.lane.b32.xlu0 %v870, 17
      %v874 = vpop.permute.xlu0 %873
      %v875 = vsel %vm542, %v872, %v874
      %v878 = vsel %vm545, 0, %v872
      %v881 = vsel %vm545, %v874, 0
      %v883 = vunpack.c.l.bf16 %v878
      %v884 = vunpack.c.l.bf16 %v875
      %v885 = vmul.f32 %v883, %v570
      %v886 = vmul.f32 %v884, %v571
      %v887 = vpack.c.bf16 %v886, %v885
      %v888 = vunpack.c.l.bf16 %v881
      %v889 = vmul.f32 %v883, %v583
      %v890 = vmul.f32 %v884, %v587
      %v891 = vmul.f32 %v888, %v585
      %v892 = vpack.c.bf16 %v890, %v889
      %v893 = vpack.c.bf16 %v891, %v891
      %v894 = vmul.f32 %v883, %v599
      %v895 = vmul.f32 %v884, %v603
      %v896 = vmul.f32 %v888, %v601
      %v897 = vpack.c.bf16 %v895, %v894
      %v898 = vpack.c.bf16 %v896, %v896
      %v899 = vmul.f32 %v883, %v613
      %v900 = vmul.f32 %v884, %v617
      %v901 = vmul.f32 %v888, %v615
      %v902 = vpack.c.bf16 %v900, %v899
      %v903 = vpack.c.bf16 %v901, %v901
      %v904 = vmul.f32 %v883, %v627
      %v905 = vmul.f32 %v884, %v631
      %v906 = vmul.f32 %v888, %v629
      %v907 = vpack.c.bf16 %v905, %v904
      %v908 = vpack.c.bf16 %v906, %v906
      %v909 = vmul.f32 %v883, %v641
      %v910 = vmul.f32 %v884, %v645
      %v911 = vmul.f32 %v888, %v643
      %v912 = vpack.c.bf16 %v910, %v909
      %v913 = vpack.c.bf16 %v911, %v911
      %v915 = vunpack.c.l.b16 %v887
      %v916 = vunpack.c.h.b16 %v887
      %v917 = vpack.c.b16 %v915, %v915
      %v918 = vpack.c.b16 %v916, %v916
      %v921 = vrot.slane %v878, 5
      %v922 = vrot.slane %v875, 5
      %v923 = vrot.slane %v881, 5
      %924 = vrot.lane.b32.xlu0 %v921, 127
      %v925 = vpop.permute.xlu0 %924
      %926 = vrot.lane.b32.xlu0 %v922, 127
      %v927 = vpop.permute.xlu0 %926
      %928 = vrot.lane.b32.xlu0 %v923, 127
      %v929 = vpop.permute.xlu0 %928
      %v930 = vsel %vm670, %v925, %v927
      %v931 = vsel %vm670, %v927, %v929
      %v934 = vunpack.c.l.b16 %v892
      %v935 = vunpack.c.h.b16 %v892
      %v936 = vunpack.c.l.b16 %v893
      %v937 = vpack.c.b16 %v934, %v934
      %v938 = vpack.c.b16 %v935, %v935
      %v939 = vpack.c.b16 %v936, %v936
      %v940 = vrot.slane %v937, 2
      %v941 = vrot.slane %v938, 2
      %v942 = vrot.slane %v939, 2
      %943 = vrot.lane.b32.xlu0 %v940, 126
      %v944 = vpop.permute.xlu0 %943
      %945 = vrot.lane.b32.xlu0 %v941, 126
      %v946 = vpop.permute.xlu0 %945
      %947 = vrot.lane.b32.xlu0 %v942, 126
      %v948 = vpop.permute.xlu0 %947
      %v949 = vsel %vm687, %v944, %v946
      %v950 = vsel %vm687, %v946, %v948
      %v953 = vunpack.c.l.b16 %v897
      %v954 = vunpack.c.h.b16 %v897
      %v955 = vunpack.c.l.b16 %v898
      %v956 = vpack.c.b16 %v953, %v953
      %v957 = vpack.c.b16 %v954, %v954
      %v958 = vpack.c.b16 %v955, %v955
      %v959 = vrot.slane %v956, 7
      %v960 = vrot.slane %v957, 7
      %v961 = vrot.slane %v958, 7
      %962 = vrot.lane.b32.xlu0 %v959, 112
      %v963 = vpop.permute.xlu0 %962
      %964 = vrot.lane.b32.xlu0 %v960, 112
      %v965 = vpop.permute.xlu0 %964
      %966 = vrot.lane.b32.xlu0 %v961, 112
      %v967 = vpop.permute.xlu0 %966
      %v968 = vsel %vm707, %v963, %v965
      %v969 = vsel %vm707, %v965, %v967
      %v970 = vrot.slane %v878, 4
      %v971 = vrot.slane %v875, 4
      %v972 = vrot.slane %v881, 4
      %973 = vrot.lane.b32.xlu0 %v970, 111
      %v974 = vpop.permute.xlu0 %973
      %975 = vrot.lane.b32.xlu0 %v971, 111
      %v976 = vpop.permute.xlu0 %975
      %977 = vrot.lane.b32.xlu0 %v972, 111
      %v978 = vpop.permute.xlu0 %977
      %v979 = vsel %vm716, %v974, %v976
      %v980 = vsel %vm716, %v976, %v978
      %v983 = vunpack.c.l.b16 %v902
      %v984 = vunpack.c.h.b16 %v902
      %v985 = vunpack.c.l.b16 %v903
      %v986 = vpack.c.b16 %v983, %v983
      %v987 = vpack.c.b16 %v984, %v984
      %v988 = vpack.c.b16 %v985, %v985
      %v989 = vrot.slane %v986, 1
      %v990 = vrot.slane %v987, 1
      %v991 = vrot.slane %v988, 1
      %992 = vrot.lane.b32.xlu0 %v989, 110
      %v993 = vpop.permute.xlu0 %992
      %994 = vrot.lane.b32.xlu0 %v990, 110
      %v995 = vpop.permute.xlu0 %994
      %996 = vrot.lane.b32.xlu0 %v991, 110
      %v997 = vpop.permute.xlu0 %996
      %v998 = vsel %vm736, %v993, %v995
      %v999 = vsel %vm736, %v995, %v997
      %v1002 = vunpack.c.l.b16 %v907
      %v1003 = vunpack.c.h.b16 %v907
      %v1004 = vunpack.c.l.b16 %v908
      %v1005 = vpack.c.b16 %v1002, %v1002
      %v1006 = vpack.c.b16 %v1003, %v1003
      %v1007 = vpack.c.b16 %v1004, %v1004
      %v1008 = vrot.slane %v1005, 6
      %v1009 = vrot.slane %v1006, 6
      %v1010 = vrot.slane %v1007, 6
      %1011 = vrot.lane.b32.xlu0 %v1008, 96
      %v1012 = vpop.permute.xlu0 %1011
      %1013 = vrot.lane.b32.xlu0 %v1009, 96
      %v1014 = vpop.permute.xlu0 %1013
      %1015 = vrot.lane.b32.xlu0 %v1010, 96
      %v1016 = vpop.permute.xlu0 %1015
      %v1017 = vsel %vm753, %v1012, %v1014
      %v1018 = vsel %vm753, %v1014, %v1016
      %v1019 = vrot.slane %v878, 3
      %v1020 = vrot.slane %v875, 3
      %v1021 = vrot.slane %v881, 3
      %1022 = vrot.lane.b32.xlu0 %v1019, 95
      %v1023 = vpop.permute.xlu0 %1022
      %1024 = vrot.lane.b32.xlu0 %v1020, 95
      %v1025 = vpop.permute.xlu0 %1024
      %1026 = vrot.lane.b32.xlu0 %v1021, 95
      %v1027 = vpop.permute.xlu0 %1026
      %v1028 = vsel %vm765, %v1023, %v1025
      %v1029 = vsel %vm765, %v1025, %v1027
      %v1032 = vunpack.c.l.b16 %v912
      %v1033 = vunpack.c.h.b16 %v912
      %v1034 = vunpack.c.l.b16 %v913
      %v1035 = vpack.c.b16 %v1032, %v1032
      %v1036 = vpack.c.b16 %v1033, %v1033
      %v1037 = vpack.c.b16 %v1034, %v1034
      %1038 = vrot.lane.b32.xlu0 %v1035, 94
      %v1039 = vpop.permute.xlu0 %1038
      %1040 = vrot.lane.b32.xlu0 %v1036, 94
      %v1041 = vpop.permute.xlu0 %1040
      %1042 = vrot.lane.b32.xlu0 %v1037, 94
      %v1043 = vpop.permute.xlu0 %1042
      %v1044 = vsel %vm782, %v1039, %v1041
      %v1045 = vsel %vm782, %v1041, %v1043
      %vm1046 = vcmask 1042432
      %v1049 = vsel %vm1046, %v917, %v930
      %v1052 = vsel %vm1046, %v918, %v931
      %v1054 = vsel %vm797, %v1049, %v949
      %v1057 = vsel %vm797, %v1052, %v950
      %vm1059 = vcmask 1040384
      %v1061 = vsel %vm1059, %v949, %v968
      %v1063 = vsel %vm1059, %v950, %v969
      %v1065 = vsel %vm792, %v1061, %v979
      %v1067 = vsel %vm792, %v1063, %v980
      %vm1068 = vcmask 1046528
      %v1070 = vsel %vm1068, %v1065, %v998
      %v1073 = vsel %vm1068, %v1067, %v999
      %v1076 = vsel %vm785, %v998, %v1017
      %v1078 = vsel %vm785, %v999, %v1018
      %vm1079 = vcmask 1044480
      %v1081 = vsel %vm1079, %v1076, %v1028
      %v1084 = vsel %vm1079, %v1078, %v1029
      %v1086 = vld [vmem:[%s4] sm:$0x7]
      %v1087 = vld [vmem:[%s5] sm:$0x3f]
      %1089 = vset.pattern.permute.xlu0 0
      %1090 = vperm.xlu0 %1089, %v1087
      %v1091 = vpop.permute.xlu0 %1090
      %vm1093 = vcmask 441344
      %v1095 = vsel %vm1093, %v1086, 0
      %v1098 = vsel %vm1046, %v1044, 0
      %v1101 = vsel %vm1046, %v1045, 0
      %1103 = vmatpush.bf16.msra.mxu0 0
      %1104 = vmatpush.bf16.msra.mxu0 0
      %1105 = vmatpush.bf16.msra.mxu0 0
      %1106 = vmatpush.bf16.msra.mxu0 0
      %1107 = vmatpush.bf16.msra.mxu0 %v1098
      %1108 = vmatpush.bf16.msra.mxu0 %v1081
      %1109 = vmatpush.bf16.msra.mxu0 %v1070
      %1110 = vmatpush.bf16.msra.mxu0 %v1054
      %1111 = vmatmul.bf16.gmra.mxu0 %v1095
      %v1112 = vpop.f32.mrf.mxu0
      %v1113 = vadd.f32 %v1091, %v1112
      %v1114 = vpop.f32.mrf.mxu0
      %1115 = vdwg.mxu0
      %1116 = vmatpush.bf16.msra.mxu0 0
      %1117 = vmatpush.bf16.msra.mxu0 0
      %1118 = vmatpush.bf16.msra.mxu0 0
      %1119 = vmatpush.bf16.msra.mxu0 0
      %1120 = vmatpush.bf16.msra.mxu0 %v1101
      %1121 = vmatpush.bf16.msra.mxu0 %v1084
      %1122 = vmatpush.bf16.msra.mxu0 %v1073
      %1123 = vmatpush.bf16.msra.mxu0 %v1057
      %1124 = vmatmul.bf16.gmra.mxu0 %v1095
      %v1125 = vpop.f32.mrf.mxu0
      %v1126 = vadd.f32 %v1091, %v1125
      %v1127 = vpop.f32.mrf.mxu0
      %1128 = vdwg.mxu0
      %v1129 = vmax.f32 %v1113, 0.0
      %v1130 = vmax.f32 %v1126, 0.0
      %v1131 = vpack.c.bf16 %v1130, %v1129
      %v1133 = vunpack.c.l.b16 %v1131
      %v1134 = vunpack.c.h.b16 %v1131
      %v1135 = vpack.c.b16 %v1133, %v1133
      %v1136 = vpack.c.b16 %v1134, %v1134
      %1137 = vrot.lane.b32.xlu0 %v1135, 17
      %v1138 = vpop.permute.xlu0 %1137
      %1139 = vrot.lane.b32.xlu0 %v1136, 17
      %v1140 = vpop.permute.xlu0 %1139
      %v1141 = vsel %vm542, %v1138, %v1140
      %v1144 = vsel %vm545, 0, %v1138
      %v1147 = vsel %vm545, %v1140, 0
      %v1149 = vunpack.c.l.bf16 %v1144
      %v1150 = vunpack.c.l.bf16 %v1141
      %v1151 = vmul.f32 %v1149, %v570
      %v1152 = vmul.f32 %v1150, %v571
      %v1153 = vpack.c.bf16 %v1152, %v1151
      %v1154 = vunpack.c.l.bf16 %v1147
      %v1155 = vmul.f32 %v1149, %v583
      %v1156 = vmul.f32 %v1150, %v587
      %v1157 = vmul.f32 %v1154, %v585
      %v1158 = vpack.c.bf16 %v1156, %v1155
      %v1159 = vpack.c.bf16 %v1157, %v1157
      %v1160 = vmul.f32 %v1149, %v599
      %v1161 = vmul.f32 %v1150, %v603
      %v1162 = vmul.f32 %v1154, %v601
      %v1163 = vpack.c.bf16 %v1161, %v1160
      %v1164 = vpack.c.bf16 %v1162, %v1162
      %v1165 = vmul.f32 %v1149, %v613
      %v1166 = vmul.f32 %v1150, %v617
      %v1167 = vmul.f32 %v1154, %v615
      %v1168 = vpack.c.bf16 %v1166, %v1165
      %v1169 = vpack.c.bf16 %v1167, %v1167
      %v1170 = vmul.f32 %v1149, %v627
      %v1171 = vmul.f32 %v1150, %v631
      %v1172 = vmul.f32 %v1154, %v629
      %v1173 = vpack.c.bf16 %v1171, %v1170
      %v1174 = vpack.c.bf16 %v1172, %v1172
      %v1175 = vmul.f32 %v1149, %v641
      %v1176 = vmul.f32 %v1150, %v645
      %v1177 = vmul.f32 %v1154, %v643
      %v1178 = vpack.c.bf16 %v1176, %v1175
      %v1179 = vpack.c.bf16 %v1177, %v1177
      %v1181 = vunpack.c.l.b16 %v1153
      %v1182 = vunpack.c.h.b16 %v1153
      %v1183 = vpack.c.b16 %v1181, %v1181
      %v1184 = vpack.c.b16 %v1182, %v1182
      %v1187 = vrot.slane %v1144, 5
      %v1188 = vrot.slane %v1141, 5
      %v1189 = vrot.slane %v1147, 5
      %1190 = vrot.lane.b32.xlu0 %v1187, 127
      %v1191 = vpop.permute.xlu0 %1190
      %1192 = vrot.lane.b32.xlu0 %v1188, 127
      %v1193 = vpop.permute.xlu0 %1192
      %1194 = vrot.lane.b32.xlu0 %v1189, 127
      %v1195 = vpop.permute.xlu0 %1194
      %v1196 = vsel %vm670, %v1191, %v1193
      %v1197 = vsel %vm670, %v1193, %v1195
      %v1200 = vunpack.c.l.b16 %v1158
      %v1201 = vunpack.c.h.b16 %v1158
      %v1202 = vunpack.c.l.b16 %v1159
      %v1203 = vpack.c.b16 %v1200, %v1200
      %v1204 = vpack.c.b16 %v1201, %v1201
      %v1205 = vpack.c.b16 %v1202, %v1202
      %v1206 = vrot.slane %v1203, 2
      %v1207 = vrot.slane %v1204, 2
      %v1208 = vrot.slane %v1205, 2
      %1209 = vrot.lane.b32.xlu0 %v1206, 126
      %v1210 = vpop.permute.xlu0 %1209
      %1211 = vrot.lane.b32.xlu0 %v1207, 126
      %v1212 = vpop.permute.xlu0 %1211
      %1213 = vrot.lane.b32.xlu0 %v1208, 126
      %v1214 = vpop.permute.xlu0 %1213
      %v1215 = vsel %vm687, %v1210, %v1212
      %v1216 = vsel %vm687, %v1212, %v1214
      %v1219 = vunpack.c.l.b16 %v1163
      %v1220 = vunpack.c.h.b16 %v1163
      %v1221 = vunpack.c.l.b16 %v1164
      %v1222 = vpack.c.b16 %v1219, %v1219
      %v1223 = vpack.c.b16 %v1220, %v1220
      %v1224 = vpack.c.b16 %v1221, %v1221
      %v1225 = vrot.slane %v1222, 7
      %v1226 = vrot.slane %v1223, 7
      %v1227 = vrot.slane %v1224, 7
      %1228 = vrot.lane.b32.xlu0 %v1225, 112
      %v1229 = vpop.permute.xlu0 %1228
      %1230 = vrot.lane.b32.xlu0 %v1226, 112
      %v1231 = vpop.permute.xlu0 %1230
      %1232 = vrot.lane.b32.xlu0 %v1227, 112
      %v1233 = vpop.permute.xlu0 %1232
      %v1234 = vsel %vm707, %v1229, %v1231
      %v1235 = vsel %vm707, %v1231, %v1233
      %v1236 = vrot.slane %v1144, 4
      %v1237 = vrot.slane %v1141, 4
      %v1238 = vrot.slane %v1147, 4
      %1239 = vrot.lane.b32.xlu0 %v1236, 111
      %v1240 = vpop.permute.xlu0 %1239
      %1241 = vrot.lane.b32.xlu0 %v1237, 111
      %v1242 = vpop.permute.xlu0 %1241
      %1243 = vrot.lane.b32.xlu0 %v1238, 111
      %v1244 = vpop.permute.xlu0 %1243
      %v1245 = vsel %vm716, %v1240, %v1242
      %v1246 = vsel %vm716, %v1242, %v1244
      %v1249 = vunpack.c.l.b16 %v1168
      %v1250 = vunpack.c.h.b16 %v1168
      %v1251 = vunpack.c.l.b16 %v1169
      %v1252 = vpack.c.b16 %v1249, %v1249
      %v1253 = vpack.c.b16 %v1250, %v1250
      %v1254 = vpack.c.b16 %v1251, %v1251
      %v1255 = vrot.slane %v1252, 1
      %v1256 = vrot.slane %v1253, 1
      %v1257 = vrot.slane %v1254, 1
      %1258 = vrot.lane.b32.xlu0 %v1255, 110
      %v1259 = vpop.permute.xlu0 %1258
      %1260 = vrot.lane.b32.xlu0 %v1256, 110
      %v1261 = vpop.permute.xlu0 %1260
      %1262 = vrot.lane.b32.xlu0 %v1257, 110
      %v1263 = vpop.permute.xlu0 %1262
      %v1264 = vsel %vm736, %v1259, %v1261
      %v1265 = vsel %vm736, %v1261, %v1263
      %v1268 = vunpack.c.l.b16 %v1173
      %v1269 = vunpack.c.h.b16 %v1173
      %v1270 = vunpack.c.l.b16 %v1174
      %v1271 = vpack.c.b16 %v1268, %v1268
      %v1272 = vpack.c.b16 %v1269, %v1269
      %v1273 = vpack.c.b16 %v1270, %v1270
      %v1274 = vrot.slane %v1271, 6
      %v1275 = vrot.slane %v1272, 6
      %v1276 = vrot.slane %v1273, 6
      %1277 = vrot.lane.b32.xlu0 %v1274, 96
      %v1278 = vpop.permute.xlu0 %1277
      %1279 = vrot.lane.b32.xlu0 %v1275, 96
      %v1280 = vpop.permute.xlu0 %1279
      %1281 = vrot.lane.b32.xlu0 %v1276, 96
      %v1282 = vpop.permute.xlu0 %1281
      %v1283 = vsel %vm753, %v1278, %v1280
      %v1284 = vsel %vm753, %v1280, %v1282
      %v1285 = vrot.slane %v1144, 3
      %v1286 = vrot.slane %v1141, 3
      %v1287 = vrot.slane %v1147, 3
      %1288 = vrot.lane.b32.xlu0 %v1285, 95
      %v1289 = vpop.permute.xlu0 %1288
      %1290 = vrot.lane.b32.xlu0 %v1286, 95
      %v1291 = vpop.permute.xlu0 %1290
      %1292 = vrot.lane.b32.xlu0 %v1287, 95
      %v1293 = vpop.permute.xlu0 %1292
      %v1294 = vsel %vm765, %v1289, %v1291
      %v1295 = vsel %vm765, %v1291, %v1293
      %v1298 = vunpack.c.l.b16 %v1178
      %v1299 = vunpack.c.h.b16 %v1178
      %v1300 = vunpack.c.l.b16 %v1179
      %v1301 = vpack.c.b16 %v1298, %v1298
      %v1302 = vpack.c.b16 %v1299, %v1299
      %v1303 = vpack.c.b16 %v1300, %v1300
      %1304 = vrot.lane.b32.xlu0 %v1301, 94
      %v1305 = vpop.permute.xlu0 %1304
      %1306 = vrot.lane.b32.xlu0 %v1302, 94
      %v1307 = vpop.permute.xlu0 %1306
      %1308 = vrot.lane.b32.xlu0 %v1303, 94
      %v1309 = vpop.permute.xlu0 %1308
      %v1310 = vsel %vm782, %v1305, %v1307
      %v1311 = vsel %vm782, %v1307, %v1309
      %v1314 = vsel %vm1046, %v1183, %v1196
      %v1317 = vsel %vm1046, %v1184, %v1197
      %v1319 = vsel %vm797, %v1314, %v1215
      %v1322 = vsel %vm797, %v1317, %v1216
      %v1325 = vsel %vm1059, %v1215, %v1234
      %v1327 = vsel %vm1059, %v1216, %v1235
      %v1329 = vsel %vm792, %v1325, %v1245
      %v1331 = vsel %vm792, %v1327, %v1246
      %v1333 = vsel %vm1068, %v1329, %v1264
      %v1336 = vsel %vm1068, %v1331, %v1265
      %v1339 = vsel %vm785, %v1264, %v1283
      %v1341 = vsel %vm785, %v1265, %v1284
      %v1343 = vsel %vm1079, %v1339, %v1294
      %v1346 = vsel %vm1079, %v1341, %v1295
      %v1348 = vld [vmem:[%s6] sm:$0x7]
      %v1349 = vld [vmem:[%s7] sm:$0x3f]
      %1351 = vset.pattern.permute.xlu0 0
      %1352 = vperm.xlu0 %1351, %v1349
      %v1353 = vpop.permute.xlu0 %1352
      %v1356 = vsel %vm1093, %v1348, 0
      %v1359 = vsel %vm1046, %v1310, 0
      %v1362 = vsel %vm1046, %v1311, 0
      %1364 = vmatpush.bf16.msra.mxu0 0
      %1365 = vmatpush.bf16.msra.mxu0 0
      %1366 = vmatpush.bf16.msra.mxu0 0
      %1367 = vmatpush.bf16.msra.mxu0 0
      %1368 = vmatpush.bf16.msra.mxu0 %v1359
      %1369 = vmatpush.bf16.msra.mxu0 %v1343
      %1370 = vmatpush.bf16.msra.mxu0 %v1333
      %1371 = vmatpush.bf16.msra.mxu0 %v1319
      %1372 = vmatmul.bf16.gmra.mxu0 %v1356
      %v1373 = vpop.f32.mrf.mxu0
      %v1374 = vadd.f32 %v1353, %v1373
      %v1375 = vpop.f32.mrf.mxu0
      %1376 = vdwg.mxu0
      %1377 = vmatpush.bf16.msra.mxu0 0
      %1378 = vmatpush.bf16.msra.mxu0 0
      %1379 = vmatpush.bf16.msra.mxu0 0
      %1380 = vmatpush.bf16.msra.mxu0 0
      %1381 = vmatpush.bf16.msra.mxu0 %v1362
      %1382 = vmatpush.bf16.msra.mxu0 %v1346
      %1383 = vmatpush.bf16.msra.mxu0 %v1336
      %1384 = vmatpush.bf16.msra.mxu0 %v1322
      %1385 = vmatmul.bf16.gmra.mxu0 %v1356
      %v1386 = vpop.f32.mrf.mxu0
      %v1387 = vadd.f32 %v1353, %v1386
      %v1388 = vpop.f32.mrf.mxu0
      %1389 = vdwg.mxu0
      %v1390 = vmax.f32 %v1374, 0.0
      %v1391 = vmax.f32 %v1387, 0.0
      %v1392 = vpack.c.bf16 %v1391, %v1390
      %v1394 = vunpack.c.l.b16 %v1392
      %v1395 = vunpack.c.h.b16 %v1392
      %v1396 = vpack.c.b16 %v1394, %v1394
      %v1397 = vpack.c.b16 %v1395, %v1395
      %1398 = vrot.lane.b32.xlu0 %v1396, 68
      %v1399 = vpop.permute.xlu0 %1398
      %1400 = vrot.lane.b32.xlu0 %v1397, 68
      %v1401 = vpop.permute.xlu0 %1400
      %vm1402 = vcmask 556032
      %v1403 = vsel %vm1402, %v1399, %v1401
      %vm1405 = vcmask 556032
      %v1407 = vsel %vm1405, 0, %v1399
      %v1410 = vsel %vm1405, %v1401, 0
      %v1412 = vpack.i.b16 %v556, %v556
      %v1414 = vperm.slane %v1412, 0
      %v1415 = vpack.i.b16 %v557, %v557
      %v1417 = vperm.slane %v1415, 0
      %v1418 = vunpack.c.l.bf16 %v1407
      %v1419 = vunpack.c.l.bf16 %v1403
      %v1420 = vunpack.c.l.bf16 %v1414
      %v1421 = vunpack.c.l.bf16 %v1417
      %v1422 = vmul.f32 %v1418, %v1420
      %v1423 = vmul.f32 %v1419, %v1421
      %v1424 = vpack.c.bf16 %v1423, %v1422
      %v1425 = vperm.slane %v560, 0
      %v1426 = vperm.slane %v565, 0
      %v1427 = vunpack.c.l.bf16 %v1410
      %v1428 = vunpack.c.l.bf16 %v1425
      %v1429 = vunpack.c.l.bf16 %v1426
      %1432 = vrot.lane.b32.xlu0 %v1428, 1
      %v1433 = vpop.permute.xlu0 %1432
      %1434 = vrot.lane.b32.xlu0 %v1429, 1
      %v1435 = vpop.permute.xlu0 %1434
      %vm1436 = vcmask 7168
      %v1437 = vsel %vm1436, %v1433, %v1435
      %v1441 = vmul.f32 %v1418, %v1433
      %v1442 = vmul.f32 %v1419, %v1437
      %v1443 = vmul.f32 %v1427, %v1435
      %v1444 = vpack.c.bf16 %v1442, %v1441
      %v1445 = vpack.c.bf16 %v1443, %v1443
      %v1446 = vperm.slane %v1412, 1
      %v1447 = vperm.slane %v1415, 1
      %v1448 = vunpack.c.l.bf16 %v1446
      %v1449 = vunpack.c.l.bf16 %v1447
      %1452 = vrot.lane.b32.xlu0 %v1448, 2
      %v1453 = vpop.permute.xlu0 %1452
      %1454 = vrot.lane.b32.xlu0 %v1449, 2
      %v1455 = vpop.permute.xlu0 %1454
      %v1456 = vsel %vm586, %v1453, %v1455
      %v1460 = vmul.f32 %v1418, %v1453
      %v1461 = vmul.f32 %v1419, %v1456
      %v1462 = vmul.f32 %v1427, %v1455
      %v1463 = vpack.c.bf16 %v1461, %v1460
      %v1464 = vpack.c.bf16 %v1462, %v1462
      %1465 = vrot.lane.b32.xlu0 %v570, 3
      %v1466 = vpop.permute.xlu0 %1465
      %1467 = vrot.lane.b32.xlu0 %v571, 3
      %v1468 = vpop.permute.xlu0 %1467
      %vm1469 = vcmask 23552
      %v1470 = vsel %vm1469, %v1466, %v1468
      %v1474 = vmul.f32 %v1418, %v1466
      %v1475 = vmul.f32 %v1419, %v1470
      %v1476 = vmul.f32 %v1427, %v1468
      %v1477 = vpack.c.bf16 %v1475, %v1474
      %v1478 = vpack.c.bf16 %v1476, %v1476
      %1479 = vrot.lane.b32.xlu0 %v578, 5
      %v1480 = vpop.permute.xlu0 %1479
      %1481 = vrot.lane.b32.xlu0 %v579, 5
      %v1482 = vpop.permute.xlu0 %1481
      %vm1483 = vcmask 39936
      %v1484 = vsel %vm1483, %v1480, %v1482
      %v1488 = vmul.f32 %v1418, %v1480
      %v1489 = vmul.f32 %v1419, %v1484
      %v1490 = vmul.f32 %v1427, %v1482
      %v1491 = vpack.c.bf16 %v1489, %v1488
      %v1492 = vpack.c.bf16 %v1490, %v1490
      %v1493 = vperm.slane %v1412, 3
      %v1494 = vperm.slane %v1415, 3
      %v1495 = vunpack.c.l.bf16 %v1493
      %v1496 = vunpack.c.l.bf16 %v1494
      %1499 = vrot.lane.b32.xlu0 %v1495, 6
      %v1500 = vpop.permute.xlu0 %1499
      %1501 = vrot.lane.b32.xlu0 %v1496, 6
      %v1502 = vpop.permute.xlu0 %1501
      %vm1503 = vcmask 48128
      %v1504 = vsel %vm1503, %v1500, %v1502
      %v1508 = vmul.f32 %v1418, %v1500
      %v1509 = vmul.f32 %v1419, %v1504
      %v1510 = vmul.f32 %v1427, %v1502
      %v1511 = vpack.c.bf16 %v1509, %v1508
      %v1512 = vpack.c.bf16 %v1510, %v1510
      %v1513 = vperm.slane %v560, 3
      %v1514 = vperm.slane %v565, 3
      %v1515 = vunpack.c.l.bf16 %v1513
      %v1516 = vunpack.c.l.bf16 %v1514
      %1519 = vrot.lane.b32.xlu0 %v1515, 7
      %v1520 = vpop.permute.xlu0 %1519
      %1521 = vrot.lane.b32.xlu0 %v1516, 7
      %v1522 = vpop.permute.xlu0 %1521
      %vm1523 = vcmask 56320
      %v1524 = vsel %vm1523, %v1520, %v1522
      %v1528 = vmul.f32 %v1418, %v1520
      %v1529 = vmul.f32 %v1419, %v1524
      %v1530 = vmul.f32 %v1427, %v1522
      %v1531 = vpack.c.bf16 %v1529, %v1528
      %v1532 = vpack.c.bf16 %v1530, %v1530
      %v1534 = vunpack.c.l.b16 %v524
      %v1535 = vunpack.c.h.b16 %v524
      %v1536 = vpack.c.b16 %v1534, %v1534
      %v1537 = vpack.c.b16 %v1535, %v1535
      %v1539 = vpack.i.b16 %v1536, %v1536
      %v1541 = vperm.slane %v1539, 0
      %v1543 = vpack.i.b16 %v1537, %v1537
      %v1545 = vperm.slane %v1543, 0
      %v1546 = vunpack.c.l.bf16 %v1541
      %v1547 = vunpack.c.l.bf16 %v1545
      %1550 = vrot.lane.b32.xlu0 %v1546, 8
      %v1551 = vpop.permute.xlu0 %1550
      %1552 = vrot.lane.b32.xlu0 %v1547, 8
      %v1553 = vpop.permute.xlu0 %1552
      %vm1554 = vcmask 64512
      %v1555 = vsel %vm1554, %v1551, %v1553
      %v1559 = vmul.f32 %v1418, %v1551
      %v1560 = vmul.f32 %v1419, %v1555
      %v1561 = vmul.f32 %v1427, %v1553
      %v1562 = vpack.c.bf16 %v1560, %v1559
      %v1563 = vpack.c.bf16 %v1561, %v1561
      %1566 = vrot.lane.b32.xlu0 %v1420, 16
      %v1567 = vpop.permute.xlu0 %1566
      %1568 = vrot.lane.b32.xlu0 %v1421, 16
      %v1569 = vpop.permute.xlu0 %1568
      %v1570 = vsel %vm602, %v1567, %v1569
      %v1574 = vmul.f32 %v1418, %v1567
      %v1575 = vmul.f32 %v1419, %v1570
      %v1576 = vmul.f32 %v1427, %v1569
      %v1577 = vpack.c.bf16 %v1575, %v1574
      %v1578 = vpack.c.bf16 %v1576, %v1576
      %1579 = vrot.lane.b32.xlu0 %v1428, 17
      %v1580 = vpop.permute.xlu0 %1579
      %1581 = vrot.lane.b32.xlu0 %v1429, 17
      %v1582 = vpop.permute.xlu0 %1581
      %v1583 = vsel %vm545, %v1580, %v1582
      %v1587 = vmul.f32 %v1418, %v1580
      %v1588 = vmul.f32 %v1419, %v1583
      %v1589 = vmul.f32 %v1427, %v1582
      %v1590 = vpack.c.bf16 %v1588, %v1587
      %v1591 = vpack.c.bf16 %v1589, %v1589
      %1592 = vrot.lane.b32.xlu0 %v1448, 18
      %v1593 = vpop.permute.xlu0 %1592
      %1594 = vrot.lane.b32.xlu0 %v1449, 18
      %v1595 = vpop.permute.xlu0 %1594
      %v1596 = vsel %vm616, %v1593, %v1595
      %v1600 = vmul.f32 %v1418, %v1593
      %v1601 = vmul.f32 %v1419, %v1596
      %v1602 = vmul.f32 %v1427, %v1595
      %v1603 = vpack.c.bf16 %v1601, %v1600
      %v1604 = vpack.c.bf16 %v1602, %v1602
      %1605 = vrot.lane.b32.xlu0 %v570, 19
      %v1606 = vpop.permute.xlu0 %1605
      %1607 = vrot.lane.b32.xlu0 %v571, 19
      %v1608 = vpop.permute.xlu0 %1607
      %vm1609 = vcmask 154624
      %v1610 = vsel %vm1609, %v1606, %v1608
      %v1614 = vmul.f32 %v1418, %v1606
      %v1615 = vmul.f32 %v1419, %v1610
      %v1616 = vmul.f32 %v1427, %v1608
      %v1617 = vpack.c.bf16 %v1615, %v1614
      %v1618 = vpack.c.bf16 %v1616, %v1616
      %1619 = vrot.lane.b32.xlu0 %v578, 21
      %v1620 = vpop.permute.xlu0 %1619
      %1621 = vrot.lane.b32.xlu0 %v579, 21
      %v1622 = vpop.permute.xlu0 %1621
      %vm1623 = vcmask 171008
      %v1624 = vsel %vm1623, %v1620, %v1622
      %v1628 = vmul.f32 %v1418, %v1620
      %v1629 = vmul.f32 %v1419, %v1624
      %v1630 = vmul.f32 %v1427, %v1622
      %v1631 = vpack.c.bf16 %v1629, %v1628
      %v1632 = vpack.c.bf16 %v1630, %v1630
      %1633 = vrot.lane.b32.xlu0 %v1495, 22
      %v1634 = vpop.permute.xlu0 %1633
      %1635 = vrot.lane.b32.xlu0 %v1496, 22
      %v1636 = vpop.permute.xlu0 %1635
      %vm1637 = vcmask 179200
      %v1638 = vsel %vm1637, %v1634, %v1636
      %v1642 = vmul.f32 %v1418, %v1634
      %v1643 = vmul.f32 %v1419, %v1638
      %v1644 = vmul.f32 %v1427, %v1636
      %v1645 = vpack.c.bf16 %v1643, %v1642
      %v1646 = vpack.c.bf16 %v1644, %v1644
      %1647 = vrot.lane.b32.xlu0 %v1515, 23
      %v1648 = vpop.permute.xlu0 %1647
      %1649 = vrot.lane.b32.xlu0 %v1516, 23
      %v1650 = vpop.permute.xlu0 %1649
      %vm1651 = vcmask 187392
      %v1652 = vsel %vm1651, %v1648, %v1650
      %v1656 = vmul.f32 %v1418, %v1648
      %v1657 = vmul.f32 %v1419, %v1652
      %v1658 = vmul.f32 %v1427, %v1650
      %v1659 = vpack.c.bf16 %v1657, %v1656
      %v1660 = vpack.c.bf16 %v1658, %v1658
      %1661 = vrot.lane.b32.xlu0 %v1546, 24
      %v1662 = vpop.permute.xlu0 %1661
      %1663 = vrot.lane.b32.xlu0 %v1547, 24
      %v1664 = vpop.permute.xlu0 %1663
      %vm1665 = vcmask 195584
      %v1666 = vsel %vm1665, %v1662, %v1664
      %v1670 = vmul.f32 %v1418, %v1662
      %v1671 = vmul.f32 %v1419, %v1666
      %v1672 = vmul.f32 %v1427, %v1664
      %v1673 = vpack.c.bf16 %v1671, %v1670
      %v1674 = vpack.c.bf16 %v1672, %v1672
      %1675 = vrot.lane.b32.xlu0 %v1420, 32
      %v1676 = vpop.permute.xlu0 %1675
      %1677 = vrot.lane.b32.xlu0 %v1421, 32
      %v1678 = vpop.permute.xlu0 %1677
      %v1679 = vsel %vm630, %v1676, %v1678
      %v1683 = vmul.f32 %v1418, %v1676
      %v1684 = vmul.f32 %v1419, %v1679
      %v1685 = vmul.f32 %v1427, %v1678
      %v1686 = vpack.c.bf16 %v1684, %v1683
      %v1687 = vpack.c.bf16 %v1685, %v1685
      %1688 = vrot.lane.b32.xlu0 %v1428, 33
      %v1689 = vpop.permute.xlu0 %1688
      %1690 = vrot.lane.b32.xlu0 %v1429, 33
      %v1691 = vpop.permute.xlu0 %1690
      %vm1692 = vcmask 269312
      %v1693 = vsel %vm1692, %v1689, %v1691
      %v1697 = vmul.f32 %v1418, %v1689
      %v1698 = vmul.f32 %v1419, %v1693
      %v1699 = vmul.f32 %v1427, %v1691
      %v1700 = vpack.c.bf16 %v1698, %v1697
      %v1701 = vpack.c.bf16 %v1699, %v1699
      %1702 = vrot.lane.b32.xlu0 %v1448, 34
      %v1703 = vpop.permute.xlu0 %1702
      %1704 = vrot.lane.b32.xlu0 %v1449, 34
      %v1705 = vpop.permute.xlu0 %1704
      %v1706 = vsel %vm644, %v1703, %v1705
      %v1710 = vmul.f32 %v1418, %v1703
      %v1711 = vmul.f32 %v1419, %v1706
      %v1712 = vmul.f32 %v1427, %v1705
      %v1713 = vpack.c.bf16 %v1711, %v1710
      %v1714 = vpack.c.bf16 %v1712, %v1712
      %1715 = vrot.lane.b32.xlu0 %v570, 35
      %v1716 = vpop.permute.xlu0 %1715
      %1717 = vrot.lane.b32.xlu0 %v571, 35
      %v1718 = vpop.permute.xlu0 %1717
      %vm1719 = vcmask 285696
      %v1720 = vsel %vm1719, %v1716, %v1718
      %v1724 = vmul.f32 %v1418, %v1716
      %v1725 = vmul.f32 %v1419, %v1720
      %v1726 = vmul.f32 %v1427, %v1718
      %v1727 = vpack.c.bf16 %v1725, %v1724
      %v1728 = vpack.c.bf16 %v1726, %v1726
      %1729 = vrot.lane.b32.xlu0 %v578, 37
      %v1730 = vpop.permute.xlu0 %1729
      %1731 = vrot.lane.b32.xlu0 %v579, 37
      %v1732 = vpop.permute.xlu0 %1731
      %vm1733 = vcmask 302080
      %v1734 = vsel %vm1733, %v1730, %v1732
      %v1738 = vmul.f32 %v1418, %v1730
      %v1739 = vmul.f32 %v1419, %v1734
      %v1740 = vmul.f32 %v1427, %v1732
      %v1741 = vpack.c.bf16 %v1739, %v1738
      %v1742 = vpack.c.bf16 %v1740, %v1740
      %1743 = vrot.lane.b32.xlu0 %v1495, 38
      %v1744 = vpop.permute.xlu0 %1743
      %1745 = vrot.lane.b32.xlu0 %v1496, 38
      %v1746 = vpop.permute.xlu0 %1745
      %vm1747 = vcmask 310272
      %v1748 = vsel %vm1747, %v1744, %v1746
      %v1752 = vmul.f32 %v1418, %v1744
      %v1753 = vmul.f32 %v1419, %v1748
      %v1754 = vmul.f32 %v1427, %v1746
      %v1755 = vpack.c.bf16 %v1753, %v1752
      %v1756 = vpack.c.bf16 %v1754, %v1754
      %1757 = vrot.lane.b32.xlu0 %v1515, 39
      %v1758 = vpop.permute.xlu0 %1757
      %1759 = vrot.lane.b32.xlu0 %v1516, 39
      %v1760 = vpop.permute.xlu0 %1759
      %vm1761 = vcmask 318464
      %v1762 = vsel %vm1761, %v1758, %v1760
      %v1766 = vmul.f32 %v1418, %v1758
      %v1767 = vmul.f32 %v1419, %v1762
      %v1768 = vmul.f32 %v1427, %v1760
      %v1769 = vpack.c.bf16 %v1767, %v1766
      %v1770 = vpack.c.bf16 %v1768, %v1768
      %1771 = vrot.lane.b32.xlu0 %v1546, 40
      %v1772 = vpop.permute.xlu0 %1771
      %1773 = vrot.lane.b32.xlu0 %v1547, 40
      %v1774 = vpop.permute.xlu0 %1773
      %vm1775 = vcmask 326656
      %v1776 = vsel %vm1775, %v1772, %v1774
      %v1780 = vmul.f32 %v1418, %v1772
      %v1781 = vmul.f32 %v1419, %v1776
      %v1782 = vmul.f32 %v1427, %v1774
      %v1783 = vpack.c.bf16 %v1781, %v1780
      %v1784 = vpack.c.bf16 %v1782, %v1782
      %1785 = vrot.lane.b32.xlu0 %v1420, 48
      %v1786 = vpop.permute.xlu0 %1785
      %1787 = vrot.lane.b32.xlu0 %v1421, 48
      %v1788 = vpop.permute.xlu0 %1787
      %vm1789 = vcmask 392192
      %v1790 = vsel %vm1789, %v1786, %v1788
      %v1794 = vmul.f32 %v1418, %v1786
      %v1795 = vmul.f32 %v1419, %v1790
      %v1796 = vmul.f32 %v1427, %v1788
      %v1797 = vpack.c.bf16 %v1795, %v1794
      %v1798 = vpack.c.bf16 %v1796, %v1796
      %1799 = vrot.lane.b32.xlu0 %v1428, 49
      %v1800 = vpop.permute.xlu0 %1799
      %1801 = vrot.lane.b32.xlu0 %v1429, 49
      %v1802 = vpop.permute.xlu0 %1801
      %vm1803 = vcmask 400384
      %v1804 = vsel %vm1803, %v1800, %v1802
      %v1808 = vmul.f32 %v1418, %v1800
      %v1809 = vmul.f32 %v1419, %v1804
      %v1810 = vmul.f32 %v1427, %v1802
      %v1811 = vpack.c.bf16 %v1809, %v1808
      %v1812 = vpack.c.bf16 %v1810, %v1810
      %1813 = vrot.lane.b32.xlu0 %v1448, 50
      %v1814 = vpop.permute.xlu0 %1813
      %1815 = vrot.lane.b32.xlu0 %v1449, 50
      %v1816 = vpop.permute.xlu0 %1815
      %vm1817 = vcmask 408576
      %v1818 = vsel %vm1817, %v1814, %v1816
      %v1822 = vmul.f32 %v1418, %v1814
      %v1823 = vmul.f32 %v1419, %v1818
      %v1824 = vmul.f32 %v1427, %v1816
      %v1825 = vpack.c.bf16 %v1823, %v1822
      %v1826 = vpack.c.bf16 %v1824, %v1824
      %1827 = vrot.lane.b32.xlu0 %v570, 51
      %v1828 = vpop.permute.xlu0 %1827
      %1829 = vrot.lane.b32.xlu0 %v571, 51
      %v1830 = vpop.permute.xlu0 %1829
      %vm1831 = vcmask 416768
      %v1832 = vsel %vm1831, %v1828, %v1830
      %v1836 = vmul.f32 %v1418, %v1828
      %v1837 = vmul.f32 %v1419, %v1832
      %v1838 = vmul.f32 %v1427, %v1830
      %v1839 = vpack.c.bf16 %v1837, %v1836
      %v1840 = vpack.c.bf16 %v1838, %v1838
      %1841 = vrot.lane.b32.xlu0 %v578, 53
      %v1842 = vpop.permute.xlu0 %1841
      %1843 = vrot.lane.b32.xlu0 %v579, 53
      %v1844 = vpop.permute.xlu0 %1843
      %vm1845 = vcmask 433152
      %v1846 = vsel %vm1845, %v1842, %v1844
      %v1850 = vmul.f32 %v1418, %v1842
      %v1851 = vmul.f32 %v1419, %v1846
      %v1852 = vmul.f32 %v1427, %v1844
      %v1853 = vpack.c.bf16 %v1851, %v1850
      %v1854 = vpack.c.bf16 %v1852, %v1852
      %1855 = vrot.lane.b32.xlu0 %v1495, 54
      %v1856 = vpop.permute.xlu0 %1855
      %1857 = vrot.lane.b32.xlu0 %v1496, 54
      %v1858 = vpop.permute.xlu0 %1857
      %v1859 = vsel %vm1093, %v1856, %v1858
      %v1863 = vmul.f32 %v1418, %v1856
      %v1864 = vmul.f32 %v1419, %v1859
      %v1865 = vmul.f32 %v1427, %v1858
      %v1866 = vpack.c.bf16 %v1864, %v1863
      %v1867 = vpack.c.bf16 %v1865, %v1865
      %1868 = vrot.lane.b32.xlu0 %v1515, 55
      %v1869 = vpop.permute.xlu0 %1868
      %1870 = vrot.lane.b32.xlu0 %v1516, 55
      %v1871 = vpop.permute.xlu0 %1870
      %vm1872 = vcmask 449536
      %v1873 = vsel %vm1872, %v1869, %v1871
      %v1877 = vmul.f32 %v1418, %v1869
      %v1878 = vmul.f32 %v1419, %v1873
      %v1879 = vmul.f32 %v1427, %v1871
      %v1880 = vpack.c.bf16 %v1878, %v1877
      %v1881 = vpack.c.bf16 %v1879, %v1879
      %1882 = vrot.lane.b32.xlu0 %v1546, 56
      %v1883 = vpop.permute.xlu0 %1882
      %1884 = vrot.lane.b32.xlu0 %v1547, 56
      %v1885 = vpop.permute.xlu0 %1884
      %vm1886 = vcmask 457728
      %v1887 = vsel %vm1886, %v1883, %v1885
      %v1891 = vmul.f32 %v1418, %v1883
      %v1892 = vmul.f32 %v1419, %v1887
      %v1893 = vmul.f32 %v1427, %v1885
      %v1894 = vpack.c.bf16 %v1892, %v1891
      %v1895 = vpack.c.bf16 %v1893, %v1893
      %1896 = vrot.lane.b32.xlu0 %v1420, 64
      %v1897 = vpop.permute.xlu0 %1896
      %1898 = vrot.lane.b32.xlu0 %v1421, 64
      %v1899 = vpop.permute.xlu0 %1898
      %vm1900 = vcmask 523264
      %v1901 = vsel %vm1900, %v1897, %v1899
      %v1905 = vmul.f32 %v1418, %v1897
      %v1906 = vmul.f32 %v1419, %v1901
      %v1907 = vmul.f32 %v1427, %v1899
      %v1908 = vpack.c.bf16 %v1906, %v1905
      %v1909 = vpack.c.bf16 %v1907, %v1907
      %1910 = vrot.lane.b32.xlu0 %v1428, 65
      %v1911 = vpop.permute.xlu0 %1910
      %1912 = vrot.lane.b32.xlu0 %v1429, 65
      %v1913 = vpop.permute.xlu0 %1912
      %vm1914 = vcmask 531456
      %v1915 = vsel %vm1914, %v1911, %v1913
      %v1919 = vmul.f32 %v1418, %v1911
      %v1920 = vmul.f32 %v1419, %v1915
      %v1921 = vmul.f32 %v1427, %v1913
      %v1922 = vpack.c.bf16 %v1920, %v1919
      %v1923 = vpack.c.bf16 %v1921, %v1921
      %1924 = vrot.lane.b32.xlu0 %v1448, 66
      %v1925 = vpop.permute.xlu0 %1924
      %1926 = vrot.lane.b32.xlu0 %v1449, 66
      %v1927 = vpop.permute.xlu0 %1926
      %vm1928 = vcmask 539648
      %v1929 = vsel %vm1928, %v1925, %v1927
      %v1933 = vmul.f32 %v1418, %v1925
      %v1934 = vmul.f32 %v1419, %v1929
      %v1935 = vmul.f32 %v1427, %v1927
      %v1936 = vpack.c.bf16 %v1934, %v1933
      %v1937 = vpack.c.bf16 %v1935, %v1935
      %1938 = vrot.lane.b32.xlu0 %v570, 67
      %v1939 = vpop.permute.xlu0 %1938
      %1940 = vrot.lane.b32.xlu0 %v571, 67
      %v1941 = vpop.permute.xlu0 %1940
      %vm1942 = vcmask 547840
      %v1943 = vsel %vm1942, %v1939, %v1941
      %v1947 = vmul.f32 %v1418, %v1939
      %v1948 = vmul.f32 %v1419, %v1943
      %v1949 = vmul.f32 %v1427, %v1941
      %v1950 = vpack.c.bf16 %v1948, %v1947
      %v1951 = vpack.c.bf16 %v1949, %v1949
      %1952 = vrot.lane.b32.xlu0 %v578, 69
      %v1953 = vpop.permute.xlu0 %1952
      %1954 = vrot.lane.b32.xlu0 %v579, 69
      %v1955 = vpop.permute.xlu0 %1954
      %vm1956 = vcmask 564224
      %v1957 = vsel %vm1956, %v1953, %v1955
      %v1961 = vmul.f32 %v1418, %v1953
      %v1962 = vmul.f32 %v1419, %v1957
      %v1963 = vmul.f32 %v1427, %v1955
      %v1964 = vpack.c.bf16 %v1962, %v1961
      %v1965 = vpack.c.bf16 %v1963, %v1963
      %1966 = vrot.lane.b32.xlu0 %v1495, 70
      %v1967 = vpop.permute.xlu0 %1966
      %1968 = vrot.lane.b32.xlu0 %v1496, 70
      %v1969 = vpop.permute.xlu0 %1968
      %vm1970 = vcmask 572416
      %v1971 = vsel %vm1970, %v1967, %v1969
      %v1975 = vmul.f32 %v1418, %v1967
      %v1976 = vmul.f32 %v1419, %v1971
      %v1977 = vmul.f32 %v1427, %v1969
      %v1978 = vpack.c.bf16 %v1976, %v1975
      %v1979 = vpack.c.bf16 %v1977, %v1977
      %1980 = vrot.lane.b32.xlu0 %v1515, 71
      %v1981 = vpop.permute.xlu0 %1980
      %1982 = vrot.lane.b32.xlu0 %v1516, 71
      %v1983 = vpop.permute.xlu0 %1982
      %vm1984 = vcmask 580608
      %v1985 = vsel %vm1984, %v1981, %v1983
      %v1989 = vmul.f32 %v1418, %v1981
      %v1990 = vmul.f32 %v1419, %v1985
      %v1991 = vmul.f32 %v1427, %v1983
      %v1992 = vpack.c.bf16 %v1990, %v1989
      %v1993 = vpack.c.bf16 %v1991, %v1991
      %1994 = vrot.lane.b32.xlu0 %v1546, 72
      %v1995 = vpop.permute.xlu0 %1994
      %1996 = vrot.lane.b32.xlu0 %v1547, 72
      %v1997 = vpop.permute.xlu0 %1996
      %vm1998 = vcmask 588800
      %v1999 = vsel %vm1998, %v1995, %v1997
      %v2003 = vmul.f32 %v1418, %v1995
      %v2004 = vmul.f32 %v1419, %v1999
      %v2005 = vmul.f32 %v1427, %v1997
      %v2006 = vpack.c.bf16 %v2004, %v2003
      %v2007 = vpack.c.bf16 %v2005, %v2005
      %2008 = vrot.lane.b32.xlu0 %v1420, 80
      %v2009 = vpop.permute.xlu0 %2008
      %2010 = vrot.lane.b32.xlu0 %v1421, 80
      %v2011 = vpop.permute.xlu0 %2010
      %vm2012 = vcmask 654336
      %v2013 = vsel %vm2012, %v2009, %v2011
      %v2017 = vmul.f32 %v1418, %v2009
      %v2018 = vmul.f32 %v1419, %v2013
      %v2019 = vmul.f32 %v1427, %v2011
      %v2020 = vpack.c.bf16 %v2018, %v2017
      %v2021 = vpack.c.bf16 %v2019, %v2019
      %2022 = vrot.lane.b32.xlu0 %v1428, 81
      %v2023 = vpop.permute.xlu0 %2022
      %2024 = vrot.lane.b32.xlu0 %v1429, 81
      %v2025 = vpop.permute.xlu0 %2024
      %vm2026 = vcmask 662528
      %v2027 = vsel %vm2026, %v2023, %v2025
      %v2031 = vmul.f32 %v1418, %v2023
      %v2032 = vmul.f32 %v1419, %v2027
      %v2033 = vmul.f32 %v1427, %v2025
      %v2034 = vpack.c.bf16 %v2032, %v2031
      %v2035 = vpack.c.bf16 %v2033, %v2033
      %2036 = vrot.lane.b32.xlu0 %v1448, 82
      %v2037 = vpop.permute.xlu0 %2036
      %2038 = vrot.lane.b32.xlu0 %v1449, 82
      %v2039 = vpop.permute.xlu0 %2038
      %vm2040 = vcmask 670720
      %v2041 = vsel %vm2040, %v2037, %v2039
      %v2045 = vmul.f32 %v1418, %v2037
      %v2046 = vmul.f32 %v1419, %v2041
      %v2047 = vmul.f32 %v1427, %v2039
      %v2048 = vpack.c.bf16 %v2046, %v2045
      %v2049 = vpack.c.bf16 %v2047, %v2047
      %2050 = vrot.lane.b32.xlu0 %v570, 83
      %v2051 = vpop.permute.xlu0 %2050
      %2052 = vrot.lane.b32.xlu0 %v571, 83
      %v2053 = vpop.permute.xlu0 %2052
      %vm2054 = vcmask 678912
      %v2055 = vsel %vm2054, %v2051, %v2053
      %v2059 = vmul.f32 %v1418, %v2051
      %v2060 = vmul.f32 %v1419, %v2055
      %v2061 = vmul.f32 %v1427, %v2053
      %v2062 = vpack.c.bf16 %v2060, %v2059
      %v2063 = vpack.c.bf16 %v2061, %v2061
      %2064 = vrot.lane.b32.xlu0 %v578, 85
      %v2065 = vpop.permute.xlu0 %2064
      %2066 = vrot.lane.b32.xlu0 %v579, 85
      %v2067 = vpop.permute.xlu0 %2066
      %vm2068 = vcmask 695296
      %v2069 = vsel %vm2068, %v2065, %v2067
      %v2073 = vmul.f32 %v1418, %v2065
      %v2074 = vmul.f32 %v1419, %v2069
      %v2075 = vmul.f32 %v1427, %v2067
      %v2076 = vpack.c.bf16 %v2074, %v2073
      %v2077 = vpack.c.bf16 %v2075, %v2075
      %2078 = vrot.lane.b32.xlu0 %v1495, 86
      %v2079 = vpop.permute.xlu0 %2078
      %2080 = vrot.lane.b32.xlu0 %v1496, 86
      %v2081 = vpop.permute.xlu0 %2080
      %vm2082 = vcmask 703488
      %v2083 = vsel %vm2082, %v2079, %v2081
      %v2087 = vmul.f32 %v1418, %v2079
      %v2088 = vmul.f32 %v1419, %v2083
      %v2089 = vmul.f32 %v1427, %v2081
      %v2090 = vpack.c.bf16 %v2088, %v2087
      %v2091 = vpack.c.bf16 %v2089, %v2089
      %2092 = vrot.lane.b32.xlu0 %v1515, 87
      %v2093 = vpop.permute.xlu0 %2092
      %2094 = vrot.lane.b32.xlu0 %v1516, 87
      %v2095 = vpop.permute.xlu0 %2094
      %vm2096 = vcmask 711680
      %v2097 = vsel %vm2096, %v2093, %v2095
      %v2101 = vmul.f32 %v1418, %v2093
      %v2102 = vmul.f32 %v1419, %v2097
      %v2103 = vmul.f32 %v1427, %v2095
      %v2104 = vpack.c.bf16 %v2102, %v2101
      %v2105 = vpack.c.bf16 %v2103, %v2103
      %2106 = vrot.lane.b32.xlu0 %v1546, 88
      %v2107 = vpop.permute.xlu0 %2106
      %2108 = vrot.lane.b32.xlu0 %v1547, 88
      %v2109 = vpop.permute.xlu0 %2108
      %vm2110 = vcmask 719872
      %v2111 = vsel %vm2110, %v2107, %v2109
      %v2115 = vmul.f32 %v1418, %v2107
      %v2116 = vmul.f32 %v1419, %v2111
      %v2117 = vmul.f32 %v1427, %v2109
      %v2118 = vpack.c.bf16 %v2116, %v2115
      %v2119 = vpack.c.bf16 %v2117, %v2117
      %2120 = vrot.lane.b32.xlu0 %v1420, 96
      %v2121 = vpop.permute.xlu0 %2120
      %2122 = vrot.lane.b32.xlu0 %v1421, 96
      %v2123 = vpop.permute.xlu0 %2122
      %vm2124 = vcmask 785408
      %v2125 = vsel %vm2124, %v2121, %v2123
      %v2129 = vmul.f32 %v1418, %v2121
      %v2130 = vmul.f32 %v1419, %v2125
      %v2131 = vmul.f32 %v1427, %v2123
      %v2132 = vpack.c.bf16 %v2130, %v2129
      %v2133 = vpack.c.bf16 %v2131, %v2131
      %2134 = vrot.lane.b32.xlu0 %v1428, 97
      %v2135 = vpop.permute.xlu0 %2134
      %2136 = vrot.lane.b32.xlu0 %v1429, 97
      %v2137 = vpop.permute.xlu0 %2136
      %vm2138 = vcmask 793600
      %v2139 = vsel %vm2138, %v2135, %v2137
      %v2143 = vmul.f32 %v1418, %v2135
      %v2144 = vmul.f32 %v1419, %v2139
      %v2145 = vmul.f32 %v1427, %v2137
      %v2146 = vpack.c.bf16 %v2144, %v2143
      %v2147 = vpack.c.bf16 %v2145, %v2145
      %2148 = vrot.lane.b32.xlu0 %v1448, 98
      %v2149 = vpop.permute.xlu0 %2148
      %2150 = vrot.lane.b32.xlu0 %v1449, 98
      %v2151 = vpop.permute.xlu0 %2150
      %vm2152 = vcmask 801792
      %v2153 = vsel %vm2152, %v2149, %v2151
      %v2157 = vmul.f32 %v1418, %v2149
      %v2158 = vmul.f32 %v1419, %v2153
      %v2159 = vmul.f32 %v1427, %v2151
      %v2160 = vpack.c.bf16 %v2158, %v2157
      %v2161 = vpack.c.bf16 %v2159, %v2159
      %2162 = vrot.lane.b32.xlu0 %v570, 99
      %v2163 = vpop.permute.xlu0 %2162
      %2164 = vrot.lane.b32.xlu0 %v571, 99
      %v2165 = vpop.permute.xlu0 %2164
      %vm2166 = vcmask 809984
      %v2167 = vsel %vm2166, %v2163, %v2165
      %v2171 = vmul.f32 %v1418, %v2163
      %v2172 = vmul.f32 %v1419, %v2167
      %v2173 = vmul.f32 %v1427, %v2165
      %v2174 = vpack.c.bf16 %v2172, %v2171
      %v2175 = vpack.c.bf16 %v2173, %v2173
      %2176 = vrot.lane.b32.xlu0 %v578, 101
      %v2177 = vpop.permute.xlu0 %2176
      %2178 = vrot.lane.b32.xlu0 %v579, 101
      %v2179 = vpop.permute.xlu0 %2178
      %vm2180 = vcmask 826368
      %v2181 = vsel %vm2180, %v2177, %v2179
      %v2185 = vmul.f32 %v1418, %v2177
      %v2186 = vmul.f32 %v1419, %v2181
      %v2187 = vmul.f32 %v1427, %v2179
      %v2188 = vpack.c.bf16 %v2186, %v2185
      %v2189 = vpack.c.bf16 %v2187, %v2187
      %2190 = vrot.lane.b32.xlu0 %v1495, 102
      %v2191 = vpop.permute.xlu0 %2190
      %2192 = vrot.lane.b32.xlu0 %v1496, 102
      %v2193 = vpop.permute.xlu0 %2192
      %vm2194 = vcmask 834560
      %v2195 = vsel %vm2194, %v2191, %v2193
      %v2199 = vmul.f32 %v1418, %v2191
      %v2200 = vmul.f32 %v1419, %v2195
      %v2201 = vmul.f32 %v1427, %v2193
      %v2202 = vpack.c.bf16 %v2200, %v2199
      %v2203 = vpack.c.bf16 %v2201, %v2201
      %2204 = vrot.lane.b32.xlu0 %v1515, 103
      %v2205 = vpop.permute.xlu0 %2204
      %2206 = vrot.lane.b32.xlu0 %v1516, 103
      %v2207 = vpop.permute.xlu0 %2206
      %vm2208 = vcmask 842752
      %v2209 = vsel %vm2208, %v2205, %v2207
      %v2213 = vmul.f32 %v1418, %v2205
      %v2214 = vmul.f32 %v1419, %v2209
      %v2215 = vmul.f32 %v1427, %v2207
      %v2216 = vpack.c.bf16 %v2214, %v2213
      %v2217 = vpack.c.bf16 %v2215, %v2215
      %2218 = vrot.lane.b32.xlu0 %v1546, 104
      %v2219 = vpop.permute.xlu0 %2218
      %2220 = vrot.lane.b32.xlu0 %v1547, 104
      %v2221 = vpop.permute.xlu0 %2220
      %vm2222 = vcmask 850944
      %v2223 = vsel %vm2222, %v2219, %v2221
      %v2227 = vmul.f32 %v1418, %v2219
      %v2228 = vmul.f32 %v1419, %v2223
      %v2229 = vmul.f32 %v1427, %v2221
      %v2230 = vpack.c.bf16 %v2228, %v2227
      %v2231 = vpack.c.bf16 %v2229, %v2229
      %2232 = vrot.lane.b32.xlu0 %v1420, 112
      %v2233 = vpop.permute.xlu0 %2232
      %2234 = vrot.lane.b32.xlu0 %v1421, 112
      %v2235 = vpop.permute.xlu0 %2234
      %vm2236 = vcmask 916480
      %v2237 = vsel %vm2236, %v2233, %v2235
      %v2241 = vmul.f32 %v1418, %v2233
      %v2242 = vmul.f32 %v1419, %v2237
      %v2243 = vmul.f32 %v1427, %v2235
      %v2244 = vpack.c.bf16 %v2242, %v2241
      %v2245 = vpack.c.bf16 %v2243, %v2243
      %2246 = vrot.lane.b32.xlu0 %v1428, 113
      %v2247 = vpop.permute.xlu0 %2246
      %2248 = vrot.lane.b32.xlu0 %v1429, 113
      %v2249 = vpop.permute.xlu0 %2248
      %vm2250 = vcmask 924672
      %v2251 = vsel %vm2250, %v2247, %v2249
      %v2255 = vmul.f32 %v1418, %v2247
      %v2256 = vmul.f32 %v1419, %v2251
      %v2257 = vmul.f32 %v1427, %v2249
      %v2258 = vpack.c.bf16 %v2256, %v2255
      %v2259 = vpack.c.bf16 %v2257, %v2257
      %2260 = vrot.lane.b32.xlu0 %v1448, 114
      %v2261 = vpop.permute.xlu0 %2260
      %2262 = vrot.lane.b32.xlu0 %v1449, 114
      %v2263 = vpop.permute.xlu0 %2262
      %vm2264 = vcmask 932864
      %v2265 = vsel %vm2264, %v2261, %v2263
      %v2269 = vmul.f32 %v1418, %v2261
      %v2270 = vmul.f32 %v1419, %v2265
      %v2271 = vmul.f32 %v1427, %v2263
      %v2272 = vpack.c.bf16 %v2270, %v2269
      %v2273 = vpack.c.bf16 %v2271, %v2271
      %2274 = vrot.lane.b32.xlu0 %v570, 115
      %v2275 = vpop.permute.xlu0 %2274
      %2276 = vrot.lane.b32.xlu0 %v571, 115
      %v2277 = vpop.permute.xlu0 %2276
      %vm2278 = vcmask 941056
      %v2279 = vsel %vm2278, %v2275, %v2277
      %v2283 = vmul.f32 %v1418, %v2275
      %v2284 = vmul.f32 %v1419, %v2279
      %v2285 = vmul.f32 %v1427, %v2277
      %v2286 = vpack.c.bf16 %v2284, %v2283
      %v2287 = vpack.c.bf16 %v2285, %v2285
      %2288 = vrot.lane.b32.xlu0 %v578, 117
      %v2289 = vpop.permute.xlu0 %2288
      %2290 = vrot.lane.b32.xlu0 %v579, 117
      %v2291 = vpop.permute.xlu0 %2290
      %vm2292 = vcmask 957440
      %v2293 = vsel %vm2292, %v2289, %v2291
      %v2297 = vmul.f32 %v1418, %v2289
      %v2298 = vmul.f32 %v1419, %v2293
      %v2299 = vmul.f32 %v1427, %v2291
      %v2300 = vpack.c.bf16 %v2298, %v2297
      %v2301 = vpack.c.bf16 %v2299, %v2299
      %2302 = vrot.lane.b32.xlu0 %v1495, 118
      %v2303 = vpop.permute.xlu0 %2302
      %2304 = vrot.lane.b32.xlu0 %v1496, 118
      %v2305 = vpop.permute.xlu0 %2304
      %vm2306 = vcmask 965632
      %v2307 = vsel %vm2306, %v2303, %v2305
      %v2311 = vmul.f32 %v1418, %v2303
      %v2312 = vmul.f32 %v1419, %v2307
      %v2313 = vmul.f32 %v1427, %v2305
      %v2314 = vpack.c.bf16 %v2312, %v2311
      %v2315 = vpack.c.bf16 %v2313, %v2313
      %2316 = vrot.lane.b32.xlu0 %v1515, 119
      %v2317 = vpop.permute.xlu0 %2316
      %2318 = vrot.lane.b32.xlu0 %v1516, 119
      %v2319 = vpop.permute.xlu0 %2318
      %vm2320 = vcmask 973824
      %v2321 = vsel %vm2320, %v2317, %v2319
      %v2325 = vmul.f32 %v1418, %v2317
      %v2326 = vmul.f32 %v1419, %v2321
      %v2327 = vmul.f32 %v1427, %v2319
      %v2328 = vpack.c.bf16 %v2326, %v2325
      %v2329 = vpack.c.bf16 %v2327, %v2327
      %2330 = vrot.lane.b32.xlu0 %v1546, 120
      %v2331 = vpop.permute.xlu0 %2330
      %2332 = vrot.lane.b32.xlu0 %v1547, 120
      %v2333 = vpop.permute.xlu0 %2332
      %vm2334 = vcmask 982016
      %v2335 = vsel %vm2334, %v2331, %v2333
      %v2339 = vmul.f32 %v1418, %v2331
      %v2340 = vmul.f32 %v1419, %v2335
      %v2341 = vmul.f32 %v1427, %v2333
      %v2342 = vpack.c.bf16 %v2340, %v2339
      %v2343 = vpack.c.bf16 %v2341, %v2341
      %v2344 = vmul.f32 %v1419, %v1420
      %v2345 = vmul.f32 %v1427, %v1421
      %v2346 = vpack.c.bf16 %v2345, %v2344
      %v2347 = vunpack.c.l.bf16 0
      %v2348 = vmul.f32 %v1419, %v1433
      %v2349 = vmul.f32 %v1427, %v1437
      %v2350 = vmul.f32 %v2347, %v1435
      %v2351 = vpack.c.bf16 %v2349, %v2348
      %v2352 = vpack.c.bf16 %v2350, %v2350
      %v2353 = vmul.f32 %v1419, %v1453
      %v2354 = vmul.f32 %v1427, %v1456
      %v2355 = vmul.f32 %v2347, %v1455
      %v2356 = vpack.c.bf16 %v2354, %v2353
      %v2357 = vpack.c.bf16 %v2355, %v2355
      %v2358 = vmul.f32 %v1419, %v1466
      %v2359 = vmul.f32 %v1427, %v1470
      %v2360 = vmul.f32 %v2347, %v1468
      %v2361 = vpack.c.bf16 %v2359, %v2358
      %v2362 = vpack.c.bf16 %v2360, %v2360
      %v2363 = vmul.f32 %v1419, %v1480
      %v2364 = vmul.f32 %v1427, %v1484
      %v2365 = vmul.f32 %v2347, %v1482
      %v2366 = vpack.c.bf16 %v2364, %v2363
      %v2367 = vpack.c.bf16 %v2365, %v2365
      %v2368 = vmul.f32 %v1419, %v1500
      %v2369 = vmul.f32 %v1427, %v1504
      %v2370 = vmul.f32 %v2347, %v1502
      %v2371 = vpack.c.bf16 %v2369, %v2368
      %v2372 = vpack.c.bf16 %v2370, %v2370
      %v2373 = vmul.f32 %v1419, %v1520
      %v2374 = vmul.f32 %v1427, %v1524
      %v2375 = vmul.f32 %v2347, %v1522
      %v2376 = vpack.c.bf16 %v2374, %v2373
      %v2377 = vpack.c.bf16 %v2375, %v2375
      %v2378 = vmul.f32 %v1419, %v1551
      %v2379 = vmul.f32 %v1427, %v1555
      %v2380 = vmul.f32 %v2347, %v1553
      %v2381 = vpack.c.bf16 %v2379, %v2378
      %v2382 = vpack.c.bf16 %v2380, %v2380
      %v2384 = vunpack.c.l.b16 %v1424
      %v2385 = vunpack.c.h.b16 %v1424
      %v2386 = vpack.c.b16 %v2384, %v2384
      %v2387 = vpack.c.b16 %v2385, %v2385
      %v2390 = vunpack.c.l.b16 %v1444
      %v2391 = vunpack.c.h.b16 %v1444
      %v2392 = vunpack.c.l.b16 %v1445
      %v2393 = vpack.c.b16 %v2390, %v2390
      %v2394 = vpack.c.b16 %v2391, %v2391
      %v2395 = vpack.c.b16 %v2392, %v2392
      %v2396 = vrot.slane %v2393, 5
      %v2397 = vrot.slane %v2394, 5
      %v2398 = vrot.slane %v2395, 5
      %2399 = vrot.lane.b32.xlu0 %v2396, 127
      %v2400 = vpop.permute.xlu0 %2399
      %2401 = vrot.lane.b32.xlu0 %v2397, 127
      %v2402 = vpop.permute.xlu0 %2401
      %2403 = vrot.lane.b32.xlu0 %v2398, 127
      %v2404 = vpop.permute.xlu0 %2403
      %v2405 = vsel %vm670, %v2400, %v2402
      %v2406 = vsel %vm670, %v2402, %v2404
      %v2409 = vunpack.c.l.b16 %v1463
      %v2410 = vunpack.c.h.b16 %v1463
      %v2411 = vunpack.c.l.b16 %v1464
      %v2412 = vpack.c.b16 %v2409, %v2409
      %v2413 = vpack.c.b16 %v2410, %v2410
      %v2414 = vpack.c.b16 %v2411, %v2411
      %v2415 = vrot.slane %v2412, 2
      %v2416 = vrot.slane %v2413, 2
      %v2417 = vrot.slane %v2414, 2
      %2418 = vrot.lane.b32.xlu0 %v2415, 126
      %v2419 = vpop.permute.xlu0 %2418
      %2420 = vrot.lane.b32.xlu0 %v2416, 126
      %v2421 = vpop.permute.xlu0 %2420
      %2422 = vrot.lane.b32.xlu0 %v2417, 126
      %v2423 = vpop.permute.xlu0 %2422
      %v2424 = vsel %vm687, %v2419, %v2421
      %v2425 = vsel %vm687, %v2421, %v2423
      %v2428 = vunpack.c.l.b16 %v1477
      %v2429 = vunpack.c.h.b16 %v1477
      %v2430 = vunpack.c.l.b16 %v1478
      %v2431 = vpack.c.b16 %v2428, %v2428
      %v2432 = vpack.c.b16 %v2429, %v2429
      %v2433 = vpack.c.b16 %v2430, %v2430
      %v2434 = vrot.slane %v2431, 7
      %v2435 = vrot.slane %v2432, 7
      %v2436 = vrot.slane %v2433, 7
      %2437 = vrot.lane.b32.xlu0 %v2434, 125
      %v2438 = vpop.permute.xlu0 %2437
      %2439 = vrot.lane.b32.xlu0 %v2435, 125
      %v2440 = vpop.permute.xlu0 %2439
      %2441 = vrot.lane.b32.xlu0 %v2436, 125
      %v2442 = vpop.permute.xlu0 %2441
      %vm2443 = vcmask 1022976
      %v2444 = vsel %vm2443, %v2438, %v2440
      %v2445 = vsel %vm2443, %v2440, %v2442
      %v2448 = vrot.slane %v1407, 4
      %v2449 = vrot.slane %v1403, 4
      %v2450 = vrot.slane %v1410, 4
      %2451 = vrot.lane.b32.xlu0 %v2448, 124
      %v2452 = vpop.permute.xlu0 %2451
      %2453 = vrot.lane.b32.xlu0 %v2449, 124
      %v2454 = vpop.permute.xlu0 %2453
      %2455 = vrot.lane.b32.xlu0 %v2450, 124
      %v2456 = vpop.permute.xlu0 %2455
      %vm2457 = vcmask 1014784
      %v2458 = vsel %vm2457, %v2452, %v2454
      %v2459 = vsel %vm2457, %v2454, %v2456
      %v2462 = vunpack.c.l.b16 %v1491
      %v2463 = vunpack.c.h.b16 %v1491
      %v2464 = vunpack.c.l.b16 %v1492
      %v2465 = vpack.c.b16 %v2462, %v2462
      %v2466 = vpack.c.b16 %v2463, %v2463
      %v2467 = vpack.c.b16 %v2464, %v2464
      %v2468 = vrot.slane %v2465, 1
      %v2469 = vrot.slane %v2466, 1
      %v2470 = vrot.slane %v2467, 1
      %2471 = vrot.lane.b32.xlu0 %v2468, 123
      %v2472 = vpop.permute.xlu0 %2471
      %2473 = vrot.lane.b32.xlu0 %v2469, 123
      %v2474 = vpop.permute.xlu0 %2473
      %2475 = vrot.lane.b32.xlu0 %v2470, 123
      %v2476 = vpop.permute.xlu0 %2475
      %vm2477 = vcmask 1006592
      %v2478 = vsel %vm2477, %v2472, %v2474
      %v2479 = vsel %vm2477, %v2474, %v2476
      %v2482 = vunpack.c.l.b16 %v1511
      %v2483 = vunpack.c.h.b16 %v1511
      %v2484 = vunpack.c.l.b16 %v1512
      %v2485 = vpack.c.b16 %v2482, %v2482
      %v2486 = vpack.c.b16 %v2483, %v2483
      %v2487 = vpack.c.b16 %v2484, %v2484
      %v2488 = vrot.slane %v2485, 6
      %v2489 = vrot.slane %v2486, 6
      %v2490 = vrot.slane %v2487, 6
      %2491 = vrot.lane.b32.xlu0 %v2488, 122
      %v2492 = vpop.permute.xlu0 %2491
      %2493 = vrot.lane.b32.xlu0 %v2489, 122
      %v2494 = vpop.permute.xlu0 %2493
      %2495 = vrot.lane.b32.xlu0 %v2490, 122
      %v2496 = vpop.permute.xlu0 %2495
      %vm2497 = vcmask 998400
      %v2498 = vsel %vm2497, %v2492, %v2494
      %v2499 = vsel %vm2497, %v2494, %v2496
      %v2502 = vunpack.c.l.b16 %v1531
      %v2503 = vunpack.c.h.b16 %v1531
      %v2504 = vunpack.c.l.b16 %v1532
      %v2505 = vpack.c.b16 %v2502, %v2502
      %v2506 = vpack.c.b16 %v2503, %v2503
      %v2507 = vpack.c.b16 %v2504, %v2504
      %v2508 = vrot.slane %v2505, 3
      %v2509 = vrot.slane %v2506, 3
      %v2510 = vrot.slane %v2507, 3
      %2511 = vrot.lane.b32.xlu0 %v2508, 121
      %v2512 = vpop.permute.xlu0 %2511
      %2513 = vrot.lane.b32.xlu0 %v2509, 121
      %v2514 = vpop.permute.xlu0 %2513
      %2515 = vrot.lane.b32.xlu0 %v2510, 121
      %v2516 = vpop.permute.xlu0 %2515
      %vm2517 = vcmask 990208
      %v2518 = vsel %vm2517, %v2512, %v2514
      %v2519 = vsel %vm2517, %v2514, %v2516
      %v2522 = vunpack.c.l.b16 %v1562
      %v2523 = vunpack.c.h.b16 %v1562
      %v2524 = vunpack.c.l.b16 %v1563
      %v2525 = vpack.c.b16 %v2522, %v2522
      %v2526 = vpack.c.b16 %v2523, %v2523
      %v2527 = vpack.c.b16 %v2524, %v2524
      %2528 = vrot.lane.b32.xlu0 %v2525, 120
      %v2529 = vpop.permute.xlu0 %2528
      %2530 = vrot.lane.b32.xlu0 %v2526, 120
      %v2531 = vpop.permute.xlu0 %2530
      %2532 = vrot.lane.b32.xlu0 %v2527, 120
      %v2533 = vpop.permute.xlu0 %2532
      %vm2534 = vcmask 982016
      %v2535 = vsel %vm2534, %v2529, %v2531
      %v2536 = vsel %vm2534, %v2531, %v2533
      %v2539 = vunpack.c.l.b16 %v1577
      %v2540 = vunpack.c.h.b16 %v1577
      %v2541 = vunpack.c.l.b16 %v1578
      %v2542 = vpack.c.b16 %v2539, %v2539
      %v2543 = vpack.c.b16 %v2540, %v2540
      %v2544 = vpack.c.b16 %v2541, %v2541
      %v2545 = vrot.slane %v2542, 5
      %v2546 = vrot.slane %v2543, 5
      %v2547 = vrot.slane %v2544, 5
      %2548 = vrot.lane.b32.xlu0 %v2545, 112
      %v2549 = vpop.permute.xlu0 %2548
      %2550 = vrot.lane.b32.xlu0 %v2546, 112
      %v2551 = vpop.permute.xlu0 %2550
      %2552 = vrot.lane.b32.xlu0 %v2547, 112
      %v2553 = vpop.permute.xlu0 %2552
      %v2554 = vsel %vm707, %v2549, %v2551
      %v2555 = vsel %vm707, %v2551, %v2553
      %v2558 = vunpack.c.l.b16 %v1590
      %v2559 = vunpack.c.h.b16 %v1590
      %v2560 = vunpack.c.l.b16 %v1591
      %v2561 = vpack.c.b16 %v2558, %v2558
      %v2562 = vpack.c.b16 %v2559, %v2559
      %v2563 = vpack.c.b16 %v2560, %v2560
      %v2564 = vrot.slane %v2561, 2
      %v2565 = vrot.slane %v2562, 2
      %v2566 = vrot.slane %v2563, 2
      %2567 = vrot.lane.b32.xlu0 %v2564, 111
      %v2568 = vpop.permute.xlu0 %2567
      %2569 = vrot.lane.b32.xlu0 %v2565, 111
      %v2570 = vpop.permute.xlu0 %2569
      %2571 = vrot.lane.b32.xlu0 %v2566, 111
      %v2572 = vpop.permute.xlu0 %2571
      %v2573 = vsel %vm716, %v2568, %v2570
      %v2574 = vsel %vm716, %v2570, %v2572
      %v2577 = vunpack.c.l.b16 %v1603
      %v2578 = vunpack.c.h.b16 %v1603
      %v2579 = vunpack.c.l.b16 %v1604
      %v2580 = vpack.c.b16 %v2577, %v2577
      %v2581 = vpack.c.b16 %v2578, %v2578
      %v2582 = vpack.c.b16 %v2579, %v2579
      %v2583 = vrot.slane %v2580, 7
      %v2584 = vrot.slane %v2581, 7
      %v2585 = vrot.slane %v2582, 7
      %2586 = vrot.lane.b32.xlu0 %v2583, 110
      %v2587 = vpop.permute.xlu0 %2586
      %2588 = vrot.lane.b32.xlu0 %v2584, 110
      %v2589 = vpop.permute.xlu0 %2588
      %2590 = vrot.lane.b32.xlu0 %v2585, 110
      %v2591 = vpop.permute.xlu0 %2590
      %v2592 = vsel %vm736, %v2587, %v2589
      %v2593 = vsel %vm736, %v2589, %v2591
      %v2596 = vunpack.c.l.b16 %v1617
      %v2597 = vunpack.c.h.b16 %v1617
      %v2598 = vunpack.c.l.b16 %v1618
      %v2599 = vpack.c.b16 %v2596, %v2596
      %v2600 = vpack.c.b16 %v2597, %v2597
      %v2601 = vpack.c.b16 %v2598, %v2598
      %2602 = vrot.lane.b32.xlu0 %v2599, 109
      %v2603 = vpop.permute.xlu0 %2602
      %2604 = vrot.lane.b32.xlu0 %v2600, 109
      %v2605 = vpop.permute.xlu0 %2604
      %2606 = vrot.lane.b32.xlu0 %v2601, 109
      %v2607 = vpop.permute.xlu0 %2606
      %vm2608 = vcmask 891904
      %v2609 = vsel %vm2608, %v2603, %v2605
      %v2610 = vsel %vm2608, %v2605, %v2607
      %v2611 = vrot.slane %v1407, 1
      %v2612 = vrot.slane %v1403, 1
      %v2613 = vrot.slane %v1410, 1
      %2614 = vrot.lane.b32.xlu0 %v2611, 108
      %v2615 = vpop.permute.xlu0 %2614
      %2616 = vrot.lane.b32.xlu0 %v2612, 108
      %v2617 = vpop.permute.xlu0 %2616
      %2618 = vrot.lane.b32.xlu0 %v2613, 108
      %v2619 = vpop.permute.xlu0 %2618
      %vm2620 = vcmask 883712
      %v2621 = vsel %vm2620, %v2615, %v2617
      %v2622 = vsel %vm2620, %v2617, %v2619
      %v2625 = vunpack.c.l.b16 %v1631
      %v2626 = vunpack.c.h.b16 %v1631
      %v2627 = vunpack.c.l.b16 %v1632
      %v2628 = vpack.c.b16 %v2625, %v2625
      %v2629 = vpack.c.b16 %v2626, %v2626
      %v2630 = vpack.c.b16 %v2627, %v2627
      %v2631 = vrot.slane %v2628, 6
      %v2632 = vrot.slane %v2629, 6
      %v2633 = vrot.slane %v2630, 6
      %2634 = vrot.lane.b32.xlu0 %v2631, 107
      %v2635 = vpop.permute.xlu0 %2634
      %2636 = vrot.lane.b32.xlu0 %v2632, 107
      %v2637 = vpop.permute.xlu0 %2636
      %2638 = vrot.lane.b32.xlu0 %v2633, 107
      %v2639 = vpop.permute.xlu0 %2638
      %vm2640 = vcmask 875520
      %v2641 = vsel %vm2640, %v2635, %v2637
      %v2642 = vsel %vm2640, %v2637, %v2639
      %v2645 = vunpack.c.l.b16 %v1645
      %v2646 = vunpack.c.h.b16 %v1645
      %v2647 = vunpack.c.l.b16 %v1646
      %v2648 = vpack.c.b16 %v2645, %v2645
      %v2649 = vpack.c.b16 %v2646, %v2646
      %v2650 = vpack.c.b16 %v2647, %v2647
      %v2651 = vrot.slane %v2648, 3
      %v2652 = vrot.slane %v2649, 3
      %v2653 = vrot.slane %v2650, 3
      %2654 = vrot.lane.b32.xlu0 %v2651, 106
      %v2655 = vpop.permute.xlu0 %2654
      %2656 = vrot.lane.b32.xlu0 %v2652, 106
      %v2657 = vpop.permute.xlu0 %2656
      %2658 = vrot.lane.b32.xlu0 %v2653, 106
      %v2659 = vpop.permute.xlu0 %2658
      %vm2660 = vcmask 867328
      %v2661 = vsel %vm2660, %v2655, %v2657
      %v2662 = vsel %vm2660, %v2657, %v2659
      %v2665 = vsel %vm1046, %v2386, %v2405
      %v2668 = vsel %vm1046, %v2387, %v2406
      %v2670 = vsel %vm797, %v2665, %v2424
      %v2673 = vsel %vm797, %v2668, %v2425
      %v2676 = vsel %vm1059, %v2424, %v2444
      %v2678 = vsel %vm1059, %v2425, %v2445
      %v2680 = vsel %vm792, %v2676, %v2458
      %v2682 = vsel %vm792, %v2678, %v2459
      %v2684 = vsel %vm1068, %v2680, %v2478
      %v2687 = vsel %vm1068, %v2682, %v2479
      %v2690 = vsel %vm785, %v2478, %v2498
      %v2692 = vsel %vm785, %v2479, %v2499
      %v2694 = vsel %vm1079, %v2690, %v2518
      %v2697 = vsel %vm1079, %v2692, %v2519
      %v2701 = vsel %vm1046, %v2535, %v2554
      %v2704 = vsel %vm1046, %v2536, %v2555
      %v2706 = vsel %vm797, %v2701, %v2573
      %v2709 = vsel %vm797, %v2704, %v2574
      %v2712 = vsel %vm1059, %v2573, %v2592
      %v2714 = vsel %vm1059, %v2574, %v2593
      %v2716 = vsel %vm792, %v2712, %v2609
      %v2718 = vsel %vm792, %v2714, %v2610
      %v2720 = vsel %vm1068, %v2716, %v2621
      %v2723 = vsel %vm1068, %v2718, %v2622
      %v2726 = vsel %vm785, %v2621, %v2641
      %v2728 = vsel %vm785, %v2622, %v2642
      %v2730 = vsel %vm1079, %v2726, %v2661
      %v2733 = vsel %vm1079, %v2728, %v2662
      %v2737 = vunpack.c.l.b16 %v1659
      %v2738 = vunpack.c.h.b16 %v1659
      %v2739 = vunpack.c.l.b16 %v1660
      %v2740 = vpack.c.b16 %v2737, %v2737
      %v2741 = vpack.c.b16 %v2738, %v2738
      %v2742 = vpack.c.b16 %v2739, %v2739
      %v2745 = vunpack.c.l.b16 %v1673
      %v2746 = vunpack.c.h.b16 %v1673
      %v2747 = vunpack.c.l.b16 %v1674
      %v2748 = vpack.c.b16 %v2745, %v2745
      %v2749 = vpack.c.b16 %v2746, %v2746
      %v2750 = vpack.c.b16 %v2747, %v2747
      %v2751 = vrot.slane %v2748, 5
      %v2752 = vrot.slane %v2749, 5
      %v2753 = vrot.slane %v2750, 5
      %2754 = vrot.lane.b32.xlu0 %v2751, 127
      %v2755 = vpop.permute.xlu0 %2754
      %2756 = vrot.lane.b32.xlu0 %v2752, 127
      %v2757 = vpop.permute.xlu0 %2756
      %2758 = vrot.lane.b32.xlu0 %v2753, 127
      %v2759 = vpop.permute.xlu0 %2758
      %v2760 = vsel %vm670, %v2755, %v2757
      %v2761 = vsel %vm670, %v2757, %v2759
      %v2764 = vunpack.c.l.b16 %v1686
      %v2765 = vunpack.c.h.b16 %v1686
      %v2766 = vunpack.c.l.b16 %v1687
      %v2767 = vpack.c.b16 %v2764, %v2764
      %v2768 = vpack.c.b16 %v2765, %v2765
      %v2769 = vpack.c.b16 %v2766, %v2766
      %v2770 = vrot.slane %v2767, 2
      %v2771 = vrot.slane %v2768, 2
      %v2772 = vrot.slane %v2769, 2
      %2773 = vrot.lane.b32.xlu0 %v2770, 119
      %v2774 = vpop.permute.xlu0 %2773
      %2775 = vrot.lane.b32.xlu0 %v2771, 119
      %v2776 = vpop.permute.xlu0 %2775
      %2777 = vrot.lane.b32.xlu0 %v2772, 119
      %v2778 = vpop.permute.xlu0 %2777
      %vm2779 = vcmask 973824
      %v2780 = vsel %vm2779, %v2774, %v2776
      %v2781 = vsel %vm2779, %v2776, %v2778
      %v2784 = vunpack.c.l.b16 %v1700
      %v2785 = vunpack.c.h.b16 %v1700
      %v2786 = vunpack.c.l.b16 %v1701
      %v2787 = vpack.c.b16 %v2784, %v2784
      %v2788 = vpack.c.b16 %v2785, %v2785
      %v2789 = vpack.c.b16 %v2786, %v2786
      %v2790 = vrot.slane %v2787, 7
      %v2791 = vrot.slane %v2788, 7
      %v2792 = vrot.slane %v2789, 7
      %2793 = vrot.lane.b32.xlu0 %v2790, 118
      %v2794 = vpop.permute.xlu0 %2793
      %2795 = vrot.lane.b32.xlu0 %v2791, 118
      %v2796 = vpop.permute.xlu0 %2795
      %2797 = vrot.lane.b32.xlu0 %v2792, 118
      %v2798 = vpop.permute.xlu0 %2797
      %vm2799 = vcmask 965632
      %v2800 = vsel %vm2799, %v2794, %v2796
      %v2801 = vsel %vm2799, %v2796, %v2798
      %v2804 = vunpack.c.l.b16 %v1713
      %v2805 = vunpack.c.h.b16 %v1713
      %v2806 = vunpack.c.l.b16 %v1714
      %v2807 = vpack.c.b16 %v2804, %v2804
      %v2808 = vpack.c.b16 %v2805, %v2805
      %v2809 = vpack.c.b16 %v2806, %v2806
      %2810 = vrot.lane.b32.xlu0 %v2807, 117
      %v2811 = vpop.permute.xlu0 %2810
      %2812 = vrot.lane.b32.xlu0 %v2808, 117
      %v2813 = vpop.permute.xlu0 %2812
      %2814 = vrot.lane.b32.xlu0 %v2809, 117
      %v2815 = vpop.permute.xlu0 %2814
      %vm2816 = vcmask 957440
      %v2817 = vsel %vm2816, %v2811, %v2813
      %v2818 = vsel %vm2816, %v2813, %v2815
      %v2821 = vunpack.c.l.b16 %v1727
      %v2822 = vunpack.c.h.b16 %v1727
      %v2823 = vunpack.c.l.b16 %v1728
      %v2824 = vpack.c.b16 %v2821, %v2821
      %v2825 = vpack.c.b16 %v2822, %v2822
      %v2826 = vpack.c.b16 %v2823, %v2823
      %v2827 = vrot.slane %v2824, 1
      %v2828 = vrot.slane %v2825, 1
      %v2829 = vrot.slane %v2826, 1
      %2830 = vrot.lane.b32.xlu0 %v2827, 116
      %v2831 = vpop.permute.xlu0 %2830
      %2832 = vrot.lane.b32.xlu0 %v2828, 116
      %v2833 = vpop.permute.xlu0 %2832
      %2834 = vrot.lane.b32.xlu0 %v2829, 116
      %v2835 = vpop.permute.xlu0 %2834
      %vm2836 = vcmask 949248
      %v2837 = vsel %vm2836, %v2831, %v2833
      %v2838 = vsel %vm2836, %v2833, %v2835
      %v2839 = vrot.slane %v1407, 6
      %v2840 = vrot.slane %v1403, 6
      %v2841 = vrot.slane %v1410, 6
      %2842 = vrot.lane.b32.xlu0 %v2839, 115
      %v2843 = vpop.permute.xlu0 %2842
      %2844 = vrot.lane.b32.xlu0 %v2840, 115
      %v2845 = vpop.permute.xlu0 %2844
      %2846 = vrot.lane.b32.xlu0 %v2841, 115
      %v2847 = vpop.permute.xlu0 %2846
      %vm2848 = vcmask 941056
      %v2849 = vsel %vm2848, %v2843, %v2845
      %v2850 = vsel %vm2848, %v2845, %v2847
      %v2853 = vunpack.c.l.b16 %v1741
      %v2854 = vunpack.c.h.b16 %v1741
      %v2855 = vunpack.c.l.b16 %v1742
      %v2856 = vpack.c.b16 %v2853, %v2853
      %v2857 = vpack.c.b16 %v2854, %v2854
      %v2858 = vpack.c.b16 %v2855, %v2855
      %v2859 = vrot.slane %v2856, 3
      %v2860 = vrot.slane %v2857, 3
      %v2861 = vrot.slane %v2858, 3
      %2862 = vrot.lane.b32.xlu0 %v2859, 114
      %v2863 = vpop.permute.xlu0 %2862
      %2864 = vrot.lane.b32.xlu0 %v2860, 114
      %v2865 = vpop.permute.xlu0 %2864
      %2866 = vrot.lane.b32.xlu0 %v2861, 114
      %v2867 = vpop.permute.xlu0 %2866
      %vm2868 = vcmask 932864
      %v2869 = vsel %vm2868, %v2863, %v2865
      %v2870 = vsel %vm2868, %v2865, %v2867
      %v2873 = vunpack.c.l.b16 %v1755
      %v2874 = vunpack.c.h.b16 %v1755
      %v2875 = vunpack.c.l.b16 %v1756
      %v2876 = vpack.c.b16 %v2873, %v2873
      %v2877 = vpack.c.b16 %v2874, %v2874
      %v2878 = vpack.c.b16 %v2875, %v2875
      %2879 = vrot.lane.b32.xlu0 %v2876, 113
      %v2880 = vpop.permute.xlu0 %2879
      %2881 = vrot.lane.b32.xlu0 %v2877, 113
      %v2882 = vpop.permute.xlu0 %2881
      %2883 = vrot.lane.b32.xlu0 %v2878, 113
      %v2884 = vpop.permute.xlu0 %2883
      %vm2885 = vcmask 924672
      %v2886 = vsel %vm2885, %v2880, %v2882
      %v2887 = vsel %vm2885, %v2882, %v2884
      %v2890 = vunpack.c.l.b16 %v1769
      %v2891 = vunpack.c.h.b16 %v1769
      %v2892 = vunpack.c.l.b16 %v1770
      %v2893 = vpack.c.b16 %v2890, %v2890
      %v2894 = vpack.c.b16 %v2891, %v2891
      %v2895 = vpack.c.b16 %v2892, %v2892
      %v2896 = vrot.slane %v2893, 5
      %v2897 = vrot.slane %v2894, 5
      %v2898 = vrot.slane %v2895, 5
      %2899 = vrot.lane.b32.xlu0 %v2896, 112
      %v2900 = vpop.permute.xlu0 %2899
      %2901 = vrot.lane.b32.xlu0 %v2897, 112
      %v2902 = vpop.permute.xlu0 %2901
      %2903 = vrot.lane.b32.xlu0 %v2898, 112
      %v2904 = vpop.permute.xlu0 %2903
      %v2905 = vsel %vm707, %v2900, %v2902
      %v2906 = vsel %vm707, %v2902, %v2904
      %v2909 = vunpack.c.l.b16 %v1783
      %v2910 = vunpack.c.h.b16 %v1783
      %v2911 = vunpack.c.l.b16 %v1784
      %v2912 = vpack.c.b16 %v2909, %v2909
      %v2913 = vpack.c.b16 %v2910, %v2910
      %v2914 = vpack.c.b16 %v2911, %v2911
      %v2915 = vrot.slane %v2912, 2
      %v2916 = vrot.slane %v2913, 2
      %v2917 = vrot.slane %v2914, 2
      %2918 = vrot.lane.b32.xlu0 %v2915, 111
      %v2919 = vpop.permute.xlu0 %2918
      %2920 = vrot.lane.b32.xlu0 %v2916, 111
      %v2921 = vpop.permute.xlu0 %2920
      %2922 = vrot.lane.b32.xlu0 %v2917, 111
      %v2923 = vpop.permute.xlu0 %2922
      %v2924 = vsel %vm716, %v2919, %v2921
      %v2925 = vsel %vm716, %v2921, %v2923
      %v2928 = vunpack.c.l.b16 %v1797
      %v2929 = vunpack.c.h.b16 %v1797
      %v2930 = vunpack.c.l.b16 %v1798
      %v2931 = vpack.c.b16 %v2928, %v2928
      %v2932 = vpack.c.b16 %v2929, %v2929
      %v2933 = vpack.c.b16 %v2930, %v2930
      %v2934 = vrot.slane %v2931, 7
      %v2935 = vrot.slane %v2932, 7
      %v2936 = vrot.slane %v2933, 7
      %2937 = vrot.lane.b32.xlu0 %v2934, 103
      %v2938 = vpop.permute.xlu0 %2937
      %2939 = vrot.lane.b32.xlu0 %v2935, 103
      %v2940 = vpop.permute.xlu0 %2939
      %2941 = vrot.lane.b32.xlu0 %v2936, 103
      %v2942 = vpop.permute.xlu0 %2941
      %vm2943 = vcmask 842752
      %v2944 = vsel %vm2943, %v2938, %v2940
      %v2945 = vsel %vm2943, %v2940, %v2942
      %v2948 = vunpack.c.l.b16 %v1811
      %v2949 = vunpack.c.h.b16 %v1811
      %v2950 = vunpack.c.l.b16 %v1812
      %v2951 = vpack.c.b16 %v2948, %v2948
      %v2952 = vpack.c.b16 %v2949, %v2949
      %v2953 = vpack.c.b16 %v2950, %v2950
      %2954 = vrot.lane.b32.xlu0 %v2951, 102
      %v2955 = vpop.permute.xlu0 %2954
      %2956 = vrot.lane.b32.xlu0 %v2952, 102
      %v2957 = vpop.permute.xlu0 %2956
      %2958 = vrot.lane.b32.xlu0 %v2953, 102
      %v2959 = vpop.permute.xlu0 %2958
      %vm2960 = vcmask 834560
      %v2961 = vsel %vm2960, %v2955, %v2957
      %v2962 = vsel %vm2960, %v2957, %v2959
      %v2965 = vunpack.c.l.b16 %v1825
      %v2966 = vunpack.c.h.b16 %v1825
      %v2967 = vunpack.c.l.b16 %v1826
      %v2968 = vpack.c.b16 %v2965, %v2965
      %v2969 = vpack.c.b16 %v2966, %v2966
      %v2970 = vpack.c.b16 %v2967, %v2967
      %v2971 = vrot.slane %v2968, 1
      %v2972 = vrot.slane %v2969, 1
      %v2973 = vrot.slane %v2970, 1
      %2974 = vrot.lane.b32.xlu0 %v2971, 101
      %v2975 = vpop.permute.xlu0 %2974
      %2976 = vrot.lane.b32.xlu0 %v2972, 101
      %v2977 = vpop.permute.xlu0 %2976
      %2978 = vrot.lane.b32.xlu0 %v2973, 101
      %v2979 = vpop.permute.xlu0 %2978
      %vm2980 = vcmask 826368
      %v2981 = vsel %vm2980, %v2975, %v2977
      %v2982 = vsel %vm2980, %v2977, %v2979
      %v2985 = vunpack.c.l.b16 %v1839
      %v2986 = vunpack.c.h.b16 %v1839
      %v2987 = vunpack.c.l.b16 %v1840
      %v2988 = vpack.c.b16 %v2985, %v2985
      %v2989 = vpack.c.b16 %v2986, %v2986
      %v2990 = vpack.c.b16 %v2987, %v2987
      %v2991 = vrot.slane %v2988, 6
      %v2992 = vrot.slane %v2989, 6
      %v2993 = vrot.slane %v2990, 6
      %2994 = vrot.lane.b32.xlu0 %v2991, 100
      %v2995 = vpop.permute.xlu0 %2994
      %2996 = vrot.lane.b32.xlu0 %v2992, 100
      %v2997 = vpop.permute.xlu0 %2996
      %2998 = vrot.lane.b32.xlu0 %v2993, 100
      %v2999 = vpop.permute.xlu0 %2998
      %vm3000 = vcmask 818176
      %v3001 = vsel %vm3000, %v2995, %v2997
      %v3002 = vsel %vm3000, %v2997, %v2999
      %v3003 = vrot.slane %v1407, 3
      %v3004 = vrot.slane %v1403, 3
      %v3005 = vrot.slane %v1410, 3
      %3006 = vrot.lane.b32.xlu0 %v3003, 99
      %v3007 = vpop.permute.xlu0 %3006
      %3008 = vrot.lane.b32.xlu0 %v3004, 99
      %v3009 = vpop.permute.xlu0 %3008
      %3010 = vrot.lane.b32.xlu0 %v3005, 99
      %v3011 = vpop.permute.xlu0 %3010
      %vm3012 = vcmask 809984
      %v3013 = vsel %vm3012, %v3007, %v3009
      %v3014 = vsel %vm3012, %v3009, %v3011
      %v3017 = vsel %vm1046, %v2740, %v2760
      %v3020 = vsel %vm1046, %v2741, %v2761
      %v3023 = vsel %vm1046, %v2742, %v2759
      %v3025 = vsel %vm797, %v3017, %v2780
      %v3027 = vsel %vm797, %v3020, %v2781
      %v3029 = vsel %vm797, %v3023, %v2778
      %v3031 = vsel %vm1059, %v2780, %v2800
      %v3033 = vsel %vm1059, %v2781, %v2801
      %v3035 = vsel %vm1059, %v2778, %v2798
      %v3037 = vsel %vm792, %v3031, %v2817
      %v3039 = vsel %vm792, %v3033, %v2818
      %v3041 = vsel %vm792, %v3035, %v2815
      %v3043 = vsel %vm1068, %v3037, %v2837
      %v3045 = vsel %vm1068, %v3039, %v2838
      %v3047 = vsel %vm1068, %v3041, %v2835
      %v3049 = vsel %vm785, %v2837, %v2849
      %v3051 = vsel %vm785, %v2838, %v2850
      %v3053 = vsel %vm785, %v2835, %v2847
      %v3055 = vsel %vm1079, %v3049, %v2869
      %v3057 = vsel %vm1079, %v3051, %v2870
      %v3059 = vsel %vm1079, %v3053, %v2867
      %v3062 = vsel %vm1046, %v2886, %v2905
      %v3065 = vsel %vm1046, %v2887, %v2906
      %v3068 = vsel %vm1046, %v2884, %v2904
      %v3070 = vsel %vm797, %v3062, %v2924
      %v3072 = vsel %vm797, %v3065, %v2925
      %v3074 = vsel %vm797, %v3068, %v2923
      %v3076 = vsel %vm1059, %v2924, %v2944
      %v3078 = vsel %vm1059, %v2925, %v2945
      %v3080 = vsel %vm1059, %v2923, %v2942
      %v3082 = vsel %vm792, %v3076, %v2961
      %v3084 = vsel %vm792, %v3078, %v2962
      %v3086 = vsel %vm792, %v3080, %v2959
      %v3088 = vsel %vm1068, %v3082, %v2981
      %v3090 = vsel %vm1068, %v3084, %v2982
      %v3092 = vsel %vm1068, %v3086, %v2979
      %v3094 = vsel %vm785, %v2981, %v3001
      %v3096 = vsel %vm785, %v2982, %v3002
      %v3098 = vsel %vm785, %v2979, %v2999
      %v3100 = vsel %vm1079, %v3094, %v3013
      %v3102 = vsel %vm1079, %v3096, %v3014
      %v3104 = vsel %vm1079, %v3098, %v3011
      %v3107 = vunpack.c.l.b16 %v1853
      %v3108 = vunpack.c.h.b16 %v1853
      %v3109 = vunpack.c.l.b16 %v1854
      %v3110 = vpack.c.b16 %v3107, %v3107
      %v3111 = vpack.c.b16 %v3108, %v3108
      %v3112 = vpack.c.b16 %v3109, %v3109
      %v3115 = vunpack.c.l.b16 %v1866
      %v3116 = vunpack.c.h.b16 %v1866
      %v3117 = vunpack.c.l.b16 %v1867
      %v3118 = vpack.c.b16 %v3115, %v3115
      %v3119 = vpack.c.b16 %v3116, %v3116
      %v3120 = vpack.c.b16 %v3117, %v3117
      %v3121 = vrot.slane %v3118, 5
      %v3122 = vrot.slane %v3119, 5
      %v3123 = vrot.slane %v3120, 5
      %3124 = vrot.lane.b32.xlu0 %v3121, 127
      %v3125 = vpop.permute.xlu0 %3124
      %3126 = vrot.lane.b32.xlu0 %v3122, 127
      %v3127 = vpop.permute.xlu0 %3126
      %3128 = vrot.lane.b32.xlu0 %v3123, 127
      %v3129 = vpop.permute.xlu0 %3128
      %v3130 = vsel %vm670, %v3125, %v3127
      %v3131 = vsel %vm670, %v3127, %v3129
      %v3134 = vunpack.c.l.b16 %v1880
      %v3135 = vunpack.c.h.b16 %v1880
      %v3136 = vunpack.c.l.b16 %v1881
      %v3137 = vpack.c.b16 %v3134, %v3134
      %v3138 = vpack.c.b16 %v3135, %v3135
      %v3139 = vpack.c.b16 %v3136, %v3136
      %v3140 = vrot.slane %v3137, 2
      %v3141 = vrot.slane %v3138, 2
      %v3142 = vrot.slane %v3139, 2
      %3143 = vrot.lane.b32.xlu0 %v3140, 126
      %v3144 = vpop.permute.xlu0 %3143
      %3145 = vrot.lane.b32.xlu0 %v3141, 126
      %v3146 = vpop.permute.xlu0 %3145
      %3147 = vrot.lane.b32.xlu0 %v3142, 126
      %v3148 = vpop.permute.xlu0 %3147
      %v3149 = vsel %vm687, %v3144, %v3146
      %v3150 = vsel %vm687, %v3146, %v3148
      %v3153 = vunpack.c.l.b16 %v1894
      %v3154 = vunpack.c.h.b16 %v1894
      %v3155 = vunpack.c.l.b16 %v1895
      %v3156 = vpack.c.b16 %v3153, %v3153
      %v3157 = vpack.c.b16 %v3154, %v3154
      %v3158 = vpack.c.b16 %v3155, %v3155
      %v3159 = vrot.slane %v3156, 7
      %v3160 = vrot.slane %v3157, 7
      %v3161 = vrot.slane %v3158, 7
      %3162 = vrot.lane.b32.xlu0 %v3159, 125
      %v3163 = vpop.permute.xlu0 %3162
      %3164 = vrot.lane.b32.xlu0 %v3160, 125
      %v3165 = vpop.permute.xlu0 %3164
      %3166 = vrot.lane.b32.xlu0 %v3161, 125
      %v3167 = vpop.permute.xlu0 %3166
      %v3168 = vsel %vm2443, %v3163, %v3165
      %v3169 = vsel %vm2443, %v3165, %v3167
      %v3172 = vunpack.c.l.b16 %v1908
      %v3173 = vunpack.c.h.b16 %v1908
      %v3174 = vunpack.c.l.b16 %v1909
      %v3175 = vpack.c.b16 %v3172, %v3172
      %v3176 = vpack.c.b16 %v3173, %v3173
      %v3177 = vpack.c.b16 %v3174, %v3174
      %3178 = vrot.lane.b32.xlu0 %v3175, 117
      %v3179 = vpop.permute.xlu0 %3178
      %3180 = vrot.lane.b32.xlu0 %v3176, 117
      %v3181 = vpop.permute.xlu0 %3180
      %3182 = vrot.lane.b32.xlu0 %v3177, 117
      %v3183 = vpop.permute.xlu0 %3182
      %v3184 = vsel %vm2816, %v3179, %v3181
      %v3185 = vsel %vm2816, %v3181, %v3183
      %v3188 = vunpack.c.l.b16 %v1922
      %v3189 = vunpack.c.h.b16 %v1922
      %v3190 = vunpack.c.l.b16 %v1923
      %v3191 = vpack.c.b16 %v3188, %v3188
      %v3192 = vpack.c.b16 %v3189, %v3189
      %v3193 = vpack.c.b16 %v3190, %v3190
      %v3194 = vrot.slane %v3191, 1
      %v3195 = vrot.slane %v3192, 1
      %v3196 = vrot.slane %v3193, 1
      %3197 = vrot.lane.b32.xlu0 %v3194, 116
      %v3198 = vpop.permute.xlu0 %3197
      %3199 = vrot.lane.b32.xlu0 %v3195, 116
      %v3200 = vpop.permute.xlu0 %3199
      %3201 = vrot.lane.b32.xlu0 %v3196, 116
      %v3202 = vpop.permute.xlu0 %3201
      %v3203 = vsel %vm2836, %v3198, %v3200
      %v3204 = vsel %vm2836, %v3200, %v3202
      %v3207 = vunpack.c.l.b16 %v1936
      %v3208 = vunpack.c.h.b16 %v1936
      %v3209 = vunpack.c.l.b16 %v1937
      %v3210 = vpack.c.b16 %v3207, %v3207
      %v3211 = vpack.c.b16 %v3208, %v3208
      %v3212 = vpack.c.b16 %v3209, %v3209
      %v3213 = vrot.slane %v3210, 6
      %v3214 = vrot.slane %v3211, 6
      %v3215 = vrot.slane %v3212, 6
      %3216 = vrot.lane.b32.xlu0 %v3213, 115
      %v3217 = vpop.permute.xlu0 %3216
      %3218 = vrot.lane.b32.xlu0 %v3214, 115
      %v3219 = vpop.permute.xlu0 %3218
      %3220 = vrot.lane.b32.xlu0 %v3215, 115
      %v3221 = vpop.permute.xlu0 %3220
      %v3222 = vsel %vm2848, %v3217, %v3219
      %v3223 = vsel %vm2848, %v3219, %v3221
      %v3226 = vunpack.c.l.b16 %v1950
      %v3227 = vunpack.c.h.b16 %v1950
      %v3228 = vunpack.c.l.b16 %v1951
      %v3229 = vpack.c.b16 %v3226, %v3226
      %v3230 = vpack.c.b16 %v3227, %v3227
      %v3231 = vpack.c.b16 %v3228, %v3228
      %v3232 = vrot.slane %v3229, 3
      %v3233 = vrot.slane %v3230, 3
      %v3234 = vrot.slane %v3231, 3
      %3235 = vrot.lane.b32.xlu0 %v3232, 114
      %v3236 = vpop.permute.xlu0 %3235
      %3237 = vrot.lane.b32.xlu0 %v3233, 114
      %v3238 = vpop.permute.xlu0 %3237
      %3239 = vrot.lane.b32.xlu0 %v3234, 114
      %v3240 = vpop.permute.xlu0 %3239
      %v3241 = vsel %vm2868, %v3236, %v3238
      %v3242 = vsel %vm2868, %v3238, %v3240
      %3243 = vrot.lane.b32.xlu0 %v1407, 113
      %v3244 = vpop.permute.xlu0 %3243
      %3245 = vrot.lane.b32.xlu0 %v1403, 113
      %v3246 = vpop.permute.xlu0 %3245
      %3247 = vrot.lane.b32.xlu0 %v1410, 113
      %v3248 = vpop.permute.xlu0 %3247
      %v3249 = vsel %vm2885, %v3244, %v3246
      %v3250 = vsel %vm2885, %v3246, %v3248
      %v3253 = vunpack.c.l.b16 %v1964
      %v3254 = vunpack.c.h.b16 %v1964
      %v3255 = vunpack.c.l.b16 %v1965
      %v3256 = vpack.c.b16 %v3253, %v3253
      %v3257 = vpack.c.b16 %v3254, %v3254
      %v3258 = vpack.c.b16 %v3255, %v3255
      %v3259 = vrot.slane %v3256, 5
      %v3260 = vrot.slane %v3257, 5
      %v3261 = vrot.slane %v3258, 5
      %3262 = vrot.lane.b32.xlu0 %v3259, 112
      %v3263 = vpop.permute.xlu0 %3262
      %3264 = vrot.lane.b32.xlu0 %v3260, 112
      %v3265 = vpop.permute.xlu0 %3264
      %3266 = vrot.lane.b32.xlu0 %v3261, 112
      %v3267 = vpop.permute.xlu0 %3266
      %v3268 = vsel %vm707, %v3263, %v3265
      %v3269 = vsel %vm707, %v3265, %v3267
      %v3272 = vunpack.c.l.b16 %v1978
      %v3273 = vunpack.c.h.b16 %v1978
      %v3274 = vunpack.c.l.b16 %v1979
      %v3275 = vpack.c.b16 %v3272, %v3272
      %v3276 = vpack.c.b16 %v3273, %v3273
      %v3277 = vpack.c.b16 %v3274, %v3274
      %v3278 = vrot.slane %v3275, 2
      %v3279 = vrot.slane %v3276, 2
      %v3280 = vrot.slane %v3277, 2
      %3281 = vrot.lane.b32.xlu0 %v3278, 111
      %v3282 = vpop.permute.xlu0 %3281
      %3283 = vrot.lane.b32.xlu0 %v3279, 111
      %v3284 = vpop.permute.xlu0 %3283
      %3285 = vrot.lane.b32.xlu0 %v3280, 111
      %v3286 = vpop.permute.xlu0 %3285
      %v3287 = vsel %vm716, %v3282, %v3284
      %v3288 = vsel %vm716, %v3284, %v3286
      %v3291 = vunpack.c.l.b16 %v1992
      %v3292 = vunpack.c.h.b16 %v1992
      %v3293 = vunpack.c.l.b16 %v1993
      %v3294 = vpack.c.b16 %v3291, %v3291
      %v3295 = vpack.c.b16 %v3292, %v3292
      %v3296 = vpack.c.b16 %v3293, %v3293
      %v3297 = vrot.slane %v3294, 7
      %v3298 = vrot.slane %v3295, 7
      %v3299 = vrot.slane %v3296, 7
      %3300 = vrot.lane.b32.xlu0 %v3297, 110
      %v3301 = vpop.permute.xlu0 %3300
      %3302 = vrot.lane.b32.xlu0 %v3298, 110
      %v3303 = vpop.permute.xlu0 %3302
      %3304 = vrot.lane.b32.xlu0 %v3299, 110
      %v3305 = vpop.permute.xlu0 %3304
      %v3306 = vsel %vm736, %v3301, %v3303
      %v3307 = vsel %vm736, %v3303, %v3305
      %v3310 = vunpack.c.l.b16 %v2006
      %v3311 = vunpack.c.h.b16 %v2006
      %v3312 = vunpack.c.l.b16 %v2007
      %v3313 = vpack.c.b16 %v3310, %v3310
      %v3314 = vpack.c.b16 %v3311, %v3311
      %v3315 = vpack.c.b16 %v3312, %v3312
      %3316 = vrot.lane.b32.xlu0 %v3313, 109
      %v3317 = vpop.permute.xlu0 %3316
      %3318 = vrot.lane.b32.xlu0 %v3314, 109
      %v3319 = vpop.permute.xlu0 %3318
      %3320 = vrot.lane.b32.xlu0 %v3315, 109
      %v3321 = vpop.permute.xlu0 %3320
      %v3322 = vsel %vm2608, %v3317, %v3319
      %v3323 = vsel %vm2608, %v3319, %v3321
      %v3326 = vunpack.c.l.b16 %v2020
      %v3327 = vunpack.c.h.b16 %v2020
      %v3328 = vunpack.c.l.b16 %v2021
      %v3329 = vpack.c.b16 %v3326, %v3326
      %v3330 = vpack.c.b16 %v3327, %v3327
      %v3331 = vpack.c.b16 %v3328, %v3328
      %v3332 = vrot.slane %v3329, 1
      %v3333 = vrot.slane %v3330, 1
      %v3334 = vrot.slane %v3331, 1
      %3335 = vrot.lane.b32.xlu0 %v3332, 101
      %v3336 = vpop.permute.xlu0 %3335
      %3337 = vrot.lane.b32.xlu0 %v3333, 101
      %v3338 = vpop.permute.xlu0 %3337
      %3339 = vrot.lane.b32.xlu0 %v3334, 101
      %v3340 = vpop.permute.xlu0 %3339
      %v3341 = vsel %vm2980, %v3336, %v3338
      %v3342 = vsel %vm2980, %v3338, %v3340
      %v3345 = vunpack.c.l.b16 %v2034
      %v3346 = vunpack.c.h.b16 %v2034
      %v3347 = vunpack.c.l.b16 %v2035
      %v3348 = vpack.c.b16 %v3345, %v3345
      %v3349 = vpack.c.b16 %v3346, %v3346
      %v3350 = vpack.c.b16 %v3347, %v3347
      %v3351 = vrot.slane %v3348, 6
      %v3352 = vrot.slane %v3349, 6
      %v3353 = vrot.slane %v3350, 6
      %3354 = vrot.lane.b32.xlu0 %v3351, 100
      %v3355 = vpop.permute.xlu0 %3354
      %3356 = vrot.lane.b32.xlu0 %v3352, 100
      %v3357 = vpop.permute.xlu0 %3356
      %3358 = vrot.lane.b32.xlu0 %v3353, 100
      %v3359 = vpop.permute.xlu0 %3358
      %v3360 = vsel %vm3000, %v3355, %v3357
      %v3361 = vsel %vm3000, %v3357, %v3359
      %v3364 = vunpack.c.l.b16 %v2048
      %v3365 = vunpack.c.h.b16 %v2048
      %v3366 = vunpack.c.l.b16 %v2049
      %v3367 = vpack.c.b16 %v3364, %v3364
      %v3368 = vpack.c.b16 %v3365, %v3365
      %v3369 = vpack.c.b16 %v3366, %v3366
      %v3370 = vrot.slane %v3367, 3
      %v3371 = vrot.slane %v3368, 3
      %v3372 = vrot.slane %v3369, 3
      %3373 = vrot.lane.b32.xlu0 %v3370, 99
      %v3374 = vpop.permute.xlu0 %3373
      %3375 = vrot.lane.b32.xlu0 %v3371, 99
      %v3376 = vpop.permute.xlu0 %3375
      %3377 = vrot.lane.b32.xlu0 %v3372, 99
      %v3378 = vpop.permute.xlu0 %3377
      %v3379 = vsel %vm3012, %v3374, %v3376
      %v3380 = vsel %vm3012, %v3376, %v3378
      %v3383 = vsel %vm1046, %v3110, %v3130
      %v3386 = vsel %vm1046, %v3111, %v3131
      %v3389 = vsel %vm1046, %v3112, %v3129
      %v3391 = vsel %vm797, %v3383, %v3149
      %v3393 = vsel %vm797, %v3386, %v3150
      %v3395 = vsel %vm797, %v3389, %v3148
      %v3397 = vsel %vm1059, %v3149, %v3168
      %v3399 = vsel %vm1059, %v3150, %v3169
      %v3401 = vsel %vm1059, %v3148, %v3167
      %v3403 = vsel %vm792, %v3397, %v3184
      %v3405 = vsel %vm792, %v3399, %v3185
      %v3407 = vsel %vm792, %v3401, %v3183
      %v3409 = vsel %vm1068, %v3403, %v3203
      %v3411 = vsel %vm1068, %v3405, %v3204
      %v3413 = vsel %vm1068, %v3407, %v3202
      %v3415 = vsel %vm785, %v3203, %v3222
      %v3417 = vsel %vm785, %v3204, %v3223
      %v3419 = vsel %vm785, %v3202, %v3221
      %v3421 = vsel %vm1079, %v3415, %v3241
      %v3423 = vsel %vm1079, %v3417, %v3242
      %v3425 = vsel %vm1079, %v3419, %v3240
      %v3428 = vsel %vm1046, %v3249, %v3268
      %v3431 = vsel %vm1046, %v3250, %v3269
      %v3434 = vsel %vm1046, %v3248, %v3267
      %v3436 = vsel %vm797, %v3428, %v3287
      %v3438 = vsel %vm797, %v3431, %v3288
      %v3440 = vsel %vm797, %v3434, %v3286
      %v3442 = vsel %vm1059, %v3287, %v3306
      %v3444 = vsel %vm1059, %v3288, %v3307
      %v3446 = vsel %vm1059, %v3286, %v3305
      %v3448 = vsel %vm792, %v3442, %v3322
      %v3450 = vsel %vm792, %v3444, %v3323
      %v3452 = vsel %vm792, %v3446, %v3321
      %v3454 = vsel %vm1068, %v3448, %v3341
      %v3456 = vsel %vm1068, %v3450, %v3342
      %v3458 = vsel %vm1068, %v3452, %v3340
      %v3460 = vsel %vm785, %v3341, %v3360
      %v3462 = vsel %vm785, %v3342, %v3361
      %v3464 = vsel %vm785, %v3340, %v3359
      %v3466 = vsel %vm1079, %v3460, %v3379
      %v3468 = vsel %vm1079, %v3462, %v3380
      %v3470 = vsel %vm1079, %v3464, %v3378
      %v3473 = vunpack.c.l.b16 %v2062
      %v3474 = vunpack.c.h.b16 %v2062
      %v3475 = vunpack.c.l.b16 %v2063
      %v3476 = vpack.c.b16 %v3473, %v3473
      %v3477 = vpack.c.b16 %v3474, %v3474
      %v3478 = vpack.c.b16 %v3475, %v3475
      %v3479 = vrot.slane %v1407, 5
      %v3480 = vrot.slane %v1403, 5
      %v3481 = vrot.slane %v1410, 5
      %3482 = vrot.lane.b32.xlu0 %v3479, 127
      %v3483 = vpop.permute.xlu0 %3482
      %3484 = vrot.lane.b32.xlu0 %v3480, 127
      %v3485 = vpop.permute.xlu0 %3484
      %3486 = vrot.lane.b32.xlu0 %v3481, 127
      %v3487 = vpop.permute.xlu0 %3486
      %v3488 = vsel %vm670, %v3483, %v3485
      %v3489 = vsel %vm670, %v3485, %v3487
      %v3492 = vunpack.c.l.b16 %v2076
      %v3493 = vunpack.c.h.b16 %v2076
      %v3494 = vunpack.c.l.b16 %v2077
      %v3495 = vpack.c.b16 %v3492, %v3492
      %v3496 = vpack.c.b16 %v3493, %v3493
      %v3497 = vpack.c.b16 %v3494, %v3494
      %v3498 = vrot.slane %v3495, 2
      %v3499 = vrot.slane %v3496, 2
      %v3500 = vrot.slane %v3497, 2
      %3501 = vrot.lane.b32.xlu0 %v3498, 126
      %v3502 = vpop.permute.xlu0 %3501
      %3503 = vrot.lane.b32.xlu0 %v3499, 126
      %v3504 = vpop.permute.xlu0 %3503
      %3505 = vrot.lane.b32.xlu0 %v3500, 126
      %v3506 = vpop.permute.xlu0 %3505
      %v3507 = vsel %vm687, %v3502, %v3504
      %v3508 = vsel %vm687, %v3504, %v3506
      %v3511 = vunpack.c.l.b16 %v2090
      %v3512 = vunpack.c.h.b16 %v2090
      %v3513 = vunpack.c.l.b16 %v2091
      %v3514 = vpack.c.b16 %v3511, %v3511
      %v3515 = vpack.c.b16 %v3512, %v3512
      %v3516 = vpack.c.b16 %v3513, %v3513
      %v3517 = vrot.slane %v3514, 7
      %v3518 = vrot.slane %v3515, 7
      %v3519 = vrot.slane %v3516, 7
      %3520 = vrot.lane.b32.xlu0 %v3517, 125
      %v3521 = vpop.permute.xlu0 %3520
      %3522 = vrot.lane.b32.xlu0 %v3518, 125
      %v3523 = vpop.permute.xlu0 %3522
      %3524 = vrot.lane.b32.xlu0 %v3519, 125
      %v3525 = vpop.permute.xlu0 %3524
      %v3526 = vsel %vm2443, %v3521, %v3523
      %v3527 = vsel %vm2443, %v3523, %v3525
      %v3530 = vunpack.c.l.b16 %v2104
      %v3531 = vunpack.c.h.b16 %v2104
      %v3532 = vunpack.c.l.b16 %v2105
      %v3533 = vpack.c.b16 %v3530, %v3530
      %v3534 = vpack.c.b16 %v3531, %v3531
      %v3535 = vpack.c.b16 %v3532, %v3532
      %3536 = vrot.lane.b32.xlu0 %v3533, 124
      %v3537 = vpop.permute.xlu0 %3536
      %3538 = vrot.lane.b32.xlu0 %v3534, 124
      %v3539 = vpop.permute.xlu0 %3538
      %3540 = vrot.lane.b32.xlu0 %v3535, 124
      %v3541 = vpop.permute.xlu0 %3540
      %v3542 = vsel %vm2457, %v3537, %v3539
      %v3543 = vsel %vm2457, %v3539, %v3541
      %v3546 = vunpack.c.l.b16 %v2118
      %v3547 = vunpack.c.h.b16 %v2118
      %v3548 = vunpack.c.l.b16 %v2119
      %v3549 = vpack.c.b16 %v3546, %v3546
      %v3550 = vpack.c.b16 %v3547, %v3547
      %v3551 = vpack.c.b16 %v3548, %v3548
      %v3552 = vrot.slane %v3549, 1
      %v3553 = vrot.slane %v3550, 1
      %v3554 = vrot.slane %v3551, 1
      %3555 = vrot.lane.b32.xlu0 %v3552, 123
      %v3556 = vpop.permute.xlu0 %3555
      %3557 = vrot.lane.b32.xlu0 %v3553, 123
      %v3558 = vpop.permute.xlu0 %3557
      %3559 = vrot.lane.b32.xlu0 %v3554, 123
      %v3560 = vpop.permute.xlu0 %3559
      %v3561 = vsel %vm2477, %v3556, %v3558
      %v3562 = vsel %vm2477, %v3558, %v3560
      %v3565 = vunpack.c.l.b16 %v2132
      %v3566 = vunpack.c.h.b16 %v2132
      %v3567 = vunpack.c.l.b16 %v2133
      %v3568 = vpack.c.b16 %v3565, %v3565
      %v3569 = vpack.c.b16 %v3566, %v3566
      %v3570 = vpack.c.b16 %v3567, %v3567
      %v3571 = vrot.slane %v3568, 6
      %v3572 = vrot.slane %v3569, 6
      %v3573 = vrot.slane %v3570, 6
      %3574 = vrot.lane.b32.xlu0 %v3571, 115
      %v3575 = vpop.permute.xlu0 %3574
      %3576 = vrot.lane.b32.xlu0 %v3572, 115
      %v3577 = vpop.permute.xlu0 %3576
      %3578 = vrot.lane.b32.xlu0 %v3573, 115
      %v3579 = vpop.permute.xlu0 %3578
      %v3580 = vsel %vm2848, %v3575, %v3577
      %v3581 = vsel %vm2848, %v3577, %v3579
      %v3584 = vunpack.c.l.b16 %v2146
      %v3585 = vunpack.c.h.b16 %v2146
      %v3586 = vunpack.c.l.b16 %v2147
      %v3587 = vpack.c.b16 %v3584, %v3584
      %v3588 = vpack.c.b16 %v3585, %v3585
      %v3589 = vpack.c.b16 %v3586, %v3586
      %v3590 = vrot.slane %v3587, 3
      %v3591 = vrot.slane %v3588, 3
      %v3592 = vrot.slane %v3589, 3
      %3593 = vrot.lane.b32.xlu0 %v3590, 114
      %v3594 = vpop.permute.xlu0 %3593
      %3595 = vrot.lane.b32.xlu0 %v3591, 114
      %v3596 = vpop.permute.xlu0 %3595
      %3597 = vrot.lane.b32.xlu0 %v3592, 114
      %v3598 = vpop.permute.xlu0 %3597
      %v3599 = vsel %vm2868, %v3594, %v3596
      %v3600 = vsel %vm2868, %v3596, %v3598
      %v3603 = vunpack.c.l.b16 %v2160
      %v3604 = vunpack.c.h.b16 %v2160
      %v3605 = vunpack.c.l.b16 %v2161
      %v3606 = vpack.c.b16 %v3603, %v3603
      %v3607 = vpack.c.b16 %v3604, %v3604
      %v3608 = vpack.c.b16 %v3605, %v3605
      %3609 = vrot.lane.b32.xlu0 %v3606, 113
      %v3610 = vpop.permute.xlu0 %3609
      %3611 = vrot.lane.b32.xlu0 %v3607, 113
      %v3612 = vpop.permute.xlu0 %3611
      %3613 = vrot.lane.b32.xlu0 %v3608, 113
      %v3614 = vpop.permute.xlu0 %3613
      %v3615 = vsel %vm2885, %v3610, %v3612
      %v3616 = vsel %vm2885, %v3612, %v3614
      %v3619 = vunpack.c.l.b16 %v2174
      %v3620 = vunpack.c.h.b16 %v2174
      %v3621 = vunpack.c.l.b16 %v2175
      %v3622 = vpack.c.b16 %v3619, %v3619
      %v3623 = vpack.c.b16 %v3620, %v3620
      %v3624 = vpack.c.b16 %v3621, %v3621
      %v3625 = vrot.slane %v3622, 5
      %v3626 = vrot.slane %v3623, 5
      %v3627 = vrot.slane %v3624, 5
      %3628 = vrot.lane.b32.xlu0 %v3625, 112
      %v3629 = vpop.permute.xlu0 %3628
      %3630 = vrot.lane.b32.xlu0 %v3626, 112
      %v3631 = vpop.permute.xlu0 %3630
      %3632 = vrot.lane.b32.xlu0 %v3627, 112
      %v3633 = vpop.permute.xlu0 %3632
      %v3634 = vsel %vm707, %v3629, %v3631
      %v3635 = vsel %vm707, %v3631, %v3633
      %v3636 = vrot.slane %v1407, 2
      %v3637 = vrot.slane %v1403, 2
      %v3638 = vrot.slane %v1410, 2
      %3639 = vrot.lane.b32.xlu0 %v3636, 111
      %v3640 = vpop.permute.xlu0 %3639
      %3641 = vrot.lane.b32.xlu0 %v3637, 111
      %v3642 = vpop.permute.xlu0 %3641
      %3643 = vrot.lane.b32.xlu0 %v3638, 111
      %v3644 = vpop.permute.xlu0 %3643
      %v3645 = vsel %vm716, %v3640, %v3642
      %v3646 = vsel %vm716, %v3642, %v3644
      %v3649 = vunpack.c.l.b16 %v2188
      %v3650 = vunpack.c.h.b16 %v2188
      %v3651 = vunpack.c.l.b16 %v2189
      %v3652 = vpack.c.b16 %v3649, %v3649
      %v3653 = vpack.c.b16 %v3650, %v3650
      %v3654 = vpack.c.b16 %v3651, %v3651
      %v3655 = vrot.slane %v3652, 7
      %v3656 = vrot.slane %v3653, 7
      %v3657 = vrot.slane %v3654, 7
      %3658 = vrot.lane.b32.xlu0 %v3655, 110
      %v3659 = vpop.permute.xlu0 %3658
      %3660 = vrot.lane.b32.xlu0 %v3656, 110
      %v3661 = vpop.permute.xlu0 %3660
      %3662 = vrot.lane.b32.xlu0 %v3657, 110
      %v3663 = vpop.permute.xlu0 %3662
      %v3664 = vsel %vm736, %v3659, %v3661
      %v3665 = vsel %vm736, %v3661, %v3663
      %v3668 = vunpack.c.l.b16 %v2202
      %v3669 = vunpack.c.h.b16 %v2202
      %v3670 = vunpack.c.l.b16 %v2203
      %v3671 = vpack.c.b16 %v3668, %v3668
      %v3672 = vpack.c.b16 %v3669, %v3669
      %v3673 = vpack.c.b16 %v3670, %v3670
      %3674 = vrot.lane.b32.xlu0 %v3671, 109
      %v3675 = vpop.permute.xlu0 %3674
      %3676 = vrot.lane.b32.xlu0 %v3672, 109
      %v3677 = vpop.permute.xlu0 %3676
      %3678 = vrot.lane.b32.xlu0 %v3673, 109
      %v3679 = vpop.permute.xlu0 %3678
      %v3680 = vsel %vm2608, %v3675, %v3677
      %v3681 = vsel %vm2608, %v3677, %v3679
      %v3684 = vunpack.c.l.b16 %v2216
      %v3685 = vunpack.c.h.b16 %v2216
      %v3686 = vunpack.c.l.b16 %v2217
      %v3687 = vpack.c.b16 %v3684, %v3684
      %v3688 = vpack.c.b16 %v3685, %v3685
      %v3689 = vpack.c.b16 %v3686, %v3686
      %v3690 = vrot.slane %v3687, 1
      %v3691 = vrot.slane %v3688, 1
      %v3692 = vrot.slane %v3689, 1
      %3693 = vrot.lane.b32.xlu0 %v3690, 108
      %v3694 = vpop.permute.xlu0 %3693
      %3695 = vrot.lane.b32.xlu0 %v3691, 108
      %v3696 = vpop.permute.xlu0 %3695
      %3697 = vrot.lane.b32.xlu0 %v3692, 108
      %v3698 = vpop.permute.xlu0 %3697
      %v3699 = vsel %vm2620, %v3694, %v3696
      %v3700 = vsel %vm2620, %v3696, %v3698
      %v3703 = vunpack.c.l.b16 %v2230
      %v3704 = vunpack.c.h.b16 %v2230
      %v3705 = vunpack.c.l.b16 %v2231
      %v3706 = vpack.c.b16 %v3703, %v3703
      %v3707 = vpack.c.b16 %v3704, %v3704
      %v3708 = vpack.c.b16 %v3705, %v3705
      %v3709 = vrot.slane %v3706, 6
      %v3710 = vrot.slane %v3707, 6
      %v3711 = vrot.slane %v3708, 6
      %3712 = vrot.lane.b32.xlu0 %v3709, 107
      %v3713 = vpop.permute.xlu0 %3712
      %3714 = vrot.lane.b32.xlu0 %v3710, 107
      %v3715 = vpop.permute.xlu0 %3714
      %3716 = vrot.lane.b32.xlu0 %v3711, 107
      %v3717 = vpop.permute.xlu0 %3716
      %v3718 = vsel %vm2640, %v3713, %v3715
      %v3719 = vsel %vm2640, %v3715, %v3717
      %v3722 = vunpack.c.l.b16 %v2244
      %v3723 = vunpack.c.h.b16 %v2244
      %v3724 = vunpack.c.l.b16 %v2245
      %v3725 = vpack.c.b16 %v3722, %v3722
      %v3726 = vpack.c.b16 %v3723, %v3723
      %v3727 = vpack.c.b16 %v3724, %v3724
      %v3728 = vrot.slane %v3725, 3
      %v3729 = vrot.slane %v3726, 3
      %v3730 = vrot.slane %v3727, 3
      %3731 = vrot.lane.b32.xlu0 %v3728, 99
      %v3732 = vpop.permute.xlu0 %3731
      %3733 = vrot.lane.b32.xlu0 %v3729, 99
      %v3734 = vpop.permute.xlu0 %3733
      %3735 = vrot.lane.b32.xlu0 %v3730, 99
      %v3736 = vpop.permute.xlu0 %3735
      %v3737 = vsel %vm3012, %v3732, %v3734
      %v3738 = vsel %vm3012, %v3734, %v3736
      %v3741 = vsel %vm1046, %v3476, %v3488
      %v3744 = vsel %vm1046, %v3477, %v3489
      %v3747 = vsel %vm1046, %v3478, %v3487
      %v3749 = vsel %vm797, %v3741, %v3507
      %v3751 = vsel %vm797, %v3744, %v3508
      %v3753 = vsel %vm797, %v3747, %v3506
      %v3755 = vsel %vm1059, %v3507, %v3526
      %v3757 = vsel %vm1059, %v3508, %v3527
      %v3759 = vsel %vm1059, %v3506, %v3525
      %v3761 = vsel %vm792, %v3755, %v3542
      %v3763 = vsel %vm792, %v3757, %v3543
      %v3765 = vsel %vm792, %v3759, %v3541
      %v3767 = vsel %vm1068, %v3761, %v3561
      %v3769 = vsel %vm1068, %v3763, %v3562
      %v3771 = vsel %vm1068, %v3765, %v3560
      %v3773 = vsel %vm785, %v3561, %v3580
      %v3775 = vsel %vm785, %v3562, %v3581
      %v3777 = vsel %vm785, %v3560, %v3579
      %v3779 = vsel %vm1079, %v3773, %v3599
      %v3781 = vsel %vm1079, %v3775, %v3600
      %v3783 = vsel %vm1079, %v3777, %v3598
      %v3786 = vsel %vm1046, %v3615, %v3634
      %v3789 = vsel %vm1046, %v3616, %v3635
      %v3792 = vsel %vm1046, %v3614, %v3633
      %v3794 = vsel %vm797, %v3786, %v3645
      %v3796 = vsel %vm797, %v3789, %v3646
      %v3798 = vsel %vm797, %v3792, %v3644
      %v3800 = vsel %vm1059, %v3645, %v3664
      %v3802 = vsel %vm1059, %v3646, %v3665
      %v3804 = vsel %vm1059, %v3644, %v3663
      %v3806 = vsel %vm792, %v3800, %v3680
      %v3808 = vsel %vm792, %v3802, %v3681
      %v3810 = vsel %vm792, %v3804, %v3679
      %v3812 = vsel %vm1068, %v3806, %v3699
      %v3814 = vsel %vm1068, %v3808, %v3700
      %v3816 = vsel %vm1068, %v3810, %v3698
      %v3818 = vsel %vm785, %v3699, %v3718
      %v3820 = vsel %vm785, %v3700, %v3719
      %v3822 = vsel %vm785, %v3698, %v3717
      %v3824 = vsel %vm1079, %v3818, %v3737
      %v3826 = vsel %vm1079, %v3820, %v3738
      %v3828 = vsel %vm1079, %v3822, %v3736
      %v3831 = vunpack.c.l.b16 %v2258
      %v3832 = vunpack.c.h.b16 %v2258
      %v3833 = vunpack.c.l.b16 %v2259
      %v3834 = vpack.c.b16 %v3831, %v3831
      %v3835 = vpack.c.b16 %v3832, %v3832
      %v3836 = vpack.c.b16 %v3833, %v3833
      %v3839 = vunpack.c.l.b16 %v2272
      %v3840 = vunpack.c.h.b16 %v2272
      %v3841 = vunpack.c.l.b16 %v2273
      %v3842 = vpack.c.b16 %v3839, %v3839
      %v3843 = vpack.c.b16 %v3840, %v3840
      %v3844 = vpack.c.b16 %v3841, %v3841
      %v3845 = vrot.slane %v3842, 5
      %v3846 = vrot.slane %v3843, 5
      %v3847 = vrot.slane %v3844, 5
      %3848 = vrot.lane.b32.xlu0 %v3845, 127
      %v3849 = vpop.permute.xlu0 %3848
      %3850 = vrot.lane.b32.xlu0 %v3846, 127
      %v3851 = vpop.permute.xlu0 %3850
      %3852 = vrot.lane.b32.xlu0 %v3847, 127
      %v3853 = vpop.permute.xlu0 %3852
      %v3854 = vsel %vm670, %v3849, %v3851
      %v3855 = vsel %vm670, %v3851, %v3853
      %v3858 = vunpack.c.l.b16 %v2286
      %v3859 = vunpack.c.h.b16 %v2286
      %v3860 = vunpack.c.l.b16 %v2287
      %v3861 = vpack.c.b16 %v3858, %v3858
      %v3862 = vpack.c.b16 %v3859, %v3859
      %v3863 = vpack.c.b16 %v3860, %v3860
      %v3864 = vrot.slane %v3861, 2
      %v3865 = vrot.slane %v3862, 2
      %v3866 = vrot.slane %v3863, 2
      %3867 = vrot.lane.b32.xlu0 %v3864, 126
      %v3868 = vpop.permute.xlu0 %3867
      %3869 = vrot.lane.b32.xlu0 %v3865, 126
      %v3870 = vpop.permute.xlu0 %3869
      %3871 = vrot.lane.b32.xlu0 %v3866, 126
      %v3872 = vpop.permute.xlu0 %3871
      %v3873 = vsel %vm687, %v3868, %v3870
      %v3874 = vsel %vm687, %v3870, %v3872
      %v3875 = vrot.slane %v1407, 7
      %v3876 = vrot.slane %v1403, 7
      %v3877 = vrot.slane %v1410, 7
      %3878 = vrot.lane.b32.xlu0 %v3875, 125
      %v3879 = vpop.permute.xlu0 %3878
      %3880 = vrot.lane.b32.xlu0 %v3876, 125
      %v3881 = vpop.permute.xlu0 %3880
      %3882 = vrot.lane.b32.xlu0 %v3877, 125
      %v3883 = vpop.permute.xlu0 %3882
      %v3884 = vsel %vm2443, %v3879, %v3881
      %v3885 = vsel %vm2443, %v3881, %v3883
      %v3888 = vunpack.c.l.b16 %v2300
      %v3889 = vunpack.c.h.b16 %v2300
      %v3890 = vunpack.c.l.b16 %v2301
      %v3891 = vpack.c.b16 %v3888, %v3888
      %v3892 = vpack.c.b16 %v3889, %v3889
      %v3893 = vpack.c.b16 %v3890, %v3890
      %3894 = vrot.lane.b32.xlu0 %v3891, 124
      %v3895 = vpop.permute.xlu0 %3894
      %3896 = vrot.lane.b32.xlu0 %v3892, 124
      %v3897 = vpop.permute.xlu0 %3896
      %3898 = vrot.lane.b32.xlu0 %v3893, 124
      %v3899 = vpop.permute.xlu0 %3898
      %v3900 = vsel %vm2457, %v3895, %v3897
      %v3901 = vsel %vm2457, %v3897, %v3899
      %v3904 = vunpack.c.l.b16 %v2314
      %v3905 = vunpack.c.h.b16 %v2314
      %v3906 = vunpack.c.l.b16 %v2315
      %v3907 = vpack.c.b16 %v3904, %v3904
      %v3908 = vpack.c.b16 %v3905, %v3905
      %v3909 = vpack.c.b16 %v3906, %v3906
      %v3910 = vrot.slane %v3907, 1
      %v3911 = vrot.slane %v3908, 1
      %v3912 = vrot.slane %v3909, 1
      %3913 = vrot.lane.b32.xlu0 %v3910, 123
      %v3914 = vpop.permute.xlu0 %3913
      %3915 = vrot.lane.b32.xlu0 %v3911, 123
      %v3916 = vpop.permute.xlu0 %3915
      %3917 = vrot.lane.b32.xlu0 %v3912, 123
      %v3918 = vpop.permute.xlu0 %3917
      %v3919 = vsel %vm2477, %v3914, %v3916
      %v3920 = vsel %vm2477, %v3916, %v3918
      %v3923 = vunpack.c.l.b16 %v2328
      %v3924 = vunpack.c.h.b16 %v2328
      %v3925 = vunpack.c.l.b16 %v2329
      %v3926 = vpack.c.b16 %v3923, %v3923
      %v3927 = vpack.c.b16 %v3924, %v3924
      %v3928 = vpack.c.b16 %v3925, %v3925
      %v3929 = vrot.slane %v3926, 6
      %v3930 = vrot.slane %v3927, 6
      %v3931 = vrot.slane %v3928, 6
      %3932 = vrot.lane.b32.xlu0 %v3929, 122
      %v3933 = vpop.permute.xlu0 %3932
      %3934 = vrot.lane.b32.xlu0 %v3930, 122
      %v3935 = vpop.permute.xlu0 %3934
      %3936 = vrot.lane.b32.xlu0 %v3931, 122
      %v3937 = vpop.permute.xlu0 %3936
      %v3938 = vsel %vm2497, %v3933, %v3935
      %v3939 = vsel %vm2497, %v3935, %v3937
      %v3942 = vunpack.c.l.b16 %v2342
      %v3943 = vunpack.c.h.b16 %v2342
      %v3944 = vunpack.c.l.b16 %v2343
      %v3945 = vpack.c.b16 %v3942, %v3942
      %v3946 = vpack.c.b16 %v3943, %v3943
      %v3947 = vpack.c.b16 %v3944, %v3944
      %v3948 = vrot.slane %v3945, 3
      %v3949 = vrot.slane %v3946, 3
      %v3950 = vrot.slane %v3947, 3
      %3951 = vrot.lane.b32.xlu0 %v3948, 121
      %v3952 = vpop.permute.xlu0 %3951
      %3953 = vrot.lane.b32.xlu0 %v3949, 121
      %v3954 = vpop.permute.xlu0 %3953
      %3955 = vrot.lane.b32.xlu0 %v3950, 121
      %v3956 = vpop.permute.xlu0 %3955
      %v3957 = vsel %vm2517, %v3952, %v3954
      %v3958 = vsel %vm2517, %v3954, %v3956
      %v3960 = vunpack.c.l.b16 %v2346
      %v3961 = vunpack.c.h.b16 %v2346
      %v3962 = vpack.c.b16 %v3960, %v3960
      %v3963 = vpack.c.b16 %v3961, %v3961
      %3964 = vrot.lane.b32.xlu0 %v3962, 113
      %v3965 = vpop.permute.xlu0 %3964
      %3966 = vrot.lane.b32.xlu0 %v3963, 113
      %v3967 = vpop.permute.xlu0 %3966
      %v3968 = vsel %vm2885, %v3965, %v3967
      %v3971 = vunpack.c.l.b16 %v2351
      %v3972 = vunpack.c.h.b16 %v2351
      %v3973 = vunpack.c.l.b16 %v2352
      %v3974 = vpack.c.b16 %v3971, %v3971
      %v3975 = vpack.c.b16 %v3972, %v3972
      %v3976 = vpack.c.b16 %v3973, %v3973
      %v3977 = vrot.slane %v3974, 5
      %v3978 = vrot.slane %v3975, 5
      %v3979 = vrot.slane %v3976, 5
      %3980 = vrot.lane.b32.xlu0 %v3977, 112
      %v3981 = vpop.permute.xlu0 %3980
      %3982 = vrot.lane.b32.xlu0 %v3978, 112
      %v3983 = vpop.permute.xlu0 %3982
      %3984 = vrot.lane.b32.xlu0 %v3979, 112
      %v3985 = vpop.permute.xlu0 %3984
      %v3986 = vsel %vm707, %v3981, %v3983
      %v3987 = vsel %vm707, %v3983, %v3985
      %v3990 = vunpack.c.l.b16 %v2356
      %v3991 = vunpack.c.h.b16 %v2356
      %v3992 = vunpack.c.l.b16 %v2357
      %v3993 = vpack.c.b16 %v3990, %v3990
      %v3994 = vpack.c.b16 %v3991, %v3991
      %v3995 = vpack.c.b16 %v3992, %v3992
      %v3996 = vrot.slane %v3993, 2
      %v3997 = vrot.slane %v3994, 2
      %v3998 = vrot.slane %v3995, 2
      %3999 = vrot.lane.b32.xlu0 %v3996, 111
      %v4000 = vpop.permute.xlu0 %3999
      %4001 = vrot.lane.b32.xlu0 %v3997, 111
      %v4002 = vpop.permute.xlu0 %4001
      %4003 = vrot.lane.b32.xlu0 %v3998, 111
      %v4004 = vpop.permute.xlu0 %4003
      %v4005 = vsel %vm716, %v4000, %v4002
      %v4006 = vsel %vm716, %v4002, %v4004
      %v4009 = vunpack.c.l.b16 %v2361
      %v4010 = vunpack.c.h.b16 %v2361
      %v4011 = vunpack.c.l.b16 %v2362
      %v4012 = vpack.c.b16 %v4009, %v4009
      %v4013 = vpack.c.b16 %v4010, %v4010
      %v4014 = vpack.c.b16 %v4011, %v4011
      %v4015 = vrot.slane %v4012, 7
      %v4016 = vrot.slane %v4013, 7
      %v4017 = vrot.slane %v4014, 7
      %4018 = vrot.lane.b32.xlu0 %v4015, 110
      %v4019 = vpop.permute.xlu0 %4018
      %4020 = vrot.lane.b32.xlu0 %v4016, 110
      %v4021 = vpop.permute.xlu0 %4020
      %4022 = vrot.lane.b32.xlu0 %v4017, 110
      %v4023 = vpop.permute.xlu0 %4022
      %v4024 = vsel %vm736, %v4019, %v4021
      %v4025 = vsel %vm736, %v4021, %v4023
      %v4027 = vrot.slane 0, 4
      %4028 = vrot.lane.b32.xlu0 %v2449, 109
      %v4029 = vpop.permute.xlu0 %4028
      %4030 = vrot.lane.b32.xlu0 %v2450, 109
      %v4031 = vpop.permute.xlu0 %4030
      %4032 = vrot.lane.b32.xlu0 %v4027, 109
      %v4033 = vpop.permute.xlu0 %4032
      %v4034 = vsel %vm2608, %v4029, %v4031
      %v4035 = vsel %vm2608, %v4031, %v4033
      %v4038 = vunpack.c.l.b16 %v2366
      %v4039 = vunpack.c.h.b16 %v2366
      %v4040 = vunpack.c.l.b16 %v2367
      %v4041 = vpack.c.b16 %v4038, %v4038
      %v4042 = vpack.c.b16 %v4039, %v4039
      %v4043 = vpack.c.b16 %v4040, %v4040
      %v4044 = vrot.slane %v4041, 1
      %v4045 = vrot.slane %v4042, 1
      %v4046 = vrot.slane %v4043, 1
      %4047 = vrot.lane.b32.xlu0 %v4044, 108
      %v4048 = vpop.permute.xlu0 %4047
      %4049 = vrot.lane.b32.xlu0 %v4045, 108
      %v4050 = vpop.permute.xlu0 %4049
      %4051 = vrot.lane.b32.xlu0 %v4046, 108
      %v4052 = vpop.permute.xlu0 %4051
      %v4053 = vsel %vm2620, %v4048, %v4050
      %v4054 = vsel %vm2620, %v4050, %v4052
      %v4057 = vunpack.c.l.b16 %v2371
      %v4058 = vunpack.c.h.b16 %v2371
      %v4059 = vunpack.c.l.b16 %v2372
      %v4060 = vpack.c.b16 %v4057, %v4057
      %v4061 = vpack.c.b16 %v4058, %v4058
      %v4062 = vpack.c.b16 %v4059, %v4059
      %v4063 = vrot.slane %v4060, 6
      %v4064 = vrot.slane %v4061, 6
      %v4065 = vrot.slane %v4062, 6
      %4066 = vrot.lane.b32.xlu0 %v4063, 107
      %v4067 = vpop.permute.xlu0 %4066
      %4068 = vrot.lane.b32.xlu0 %v4064, 107
      %v4069 = vpop.permute.xlu0 %4068
      %4070 = vrot.lane.b32.xlu0 %v4065, 107
      %v4071 = vpop.permute.xlu0 %4070
      %v4072 = vsel %vm2640, %v4067, %v4069
      %v4073 = vsel %vm2640, %v4069, %v4071
      %v4076 = vunpack.c.l.b16 %v2376
      %v4077 = vunpack.c.h.b16 %v2376
      %v4078 = vunpack.c.l.b16 %v2377
      %v4079 = vpack.c.b16 %v4076, %v4076
      %v4080 = vpack.c.b16 %v4077, %v4077
      %v4081 = vpack.c.b16 %v4078, %v4078
      %v4082 = vrot.slane %v4079, 3
      %v4083 = vrot.slane %v4080, 3
      %v4084 = vrot.slane %v4081, 3
      %4085 = vrot.lane.b32.xlu0 %v4082, 106
      %v4086 = vpop.permute.xlu0 %4085
      %4087 = vrot.lane.b32.xlu0 %v4083, 106
      %v4088 = vpop.permute.xlu0 %4087
      %4089 = vrot.lane.b32.xlu0 %v4084, 106
      %v4090 = vpop.permute.xlu0 %4089
      %v4091 = vsel %vm2660, %v4086, %v4088
      %v4092 = vsel %vm2660, %v4088, %v4090
      %v4095 = vsel %vm1046, %v3834, %v3854
      %v4098 = vsel %vm1046, %v3835, %v3855
      %v4101 = vsel %vm1046, %v3836, %v3853
      %v4103 = vsel %vm797, %v4095, %v3873
      %v4105 = vsel %vm797, %v4098, %v3874
      %v4107 = vsel %vm797, %v4101, %v3872
      %v4109 = vsel %vm1059, %v3873, %v3884
      %v4111 = vsel %vm1059, %v3874, %v3885
      %v4113 = vsel %vm1059, %v3872, %v3883
      %v4115 = vsel %vm792, %v4109, %v3900
      %v4117 = vsel %vm792, %v4111, %v3901
      %v4119 = vsel %vm792, %v4113, %v3899
      %v4121 = vsel %vm1068, %v4115, %v3919
      %v4123 = vsel %vm1068, %v4117, %v3920
      %v4125 = vsel %vm1068, %v4119, %v3918
      %v4127 = vsel %vm785, %v3919, %v3938
      %v4129 = vsel %vm785, %v3920, %v3939
      %v4131 = vsel %vm785, %v3918, %v3937
      %v4133 = vsel %vm1079, %v4127, %v3957
      %v4135 = vsel %vm1079, %v4129, %v3958
      %v4137 = vsel %vm1079, %v4131, %v3956
      %v4140 = vsel %vm1046, %v3965, %v3981
      %v4143 = vsel %vm1046, %v3968, %v3986
      %v4146 = vsel %vm1046, %v3967, %v3987
      %v4148 = vsel %vm797, %v4140, %v4000
      %v4150 = vsel %vm797, %v4143, %v4005
      %v4152 = vsel %vm797, %v4146, %v4006
      %v4154 = vsel %vm1059, %v4000, %v4019
      %v4156 = vsel %vm1059, %v4005, %v4024
      %v4158 = vsel %vm1059, %v4006, %v4025
      %v4160 = vsel %vm792, %v4154, %v4029
      %v4162 = vsel %vm792, %v4156, %v4034
      %v4164 = vsel %vm792, %v4158, %v4035
      %v4166 = vsel %vm1068, %v4160, %v4048
      %v4168 = vsel %vm1068, %v4162, %v4053
      %v4170 = vsel %vm1068, %v4164, %v4054
      %v4172 = vsel %vm785, %v4048, %v4067
      %v4174 = vsel %vm785, %v4053, %v4072
      %v4176 = vsel %vm785, %v4054, %v4073
      %v4178 = vsel %vm1079, %v4172, %v4086
      %v4180 = vsel %vm1079, %v4174, %v4091
      %v4182 = vsel %vm1079, %v4176, %v4092
      %4201 = vrot.lane.b32.xlu0 %v3025, 105
      %v4202 = vpop.permute.xlu0 %4201
      %4203 = vrot.lane.b32.xlu0 %v3027, 105
      %v4204 = vpop.permute.xlu0 %4203
      %4205 = vrot.lane.b32.xlu0 %v3029, 105
      %v4206 = vpop.permute.xlu0 %4205
      %4207 = vrot.lane.b32.xlu0 %v3043, 105
      %v4208 = vpop.permute.xlu0 %4207
      %4209 = vrot.lane.b32.xlu0 %v3045, 105
      %v4210 = vpop.permute.xlu0 %4209
      %4211 = vrot.lane.b32.xlu0 %v3047, 105
      %v4212 = vpop.permute.xlu0 %4211
      %4213 = vrot.lane.b32.xlu0 %v3055, 105
      %v4214 = vpop.permute.xlu0 %4213
      %4215 = vrot.lane.b32.xlu0 %v3057, 105
      %v4216 = vpop.permute.xlu0 %4215
      %4217 = vrot.lane.b32.xlu0 %v3059, 105
      %v4218 = vpop.permute.xlu0 %4217
      %4219 = vrot.lane.b32.xlu0 %v3070, 105
      %v4220 = vpop.permute.xlu0 %4219
      %4221 = vrot.lane.b32.xlu0 %v3072, 105
      %v4222 = vpop.permute.xlu0 %4221
      %4223 = vrot.lane.b32.xlu0 %v3074, 105
      %v4224 = vpop.permute.xlu0 %4223
      %4225 = vrot.lane.b32.xlu0 %v3088, 105
      %v4226 = vpop.permute.xlu0 %4225
      %4227 = vrot.lane.b32.xlu0 %v3090, 105
      %v4228 = vpop.permute.xlu0 %4227
      %4229 = vrot.lane.b32.xlu0 %v3092, 105
      %v4230 = vpop.permute.xlu0 %4229
      %4231 = vrot.lane.b32.xlu0 %v3100, 105
      %v4232 = vpop.permute.xlu0 %4231
      %4233 = vrot.lane.b32.xlu0 %v3102, 105
      %v4234 = vpop.permute.xlu0 %4233
      %4235 = vrot.lane.b32.xlu0 %v3104, 105
      %v4236 = vpop.permute.xlu0 %4235
      %vm4237 = vcmask 859136
      %v4238 = vsel %vm4237, %v4202, %v4204
      %v4239 = vsel %vm4237, %v4204, %v4206
      %v4240 = vsel %vm4237, %v4208, %v4210
      %v4241 = vsel %vm4237, %v4210, %v4212
      %v4242 = vsel %vm4237, %v4214, %v4216
      %v4243 = vsel %vm4237, %v4216, %v4218
      %v4244 = vsel %vm4237, %v4220, %v4222
      %v4245 = vsel %vm4237, %v4222, %v4224
      %v4246 = vsel %vm4237, %v4226, %v4228
      %v4247 = vsel %vm4237, %v4228, %v4230
      %v4248 = vsel %vm4237, %v4232, %v4234
      %v4249 = vsel %vm4237, %v4234, %v4236
      %4280 = vrot.lane.b32.xlu0 %v3391, 75
      %v4281 = vpop.permute.xlu0 %4280
      %4282 = vrot.lane.b32.xlu0 %v3393, 75
      %v4283 = vpop.permute.xlu0 %4282
      %4284 = vrot.lane.b32.xlu0 %v3395, 75
      %v4285 = vpop.permute.xlu0 %4284
      %4286 = vrot.lane.b32.xlu0 %v3409, 75
      %v4287 = vpop.permute.xlu0 %4286
      %4288 = vrot.lane.b32.xlu0 %v3411, 75
      %v4289 = vpop.permute.xlu0 %4288
      %4290 = vrot.lane.b32.xlu0 %v3413, 75
      %v4291 = vpop.permute.xlu0 %4290
      %4292 = vrot.lane.b32.xlu0 %v3421, 75
      %v4293 = vpop.permute.xlu0 %4292
      %4294 = vrot.lane.b32.xlu0 %v3423, 75
      %v4295 = vpop.permute.xlu0 %4294
      %4296 = vrot.lane.b32.xlu0 %v3425, 75
      %v4297 = vpop.permute.xlu0 %4296
      %4298 = vrot.lane.b32.xlu0 %v3436, 75
      %v4299 = vpop.permute.xlu0 %4298
      %4300 = vrot.lane.b32.xlu0 %v3438, 75
      %v4301 = vpop.permute.xlu0 %4300
      %4302 = vrot.lane.b32.xlu0 %v3440, 75
      %v4303 = vpop.permute.xlu0 %4302
      %4304 = vrot.lane.b32.xlu0 %v3454, 75
      %v4305 = vpop.permute.xlu0 %4304
      %4306 = vrot.lane.b32.xlu0 %v3456, 75
      %v4307 = vpop.permute.xlu0 %4306
      %4308 = vrot.lane.b32.xlu0 %v3458, 75
      %v4309 = vpop.permute.xlu0 %4308
      %4310 = vrot.lane.b32.xlu0 %v3466, 75
      %v4311 = vpop.permute.xlu0 %4310
      %4312 = vrot.lane.b32.xlu0 %v3468, 75
      %v4313 = vpop.permute.xlu0 %4312
      %4314 = vrot.lane.b32.xlu0 %v3470, 75
      %v4315 = vpop.permute.xlu0 %4314
      %vm4316 = vcmask 613376
      %v4317 = vsel %vm4316, %v4281, %v4283
      %v4318 = vsel %vm4316, %v4283, %v4285
      %v4319 = vsel %vm4316, %v4287, %v4289
      %v4320 = vsel %vm4316, %v4289, %v4291
      %v4321 = vsel %vm4316, %v4293, %v4295
      %v4322 = vsel %vm4316, %v4295, %v4297
      %v4323 = vsel %vm4316, %v4299, %v4301
      %v4324 = vsel %vm4316, %v4301, %v4303
      %v4325 = vsel %vm4316, %v4305, %v4307
      %v4326 = vsel %vm4316, %v4307, %v4309
      %v4327 = vsel %vm4316, %v4311, %v4313
      %v4328 = vsel %vm4316, %v4313, %v4315
      %4359 = vrot.lane.b32.xlu0 %v3749, 45
      %v4360 = vpop.permute.xlu0 %4359
      %4361 = vrot.lane.b32.xlu0 %v3751, 45
      %v4362 = vpop.permute.xlu0 %4361
      %4363 = vrot.lane.b32.xlu0 %v3753, 45
      %v4364 = vpop.permute.xlu0 %4363
      %4365 = vrot.lane.b32.xlu0 %v3767, 45
      %v4366 = vpop.permute.xlu0 %4365
      %4367 = vrot.lane.b32.xlu0 %v3769, 45
      %v4368 = vpop.permute.xlu0 %4367
      %4369 = vrot.lane.b32.xlu0 %v3771, 45
      %v4370 = vpop.permute.xlu0 %4369
      %4371 = vrot.lane.b32.xlu0 %v3779, 45
      %v4372 = vpop.permute.xlu0 %4371
      %4373 = vrot.lane.b32.xlu0 %v3781, 45
      %v4374 = vpop.permute.xlu0 %4373
      %4375 = vrot.lane.b32.xlu0 %v3783, 45
      %v4376 = vpop.permute.xlu0 %4375
      %4377 = vrot.lane.b32.xlu0 %v3794, 45
      %v4378 = vpop.permute.xlu0 %4377
      %4379 = vrot.lane.b32.xlu0 %v3796, 45
      %v4380 = vpop.permute.xlu0 %4379
      %4381 = vrot.lane.b32.xlu0 %v3798, 45
      %v4382 = vpop.permute.xlu0 %4381
      %4383 = vrot.lane.b32.xlu0 %v3812, 45
      %v4384 = vpop.permute.xlu0 %4383
      %4385 = vrot.lane.b32.xlu0 %v3814, 45
      %v4386 = vpop.permute.xlu0 %4385
      %4387 = vrot.lane.b32.xlu0 %v3816, 45
      %v4388 = vpop.permute.xlu0 %4387
      %4389 = vrot.lane.b32.xlu0 %v3824, 45
      %v4390 = vpop.permute.xlu0 %4389
      %4391 = vrot.lane.b32.xlu0 %v3826, 45
      %v4392 = vpop.permute.xlu0 %4391
      %4393 = vrot.lane.b32.xlu0 %v3828, 45
      %v4394 = vpop.permute.xlu0 %4393
      %vm4395 = vcmask 367616
      %v4396 = vsel %vm4395, %v4360, %v4362
      %v4397 = vsel %vm4395, %v4362, %v4364
      %v4398 = vsel %vm4395, %v4366, %v4368
      %v4399 = vsel %vm4395, %v4368, %v4370
      %v4400 = vsel %vm4395, %v4372, %v4374
      %v4401 = vsel %vm4395, %v4374, %v4376
      %v4402 = vsel %vm4395, %v4378, %v4380
      %v4403 = vsel %vm4395, %v4380, %v4382
      %v4404 = vsel %vm4395, %v4384, %v4386
      %v4405 = vsel %vm4395, %v4386, %v4388
      %v4406 = vsel %vm4395, %v4390, %v4392
      %v4407 = vsel %vm4395, %v4392, %v4394
      %4438 = vrot.lane.b32.xlu0 %v4103, 15
      %v4439 = vpop.permute.xlu0 %4438
      %4440 = vrot.lane.b32.xlu0 %v4105, 15
      %v4441 = vpop.permute.xlu0 %4440
      %4442 = vrot.lane.b32.xlu0 %v4107, 15
      %v4443 = vpop.permute.xlu0 %4442
      %4444 = vrot.lane.b32.xlu0 %v4121, 15
      %v4445 = vpop.permute.xlu0 %4444
      %4446 = vrot.lane.b32.xlu0 %v4123, 15
      %v4447 = vpop.permute.xlu0 %4446
      %4448 = vrot.lane.b32.xlu0 %v4125, 15
      %v4449 = vpop.permute.xlu0 %4448
      %4450 = vrot.lane.b32.xlu0 %v4133, 15
      %v4451 = vpop.permute.xlu0 %4450
      %4452 = vrot.lane.b32.xlu0 %v4135, 15
      %v4453 = vpop.permute.xlu0 %4452
      %4454 = vrot.lane.b32.xlu0 %v4137, 15
      %v4455 = vpop.permute.xlu0 %4454
      %4456 = vrot.lane.b32.xlu0 %v4148, 15
      %v4457 = vpop.permute.xlu0 %4456
      %4458 = vrot.lane.b32.xlu0 %v4150, 15
      %v4459 = vpop.permute.xlu0 %4458
      %4460 = vrot.lane.b32.xlu0 %v4152, 15
      %v4461 = vpop.permute.xlu0 %4460
      %4462 = vrot.lane.b32.xlu0 %v4166, 15
      %v4463 = vpop.permute.xlu0 %4462
      %4464 = vrot.lane.b32.xlu0 %v4168, 15
      %v4465 = vpop.permute.xlu0 %4464
      %4466 = vrot.lane.b32.xlu0 %v4170, 15
      %v4467 = vpop.permute.xlu0 %4466
      %4468 = vrot.lane.b32.xlu0 %v4178, 15
      %v4469 = vpop.permute.xlu0 %4468
      %4470 = vrot.lane.b32.xlu0 %v4180, 15
      %v4471 = vpop.permute.xlu0 %4470
      %4472 = vrot.lane.b32.xlu0 %v4182, 15
      %v4473 = vpop.permute.xlu0 %4472
      %vm4474 = vcmask 121856
      %v4475 = vsel %vm4474, %v4439, %v4441
      %v4476 = vsel %vm4474, %v4441, %v4443
      %v4477 = vsel %vm4474, %v4445, %v4447
      %v4478 = vsel %vm4474, %v4447, %v4449
      %v4479 = vsel %vm4474, %v4451, %v4453
      %v4480 = vsel %vm4474, %v4453, %v4455
      %v4481 = vsel %vm4474, %v4457, %v4459
      %v4482 = vsel %vm4474, %v4459, %v4461
      %v4483 = vsel %vm4474, %v4463, %v4465
      %v4484 = vsel %vm4474, %v4465, %v4467
      %v4485 = vsel %vm4474, %v4469, %v4471
      %v4486 = vsel %vm4474, %v4471, %v4473
      %v4501 = vunpack.c.l.b16 %v2381
      %v4502 = vunpack.c.h.b16 %v2381
      %v4503 = vunpack.c.l.b16 %v2382
      %v4504 = vpack.c.b16 %v4501, %v4501
      %v4505 = vpack.c.b16 %v4502, %v4502
      %v4506 = vpack.c.b16 %v4503, %v4503
      %4507 = vrot.lane.b32.xlu0 %v4504, 120
      %v4508 = vpop.permute.xlu0 %4507
      %4509 = vrot.lane.b32.xlu0 %v4505, 120
      %v4510 = vpop.permute.xlu0 %4509
      %4511 = vrot.lane.b32.xlu0 %v4506, 120
      %v4512 = vpop.permute.xlu0 %4511
      %v4513 = vsel %vm2534, %v4508, %v4510
      %v4514 = vsel %vm2534, %v4510, %v4512
      %v4515 = vld [vmem:[%s8] sm:$0xff]
      %v4516 = vld [vmem:[%s8 + $0x8] sm:$0xff]
      %v4517 = vld [vmem:[%s8 + $0x10] sm:$0xff]
      %v4518 = vld [vmem:[%s8 + $0x18] sm:$0xff]
      %v4519 = vld [vmem:[%s8 + $0x20] sm:$0xff]
      %v4520 = vld [vmem:[%s8 + $0x28] sm:$0xff]
      %v4521 = vld [vmem:[%s8 + $0x30] sm:$0xff]
      %v4522 = vld [vmem:[%s8 + $0x38] sm:$0xff]
      %v4523 = vld [vmem:[%s8 + $0x40] sm:$0xff]
      %v4524 = vld [vmem:[%s8 + $0x48] sm:$0xff]
      %v4525 = vld [vmem:[%s8 + $0x50] sm:$0xff]
      %v4526 = vld [vmem:[%s8 + $0x58] sm:$0xff]
      %v4527 = vld [vmem:[%s8 + $0x60] sm:$0xff]
      %v4528 = vld [vmem:[%s8 + $0x68] sm:$0xff]
      %v4529 = vld [vmem:[%s8 + $0x70] sm:$0xff]
      %v4530 = vld [vmem:[%s8 + $0x78] sm:$0xff]
      %v4531 = vld [vmem:[%s8 + $0x80] sm:$0xff]
      %v4532 = vld [vmem:[%s8 + $0x88] sm:$0xff]
      %v4533 = vld [vmem:[%s8 + $0x90] sm:$0xff]
      %v4534 = vld [vmem:[%s8 + $0x98] sm:$0xff]
      %v4535 = vld [vmem:[%s8 + $0xa0] sm:$0xff]
      %v4536 = vld [vmem:[%s8 + $0xa8] sm:$0xff]
      %v4537 = vld [vmem:[%s8 + $0xb0] sm:$0xff]
      %v4538 = vld [vmem:[%s8 + $0xb8] sm:$0xff]
      %v4539 = vld [vmem:[%s9] sm:$0xff]
      %v4540 = vld [vmem:[%s9 + $0x8] sm:$0xff]
      %v4541 = vld [vmem:[%s9 + $0x10] sm:$0xff]
      %v4542 = vld [vmem:[%s9 + $0x18] sm:$0xff]
      %v4543 = vld [vmem:[%s9 + $0x20] sm:$0xff]
      %v4544 = vld [vmem:[%s9 + $0x28] sm:$0xff]
      %v4545 = vld [vmem:[%s9 + $0x30] sm:$0xff]
      %v4546 = vld [vmem:[%s9 + $0x38] sm:$0xff]
      %v4547 = vld [vmem:[%s9 + $0x40] sm:$0xff]
      %v4548 = vld [vmem:[%s9 + $0x48] sm:$0xff]
      %v4549 = vld [vmem:[%s9 + $0x50] sm:$0xff]
      %v4550 = vld [vmem:[%s9 + $0x58] sm:$0xff]
      %4552 = vset.pattern.permute.xlu0 0
      %4553 = vperm.xlu0 %4552, %v4539
      %v4554 = vpop.permute.xlu0 %4553
      %4557 = vset.pattern.permute.xlu0 0
      %4558 = vperm.xlu0 %4557, %v4540
      %v4559 = vpop.permute.xlu0 %4558
      %4562 = vset.pattern.permute.xlu0 0
      %4563 = vperm.xlu0 %4562, %v4541
      %v4564 = vpop.permute.xlu0 %4563
      %4567 = vset.pattern.permute.xlu0 0
      %4568 = vperm.xlu0 %4567, %v4542
      %v4569 = vpop.permute.xlu0 %4568
      %4572 = vset.pattern.permute.xlu0 0
      %4573 = vperm.xlu0 %4572, %v4543
      %v4574 = vpop.permute.xlu0 %4573
      %4577 = vset.pattern.permute.xlu0 0
      %4578 = vperm.xlu0 %4577, %v4544
      %v4579 = vpop.permute.xlu0 %4578
      %4582 = vset.pattern.permute.xlu0 0
      %4583 = vperm.xlu0 %4582, %v4545
      %v4584 = vpop.permute.xlu0 %4583
      %4587 = vset.pattern.permute.xlu0 0
      %4588 = vperm.xlu0 %4587, %v4546
      %v4589 = vpop.permute.xlu0 %4588
      %4592 = vset.pattern.permute.xlu0 0
      %4593 = vperm.xlu0 %4592, %v4547
      %v4594 = vpop.permute.xlu0 %4593
      %4597 = vset.pattern.permute.xlu0 0
      %4598 = vperm.xlu0 %4597, %v4548
      %v4599 = vpop.permute.xlu0 %4598
      %4602 = vset.pattern.permute.xlu0 0
      %4603 = vperm.xlu0 %4602, %v4549
      %v4604 = vpop.permute.xlu0 %4603
      %4607 = vset.pattern.permute.xlu0 0
      %4608 = vperm.xlu0 %4607, %v4550
      %v4609 = vpop.permute.xlu0 %4608
      %v4635 = vunpack.c.l.b16 %v4515
      %v4636 = vunpack.c.h.b16 %v4515
      %v4637 = vunpack.c.l.b16 %v4516
      %v4638 = vunpack.c.h.b16 %v4516
      %v4639 = vunpack.c.l.b16 %v4517
      %v4640 = vunpack.c.h.b16 %v4517
      %v4641 = vunpack.c.l.b16 %v4518
      %v4642 = vunpack.c.h.b16 %v4518
      %v4643 = vunpack.c.l.b16 %v4519
      %v4644 = vunpack.c.h.b16 %v4519
      %v4645 = vunpack.c.l.b16 %v4520
      %v4646 = vunpack.c.h.b16 %v4520
      %v4647 = vunpack.c.l.b16 %v4521
      %v4648 = vunpack.c.h.b16 %v4521
      %v4649 = vunpack.c.l.b16 %v4522
      %v4650 = vunpack.c.h.b16 %v4522
      %v4651 = vunpack.c.l.b16 %v4523
      %v4652 = vunpack.c.h.b16 %v4523
      %v4653 = vunpack.c.l.b16 %v4524
      %v4654 = vunpack.c.h.b16 %v4524
      %v4655 = vunpack.c.l.b16 %v4525
      %v4656 = vunpack.c.h.b16 %v4525
      %v4657 = vunpack.c.l.b16 %v4526
      %v4658 = vunpack.c.h.b16 %v4526
      %v4659 = vunpack.c.l.b16 %v4527
      %v4660 = vunpack.c.h.b16 %v4527
      %v4661 = vunpack.c.l.b16 %v4528
      %v4662 = vunpack.c.h.b16 %v4528
      %v4663 = vunpack.c.l.b16 %v4529
      %v4664 = vunpack.c.h.b16 %v4529
      %v4665 = vunpack.c.l.b16 %v4530
      %v4666 = vunpack.c.h.b16 %v4530
      %v4667 = vunpack.c.l.b16 %v4531
      %v4668 = vunpack.c.h.b16 %v4531
      %v4669 = vunpack.c.l.b16 %v4532
      %v4670 = vunpack.c.h.b16 %v4532
      %v4671 = vunpack.c.l.b16 %v4533
      %v4672 = vunpack.c.h.b16 %v4533
      %v4673 = vunpack.c.l.b16 %v4534
      %v4674 = vunpack.c.h.b16 %v4534
      %v4675 = vunpack.c.l.b16 %v4535
      %v4676 = vunpack.c.h.b16 %v4535
      %v4677 = vunpack.c.l.b16 %v4536
      %v4678 = vunpack.c.h.b16 %v4536
      %v4679 = vunpack.c.l.b16 %v4537
      %v4680 = vunpack.c.h.b16 %v4537
      %v4681 = vunpack.c.l.b16 %v4538
      %v4682 = vunpack.c.h.b16 %v4538
      %v4683 = vpack.c.b16 %v4639, %v4635
      %v4684 = vpack.c.b16 %v4640, %v4636
      %v4685 = vpack.c.b16 %v4641, %v4637
      %v4686 = vpack.c.b16 %v4642, %v4638
      %v4687 = vpack.c.b16 %v4647, %v4643
      %v4688 = vpack.c.b16 %v4648, %v4644
      %v4689 = vpack.c.b16 %v4649, %v4645
      %v4690 = vpack.c.b16 %v4650, %v4646
      %v4691 = vpack.c.b16 %v4655, %v4651
      %v4692 = vpack.c.b16 %v4656, %v4652
      %v4693 = vpack.c.b16 %v4657, %v4653
      %v4694 = vpack.c.b16 %v4658, %v4654
      %v4695 = vpack.c.b16 %v4663, %v4659
      %v4696 = vpack.c.b16 %v4664, %v4660
      %v4697 = vpack.c.b16 %v4665, %v4661
      %v4698 = vpack.c.b16 %v4666, %v4662
      %v4699 = vpack.c.b16 %v4671, %v4667
      %v4700 = vpack.c.b16 %v4672, %v4668
      %v4701 = vpack.c.b16 %v4673, %v4669
      %v4702 = vpack.c.b16 %v4674, %v4670
      %v4703 = vpack.c.b16 %v4679, %v4675
      %v4704 = vpack.c.b16 %v4680, %v4676
      %v4705 = vpack.c.b16 %v4681, %v4677
      %v4706 = vpack.c.b16 %v4682, %v4678
      %v4726 = vsel %vm2194, %v4686, 0
      %v4729 = vsel %vm2194, %v4690, 0
      %v4732 = vsel %vm2194, %v4694, 0
      %v4735 = vsel %vm2194, %v4698, 0
      %v4738 = vsel %vm2194, %v4702, 0
      %v4741 = vsel %vm2194, %v4706, 0
      %v4744 = vsel %vm1046, %v4513, 0
      %v4747 = vsel %vm1046, %v4514, 0
      %4749 = vmatpush.bf16.msra.mxu0 %v4240
      %4750 = vmatpush.bf16.msra.mxu0 %v4238
      %4751 = vmatpush.bf16.msra.mxu0 %v2730
      %4752 = vmatpush.bf16.msra.mxu0 %v2720
      %4753 = vmatpush.bf16.msra.mxu0 %v2706
      %4754 = vmatpush.bf16.msra.mxu0 %v2694
      %4755 = vmatpush.bf16.msra.mxu0 %v2684
      %4756 = vmatpush.bf16.msra.mxu0 %v2670
      %4757 = vmatmul.bf16.gmra.mxu0 %v4683
      %v4758 = vpop.f32.mrf.mxu0
      %v4759 = vadd.f32 %v4554, %v4758
      %v4760 = vpop.f32.mrf.mxu0
      %v4761 = vadd.f32 %v4559, %v4760
      %4762 = vmatmul.bf16.gmra.mxu0 %v4687
      %v4763 = vpop.f32.mrf.mxu0
      %v4764 = vadd.f32 %v4564, %v4763
      %v4765 = vpop.f32.mrf.mxu0
      %v4766 = vadd.f32 %v4569, %v4765
      %4767 = vmatmul.bf16.gmra.mxu0 %v4691
      %v4768 = vpop.f32.mrf.mxu0
      %v4769 = vadd.f32 %v4574, %v4768
      %v4770 = vpop.f32.mrf.mxu0
      %v4771 = vadd.f32 %v4579, %v4770
      %4772 = vmatmul.bf16.gmra.mxu0 %v4695
      %v4773 = vpop.f32.mrf.mxu0
      %v4774 = vadd.f32 %v4584, %v4773
      %v4775 = vpop.f32.mrf.mxu0
      %v4776 = vadd.f32 %v4589, %v4775
      %4777 = vmatmul.bf16.gmra.mxu0 %v4699
      %v4778 = vpop.f32.mrf.mxu0
      %v4779 = vadd.f32 %v4594, %v4778
      %v4780 = vpop.f32.mrf.mxu0
      %v4781 = vadd.f32 %v4599, %v4780
      %4782 = vmatmul.bf16.gmra.mxu0 %v4703
      %v4783 = vpop.f32.mrf.mxu0
      %v4784 = vadd.f32 %v4604, %v4783
      %v4785 = vpop.f32.mrf.mxu0
      %v4786 = vadd.f32 %v4609, %v4785
      %4787 = vdwg.mxu0
      %4788 = vmatpush.bf16.msra.mxu0 %v4323
      %4789 = vmatpush.bf16.msra.mxu0 %v4321
      %4790 = vmatpush.bf16.msra.mxu0 %v4319
      %4791 = vmatpush.bf16.msra.mxu0 %v4317
      %4792 = vmatpush.bf16.msra.mxu0 %v4248
      %4793 = vmatpush.bf16.msra.mxu0 %v4246
      %4794 = vmatpush.bf16.msra.mxu0 %v4244
      %4795 = vmatpush.bf16.msra.mxu0 %v4242
      %4796 = vmatmul.bf16.gmra.mxu0 %v4684
      %v4797 = vpop.f32.mrf.mxu0
      %v4798 = vadd.f32 %v4759, %v4797
      %v4799 = vpop.f32.mrf.mxu0
      %v4800 = vadd.f32 %v4761, %v4799
      %4801 = vmatmul.bf16.gmra.mxu0 %v4688
      %v4802 = vpop.f32.mrf.mxu0
      %v4803 = vadd.f32 %v4764, %v4802
      %v4804 = vpop.f32.mrf.mxu0
      %v4805 = vadd.f32 %v4766, %v4804
      %4806 = vmatmul.bf16.gmra.mxu0 %v4692
      %v4807 = vpop.f32.mrf.mxu0
      %v4808 = vadd.f32 %v4769, %v4807
      %v4809 = vpop.f32.mrf.mxu0
      %v4810 = vadd.f32 %v4771, %v4809
      %4811 = vmatmul.bf16.gmra.mxu0 %v4696
      %v4812 = vpop.f32.mrf.mxu0
      %v4813 = vadd.f32 %v4774, %v4812
      %v4814 = vpop.f32.mrf.mxu0
      %v4815 = vadd.f32 %v4776, %v4814
      %4816 = vmatmul.bf16.gmra.mxu0 %v4700
      %v4817 = vpop.f32.mrf.mxu0
      %v4818 = vadd.f32 %v4779, %v4817
      %v4819 = vpop.f32.mrf.mxu0
      %v4820 = vadd.f32 %v4781, %v4819
      %4821 = vmatmul.bf16.gmra.mxu0 %v4704
      %v4822 = vpop.f32.mrf.mxu0
      %v4823 = vadd.f32 %v4784, %v4822
      %v4824 = vpop.f32.mrf.mxu0
      %v4825 = vadd.f32 %v4786, %v4824
      %4826 = vdwg.mxu0
      %4827 = vmatpush.bf16.msra.mxu0 %v4406
      %4828 = vmatpush.bf16.msra.mxu0 %v4404
      %4829 = vmatpush.bf16.msra.mxu0 %v4402
      %4830 = vmatpush.bf16.msra.mxu0 %v4400
      %4831 = vmatpush.bf16.msra.mxu0 %v4398
      %4832 = vmatpush.bf16.msra.mxu0 %v4396
      %4833 = vmatpush.bf16.msra.mxu0 %v4327
      %4834 = vmatpush.bf16.msra.mxu0 %v4325
      %4835 = vmatmul.bf16.gmra.mxu0 %v4685
      %v4836 = vpop.f32.mrf.mxu0
      %v4837 = vadd.f32 %v4798, %v4836
      %v4838 = vpop.f32.mrf.mxu0
      %v4839 = vadd.f32 %v4800, %v4838
      %4840 = vmatmul.bf16.gmra.mxu0 %v4689
      %v4841 = vpop.f32.mrf.mxu0
      %v4842 = vadd.f32 %v4803, %v4841
      %v4843 = vpop.f32.mrf.mxu0
      %v4844 = vadd.f32 %v4805, %v4843
      %4845 = vmatmul.bf16.gmra.mxu0 %v4693
      %v4846 = vpop.f32.mrf.mxu0
      %v4847 = vadd.f32 %v4808, %v4846
      %v4848 = vpop.f32.mrf.mxu0
      %v4849 = vadd.f32 %v4810, %v4848
      %4850 = vmatmul.bf16.gmra.mxu0 %v4697
      %v4851 = vpop.f32.mrf.mxu0
      %v4852 = vadd.f32 %v4813, %v4851
      %v4853 = vpop.f32.mrf.mxu0
      %v4854 = vadd.f32 %v4815, %v4853
      %4855 = vmatmul.bf16.gmra.mxu0 %v4701
      %v4856 = vpop.f32.mrf.mxu0
      %v4857 = vadd.f32 %v4818, %v4856
      %v4858 = vpop.f32.mrf.mxu0
      %v4859 = vadd.f32 %v4820, %v4858
      %4860 = vmatmul.bf16.gmra.mxu0 %v4705
      %v4861 = vpop.f32.mrf.mxu0
      %v4862 = vadd.f32 %v4823, %v4861
      %v4863 = vpop.f32.mrf.mxu0
      %v4864 = vadd.f32 %v4825, %v4863
      %4865 = vdwg.mxu0
      %4866 = vmatpush.bf16.msra.mxu0 0
      %4867 = vmatpush.bf16.msra.mxu0 %v4744
      %4868 = vmatpush.bf16.msra.mxu0 %v4485
      %4869 = vmatpush.bf16.msra.mxu0 %v4483
      %4870 = vmatpush.bf16.msra.mxu0 %v4481
      %4871 = vmatpush.bf16.msra.mxu0 %v4479
      %4872 = vmatpush.bf16.msra.mxu0 %v4477
      %4873 = vmatpush.bf16.msra.mxu0 %v4475
      %4874 = vmatmul.bf16.gmra.mxu0 %v4726
      %v4875 = vpop.f32.mrf.mxu0
      %v4876 = vadd.f32 %v4837, %v4875
      %v4877 = vpop.f32.mrf.mxu0
      %v4878 = vadd.f32 %v4839, %v4877
      %4879 = vmatmul.bf16.gmra.mxu0 %v4729
      %v4880 = vpop.f32.mrf.mxu0
      %v4881 = vadd.f32 %v4842, %v4880
      %v4882 = vpop.f32.mrf.mxu0
      %v4883 = vadd.f32 %v4844, %v4882
      %4884 = vmatmul.bf16.gmra.mxu0 %v4732
      %v4885 = vpop.f32.mrf.mxu0
      %v4886 = vadd.f32 %v4847, %v4885
      %v4887 = vpop.f32.mrf.mxu0
      %v4888 = vadd.f32 %v4849, %v4887
      %4889 = vmatmul.bf16.gmra.mxu0 %v4735
      %v4890 = vpop.f32.mrf.mxu0
      %v4891 = vadd.f32 %v4852, %v4890
      %v4892 = vpop.f32.mrf.mxu0
      %v4893 = vadd.f32 %v4854, %v4892
      %4894 = vmatmul.bf16.gmra.mxu0 %v4738
      %v4895 = vpop.f32.mrf.mxu0
      %v4896 = vadd.f32 %v4857, %v4895
      %v4897 = vpop.f32.mrf.mxu0
      %v4898 = vadd.f32 %v4859, %v4897
      %4899 = vmatmul.bf16.gmra.mxu0 %v4741
      %v4900 = vpop.f32.mrf.mxu0
      %v4901 = vadd.f32 %v4862, %v4900
      %v4902 = vpop.f32.mrf.mxu0
      %v4903 = vadd.f32 %v4864, %v4902
      %4904 = vdwg.mxu0
      %4905 = vmatpush.bf16.msra.mxu0 %v4241
      %4906 = vmatpush.bf16.msra.mxu0 %v4239
      %4907 = vmatpush.bf16.msra.mxu0 %v2733
      %4908 = vmatpush.bf16.msra.mxu0 %v2723
      %4909 = vmatpush.bf16.msra.mxu0 %v2709
      %4910 = vmatpush.bf16.msra.mxu0 %v2697
      %4911 = vmatpush.bf16.msra.mxu0 %v2687
      %4912 = vmatpush.bf16.msra.mxu0 %v2673
      %4913 = vmatmul.bf16.gmra.mxu0 %v4683
      %v4914 = vpop.f32.mrf.mxu0
      %v4915 = vadd.f32 %v4554, %v4914
      %v4916 = vpop.f32.mrf.mxu0
      %v4917 = vadd.f32 %v4559, %v4916
      %4918 = vmatmul.bf16.gmra.mxu0 %v4687
      %v4919 = vpop.f32.mrf.mxu0
      %v4920 = vadd.f32 %v4564, %v4919
      %v4921 = vpop.f32.mrf.mxu0
      %v4922 = vadd.f32 %v4569, %v4921
      %4923 = vmatmul.bf16.gmra.mxu0 %v4691
      %v4924 = vpop.f32.mrf.mxu0
      %v4925 = vadd.f32 %v4574, %v4924
      %v4926 = vpop.f32.mrf.mxu0
      %v4927 = vadd.f32 %v4579, %v4926
      %4928 = vmatmul.bf16.gmra.mxu0 %v4695
      %v4929 = vpop.f32.mrf.mxu0
      %v4930 = vadd.f32 %v4584, %v4929
      %v4931 = vpop.f32.mrf.mxu0
      %v4932 = vadd.f32 %v4589, %v4931
      %4933 = vmatmul.bf16.gmra.mxu0 %v4699
      %v4934 = vpop.f32.mrf.mxu0
      %v4935 = vadd.f32 %v4594, %v4934
      %v4936 = vpop.f32.mrf.mxu0
      %v4937 = vadd.f32 %v4599, %v4936
      %4938 = vmatmul.bf16.gmra.mxu0 %v4703
      %v4939 = vpop.f32.mrf.mxu0
      %v4940 = vadd.f32 %v4604, %v4939
      %v4941 = vpop.f32.mrf.mxu0
      %v4942 = vadd.f32 %v4609, %v4941
      %4943 = vdwg.mxu0
      %4944 = vmatpush.bf16.msra.mxu0 %v4324
      %4945 = vmatpush.bf16.msra.mxu0 %v4322
      %4946 = vmatpush.bf16.msra.mxu0 %v4320
      %4947 = vmatpush.bf16.msra.mxu0 %v4318
      %4948 = vmatpush.bf16.msra.mxu0 %v4249
      %4949 = vmatpush.bf16.msra.mxu0 %v4247
      %4950 = vmatpush.bf16.msra.mxu0 %v4245
      %4951 = vmatpush.bf16.msra.mxu0 %v4243
      %4952 = vmatmul.bf16.gmra.mxu0 %v4684
      %v4953 = vpop.f32.mrf.mxu0
      %v4954 = vadd.f32 %v4915, %v4953
      %v4955 = vpop.f32.mrf.mxu0
      %v4956 = vadd.f32 %v4917, %v4955
      %4957 = vmatmul.bf16.gmra.mxu0 %v4688
      %v4958 = vpop.f32.mrf.mxu0
      %v4959 = vadd.f32 %v4920, %v4958
      %v4960 = vpop.f32.mrf.mxu0
      %v4961 = vadd.f32 %v4922, %v4960
      %4962 = vmatmul.bf16.gmra.mxu0 %v4692
      %v4963 = vpop.f32.mrf.mxu0
      %v4964 = vadd.f32 %v4925, %v4963
      %v4965 = vpop.f32.mrf.mxu0
      %v4966 = vadd.f32 %v4927, %v4965
      %4967 = vmatmul.bf16.gmra.mxu0 %v4696
      %v4968 = vpop.f32.mrf.mxu0
      %v4969 = vadd.f32 %v4930, %v4968
      %v4970 = vpop.f32.mrf.mxu0
      %v4971 = vadd.f32 %v4932, %v4970
      %4972 = vmatmul.bf16.gmra.mxu0 %v4700
      %v4973 = vpop.f32.mrf.mxu0
      %v4974 = vadd.f32 %v4935, %v4973
      %v4975 = vpop.f32.mrf.mxu0
      %v4976 = vadd.f32 %v4937, %v4975
      %4977 = vmatmul.bf16.gmra.mxu0 %v4704
      %v4978 = vpop.f32.mrf.mxu0
      %v4979 = vadd.f32 %v4940, %v4978
      %v4980 = vpop.f32.mrf.mxu0
      %v4981 = vadd.f32 %v4942, %v4980
      %4982 = vdwg.mxu0
      %4983 = vmatpush.bf16.msra.mxu0 %v4407
      %4984 = vmatpush.bf16.msra.mxu0 %v4405
      %4985 = vmatpush.bf16.msra.mxu0 %v4403
      %4986 = vmatpush.bf16.msra.mxu0 %v4401
      %4987 = vmatpush.bf16.msra.mxu0 %v4399
      %4988 = vmatpush.bf16.msra.mxu0 %v4397
      %4989 = vmatpush.bf16.msra.mxu0 %v4328
      %4990 = vmatpush.bf16.msra.mxu0 %v4326
      %4991 = vmatmul.bf16.gmra.mxu0 %v4685
      %v4992 = vpop.f32.mrf.mxu0
      %v4993 = vadd.f32 %v4954, %v4992
      %v4994 = vpop.f32.mrf.mxu0
      %v4995 = vadd.f32 %v4956, %v4994
      %4996 = vmatmul.bf16.gmra.mxu0 %v4689
      %v4997 = vpop.f32.mrf.mxu0
      %v4998 = vadd.f32 %v4959, %v4997
      %v4999 = vpop.f32.mrf.mxu0
      %v5000 = vadd.f32 %v4961, %v4999
      %5001 = vmatmul.bf16.gmra.mxu0 %v4693
      %v5002 = vpop.f32.mrf.mxu0
      %v5003 = vadd.f32 %v4964, %v5002
      %v5004 = vpop.f32.mrf.mxu0
      %v5005 = vadd.f32 %v4966, %v5004
      %5006 = vmatmul.bf16.gmra.mxu0 %v4697
      %v5007 = vpop.f32.mrf.mxu0
      %v5008 = vadd.f32 %v4969, %v5007
      %v5009 = vpop.f32.mrf.mxu0
      %v5010 = vadd.f32 %v4971, %v5009
      %5011 = vmatmul.bf16.gmra.mxu0 %v4701
      %v5012 = vpop.f32.mrf.mxu0
      %v5013 = vadd.f32 %v4974, %v5012
      %v5014 = vpop.f32.mrf.mxu0
      %v5015 = vadd.f32 %v4976, %v5014
      %5016 = vmatmul.bf16.gmra.mxu0 %v4705
      %v5017 = vpop.f32.mrf.mxu0
      %v5018 = vadd.f32 %v4979, %v5017
      %v5019 = vpop.f32.mrf.mxu0
      %v5020 = vadd.f32 %v4981, %v5019
      %5021 = vdwg.mxu0
      %5022 = vmatpush.bf16.msra.mxu0 0
      %5023 = vmatpush.bf16.msra.mxu0 %v4747
      %5024 = vmatpush.bf16.msra.mxu0 %v4486
      %5025 = vmatpush.bf16.msra.mxu0 %v4484
      %5026 = vmatpush.bf16.msra.mxu0 %v4482
      %5027 = vmatpush.bf16.msra.mxu0 %v4480
      %5028 = vmatpush.bf16.msra.mxu0 %v4478
      %5029 = vmatpush.bf16.msra.mxu0 %v4476
      %5030 = vmatmul.bf16.gmra.mxu0 %v4726
      %v5031 = vpop.f32.mrf.mxu0
      %v5032 = vadd.f32 %v4993, %v5031
      %v5033 = vpop.f32.mrf.mxu0
      %v5034 = vadd.f32 %v4995, %v5033
      %5035 = vmatmul.bf16.gmra.mxu0 %v4729
      %v5036 = vpop.f32.mrf.mxu0
      %v5037 = vadd.f32 %v4998, %v5036
      %v5038 = vpop.f32.mrf.mxu0
      %v5039 = vadd.f32 %v5000, %v5038
      %5040 = vmatmul.bf16.gmra.mxu0 %v4732
      %v5041 = vpop.f32.mrf.mxu0
      %v5042 = vadd.f32 %v5003, %v5041
      %v5043 = vpop.f32.mrf.mxu0
      %v5044 = vadd.f32 %v5005, %v5043
      %5045 = vmatmul.bf16.gmra.mxu0 %v4735
      %v5046 = vpop.f32.mrf.mxu0
      %v5047 = vadd.f32 %v5008, %v5046
      %v5048 = vpop.f32.mrf.mxu0
      %v5049 = vadd.f32 %v5010, %v5048
      %5050 = vmatmul.bf16.gmra.mxu0 %v4738
      %v5051 = vpop.f32.mrf.mxu0
      %v5052 = vadd.f32 %v5013, %v5051
      %v5053 = vpop.f32.mrf.mxu0
      %v5054 = vadd.f32 %v5015, %v5053
      %5055 = vmatmul.bf16.gmra.mxu0 %v4741
      %v5056 = vpop.f32.mrf.mxu0
      %v5057 = vadd.f32 %v5018, %v5056
      %v5058 = vpop.f32.mrf.mxu0
      %v5059 = vadd.f32 %v5020, %v5058
      %5060 = vdwg.mxu0
      %v5061 = vld [vmem:[%s10] sm:$0xff]
      %v5062 = vld [vmem:[%s10 + $0x8] sm:$0xff]
      %v5063 = vld [vmem:[%s10 + $0x10] sm:$0xff]
      %v5064 = vld [vmem:[%s10 + $0x18] sm:$0xff]
      %v5065 = vld [vmem:[%s10 + $0x20] sm:$0xff]
      %v5066 = vld [vmem:[%s10 + $0x28] sm:$0xff]
      %v5067 = vld [vmem:[%s10 + $0x30] sm:$0xff]
      %v5068 = vld [vmem:[%s10 + $0x38] sm:$0xff]
      %v5069 = vld [vmem:[%s10 + $0x40] sm:$0xff]
      %v5070 = vld [vmem:[%s10 + $0x48] sm:$0xff]
      %v5071 = vld [vmem:[%s10 + $0x50] sm:$0xff]
      %v5072 = vld [vmem:[%s10 + $0x58] sm:$0xff]
      %vm5073 = vcmp.gt.f32.partialorder %v5061, 0.0
      %vm5074 = vcmp.gt.f32.partialorder %v5062, 0.0
      %vm5075 = vcmp.gt.f32.partialorder %v5063, 0.0
      %vm5076 = vcmp.gt.f32.partialorder %v5064, 0.0
      %vm5077 = vcmp.gt.f32.partialorder %v5065, 0.0
      %vm5078 = vcmp.gt.f32.partialorder %v5066, 0.0
      %vm5079 = vcmp.gt.f32.partialorder %v5067, 0.0
      %vm5080 = vcmp.gt.f32.partialorder %v5068, 0.0
      %vm5081 = vcmp.gt.f32.partialorder %v5069, 0.0
      %vm5082 = vcmp.gt.f32.partialorder %v5070, 0.0
      %vm5083 = vcmp.gt.f32.partialorder %v5071, 0.0
      %vm5084 = vcmp.gt.f32.partialorder %v5072, 0.0
      %v5085 = vmax.f32 %v4876, 0.0
      %v5086 = vmax.f32 %v5032, 0.0
      %v5087 = vmax.f32 %v4878, 0.0
      %v5088 = vmax.f32 %v5034, 0.0
      %v5089 = vmax.f32 %v4881, 0.0
      %v5090 = vmax.f32 %v5037, 0.0
      %v5091 = vmax.f32 %v4883, 0.0
      %v5092 = vmax.f32 %v5039, 0.0
      %v5093 = vmax.f32 %v4886, 0.0
      %v5094 = vmax.f32 %v5042, 0.0
      %v5095 = vmax.f32 %v4888, 0.0
      %v5096 = vmax.f32 %v5044, 0.0
      %v5097 = vmax.f32 %v4891, 0.0
      %v5098 = vmax.f32 %v5047, 0.0
      %v5099 = vmax.f32 %v4893, 0.0
      %v5100 = vmax.f32 %v5049, 0.0
      %v5101 = vmax.f32 %v4896, 0.0
      %v5102 = vmax.f32 %v5052, 0.0
      %v5103 = vmax.f32 %v4898, 0.0
      %v5104 = vmax.f32 %v5054, 0.0
      %v5105 = vmax.f32 %v4901, 0.0
      %v5106 = vmax.f32 %v5057, 0.0
      %v5107 = vmax.f32 %v4903, 0.0
      %v5108 = vmax.f32 %v5059, 0.0
      %v5109 = vsel %vm5073, 1, 0
      %v5110 = vsel %vm5074, 1, 0
      %v5111 = vsel %vm5075, 1, 0
      %v5112 = vsel %vm5076, 1, 0
      %v5113 = vsel %vm5077, 1, 0
      %v5114 = vsel %vm5078, 1, 0
      %v5115 = vsel %vm5079, 1, 0
      %v5116 = vsel %vm5080, 1, 0
      %v5117 = vsel %vm5081, 1, 0
      %v5118 = vsel %vm5082, 1, 0
      %v5119 = vsel %vm5083, 1, 0
      %v5120 = vsel %vm5084, 1, 0
      %5121 = vset.pattern.permute.xlu0 0
      %5122 = vperm.xlu0 %5121, %v5109
      %v5123 = vpop.permute.xlu0 %5122
      %5124 = vset.pattern.permute.xlu0 0
      %5125 = vperm.xlu0 %5124, %v5110
      %v5126 = vpop.permute.xlu0 %5125
      %5127 = vset.pattern.permute.xlu0 0
      %5128 = vperm.xlu0 %5127, %v5111
      %v5129 = vpop.permute.xlu0 %5128
      %5130 = vset.pattern.permute.xlu0 0
      %5131 = vperm.xlu0 %5130, %v5112
      %v5132 = vpop.permute.xlu0 %5131
      %5133 = vset.pattern.permute.xlu0 0
      %5134 = vperm.xlu0 %5133, %v5113
      %v5135 = vpop.permute.xlu0 %5134
      %5136 = vset.pattern.permute.xlu0 0
      %5137 = vperm.xlu0 %5136, %v5114
      %v5138 = vpop.permute.xlu0 %5137
      %5139 = vset.pattern.permute.xlu0 0
      %5140 = vperm.xlu0 %5139, %v5115
      %v5141 = vpop.permute.xlu0 %5140
      %5142 = vset.pattern.permute.xlu0 0
      %5143 = vperm.xlu0 %5142, %v5116
      %v5144 = vpop.permute.xlu0 %5143
      %5145 = vset.pattern.permute.xlu0 0
      %5146 = vperm.xlu0 %5145, %v5117
      %v5147 = vpop.permute.xlu0 %5146
      %5148 = vset.pattern.permute.xlu0 0
      %5149 = vperm.xlu0 %5148, %v5118
      %v5150 = vpop.permute.xlu0 %5149
      %5151 = vset.pattern.permute.xlu0 0
      %5152 = vperm.xlu0 %5151, %v5119
      %v5153 = vpop.permute.xlu0 %5152
      %5154 = vset.pattern.permute.xlu0 0
      %5155 = vperm.xlu0 %5154, %v5120
      %v5156 = vpop.permute.xlu0 %5155
      %vm5157 = vcmp.eq.s32.totalorder %v5123, 1
      %vm5158 = vcmp.eq.s32.totalorder %v5126, 1
      %vm5159 = vcmp.eq.s32.totalorder %v5129, 1
      %vm5160 = vcmp.eq.s32.totalorder %v5132, 1
      %vm5161 = vcmp.eq.s32.totalorder %v5135, 1
      %vm5162 = vcmp.eq.s32.totalorder %v5138, 1
      %vm5163 = vcmp.eq.s32.totalorder %v5141, 1
      %vm5164 = vcmp.eq.s32.totalorder %v5144, 1
      %vm5165 = vcmp.eq.s32.totalorder %v5147, 1
      %vm5166 = vcmp.eq.s32.totalorder %v5150, 1
      %vm5167 = vcmp.eq.s32.totalorder %v5153, 1
      %vm5168 = vcmp.eq.s32.totalorder %v5156, 1
      %v5169 = vsel %vm5157, %v5085, %v4876
      %v5170 = vsel %vm5157, %v5086, %v5032
      %v5171 = vsel %vm5158, %v5087, %v4878
      %v5172 = vsel %vm5158, %v5088, %v5034
      %v5173 = vsel %vm5159, %v5089, %v4881
      %v5174 = vsel %vm5159, %v5090, %v5037
      %v5175 = vsel %vm5160, %v5091, %v4883
      %v5176 = vsel %vm5160, %v5092, %v5039
      %v5177 = vsel %vm5161, %v5093, %v4886
      %v5178 = vsel %vm5161, %v5094, %v5042
      %v5179 = vsel %vm5162, %v5095, %v4888
      %v5180 = vsel %vm5162, %v5096, %v5044
      %v5181 = vsel %vm5163, %v5097, %v4891
      %v5182 = vsel %vm5163, %v5098, %v5047
      %v5183 = vsel %vm5164, %v5099, %v4893
      %v5184 = vsel %vm5164, %v5100, %v5049
      %v5185 = vsel %vm5165, %v5101, %v4896
      %v5186 = vsel %vm5165, %v5102, %v5052
      %v5187 = vsel %vm5166, %v5103, %v4898
      %v5188 = vsel %vm5166, %v5104, %v5054
      %v5189 = vsel %vm5167, %v5105, %v4901
      %v5190 = vsel %vm5167, %v5106, %v5057
      %v5191 = vsel %vm5168, %v5107, %v4903
      %v5192 = vsel %vm5168, %v5108, %v5059
      %v5193 = vld [vmem:[%s11] sm:$0xf]
      %v5194 = vld [vmem:[%s11 + $0x4] sm:$0xf]
      %v5195 = vld [vmem:[%s11 + $0x8] sm:$0xf]
      %v5196 = vld [vmem:[%s11 + $0xc] sm:$0xf]
      %v5197 = vld [vmem:[%s11 + $0x10] sm:$0xf]
      %v5198 = vld [vmem:[%s11 + $0x14] sm:$0xf]
      %v5199 = vpack.c.bf16 %v5171, %v5169
      %v5200 = vpack.c.bf16 %v5172, %v5170
      %v5201 = vpack.c.bf16 %v5175, %v5173
      %v5202 = vpack.c.bf16 %v5176, %v5174
      %v5203 = vpack.c.bf16 %v5179, %v5177
      %v5204 = vpack.c.bf16 %v5180, %v5178
      %v5205 = vpack.c.bf16 %v5183, %v5181
      %v5206 = vpack.c.bf16 %v5184, %v5182
      %v5207 = vpack.c.bf16 %v5187, %v5185
      %v5208 = vpack.c.bf16 %v5188, %v5186
      %v5209 = vpack.c.bf16 %v5191, %v5189
      %v5210 = vpack.c.bf16 %v5192, %v5190
      %v5211 = vld [vmem:[%s12] sm:$0xff]
      %v5212 = vld [vmem:[%s12 + $0x8] sm:$0xff]
      %v5213 = vld [vmem:[%s12 + $0x10] sm:$0xff]
      %v5214 = vld [vmem:[%s12 + $0x18] sm:$0xff]
      %v5215 = vld [vmem:[%s12 + $0x20] sm:$0xff]
      %v5216 = vld [vmem:[%s12 + $0x28] sm:$0xff]
      %5218 = vset.pattern.permute.xlu0 0
      %5219 = vperm.xlu0 %5218, %v5211
      %v5220 = vpop.permute.xlu0 %5219
      %5223 = vset.pattern.permute.xlu0 0
      %5224 = vperm.xlu0 %5223, %v5212
      %v5225 = vpop.permute.xlu0 %5224
      %5228 = vset.pattern.permute.xlu0 0
      %5229 = vperm.xlu0 %5228, %v5213
      %v5230 = vpop.permute.xlu0 %5229
      %5233 = vset.pattern.permute.xlu0 0
      %5234 = vperm.xlu0 %5233, %v5214
      %v5235 = vpop.permute.xlu0 %5234
      %5238 = vset.pattern.permute.xlu0 0
      %5239 = vperm.xlu0 %5238, %v5215
      %v5240 = vpop.permute.xlu0 %5239
      %5243 = vset.pattern.permute.xlu0 0
      %5244 = vperm.xlu0 %5243, %v5216
      %v5245 = vpop.permute.xlu0 %5244
      %v5253 = vunpack.c.l.b16 %v5193
      %v5254 = vunpack.c.l.b16 %v5194
      %v5255 = vunpack.c.l.b16 %v5195
      %v5256 = vunpack.c.l.b16 %v5196
      %v5257 = vunpack.c.l.b16 %v5197
      %v5258 = vunpack.c.l.b16 %v5198
      %v5259 = vpack.c.b16 %v5254, %v5253
      %v5260 = vpack.c.b16 %v5256, %v5255
      %v5261 = vpack.c.b16 %v5258, %v5257
      %v5263 = vsel %vm2124, %v5259, 0
      %v5266 = vsel %vm2124, %v5260, 0
      %v5269 = vsel %vm2124, %v5261, 0
      %5271 = vmatpush.bf16.msra.mxu0 0
      %5272 = vmatpush.bf16.msra.mxu0 0
      %5273 = vmatpush.bf16.msra.mxu0 %v5209
      %5274 = vmatpush.bf16.msra.mxu0 %v5207
      %5275 = vmatpush.bf16.msra.mxu0 %v5205
      %5276 = vmatpush.bf16.msra.mxu0 %v5203
      %5277 = vmatpush.bf16.msra.mxu0 %v5201
      %5278 = vmatpush.bf16.msra.mxu0 %v5199
      %5279 = vmatmul.bf16.gmra.mxu0 %v5263
      %v5280 = vpop.f32.mrf.mxu0
      %v5281 = vadd.f32 %v5220, %v5280
      %v5282 = vpop.f32.mrf.mxu0
      %v5283 = vadd.f32 %v5225, %v5282
      %5284 = vmatmul.bf16.gmra.mxu0 %v5266
      %v5285 = vpop.f32.mrf.mxu0
      %v5286 = vadd.f32 %v5230, %v5285
      %v5287 = vpop.f32.mrf.mxu0
      %v5288 = vadd.f32 %v5235, %v5287
      %5289 = vmatmul.bf16.gmra.mxu0 %v5269
      %v5290 = vpop.f32.mrf.mxu0
      %v5291 = vadd.f32 %v5240, %v5290
      %v5292 = vpop.f32.mrf.mxu0
      %v5293 = vadd.f32 %v5245, %v5292
      %5294 = vdwg.mxu0
      %5295 = vmatpush.bf16.msra.mxu0 0
      %5296 = vmatpush.bf16.msra.mxu0 0
      %5297 = vmatpush.bf16.msra.mxu0 %v5210
      %5298 = vmatpush.bf16.msra.mxu0 %v5208
      %5299 = vmatpush.bf16.msra.mxu0 %v5206
      %5300 = vmatpush.bf16.msra.mxu0 %v5204
      %5301 = vmatpush.bf16.msra.mxu0 %v5202
      %5302 = vmatpush.bf16.msra.mxu0 %v5200
      %5303 = vmatmul.bf16.gmra.mxu0 %v5263
      %v5304 = vpop.f32.mrf.mxu0
      %v5305 = vadd.f32 %v5220, %v5304
      %v5306 = vpop.f32.mrf.mxu0
      %v5307 = vadd.f32 %v5225, %v5306
      %5308 = vmatmul.bf16.gmra.mxu0 %v5266
      %v5309 = vpop.f32.mrf.mxu0
      %v5310 = vadd.f32 %v5230, %v5309
      %v5311 = vpop.f32.mrf.mxu0
      %v5312 = vadd.f32 %v5235, %v5311
      %5313 = vmatmul.bf16.gmra.mxu0 %v5269
      %v5314 = vpop.f32.mrf.mxu0
      %v5315 = vadd.f32 %v5240, %v5314
      %v5316 = vpop.f32.mrf.mxu0
      %v5317 = vadd.f32 %v5245, %v5316
      %5318 = vdwg.mxu0
      %v5319 = vld [vmem:[%s13] sm:$0xff]
      %v5320 = vld [vmem:[%s13 + $0x8] sm:$0xff]
      %v5321 = vld [vmem:[%s13 + $0x10] sm:$0xff]
      %v5322 = vld [vmem:[%s13 + $0x18] sm:$0xff]
      %v5323 = vld [vmem:[%s13 + $0x20] sm:$0xff]
      %v5324 = vld [vmem:[%s13 + $0x28] sm:$0xff]
      %vm5325 = vcmp.gt.f32.partialorder %v5319, 0.0
      %vm5326 = vcmp.gt.f32.partialorder %v5320, 0.0
      %vm5327 = vcmp.gt.f32.partialorder %v5321, 0.0
      %vm5328 = vcmp.gt.f32.partialorder %v5322, 0.0
      %vm5329 = vcmp.gt.f32.partialorder %v5323, 0.0
      %vm5330 = vcmp.gt.f32.partialorder %v5324, 0.0
      %v5331 = vmax.f32 %v5281, 0.0
      %v5332 = vmax.f32 %v5305, 0.0
      %v5333 = vmax.f32 %v5283, 0.0
      %v5334 = vmax.f32 %v5307, 0.0
      %v5335 = vmax.f32 %v5286, 0.0
      %v5336 = vmax.f32 %v5310, 0.0
      %v5337 = vmax.f32 %v5288, 0.0
      %v5338 = vmax.f32 %v5312, 0.0
      %v5339 = vmax.f32 %v5291, 0.0
      %v5340 = vmax.f32 %v5315, 0.0
      %v5341 = vmax.f32 %v5293, 0.0
      %v5342 = vmax.f32 %v5317, 0.0
      %v5343 = vsel %vm5325, 1, 0
      %v5344 = vsel %vm5326, 1, 0
      %v5345 = vsel %vm5327, 1, 0
      %v5346 = vsel %vm5328, 1, 0
      %v5347 = vsel %vm5329, 1, 0
      %v5348 = vsel %vm5330, 1, 0
      %5349 = vset.pattern.permute.xlu0 0
      %5350 = vperm.xlu0 %5349, %v5343
      %v5351 = vpop.permute.xlu0 %5350
      %5352 = vset.pattern.permute.xlu0 0
      %5353 = vperm.xlu0 %5352, %v5344
      %v5354 = vpop.permute.xlu0 %5353
      %5355 = vset.pattern.permute.xlu0 0
      %5356 = vperm.xlu0 %5355, %v5345
      %v5357 = vpop.permute.xlu0 %5356
      %5358 = vset.pattern.permute.xlu0 0
      %5359 = vperm.xlu0 %5358, %v5346
      %v5360 = vpop.permute.xlu0 %5359
      %5361 = vset.pattern.permute.xlu0 0
      %5362 = vperm.xlu0 %5361, %v5347
      %v5363 = vpop.permute.xlu0 %5362
      %5364 = vset.pattern.permute.xlu0 0
      %5365 = vperm.xlu0 %5364, %v5348
      %v5366 = vpop.permute.xlu0 %5365
      %vm5367 = vcmp.eq.s32.totalorder %v5351, 1
      %vm5368 = vcmp.eq.s32.totalorder %v5354, 1
      %vm5369 = vcmp.eq.s32.totalorder %v5357, 1
      %vm5370 = vcmp.eq.s32.totalorder %v5360, 1
      %vm5371 = vcmp.eq.s32.totalorder %v5363, 1
      %vm5372 = vcmp.eq.s32.totalorder %v5366, 1
      %v5373 = vsel %vm5367, %v5331, %v5281
      %v5374 = vsel %vm5367, %v5332, %v5305
      %v5375 = vsel %vm5368, %v5333, %v5283
      %v5376 = vsel %vm5368, %v5334, %v5307
      %v5377 = vsel %vm5369, %v5335, %v5286
      %v5378 = vsel %vm5369, %v5336, %v5310
      %v5379 = vsel %vm5370, %v5337, %v5288
      %v5380 = vsel %vm5370, %v5338, %v5312
      %v5381 = vsel %vm5371, %v5339, %v5291
      %v5382 = vsel %vm5371, %v5340, %v5315
      %v5383 = vsel %vm5372, %v5341, %v5293
      %v5384 = vsel %vm5372, %v5342, %v5317
      %v5385 = vpack.c.bf16 %v5374, %v5373
      %v5386 = vpack.c.bf16 %v5376, %v5375
      %v5387 = vpack.c.bf16 %v5378, %v5377
      %v5388 = vpack.c.bf16 %v5380, %v5379
      %v5389 = vpack.c.bf16 %v5382, %v5381
      %v5390 = vpack.c.bf16 %v5384, %v5383
      %v5397 = vunpack.c.l.b16 %v5385
      %v5398 = vunpack.c.h.b16 %v5385
      %v5399 = vunpack.c.l.b16 %v5386
      %v5400 = vunpack.c.h.b16 %v5386
      %v5401 = vunpack.c.l.b16 %v5387
      %v5402 = vunpack.c.h.b16 %v5387
      %v5403 = vunpack.c.l.b16 %v5388
      %v5404 = vunpack.c.h.b16 %v5388
      %v5405 = vunpack.c.l.b16 %v5389
      %v5406 = vunpack.c.h.b16 %v5389
      %v5407 = vunpack.c.l.b16 %v5390
      %v5408 = vunpack.c.h.b16 %v5390
      %v5409 = vpack.c.b16 %v5399, %v5397
      %v5410 = vpack.c.b16 %v5400, %v5398
      %v5411 = vpack.c.b16 %v5403, %v5401
      %v5412 = vpack.c.b16 %v5404, %v5402
      %v5413 = vpack.c.b16 %v5407, %v5405
      %v5414 = vpack.c.b16 %v5408, %v5406
      %5415 = vrot.lane.b32.xlu0 %v5409, 34
      %v5416 = vpop.permute.xlu0 %5415
      %5417 = vrot.lane.b32.xlu0 %v5410, 34
      %v5418 = vpop.permute.xlu0 %5417
      %5419 = vrot.lane.b32.xlu0 %v5411, 34
      %v5420 = vpop.permute.xlu0 %5419
      %5421 = vrot.lane.b32.xlu0 %v5412, 34
      %v5422 = vpop.permute.xlu0 %5421
      %5423 = vrot.lane.b32.xlu0 %v5413, 34
      %v5424 = vpop.permute.xlu0 %5423
      %5425 = vrot.lane.b32.xlu0 %v5414, 34
      %v5426 = vpop.permute.xlu0 %5425
      %vm5427 = vcmask 277504
      %v5428 = vsel %vm5427, %v5416, %v5418
      %v5429 = vsel %vm5427, %v5420, %v5422
      %v5430 = vsel %vm5427, %v5424, %v5426
      %v5435 = vsel %vm644, 0, %v5416
      %v5438 = vsel %vm644, 0, %v5420
      %v5441 = vsel %vm644, 0, %v5424
      %v5444 = vsel %vm644, %v5418, 0
      %v5447 = vsel %vm644, %v5422, 0
      %v5450 = vsel %vm644, %v5426, 0
      %v5452 = vunpack.c.l.bf16 %v5435
      %v5453 = vunpack.c.l.bf16 %v5428
      %v5454 = vunpack.c.h.bf16 %v5435
      %v5455 = vunpack.c.h.bf16 %v5428
      %v5456 = vunpack.c.l.bf16 %v5438
      %v5457 = vunpack.c.l.bf16 %v5429
      %v5458 = vunpack.c.h.bf16 %v5438
      %v5459 = vunpack.c.h.bf16 %v5429
      %v5460 = vunpack.c.l.bf16 %v5441
      %v5461 = vunpack.c.l.bf16 %v5430
      %v5462 = vunpack.c.h.bf16 %v5441
      %v5463 = vunpack.c.h.bf16 %v5430
      %v5464 = vmul.f32 %v5452, %v1448
      %v5465 = vmul.f32 %v5453, %v1449
      %v5466 = vmul.f32 %v5454, %v1448
      %v5467 = vmul.f32 %v5455, %v1449
      %v5468 = vmul.f32 %v5456, %v1448
      %v5469 = vmul.f32 %v5457, %v1449
      %v5470 = vmul.f32 %v5458, %v1448
      %v5471 = vmul.f32 %v5459, %v1449
      %v5472 = vmul.f32 %v5460, %v1448
      %v5473 = vmul.f32 %v5461, %v1449
      %v5474 = vmul.f32 %v5462, %v1448
      %v5475 = vmul.f32 %v5463, %v1449
      %v5476 = vpack.c.bf16 %v5465, %v5464
      %v5477 = vpack.c.bf16 %v5467, %v5466
      %v5478 = vpack.c.bf16 %v5469, %v5468
      %v5479 = vpack.c.bf16 %v5471, %v5470
      %v5480 = vpack.c.bf16 %v5473, %v5472
      %v5481 = vpack.c.bf16 %v5475, %v5474
      %v5482 = vunpack.c.l.bf16 %v5444
      %v5483 = vunpack.c.h.bf16 %v5444
      %v5484 = vunpack.c.l.bf16 %v5447
      %v5485 = vunpack.c.h.bf16 %v5447
      %v5486 = vunpack.c.l.bf16 %v5450
      %v5487 = vunpack.c.h.bf16 %v5450
      %5488 = vrot.lane.b32.xlu0 %v570, 1
      %v5489 = vpop.permute.xlu0 %5488
      %5490 = vrot.lane.b32.xlu0 %v571, 1
      %v5491 = vpop.permute.xlu0 %5490
      %v5492 = vsel %vm1436, %v5489, %v5491
      %v5496 = vmul.f32 %v5452, %v5489
      %v5497 = vmul.f32 %v5453, %v5492
      %v5498 = vmul.f32 %v5482, %v5491
      %v5499 = vmul.f32 %v5454, %v5489
      %v5500 = vmul.f32 %v5455, %v5492
      %v5501 = vmul.f32 %v5483, %v5491
      %v5502 = vmul.f32 %v5456, %v5489
      %v5503 = vmul.f32 %v5457, %v5492
      %v5504 = vmul.f32 %v5484, %v5491
      %v5505 = vmul.f32 %v5458, %v5489
      %v5506 = vmul.f32 %v5459, %v5492
      %v5507 = vmul.f32 %v5485, %v5491
      %v5508 = vmul.f32 %v5460, %v5489
      %v5509 = vmul.f32 %v5461, %v5492
      %v5510 = vmul.f32 %v5486, %v5491
      %v5511 = vmul.f32 %v5462, %v5489
      %v5512 = vmul.f32 %v5463, %v5492
      %v5513 = vmul.f32 %v5487, %v5491
      %v5514 = vpack.c.bf16 %v5497, %v5496
      %v5515 = vpack.c.bf16 %v5498, %v5498
      %v5516 = vpack.c.bf16 %v5500, %v5499
      %v5517 = vpack.c.bf16 %v5501, %v5501
      %v5518 = vpack.c.bf16 %v5503, %v5502
      %v5519 = vpack.c.bf16 %v5504, %v5504
      %v5520 = vpack.c.bf16 %v5506, %v5505
      %v5521 = vpack.c.bf16 %v5507, %v5507
      %v5522 = vpack.c.bf16 %v5509, %v5508
      %v5523 = vpack.c.bf16 %v5510, %v5510
      %v5524 = vpack.c.bf16 %v5512, %v5511
      %v5525 = vpack.c.bf16 %v5513, %v5513
      %5526 = vrot.lane.b32.xlu0 %v578, 3
      %v5527 = vpop.permute.xlu0 %5526
      %5528 = vrot.lane.b32.xlu0 %v579, 3
      %v5529 = vpop.permute.xlu0 %5528
      %v5530 = vsel %vm1469, %v5527, %v5529
      %v5534 = vmul.f32 %v5452, %v5527
      %v5535 = vmul.f32 %v5453, %v5530
      %v5536 = vmul.f32 %v5482, %v5529
      %v5537 = vmul.f32 %v5454, %v5527
      %v5538 = vmul.f32 %v5455, %v5530
      %v5539 = vmul.f32 %v5483, %v5529
      %v5540 = vmul.f32 %v5456, %v5527
      %v5541 = vmul.f32 %v5457, %v5530
      %v5542 = vmul.f32 %v5484, %v5529
      %v5543 = vmul.f32 %v5458, %v5527
      %v5544 = vmul.f32 %v5459, %v5530
      %v5545 = vmul.f32 %v5485, %v5529
      %v5546 = vmul.f32 %v5460, %v5527
      %v5547 = vmul.f32 %v5461, %v5530
      %v5548 = vmul.f32 %v5486, %v5529
      %v5549 = vmul.f32 %v5462, %v5527
      %v5550 = vmul.f32 %v5463, %v5530
      %v5551 = vmul.f32 %v5487, %v5529
      %v5552 = vpack.c.bf16 %v5535, %v5534
      %v5553 = vpack.c.bf16 %v5536, %v5536
      %v5554 = vpack.c.bf16 %v5538, %v5537
      %v5555 = vpack.c.bf16 %v5539, %v5539
      %v5556 = vpack.c.bf16 %v5541, %v5540
      %v5557 = vpack.c.bf16 %v5542, %v5542
      %v5558 = vpack.c.bf16 %v5544, %v5543
      %v5559 = vpack.c.bf16 %v5545, %v5545
      %v5560 = vpack.c.bf16 %v5547, %v5546
      %v5561 = vpack.c.bf16 %v5548, %v5548
      %v5562 = vpack.c.bf16 %v5550, %v5549
      %v5563 = vpack.c.bf16 %v5551, %v5551
      %5564 = vrot.lane.b32.xlu0 %v1495, 4
      %v5565 = vpop.permute.xlu0 %5564
      %5566 = vrot.lane.b32.xlu0 %v1496, 4
      %v5567 = vpop.permute.xlu0 %5566
      %vm5568 = vcmask 31744
      %v5569 = vsel %vm5568, %v5565, %v5567
      %v5573 = vmul.f32 %v5452, %v5565
      %v5574 = vmul.f32 %v5453, %v5569
      %v5575 = vmul.f32 %v5482, %v5567
      %v5576 = vmul.f32 %v5454, %v5565
      %v5577 = vmul.f32 %v5455, %v5569
      %v5578 = vmul.f32 %v5483, %v5567
      %v5579 = vmul.f32 %v5456, %v5565
      %v5580 = vmul.f32 %v5457, %v5569
      %v5581 = vmul.f32 %v5484, %v5567
      %v5582 = vmul.f32 %v5458, %v5565
      %v5583 = vmul.f32 %v5459, %v5569
      %v5584 = vmul.f32 %v5485, %v5567
      %v5585 = vmul.f32 %v5460, %v5565
      %v5586 = vmul.f32 %v5461, %v5569
      %v5587 = vmul.f32 %v5486, %v5567
      %v5588 = vmul.f32 %v5462, %v5565
      %v5589 = vmul.f32 %v5463, %v5569
      %v5590 = vmul.f32 %v5487, %v5567
      %v5591 = vpack.c.bf16 %v5574, %v5573
      %v5592 = vpack.c.bf16 %v5575, %v5575
      %v5593 = vpack.c.bf16 %v5577, %v5576
      %v5594 = vpack.c.bf16 %v5578, %v5578
      %v5595 = vpack.c.bf16 %v5580, %v5579
      %v5596 = vpack.c.bf16 %v5581, %v5581
      %v5597 = vpack.c.bf16 %v5583, %v5582
      %v5598 = vpack.c.bf16 %v5584, %v5584
      %v5599 = vpack.c.bf16 %v5586, %v5585
      %v5600 = vpack.c.bf16 %v5587, %v5587
      %v5601 = vpack.c.bf16 %v5589, %v5588
      %v5602 = vpack.c.bf16 %v5590, %v5590
      %5603 = vrot.lane.b32.xlu0 %v1448, 16
      %v5604 = vpop.permute.xlu0 %5603
      %5605 = vrot.lane.b32.xlu0 %v1449, 16
      %v5606 = vpop.permute.xlu0 %5605
      %v5607 = vsel %vm602, %v5604, %v5606
      %v5611 = vmul.f32 %v5452, %v5604
      %v5612 = vmul.f32 %v5453, %v5607
      %v5613 = vmul.f32 %v5482, %v5606
      %v5614 = vmul.f32 %v5454, %v5604
      %v5615 = vmul.f32 %v5455, %v5607
      %v5616 = vmul.f32 %v5483, %v5606
      %v5617 = vmul.f32 %v5456, %v5604
      %v5618 = vmul.f32 %v5457, %v5607
      %v5619 = vmul.f32 %v5484, %v5606
      %v5620 = vmul.f32 %v5458, %v5604
      %v5621 = vmul.f32 %v5459, %v5607
      %v5622 = vmul.f32 %v5485, %v5606
      %v5623 = vmul.f32 %v5460, %v5604
      %v5624 = vmul.f32 %v5461, %v5607
      %v5625 = vmul.f32 %v5486, %v5606
      %v5626 = vmul.f32 %v5462, %v5604
      %v5627 = vmul.f32 %v5463, %v5607
      %v5628 = vmul.f32 %v5487, %v5606
      %v5629 = vpack.c.bf16 %v5612, %v5611
      %v5630 = vpack.c.bf16 %v5613, %v5613
      %v5631 = vpack.c.bf16 %v5615, %v5614
      %v5632 = vpack.c.bf16 %v5616, %v5616
      %v5633 = vpack.c.bf16 %v5618, %v5617
      %v5634 = vpack.c.bf16 %v5619, %v5619
      %v5635 = vpack.c.bf16 %v5621, %v5620
      %v5636 = vpack.c.bf16 %v5622, %v5622
      %v5637 = vpack.c.bf16 %v5624, %v5623
      %v5638 = vpack.c.bf16 %v5625, %v5625
      %v5639 = vpack.c.bf16 %v5627, %v5626
      %v5640 = vpack.c.bf16 %v5628, %v5628
      %5641 = vrot.lane.b32.xlu0 %v570, 17
      %v5642 = vpop.permute.xlu0 %5641
      %5643 = vrot.lane.b32.xlu0 %v571, 17
      %v5644 = vpop.permute.xlu0 %5643
      %v5645 = vsel %vm545, %v5642, %v5644
      %v5649 = vmul.f32 %v5452, %v5642
      %v5650 = vmul.f32 %v5453, %v5645
      %v5651 = vmul.f32 %v5482, %v5644
      %v5652 = vmul.f32 %v5454, %v5642
      %v5653 = vmul.f32 %v5455, %v5645
      %v5654 = vmul.f32 %v5483, %v5644
      %v5655 = vmul.f32 %v5456, %v5642
      %v5656 = vmul.f32 %v5457, %v5645
      %v5657 = vmul.f32 %v5484, %v5644
      %v5658 = vmul.f32 %v5458, %v5642
      %v5659 = vmul.f32 %v5459, %v5645
      %v5660 = vmul.f32 %v5485, %v5644
      %v5661 = vmul.f32 %v5460, %v5642
      %v5662 = vmul.f32 %v5461, %v5645
      %v5663 = vmul.f32 %v5486, %v5644
      %v5664 = vmul.f32 %v5462, %v5642
      %v5665 = vmul.f32 %v5463, %v5645
      %v5666 = vmul.f32 %v5487, %v5644
      %v5667 = vpack.c.bf16 %v5650, %v5649
      %v5668 = vpack.c.bf16 %v5651, %v5651
      %v5669 = vpack.c.bf16 %v5653, %v5652
      %v5670 = vpack.c.bf16 %v5654, %v5654
      %v5671 = vpack.c.bf16 %v5656, %v5655
      %v5672 = vpack.c.bf16 %v5657, %v5657
      %v5673 = vpack.c.bf16 %v5659, %v5658
      %v5674 = vpack.c.bf16 %v5660, %v5660
      %v5675 = vpack.c.bf16 %v5662, %v5661
      %v5676 = vpack.c.bf16 %v5663, %v5663
      %v5677 = vpack.c.bf16 %v5665, %v5664
      %v5678 = vpack.c.bf16 %v5666, %v5666
      %5679 = vrot.lane.b32.xlu0 %v578, 19
      %v5680 = vpop.permute.xlu0 %5679
      %5681 = vrot.lane.b32.xlu0 %v579, 19
      %v5682 = vpop.permute.xlu0 %5681
      %v5683 = vsel %vm1609, %v5680, %v5682
      %v5687 = vmul.f32 %v5452, %v5680
      %v5688 = vmul.f32 %v5453, %v5683
      %v5689 = vmul.f32 %v5482, %v5682
      %v5690 = vmul.f32 %v5454, %v5680
      %v5691 = vmul.f32 %v5455, %v5683
      %v5692 = vmul.f32 %v5483, %v5682
      %v5693 = vmul.f32 %v5456, %v5680
      %v5694 = vmul.f32 %v5457, %v5683
      %v5695 = vmul.f32 %v5484, %v5682
      %v5696 = vmul.f32 %v5458, %v5680
      %v5697 = vmul.f32 %v5459, %v5683
      %v5698 = vmul.f32 %v5485, %v5682
      %v5699 = vmul.f32 %v5460, %v5680
      %v5700 = vmul.f32 %v5461, %v5683
      %v5701 = vmul.f32 %v5486, %v5682
      %v5702 = vmul.f32 %v5462, %v5680
      %v5703 = vmul.f32 %v5463, %v5683
      %v5704 = vmul.f32 %v5487, %v5682
      %v5705 = vpack.c.bf16 %v5688, %v5687
      %v5706 = vpack.c.bf16 %v5689, %v5689
      %v5707 = vpack.c.bf16 %v5691, %v5690
      %v5708 = vpack.c.bf16 %v5692, %v5692
      %v5709 = vpack.c.bf16 %v5694, %v5693
      %v5710 = vpack.c.bf16 %v5695, %v5695
      %v5711 = vpack.c.bf16 %v5697, %v5696
      %v5712 = vpack.c.bf16 %v5698, %v5698
      %v5713 = vpack.c.bf16 %v5700, %v5699
      %v5714 = vpack.c.bf16 %v5701, %v5701
      %v5715 = vpack.c.bf16 %v5703, %v5702
      %v5716 = vpack.c.bf16 %v5704, %v5704
      %5717 = vrot.lane.b32.xlu0 %v1495, 20
      %v5718 = vpop.permute.xlu0 %5717
      %5719 = vrot.lane.b32.xlu0 %v1496, 20
      %v5720 = vpop.permute.xlu0 %5719
      %vm5721 = vcmask 162816
      %v5722 = vsel %vm5721, %v5718, %v5720
      %v5726 = vmul.f32 %v5452, %v5718
      %v5727 = vmul.f32 %v5453, %v5722
      %v5728 = vmul.f32 %v5482, %v5720
      %v5729 = vmul.f32 %v5454, %v5718
      %v5730 = vmul.f32 %v5455, %v5722
      %v5731 = vmul.f32 %v5483, %v5720
      %v5732 = vmul.f32 %v5456, %v5718
      %v5733 = vmul.f32 %v5457, %v5722
      %v5734 = vmul.f32 %v5484, %v5720
      %v5735 = vmul.f32 %v5458, %v5718
      %v5736 = vmul.f32 %v5459, %v5722
      %v5737 = vmul.f32 %v5485, %v5720
      %v5738 = vmul.f32 %v5460, %v5718
      %v5739 = vmul.f32 %v5461, %v5722
      %v5740 = vmul.f32 %v5486, %v5720
      %v5741 = vmul.f32 %v5462, %v5718
      %v5742 = vmul.f32 %v5463, %v5722
      %v5743 = vmul.f32 %v5487, %v5720
      %v5744 = vpack.c.bf16 %v5727, %v5726
      %v5745 = vpack.c.bf16 %v5728, %v5728
      %v5746 = vpack.c.bf16 %v5730, %v5729
      %v5747 = vpack.c.bf16 %v5731, %v5731
      %v5748 = vpack.c.bf16 %v5733, %v5732
      %v5749 = vpack.c.bf16 %v5734, %v5734
      %v5750 = vpack.c.bf16 %v5736, %v5735
      %v5751 = vpack.c.bf16 %v5737, %v5737
      %v5752 = vpack.c.bf16 %v5739, %v5738
      %v5753 = vpack.c.bf16 %v5740, %v5740
      %v5754 = vpack.c.bf16 %v5742, %v5741
      %v5755 = vpack.c.bf16 %v5743, %v5743
      %5756 = vrot.lane.b32.xlu0 %v1448, 32
      %v5757 = vpop.permute.xlu0 %5756
      %5758 = vrot.lane.b32.xlu0 %v1449, 32
      %v5759 = vpop.permute.xlu0 %5758
      %v5760 = vsel %vm630, %v5757, %v5759
      %v5764 = vmul.f32 %v5452, %v5757
      %v5765 = vmul.f32 %v5453, %v5760
      %v5766 = vmul.f32 %v5482, %v5759
      %v5767 = vmul.f32 %v5454, %v5757
      %v5768 = vmul.f32 %v5455, %v5760
      %v5769 = vmul.f32 %v5483, %v5759
      %v5770 = vmul.f32 %v5456, %v5757
      %v5771 = vmul.f32 %v5457, %v5760
      %v5772 = vmul.f32 %v5484, %v5759
      %v5773 = vmul.f32 %v5458, %v5757
      %v5774 = vmul.f32 %v5459, %v5760
      %v5775 = vmul.f32 %v5485, %v5759
      %v5776 = vmul.f32 %v5460, %v5757
      %v5777 = vmul.f32 %v5461, %v5760
      %v5778 = vmul.f32 %v5486, %v5759
      %v5779 = vmul.f32 %v5462, %v5757
      %v5780 = vmul.f32 %v5463, %v5760
      %v5781 = vmul.f32 %v5487, %v5759
      %v5782 = vpack.c.bf16 %v5765, %v5764
      %v5783 = vpack.c.bf16 %v5766, %v5766
      %v5784 = vpack.c.bf16 %v5768, %v5767
      %v5785 = vpack.c.bf16 %v5769, %v5769
      %v5786 = vpack.c.bf16 %v5771, %v5770
      %v5787 = vpack.c.bf16 %v5772, %v5772
      %v5788 = vpack.c.bf16 %v5774, %v5773
      %v5789 = vpack.c.bf16 %v5775, %v5775
      %v5790 = vpack.c.bf16 %v5777, %v5776
      %v5791 = vpack.c.bf16 %v5778, %v5778
      %v5792 = vpack.c.bf16 %v5780, %v5779
      %v5793 = vpack.c.bf16 %v5781, %v5781
      %5794 = vrot.lane.b32.xlu0 %v570, 33
      %v5795 = vpop.permute.xlu0 %5794
      %5796 = vrot.lane.b32.xlu0 %v571, 33
      %v5797 = vpop.permute.xlu0 %5796
      %v5798 = vsel %vm1692, %v5795, %v5797
      %v5802 = vmul.f32 %v5452, %v5795
      %v5803 = vmul.f32 %v5453, %v5798
      %v5804 = vmul.f32 %v5482, %v5797
      %v5805 = vmul.f32 %v5454, %v5795
      %v5806 = vmul.f32 %v5455, %v5798
      %v5807 = vmul.f32 %v5483, %v5797
      %v5808 = vmul.f32 %v5456, %v5795
      %v5809 = vmul.f32 %v5457, %v5798
      %v5810 = vmul.f32 %v5484, %v5797
      %v5811 = vmul.f32 %v5458, %v5795
      %v5812 = vmul.f32 %v5459, %v5798
      %v5813 = vmul.f32 %v5485, %v5797
      %v5814 = vmul.f32 %v5460, %v5795
      %v5815 = vmul.f32 %v5461, %v5798
      %v5816 = vmul.f32 %v5486, %v5797
      %v5817 = vmul.f32 %v5462, %v5795
      %v5818 = vmul.f32 %v5463, %v5798
      %v5819 = vmul.f32 %v5487, %v5797
      %v5820 = vpack.c.bf16 %v5803, %v5802
      %v5821 = vpack.c.bf16 %v5804, %v5804
      %v5822 = vpack.c.bf16 %v5806, %v5805
      %v5823 = vpack.c.bf16 %v5807, %v5807
      %v5824 = vpack.c.bf16 %v5809, %v5808
      %v5825 = vpack.c.bf16 %v5810, %v5810
      %v5826 = vpack.c.bf16 %v5812, %v5811
      %v5827 = vpack.c.bf16 %v5813, %v5813
      %v5828 = vpack.c.bf16 %v5815, %v5814
      %v5829 = vpack.c.bf16 %v5816, %v5816
      %v5830 = vpack.c.bf16 %v5818, %v5817
      %v5831 = vpack.c.bf16 %v5819, %v5819
      %5832 = vrot.lane.b32.xlu0 %v578, 35
      %v5833 = vpop.permute.xlu0 %5832
      %5834 = vrot.lane.b32.xlu0 %v579, 35
      %v5835 = vpop.permute.xlu0 %5834
      %v5836 = vsel %vm1719, %v5833, %v5835
      %v5840 = vmul.f32 %v5452, %v5833
      %v5841 = vmul.f32 %v5453, %v5836
      %v5842 = vmul.f32 %v5482, %v5835
      %v5843 = vmul.f32 %v5454, %v5833
      %v5844 = vmul.f32 %v5455, %v5836
      %v5845 = vmul.f32 %v5483, %v5835
      %v5846 = vmul.f32 %v5456, %v5833
      %v5847 = vmul.f32 %v5457, %v5836
      %v5848 = vmul.f32 %v5484, %v5835
      %v5849 = vmul.f32 %v5458, %v5833
      %v5850 = vmul.f32 %v5459, %v5836
      %v5851 = vmul.f32 %v5485, %v5835
      %v5852 = vmul.f32 %v5460, %v5833
      %v5853 = vmul.f32 %v5461, %v5836
      %v5854 = vmul.f32 %v5486, %v5835
      %v5855 = vmul.f32 %v5462, %v5833
      %v5856 = vmul.f32 %v5463, %v5836
      %v5857 = vmul.f32 %v5487, %v5835
      %v5858 = vpack.c.bf16 %v5841, %v5840
      %v5859 = vpack.c.bf16 %v5842, %v5842
      %v5860 = vpack.c.bf16 %v5844, %v5843
      %v5861 = vpack.c.bf16 %v5845, %v5845
      %v5862 = vpack.c.bf16 %v5847, %v5846
      %v5863 = vpack.c.bf16 %v5848, %v5848
      %v5864 = vpack.c.bf16 %v5850, %v5849
      %v5865 = vpack.c.bf16 %v5851, %v5851
      %v5866 = vpack.c.bf16 %v5853, %v5852
      %v5867 = vpack.c.bf16 %v5854, %v5854
      %v5868 = vpack.c.bf16 %v5856, %v5855
      %v5869 = vpack.c.bf16 %v5857, %v5857
      %5870 = vrot.lane.b32.xlu0 %v1495, 36
      %v5871 = vpop.permute.xlu0 %5870
      %5872 = vrot.lane.b32.xlu0 %v1496, 36
      %v5873 = vpop.permute.xlu0 %5872
      %v5874 = vsel %vm827, %v5871, %v5873
      %v5878 = vmul.f32 %v5452, %v5871
      %v5879 = vmul.f32 %v5453, %v5874
      %v5880 = vmul.f32 %v5482, %v5873
      %v5881 = vmul.f32 %v5454, %v5871
      %v5882 = vmul.f32 %v5455, %v5874
      %v5883 = vmul.f32 %v5483, %v5873
      %v5884 = vmul.f32 %v5456, %v5871
      %v5885 = vmul.f32 %v5457, %v5874
      %v5886 = vmul.f32 %v5484, %v5873
      %v5887 = vmul.f32 %v5458, %v5871
      %v5888 = vmul.f32 %v5459, %v5874
      %v5889 = vmul.f32 %v5485, %v5873
      %v5890 = vmul.f32 %v5460, %v5871
      %v5891 = vmul.f32 %v5461, %v5874
      %v5892 = vmul.f32 %v5486, %v5873
      %v5893 = vmul.f32 %v5462, %v5871
      %v5894 = vmul.f32 %v5463, %v5874
      %v5895 = vmul.f32 %v5487, %v5873
      %v5896 = vpack.c.bf16 %v5879, %v5878
      %v5897 = vpack.c.bf16 %v5880, %v5880
      %v5898 = vpack.c.bf16 %v5882, %v5881
      %v5899 = vpack.c.bf16 %v5883, %v5883
      %v5900 = vpack.c.bf16 %v5885, %v5884
      %v5901 = vpack.c.bf16 %v5886, %v5886
      %v5902 = vpack.c.bf16 %v5888, %v5887
      %v5903 = vpack.c.bf16 %v5889, %v5889
      %v5904 = vpack.c.bf16 %v5891, %v5890
      %v5905 = vpack.c.bf16 %v5892, %v5892
      %v5906 = vpack.c.bf16 %v5894, %v5893
      %v5907 = vpack.c.bf16 %v5895, %v5895
      %5908 = vrot.lane.b32.xlu0 %v1448, 48
      %v5909 = vpop.permute.xlu0 %5908
      %5910 = vrot.lane.b32.xlu0 %v1449, 48
      %v5911 = vpop.permute.xlu0 %5910
      %v5912 = vsel %vm1789, %v5909, %v5911
      %v5916 = vmul.f32 %v5452, %v5909
      %v5917 = vmul.f32 %v5453, %v5912
      %v5918 = vmul.f32 %v5482, %v5911
      %v5919 = vmul.f32 %v5454, %v5909
      %v5920 = vmul.f32 %v5455, %v5912
      %v5921 = vmul.f32 %v5483, %v5911
      %v5922 = vmul.f32 %v5456, %v5909
      %v5923 = vmul.f32 %v5457, %v5912
      %v5924 = vmul.f32 %v5484, %v5911
      %v5925 = vmul.f32 %v5458, %v5909
      %v5926 = vmul.f32 %v5459, %v5912
      %v5927 = vmul.f32 %v5485, %v5911
      %v5928 = vmul.f32 %v5460, %v5909
      %v5929 = vmul.f32 %v5461, %v5912
      %v5930 = vmul.f32 %v5486, %v5911
      %v5931 = vmul.f32 %v5462, %v5909
      %v5932 = vmul.f32 %v5463, %v5912
      %v5933 = vmul.f32 %v5487, %v5911
      %v5934 = vpack.c.bf16 %v5917, %v5916
      %v5935 = vpack.c.bf16 %v5918, %v5918
      %v5936 = vpack.c.bf16 %v5920, %v5919
      %v5937 = vpack.c.bf16 %v5921, %v5921
      %v5938 = vpack.c.bf16 %v5923, %v5922
      %v5939 = vpack.c.bf16 %v5924, %v5924
      %v5940 = vpack.c.bf16 %v5926, %v5925
      %v5941 = vpack.c.bf16 %v5927, %v5927
      %v5942 = vpack.c.bf16 %v5929, %v5928
      %v5943 = vpack.c.bf16 %v5930, %v5930
      %v5944 = vpack.c.bf16 %v5932, %v5931
      %v5945 = vpack.c.bf16 %v5933, %v5933
      %5946 = vrot.lane.b32.xlu0 %v570, 49
      %v5947 = vpop.permute.xlu0 %5946
      %5948 = vrot.lane.b32.xlu0 %v571, 49
      %v5949 = vpop.permute.xlu0 %5948
      %v5950 = vsel %vm1803, %v5947, %v5949
      %v5954 = vmul.f32 %v5452, %v5947
      %v5955 = vmul.f32 %v5453, %v5950
      %v5956 = vmul.f32 %v5482, %v5949
      %v5957 = vmul.f32 %v5454, %v5947
      %v5958 = vmul.f32 %v5455, %v5950
      %v5959 = vmul.f32 %v5483, %v5949
      %v5960 = vmul.f32 %v5456, %v5947
      %v5961 = vmul.f32 %v5457, %v5950
      %v5962 = vmul.f32 %v5484, %v5949
      %v5963 = vmul.f32 %v5458, %v5947
      %v5964 = vmul.f32 %v5459, %v5950
      %v5965 = vmul.f32 %v5485, %v5949
      %v5966 = vmul.f32 %v5460, %v5947
      %v5967 = vmul.f32 %v5461, %v5950
      %v5968 = vmul.f32 %v5486, %v5949
      %v5969 = vmul.f32 %v5462, %v5947
      %v5970 = vmul.f32 %v5463, %v5950
      %v5971 = vmul.f32 %v5487, %v5949
      %v5972 = vpack.c.bf16 %v5955, %v5954
      %v5973 = vpack.c.bf16 %v5956, %v5956
      %v5974 = vpack.c.bf16 %v5958, %v5957
      %v5975 = vpack.c.bf16 %v5959, %v5959
      %v5976 = vpack.c.bf16 %v5961, %v5960
      %v5977 = vpack.c.bf16 %v5962, %v5962
      %v5978 = vpack.c.bf16 %v5964, %v5963
      %v5979 = vpack.c.bf16 %v5965, %v5965
      %v5980 = vpack.c.bf16 %v5967, %v5966
      %v5981 = vpack.c.bf16 %v5968, %v5968
      %v5982 = vpack.c.bf16 %v5970, %v5969
      %v5983 = vpack.c.bf16 %v5971, %v5971
      %5984 = vrot.lane.b32.xlu0 %v578, 51
      %v5985 = vpop.permute.xlu0 %5984
      %5986 = vrot.lane.b32.xlu0 %v579, 51
      %v5987 = vpop.permute.xlu0 %5986
      %v5988 = vsel %vm1831, %v5985, %v5987
      %v5992 = vmul.f32 %v5452, %v5985
      %v5993 = vmul.f32 %v5453, %v5988
      %v5994 = vmul.f32 %v5482, %v5987
      %v5995 = vmul.f32 %v5454, %v5985
      %v5996 = vmul.f32 %v5455, %v5988
      %v5997 = vmul.f32 %v5483, %v5987
      %v5998 = vmul.f32 %v5456, %v5985
      %v5999 = vmul.f32 %v5457, %v5988
      %v6000 = vmul.f32 %v5484, %v5987
      %v6001 = vmul.f32 %v5458, %v5985
      %v6002 = vmul.f32 %v5459, %v5988
      %v6003 = vmul.f32 %v5485, %v5987
      %v6004 = vmul.f32 %v5460, %v5985
      %v6005 = vmul.f32 %v5461, %v5988
      %v6006 = vmul.f32 %v5486, %v5987
      %v6007 = vmul.f32 %v5462, %v5985
      %v6008 = vmul.f32 %v5463, %v5988
      %v6009 = vmul.f32 %v5487, %v5987
      %v6010 = vpack.c.bf16 %v5993, %v5992
      %v6011 = vpack.c.bf16 %v5994, %v5994
      %v6012 = vpack.c.bf16 %v5996, %v5995
      %v6013 = vpack.c.bf16 %v5997, %v5997
      %v6014 = vpack.c.bf16 %v5999, %v5998
      %v6015 = vpack.c.bf16 %v6000, %v6000
      %v6016 = vpack.c.bf16 %v6002, %v6001
      %v6017 = vpack.c.bf16 %v6003, %v6003
      %v6018 = vpack.c.bf16 %v6005, %v6004
      %v6019 = vpack.c.bf16 %v6006, %v6006
      %v6020 = vpack.c.bf16 %v6008, %v6007
      %v6021 = vpack.c.bf16 %v6009, %v6009
      %6022 = vrot.lane.b32.xlu0 %v1495, 52
      %v6023 = vpop.permute.xlu0 %6022
      %6024 = vrot.lane.b32.xlu0 %v1496, 52
      %v6025 = vpop.permute.xlu0 %6024
      %vm6026 = vcmask 424960
      %v6027 = vsel %vm6026, %v6023, %v6025
      %v6031 = vmul.f32 %v5452, %v6023
      %v6032 = vmul.f32 %v5453, %v6027
      %v6033 = vmul.f32 %v5482, %v6025
      %v6034 = vmul.f32 %v5454, %v6023
      %v6035 = vmul.f32 %v5455, %v6027
      %v6036 = vmul.f32 %v5483, %v6025
      %v6037 = vmul.f32 %v5456, %v6023
      %v6038 = vmul.f32 %v5457, %v6027
      %v6039 = vmul.f32 %v5484, %v6025
      %v6040 = vmul.f32 %v5458, %v6023
      %v6041 = vmul.f32 %v5459, %v6027
      %v6042 = vmul.f32 %v5485, %v6025
      %v6043 = vmul.f32 %v5460, %v6023
      %v6044 = vmul.f32 %v5461, %v6027
      %v6045 = vmul.f32 %v5486, %v6025
      %v6046 = vmul.f32 %v5462, %v6023
      %v6047 = vmul.f32 %v5463, %v6027
      %v6048 = vmul.f32 %v5487, %v6025
      %v6049 = vpack.c.bf16 %v6032, %v6031
      %v6050 = vpack.c.bf16 %v6033, %v6033
      %v6051 = vpack.c.bf16 %v6035, %v6034
      %v6052 = vpack.c.bf16 %v6036, %v6036
      %v6053 = vpack.c.bf16 %v6038, %v6037
      %v6054 = vpack.c.bf16 %v6039, %v6039
      %v6055 = vpack.c.bf16 %v6041, %v6040
      %v6056 = vpack.c.bf16 %v6042, %v6042
      %v6057 = vpack.c.bf16 %v6044, %v6043
      %v6058 = vpack.c.bf16 %v6045, %v6045
      %v6059 = vpack.c.bf16 %v6047, %v6046
      %v6060 = vpack.c.bf16 %v6048, %v6048
      %6061 = vrot.lane.b32.xlu0 %v1448, 64
      %v6062 = vpop.permute.xlu0 %6061
      %6063 = vrot.lane.b32.xlu0 %v1449, 64
      %v6064 = vpop.permute.xlu0 %6063
      %v6065 = vsel %vm1900, %v6062, %v6064
      %v6069 = vmul.f32 %v5452, %v6062
      %v6070 = vmul.f32 %v5453, %v6065
      %v6071 = vmul.f32 %v5482, %v6064
      %v6072 = vmul.f32 %v5454, %v6062
      %v6073 = vmul.f32 %v5455, %v6065
      %v6074 = vmul.f32 %v5483, %v6064
      %v6075 = vmul.f32 %v5456, %v6062
      %v6076 = vmul.f32 %v5457, %v6065
      %v6077 = vmul.f32 %v5484, %v6064
      %v6078 = vmul.f32 %v5458, %v6062
      %v6079 = vmul.f32 %v5459, %v6065
      %v6080 = vmul.f32 %v5485, %v6064
      %v6081 = vmul.f32 %v5460, %v6062
      %v6082 = vmul.f32 %v5461, %v6065
      %v6083 = vmul.f32 %v5486, %v6064
      %v6084 = vmul.f32 %v5462, %v6062
      %v6085 = vmul.f32 %v5463, %v6065
      %v6086 = vmul.f32 %v5487, %v6064
      %v6087 = vpack.c.bf16 %v6070, %v6069
      %v6088 = vpack.c.bf16 %v6071, %v6071
      %v6089 = vpack.c.bf16 %v6073, %v6072
      %v6090 = vpack.c.bf16 %v6074, %v6074
      %v6091 = vpack.c.bf16 %v6076, %v6075
      %v6092 = vpack.c.bf16 %v6077, %v6077
      %v6093 = vpack.c.bf16 %v6079, %v6078
      %v6094 = vpack.c.bf16 %v6080, %v6080
      %v6095 = vpack.c.bf16 %v6082, %v6081
      %v6096 = vpack.c.bf16 %v6083, %v6083
      %v6097 = vpack.c.bf16 %v6085, %v6084
      %v6098 = vpack.c.bf16 %v6086, %v6086
      %6099 = vrot.lane.b32.xlu0 %v570, 65
      %v6100 = vpop.permute.xlu0 %6099
      %6101 = vrot.lane.b32.xlu0 %v571, 65
      %v6102 = vpop.permute.xlu0 %6101
      %v6103 = vsel %vm1914, %v6100, %v6102
      %v6107 = vmul.f32 %v5452, %v6100
      %v6108 = vmul.f32 %v5453, %v6103
      %v6109 = vmul.f32 %v5482, %v6102
      %v6110 = vmul.f32 %v5454, %v6100
      %v6111 = vmul.f32 %v5455, %v6103
      %v6112 = vmul.f32 %v5483, %v6102
      %v6113 = vmul.f32 %v5456, %v6100
      %v6114 = vmul.f32 %v5457, %v6103
      %v6115 = vmul.f32 %v5484, %v6102
      %v6116 = vmul.f32 %v5458, %v6100
      %v6117 = vmul.f32 %v5459, %v6103
      %v6118 = vmul.f32 %v5485, %v6102
      %v6119 = vmul.f32 %v5460, %v6100
      %v6120 = vmul.f32 %v5461, %v6103
      %v6121 = vmul.f32 %v5486, %v6102
      %v6122 = vmul.f32 %v5462, %v6100
      %v6123 = vmul.f32 %v5463, %v6103
      %v6124 = vmul.f32 %v5487, %v6102
      %v6125 = vpack.c.bf16 %v6108, %v6107
      %v6126 = vpack.c.bf16 %v6109, %v6109
      %v6127 = vpack.c.bf16 %v6111, %v6110
      %v6128 = vpack.c.bf16 %v6112, %v6112
      %v6129 = vpack.c.bf16 %v6114, %v6113
      %v6130 = vpack.c.bf16 %v6115, %v6115
      %v6131 = vpack.c.bf16 %v6117, %v6116
      %v6132 = vpack.c.bf16 %v6118, %v6118
      %v6133 = vpack.c.bf16 %v6120, %v6119
      %v6134 = vpack.c.bf16 %v6121, %v6121
      %v6135 = vpack.c.bf16 %v6123, %v6122
      %v6136 = vpack.c.bf16 %v6124, %v6124
      %6137 = vrot.lane.b32.xlu0 %v578, 67
      %v6138 = vpop.permute.xlu0 %6137
      %6139 = vrot.lane.b32.xlu0 %v579, 67
      %v6140 = vpop.permute.xlu0 %6139
      %v6141 = vsel %vm1942, %v6138, %v6140
      %v6145 = vmul.f32 %v5452, %v6138
      %v6146 = vmul.f32 %v5453, %v6141
      %v6147 = vmul.f32 %v5482, %v6140
      %v6148 = vmul.f32 %v5454, %v6138
      %v6149 = vmul.f32 %v5455, %v6141
      %v6150 = vmul.f32 %v5483, %v6140
      %v6151 = vmul.f32 %v5456, %v6138
      %v6152 = vmul.f32 %v5457, %v6141
      %v6153 = vmul.f32 %v5484, %v6140
      %v6154 = vmul.f32 %v5458, %v6138
      %v6155 = vmul.f32 %v5459, %v6141
      %v6156 = vmul.f32 %v5485, %v6140
      %v6157 = vmul.f32 %v5460, %v6138
      %v6158 = vmul.f32 %v5461, %v6141
      %v6159 = vmul.f32 %v5486, %v6140
      %v6160 = vmul.f32 %v5462, %v6138
      %v6161 = vmul.f32 %v5463, %v6141
      %v6162 = vmul.f32 %v5487, %v6140
      %v6163 = vpack.c.bf16 %v6146, %v6145
      %v6164 = vpack.c.bf16 %v6147, %v6147
      %v6165 = vpack.c.bf16 %v6149, %v6148
      %v6166 = vpack.c.bf16 %v6150, %v6150
      %v6167 = vpack.c.bf16 %v6152, %v6151
      %v6168 = vpack.c.bf16 %v6153, %v6153
      %v6169 = vpack.c.bf16 %v6155, %v6154
      %v6170 = vpack.c.bf16 %v6156, %v6156
      %v6171 = vpack.c.bf16 %v6158, %v6157
      %v6172 = vpack.c.bf16 %v6159, %v6159
      %v6173 = vpack.c.bf16 %v6161, %v6160
      %v6174 = vpack.c.bf16 %v6162, %v6162
      %6175 = vrot.lane.b32.xlu0 %v1495, 68
      %v6176 = vpop.permute.xlu0 %6175
      %6177 = vrot.lane.b32.xlu0 %v1496, 68
      %v6178 = vpop.permute.xlu0 %6177
      %v6179 = vsel %vm1405, %v6176, %v6178
      %v6183 = vmul.f32 %v5452, %v6176
      %v6184 = vmul.f32 %v5453, %v6179
      %v6185 = vmul.f32 %v5482, %v6178
      %v6186 = vmul.f32 %v5454, %v6176
      %v6187 = vmul.f32 %v5455, %v6179
      %v6188 = vmul.f32 %v5483, %v6178
      %v6189 = vmul.f32 %v5456, %v6176
      %v6190 = vmul.f32 %v5457, %v6179
      %v6191 = vmul.f32 %v5484, %v6178
      %v6192 = vmul.f32 %v5458, %v6176
      %v6193 = vmul.f32 %v5459, %v6179
      %v6194 = vmul.f32 %v5485, %v6178
      %v6195 = vmul.f32 %v5460, %v6176
      %v6196 = vmul.f32 %v5461, %v6179
      %v6197 = vmul.f32 %v5486, %v6178
      %v6198 = vmul.f32 %v5462, %v6176
      %v6199 = vmul.f32 %v5463, %v6179
      %v6200 = vmul.f32 %v5487, %v6178
      %v6201 = vpack.c.bf16 %v6184, %v6183
      %v6202 = vpack.c.bf16 %v6185, %v6185
      %v6203 = vpack.c.bf16 %v6187, %v6186
      %v6204 = vpack.c.bf16 %v6188, %v6188
      %v6205 = vpack.c.bf16 %v6190, %v6189
      %v6206 = vpack.c.bf16 %v6191, %v6191
      %v6207 = vpack.c.bf16 %v6193, %v6192
      %v6208 = vpack.c.bf16 %v6194, %v6194
      %v6209 = vpack.c.bf16 %v6196, %v6195
      %v6210 = vpack.c.bf16 %v6197, %v6197
      %v6211 = vpack.c.bf16 %v6199, %v6198
      %v6212 = vpack.c.bf16 %v6200, %v6200
      %v6219 = vunpack.c.l.b16 %v5476
      %v6220 = vunpack.c.h.b16 %v5476
      %v6221 = vunpack.c.l.b16 %v5477
      %v6222 = vunpack.c.h.b16 %v5477
      %v6223 = vunpack.c.l.b16 %v5478
      %v6224 = vunpack.c.h.b16 %v5478
      %v6225 = vunpack.c.l.b16 %v5479
      %v6226 = vunpack.c.h.b16 %v5479
      %v6227 = vunpack.c.l.b16 %v5480
      %v6228 = vunpack.c.h.b16 %v5480
      %v6229 = vunpack.c.l.b16 %v5481
      %v6230 = vunpack.c.h.b16 %v5481
      %v6231 = vpack.c.b16 %v6221, %v6219
      %v6232 = vpack.c.b16 %v6222, %v6220
      %v6233 = vpack.c.b16 %v6225, %v6223
      %v6234 = vpack.c.b16 %v6226, %v6224
      %v6235 = vpack.c.b16 %v6229, %v6227
      %v6236 = vpack.c.b16 %v6230, %v6228
      %v6255 = vunpack.c.l.b16 %v5514
      %v6256 = vunpack.c.h.b16 %v5514
      %v6257 = vunpack.c.l.b16 %v5515
      %v6258 = vunpack.c.l.b16 %v5516
      %v6259 = vunpack.c.h.b16 %v5516
      %v6260 = vunpack.c.l.b16 %v5517
      %v6261 = vunpack.c.l.b16 %v5518
      %v6262 = vunpack.c.h.b16 %v5518
      %v6263 = vunpack.c.l.b16 %v5519
      %v6264 = vunpack.c.l.b16 %v5520
      %v6265 = vunpack.c.h.b16 %v5520
      %v6266 = vunpack.c.l.b16 %v5521
      %v6267 = vunpack.c.l.b16 %v5522
      %v6268 = vunpack.c.h.b16 %v5522
      %v6269 = vunpack.c.l.b16 %v5523
      %v6270 = vunpack.c.l.b16 %v5524
      %v6271 = vunpack.c.h.b16 %v5524
      %v6272 = vunpack.c.l.b16 %v5525
      %v6273 = vpack.c.b16 %v6258, %v6255
      %v6274 = vpack.c.b16 %v6259, %v6256
      %v6275 = vpack.c.b16 %v6260, %v6257
      %v6276 = vpack.c.b16 %v6264, %v6261
      %v6277 = vpack.c.b16 %v6265, %v6262
      %v6278 = vpack.c.b16 %v6266, %v6263
      %v6279 = vpack.c.b16 %v6270, %v6267
      %v6280 = vpack.c.b16 %v6271, %v6268
      %v6281 = vpack.c.b16 %v6272, %v6269
      %6282 = vrot.lane.b32.xlu0 %v6273, 127
      %v6283 = vpop.permute.xlu0 %6282
      %6284 = vrot.lane.b32.xlu0 %v6274, 127
      %v6285 = vpop.permute.xlu0 %6284
      %6286 = vrot.lane.b32.xlu0 %v6275, 127
      %v6287 = vpop.permute.xlu0 %6286
      %6288 = vrot.lane.b32.xlu0 %v6276, 127
      %v6289 = vpop.permute.xlu0 %6288
      %6290 = vrot.lane.b32.xlu0 %v6277, 127
      %v6291 = vpop.permute.xlu0 %6290
      %6292 = vrot.lane.b32.xlu0 %v6278, 127
      %v6293 = vpop.permute.xlu0 %6292
      %6294 = vrot.lane.b32.xlu0 %v6279, 127
      %v6295 = vpop.permute.xlu0 %6294
      %6296 = vrot.lane.b32.xlu0 %v6280, 127
      %v6297 = vpop.permute.xlu0 %6296
      %6298 = vrot.lane.b32.xlu0 %v6281, 127
      %v6299 = vpop.permute.xlu0 %6298
      %v6300 = vsel %vm670, %v6283, %v6285
      %v6301 = vsel %vm670, %v6285, %v6287
      %v6302 = vsel %vm670, %v6289, %v6291
      %v6303 = vsel %vm670, %v6291, %v6293
      %v6304 = vsel %vm670, %v6295, %v6297
      %v6305 = vsel %vm670, %v6297, %v6299
      %6318 = vrot.lane.b32.xlu0 %v5435, 126
      %v6319 = vpop.permute.xlu0 %6318
      %6320 = vrot.lane.b32.xlu0 %v5428, 126
      %v6321 = vpop.permute.xlu0 %6320
      %6322 = vrot.lane.b32.xlu0 %v5444, 126
      %v6323 = vpop.permute.xlu0 %6322
      %6324 = vrot.lane.b32.xlu0 %v5438, 126
      %v6325 = vpop.permute.xlu0 %6324
      %6326 = vrot.lane.b32.xlu0 %v5429, 126
      %v6327 = vpop.permute.xlu0 %6326
      %6328 = vrot.lane.b32.xlu0 %v5447, 126
      %v6329 = vpop.permute.xlu0 %6328
      %6330 = vrot.lane.b32.xlu0 %v5441, 126
      %v6331 = vpop.permute.xlu0 %6330
      %6332 = vrot.lane.b32.xlu0 %v5430, 126
      %v6333 = vpop.permute.xlu0 %6332
      %6334 = vrot.lane.b32.xlu0 %v5450, 126
      %v6335 = vpop.permute.xlu0 %6334
      %v6336 = vsel %vm687, %v6319, %v6321
      %v6337 = vsel %vm687, %v6321, %v6323
      %v6338 = vsel %vm687, %v6325, %v6327
      %v6339 = vsel %vm687, %v6327, %v6329
      %v6340 = vsel %vm687, %v6331, %v6333
      %v6341 = vsel %vm687, %v6333, %v6335
      %v6360 = vunpack.c.l.b16 %v5552
      %v6361 = vunpack.c.h.b16 %v5552
      %v6362 = vunpack.c.l.b16 %v5553
      %v6363 = vunpack.c.l.b16 %v5554
      %v6364 = vunpack.c.h.b16 %v5554
      %v6365 = vunpack.c.l.b16 %v5555
      %v6366 = vunpack.c.l.b16 %v5556
      %v6367 = vunpack.c.h.b16 %v5556
      %v6368 = vunpack.c.l.b16 %v5557
      %v6369 = vunpack.c.l.b16 %v5558
      %v6370 = vunpack.c.h.b16 %v5558
      %v6371 = vunpack.c.l.b16 %v5559
      %v6372 = vunpack.c.l.b16 %v5560
      %v6373 = vunpack.c.h.b16 %v5560
      %v6374 = vunpack.c.l.b16 %v5561
      %v6375 = vunpack.c.l.b16 %v5562
      %v6376 = vunpack.c.h.b16 %v5562
      %v6377 = vunpack.c.l.b16 %v5563
      %v6378 = vpack.c.b16 %v6363, %v6360
      %v6379 = vpack.c.b16 %v6364, %v6361
      %v6380 = vpack.c.b16 %v6365, %v6362
      %v6381 = vpack.c.b16 %v6369, %v6366
      %v6382 = vpack.c.b16 %v6370, %v6367
      %v6383 = vpack.c.b16 %v6371, %v6368
      %v6384 = vpack.c.b16 %v6375, %v6372
      %v6385 = vpack.c.b16 %v6376, %v6373
      %v6386 = vpack.c.b16 %v6377, %v6374
      %6387 = vrot.lane.b32.xlu0 %v6378, 125
      %v6388 = vpop.permute.xlu0 %6387
      %6389 = vrot.lane.b32.xlu0 %v6379, 125
      %v6390 = vpop.permute.xlu0 %6389
      %6391 = vrot.lane.b32.xlu0 %v6380, 125
      %v6392 = vpop.permute.xlu0 %6391
      %6393 = vrot.lane.b32.xlu0 %v6381, 125
      %v6394 = vpop.permute.xlu0 %6393
      %6395 = vrot.lane.b32.xlu0 %v6382, 125
      %v6396 = vpop.permute.xlu0 %6395
      %6397 = vrot.lane.b32.xlu0 %v6383, 125
      %v6398 = vpop.permute.xlu0 %6397
      %6399 = vrot.lane.b32.xlu0 %v6384, 125
      %v6400 = vpop.permute.xlu0 %6399
      %6401 = vrot.lane.b32.xlu0 %v6385, 125
      %v6402 = vpop.permute.xlu0 %6401
      %6403 = vrot.lane.b32.xlu0 %v6386, 125
      %v6404 = vpop.permute.xlu0 %6403
      %v6405 = vsel %vm2443, %v6388, %v6390
      %v6406 = vsel %vm2443, %v6390, %v6392
      %v6407 = vsel %vm2443, %v6394, %v6396
      %v6408 = vsel %vm2443, %v6396, %v6398
      %v6409 = vsel %vm2443, %v6400, %v6402
      %v6410 = vsel %vm2443, %v6402, %v6404
      %v6429 = vunpack.c.l.b16 %v5591
      %v6430 = vunpack.c.h.b16 %v5591
      %v6431 = vunpack.c.l.b16 %v5592
      %v6432 = vunpack.c.l.b16 %v5593
      %v6433 = vunpack.c.h.b16 %v5593
      %v6434 = vunpack.c.l.b16 %v5594
      %v6435 = vunpack.c.l.b16 %v5595
      %v6436 = vunpack.c.h.b16 %v5595
      %v6437 = vunpack.c.l.b16 %v5596
      %v6438 = vunpack.c.l.b16 %v5597
      %v6439 = vunpack.c.h.b16 %v5597
      %v6440 = vunpack.c.l.b16 %v5598
      %v6441 = vunpack.c.l.b16 %v5599
      %v6442 = vunpack.c.h.b16 %v5599
      %v6443 = vunpack.c.l.b16 %v5600
      %v6444 = vunpack.c.l.b16 %v5601
      %v6445 = vunpack.c.h.b16 %v5601
      %v6446 = vunpack.c.l.b16 %v5602
      %v6447 = vpack.c.b16 %v6432, %v6429
      %v6448 = vpack.c.b16 %v6433, %v6430
      %v6449 = vpack.c.b16 %v6434, %v6431
      %v6450 = vpack.c.b16 %v6438, %v6435
      %v6451 = vpack.c.b16 %v6439, %v6436
      %v6452 = vpack.c.b16 %v6440, %v6437
      %v6453 = vpack.c.b16 %v6444, %v6441
      %v6454 = vpack.c.b16 %v6445, %v6442
      %v6455 = vpack.c.b16 %v6446, %v6443
      %6456 = vrot.lane.b32.xlu0 %v6447, 124
      %v6457 = vpop.permute.xlu0 %6456
      %6458 = vrot.lane.b32.xlu0 %v6448, 124
      %v6459 = vpop.permute.xlu0 %6458
      %6460 = vrot.lane.b32.xlu0 %v6449, 124
      %v6461 = vpop.permute.xlu0 %6460
      %6462 = vrot.lane.b32.xlu0 %v6450, 124
      %v6463 = vpop.permute.xlu0 %6462
      %6464 = vrot.lane.b32.xlu0 %v6451, 124
      %v6465 = vpop.permute.xlu0 %6464
      %6466 = vrot.lane.b32.xlu0 %v6452, 124
      %v6467 = vpop.permute.xlu0 %6466
      %6468 = vrot.lane.b32.xlu0 %v6453, 124
      %v6469 = vpop.permute.xlu0 %6468
      %6470 = vrot.lane.b32.xlu0 %v6454, 124
      %v6471 = vpop.permute.xlu0 %6470
      %6472 = vrot.lane.b32.xlu0 %v6455, 124
      %v6473 = vpop.permute.xlu0 %6472
      %v6474 = vsel %vm2457, %v6457, %v6459
      %v6475 = vsel %vm2457, %v6459, %v6461
      %v6476 = vsel %vm2457, %v6463, %v6465
      %v6477 = vsel %vm2457, %v6465, %v6467
      %v6478 = vsel %vm2457, %v6469, %v6471
      %v6479 = vsel %vm2457, %v6471, %v6473
      %v6498 = vunpack.c.l.b16 %v5629
      %v6499 = vunpack.c.h.b16 %v5629
      %v6500 = vunpack.c.l.b16 %v5630
      %v6501 = vunpack.c.l.b16 %v5631
      %v6502 = vunpack.c.h.b16 %v5631
      %v6503 = vunpack.c.l.b16 %v5632
      %v6504 = vunpack.c.l.b16 %v5633
      %v6505 = vunpack.c.h.b16 %v5633
      %v6506 = vunpack.c.l.b16 %v5634
      %v6507 = vunpack.c.l.b16 %v5635
      %v6508 = vunpack.c.h.b16 %v5635
      %v6509 = vunpack.c.l.b16 %v5636
      %v6510 = vunpack.c.l.b16 %v5637
      %v6511 = vunpack.c.h.b16 %v5637
      %v6512 = vunpack.c.l.b16 %v5638
      %v6513 = vunpack.c.l.b16 %v5639
      %v6514 = vunpack.c.h.b16 %v5639
      %v6515 = vunpack.c.l.b16 %v5640
      %v6516 = vpack.c.b16 %v6501, %v6498
      %v6517 = vpack.c.b16 %v6502, %v6499
      %v6518 = vpack.c.b16 %v6503, %v6500
      %v6519 = vpack.c.b16 %v6507, %v6504
      %v6520 = vpack.c.b16 %v6508, %v6505
      %v6521 = vpack.c.b16 %v6509, %v6506
      %v6522 = vpack.c.b16 %v6513, %v6510
      %v6523 = vpack.c.b16 %v6514, %v6511
      %v6524 = vpack.c.b16 %v6515, %v6512
      %6525 = vrot.lane.b32.xlu0 %v6516, 112
      %v6526 = vpop.permute.xlu0 %6525
      %6527 = vrot.lane.b32.xlu0 %v6517, 112
      %v6528 = vpop.permute.xlu0 %6527
      %6529 = vrot.lane.b32.xlu0 %v6518, 112
      %v6530 = vpop.permute.xlu0 %6529
      %6531 = vrot.lane.b32.xlu0 %v6519, 112
      %v6532 = vpop.permute.xlu0 %6531
      %6533 = vrot.lane.b32.xlu0 %v6520, 112
      %v6534 = vpop.permute.xlu0 %6533
      %6535 = vrot.lane.b32.xlu0 %v6521, 112
      %v6536 = vpop.permute.xlu0 %6535
      %6537 = vrot.lane.b32.xlu0 %v6522, 112
      %v6538 = vpop.permute.xlu0 %6537
      %6539 = vrot.lane.b32.xlu0 %v6523, 112
      %v6540 = vpop.permute.xlu0 %6539
      %6541 = vrot.lane.b32.xlu0 %v6524, 112
      %v6542 = vpop.permute.xlu0 %6541
      %v6543 = vsel %vm707, %v6526, %v6528
      %v6544 = vsel %vm707, %v6528, %v6530
      %v6545 = vsel %vm707, %v6532, %v6534
      %v6546 = vsel %vm707, %v6534, %v6536
      %v6547 = vsel %vm707, %v6538, %v6540
      %v6548 = vsel %vm707, %v6540, %v6542
      %v6567 = vunpack.c.l.b16 %v5667
      %v6568 = vunpack.c.h.b16 %v5667
      %v6569 = vunpack.c.l.b16 %v5668
      %v6570 = vunpack.c.l.b16 %v5669
      %v6571 = vunpack.c.h.b16 %v5669
      %v6572 = vunpack.c.l.b16 %v5670
      %v6573 = vunpack.c.l.b16 %v5671
      %v6574 = vunpack.c.h.b16 %v5671
      %v6575 = vunpack.c.l.b16 %v5672
      %v6576 = vunpack.c.l.b16 %v5673
      %v6577 = vunpack.c.h.b16 %v5673
      %v6578 = vunpack.c.l.b16 %v5674
      %v6579 = vunpack.c.l.b16 %v5675
      %v6580 = vunpack.c.h.b16 %v5675
      %v6581 = vunpack.c.l.b16 %v5676
      %v6582 = vunpack.c.l.b16 %v5677
      %v6583 = vunpack.c.h.b16 %v5677
      %v6584 = vunpack.c.l.b16 %v5678
      %v6585 = vpack.c.b16 %v6570, %v6567
      %v6586 = vpack.c.b16 %v6571, %v6568
      %v6587 = vpack.c.b16 %v6572, %v6569
      %v6588 = vpack.c.b16 %v6576, %v6573
      %v6589 = vpack.c.b16 %v6577, %v6574
      %v6590 = vpack.c.b16 %v6578, %v6575
      %v6591 = vpack.c.b16 %v6582, %v6579
      %v6592 = vpack.c.b16 %v6583, %v6580
      %v6593 = vpack.c.b16 %v6584, %v6581
      %6594 = vrot.lane.b32.xlu0 %v6585, 111
      %v6595 = vpop.permute.xlu0 %6594
      %6596 = vrot.lane.b32.xlu0 %v6586, 111
      %v6597 = vpop.permute.xlu0 %6596
      %6598 = vrot.lane.b32.xlu0 %v6587, 111
      %v6599 = vpop.permute.xlu0 %6598
      %6600 = vrot.lane.b32.xlu0 %v6588, 111
      %v6601 = vpop.permute.xlu0 %6600
      %6602 = vrot.lane.b32.xlu0 %v6589, 111
      %v6603 = vpop.permute.xlu0 %6602
      %6604 = vrot.lane.b32.xlu0 %v6590, 111
      %v6605 = vpop.permute.xlu0 %6604
      %6606 = vrot.lane.b32.xlu0 %v6591, 111
      %v6607 = vpop.permute.xlu0 %6606
      %6608 = vrot.lane.b32.xlu0 %v6592, 111
      %v6609 = vpop.permute.xlu0 %6608
      %6610 = vrot.lane.b32.xlu0 %v6593, 111
      %v6611 = vpop.permute.xlu0 %6610
      %v6612 = vsel %vm716, %v6595, %v6597
      %v6613 = vsel %vm716, %v6597, %v6599
      %v6614 = vsel %vm716, %v6601, %v6603
      %v6615 = vsel %vm716, %v6603, %v6605
      %v6616 = vsel %vm716, %v6607, %v6609
      %v6617 = vsel %vm716, %v6609, %v6611
      %6624 = vrot.lane.b32.xlu0 %v5435, 110
      %v6625 = vpop.permute.xlu0 %6624
      %6626 = vrot.lane.b32.xlu0 %v5428, 110
      %v6627 = vpop.permute.xlu0 %6626
      %6628 = vrot.lane.b32.xlu0 %v5444, 110
      %v6629 = vpop.permute.xlu0 %6628
      %6630 = vrot.lane.b32.xlu0 %v5438, 110
      %v6631 = vpop.permute.xlu0 %6630
      %6632 = vrot.lane.b32.xlu0 %v5429, 110
      %v6633 = vpop.permute.xlu0 %6632
      %6634 = vrot.lane.b32.xlu0 %v5447, 110
      %v6635 = vpop.permute.xlu0 %6634
      %6636 = vrot.lane.b32.xlu0 %v5441, 110
      %v6637 = vpop.permute.xlu0 %6636
      %6638 = vrot.lane.b32.xlu0 %v5430, 110
      %v6639 = vpop.permute.xlu0 %6638
      %6640 = vrot.lane.b32.xlu0 %v5450, 110
      %v6641 = vpop.permute.xlu0 %6640
      %v6642 = vsel %vm736, %v6625, %v6627
      %v6643 = vsel %vm736, %v6627, %v6629
      %v6644 = vsel %vm736, %v6631, %v6633
      %v6645 = vsel %vm736, %v6633, %v6635
      %v6646 = vsel %vm736, %v6637, %v6639
      %v6647 = vsel %vm736, %v6639, %v6641
      %v6666 = vunpack.c.l.b16 %v5705
      %v6667 = vunpack.c.h.b16 %v5705
      %v6668 = vunpack.c.l.b16 %v5706
      %v6669 = vunpack.c.l.b16 %v5707
      %v6670 = vunpack.c.h.b16 %v5707
      %v6671 = vunpack.c.l.b16 %v5708
      %v6672 = vunpack.c.l.b16 %v5709
      %v6673 = vunpack.c.h.b16 %v5709
      %v6674 = vunpack.c.l.b16 %v5710
      %v6675 = vunpack.c.l.b16 %v5711
      %v6676 = vunpack.c.h.b16 %v5711
      %v6677 = vunpack.c.l.b16 %v5712
      %v6678 = vunpack.c.l.b16 %v5713
      %v6679 = vunpack.c.h.b16 %v5713
      %v6680 = vunpack.c.l.b16 %v5714
      %v6681 = vunpack.c.l.b16 %v5715
      %v6682 = vunpack.c.h.b16 %v5715
      %v6683 = vunpack.c.l.b16 %v5716
      %v6684 = vpack.c.b16 %v6669, %v6666
      %v6685 = vpack.c.b16 %v6670, %v6667
      %v6686 = vpack.c.b16 %v6671, %v6668
      %v6687 = vpack.c.b16 %v6675, %v6672
      %v6688 = vpack.c.b16 %v6676, %v6673
      %v6689 = vpack.c.b16 %v6677, %v6674
      %v6690 = vpack.c.b16 %v6681, %v6678
      %v6691 = vpack.c.b16 %v6682, %v6679
      %v6692 = vpack.c.b16 %v6683, %v6680
      %6693 = vrot.lane.b32.xlu0 %v6684, 109
      %v6694 = vpop.permute.xlu0 %6693
      %6695 = vrot.lane.b32.xlu0 %v6685, 109
      %v6696 = vpop.permute.xlu0 %6695
      %6697 = vrot.lane.b32.xlu0 %v6686, 109
      %v6698 = vpop.permute.xlu0 %6697
      %6699 = vrot.lane.b32.xlu0 %v6687, 109
      %v6700 = vpop.permute.xlu0 %6699
      %6701 = vrot.lane.b32.xlu0 %v6688, 109
      %v6702 = vpop.permute.xlu0 %6701
      %6703 = vrot.lane.b32.xlu0 %v6689, 109
      %v6704 = vpop.permute.xlu0 %6703
      %6705 = vrot.lane.b32.xlu0 %v6690, 109
      %v6706 = vpop.permute.xlu0 %6705
      %6707 = vrot.lane.b32.xlu0 %v6691, 109
      %v6708 = vpop.permute.xlu0 %6707
      %6709 = vrot.lane.b32.xlu0 %v6692, 109
      %v6710 = vpop.permute.xlu0 %6709
      %v6711 = vsel %vm2608, %v6694, %v6696
      %v6712 = vsel %vm2608, %v6696, %v6698
      %v6713 = vsel %vm2608, %v6700, %v6702
      %v6714 = vsel %vm2608, %v6702, %v6704
      %v6715 = vsel %vm2608, %v6706, %v6708
      %v6716 = vsel %vm2608, %v6708, %v6710
      %v6735 = vunpack.c.l.b16 %v5744
      %v6736 = vunpack.c.h.b16 %v5744
      %v6737 = vunpack.c.l.b16 %v5745
      %v6738 = vunpack.c.l.b16 %v5746
      %v6739 = vunpack.c.h.b16 %v5746
      %v6740 = vunpack.c.l.b16 %v5747
      %v6741 = vunpack.c.l.b16 %v5748
      %v6742 = vunpack.c.h.b16 %v5748
      %v6743 = vunpack.c.l.b16 %v5749
      %v6744 = vunpack.c.l.b16 %v5750
      %v6745 = vunpack.c.h.b16 %v5750
      %v6746 = vunpack.c.l.b16 %v5751
      %v6747 = vunpack.c.l.b16 %v5752
      %v6748 = vunpack.c.h.b16 %v5752
      %v6749 = vunpack.c.l.b16 %v5753
      %v6750 = vunpack.c.l.b16 %v5754
      %v6751 = vunpack.c.h.b16 %v5754
      %v6752 = vunpack.c.l.b16 %v5755
      %v6753 = vpack.c.b16 %v6738, %v6735
      %v6754 = vpack.c.b16 %v6739, %v6736
      %v6755 = vpack.c.b16 %v6740, %v6737
      %v6756 = vpack.c.b16 %v6744, %v6741
      %v6757 = vpack.c.b16 %v6745, %v6742
      %v6758 = vpack.c.b16 %v6746, %v6743
      %v6759 = vpack.c.b16 %v6750, %v6747
      %v6760 = vpack.c.b16 %v6751, %v6748
      %v6761 = vpack.c.b16 %v6752, %v6749
      %6762 = vrot.lane.b32.xlu0 %v6753, 108
      %v6763 = vpop.permute.xlu0 %6762
      %6764 = vrot.lane.b32.xlu0 %v6754, 108
      %v6765 = vpop.permute.xlu0 %6764
      %6766 = vrot.lane.b32.xlu0 %v6755, 108
      %v6767 = vpop.permute.xlu0 %6766
      %6768 = vrot.lane.b32.xlu0 %v6756, 108
      %v6769 = vpop.permute.xlu0 %6768
      %6770 = vrot.lane.b32.xlu0 %v6757, 108
      %v6771 = vpop.permute.xlu0 %6770
      %6772 = vrot.lane.b32.xlu0 %v6758, 108
      %v6773 = vpop.permute.xlu0 %6772
      %6774 = vrot.lane.b32.xlu0 %v6759, 108
      %v6775 = vpop.permute.xlu0 %6774
      %6776 = vrot.lane.b32.xlu0 %v6760, 108
      %v6777 = vpop.permute.xlu0 %6776
      %6778 = vrot.lane.b32.xlu0 %v6761, 108
      %v6779 = vpop.permute.xlu0 %6778
      %v6780 = vsel %vm2620, %v6763, %v6765
      %v6781 = vsel %vm2620, %v6765, %v6767
      %v6782 = vsel %vm2620, %v6769, %v6771
      %v6783 = vsel %vm2620, %v6771, %v6773
      %v6784 = vsel %vm2620, %v6775, %v6777
      %v6785 = vsel %vm2620, %v6777, %v6779
      %v6804 = vunpack.c.l.b16 %v5782
      %v6805 = vunpack.c.h.b16 %v5782
      %v6806 = vunpack.c.l.b16 %v5783
      %v6807 = vunpack.c.l.b16 %v5784
      %v6808 = vunpack.c.h.b16 %v5784
      %v6809 = vunpack.c.l.b16 %v5785
      %v6810 = vunpack.c.l.b16 %v5786
      %v6811 = vunpack.c.h.b16 %v5786
      %v6812 = vunpack.c.l.b16 %v5787
      %v6813 = vunpack.c.l.b16 %v5788
      %v6814 = vunpack.c.h.b16 %v5788
      %v6815 = vunpack.c.l.b16 %v5789
      %v6816 = vunpack.c.l.b16 %v5790
      %v6817 = vunpack.c.h.b16 %v5790
      %v6818 = vunpack.c.l.b16 %v5791
      %v6819 = vunpack.c.l.b16 %v5792
      %v6820 = vunpack.c.h.b16 %v5792
      %v6821 = vunpack.c.l.b16 %v5793
      %v6822 = vpack.c.b16 %v6807, %v6804
      %v6823 = vpack.c.b16 %v6808, %v6805
      %v6824 = vpack.c.b16 %v6809, %v6806
      %v6825 = vpack.c.b16 %v6813, %v6810
      %v6826 = vpack.c.b16 %v6814, %v6811
      %v6827 = vpack.c.b16 %v6815, %v6812
      %v6828 = vpack.c.b16 %v6819, %v6816
      %v6829 = vpack.c.b16 %v6820, %v6817
      %v6830 = vpack.c.b16 %v6821, %v6818
      %6831 = vrot.lane.b32.xlu0 %v6822, 96
      %v6832 = vpop.permute.xlu0 %6831
      %6833 = vrot.lane.b32.xlu0 %v6823, 96
      %v6834 = vpop.permute.xlu0 %6833
      %6835 = vrot.lane.b32.xlu0 %v6824, 96
      %v6836 = vpop.permute.xlu0 %6835
      %6837 = vrot.lane.b32.xlu0 %v6825, 96
      %v6838 = vpop.permute.xlu0 %6837
      %6839 = vrot.lane.b32.xlu0 %v6826, 96
      %v6840 = vpop.permute.xlu0 %6839
      %6841 = vrot.lane.b32.xlu0 %v6827, 96
      %v6842 = vpop.permute.xlu0 %6841
      %6843 = vrot.lane.b32.xlu0 %v6828, 96
      %v6844 = vpop.permute.xlu0 %6843
      %6845 = vrot.lane.b32.xlu0 %v6829, 96
      %v6846 = vpop.permute.xlu0 %6845
      %6847 = vrot.lane.b32.xlu0 %v6830, 96
      %v6848 = vpop.permute.xlu0 %6847
      %v6849 = vsel %vm753, %v6832, %v6834
      %v6850 = vsel %vm753, %v6834, %v6836
      %v6851 = vsel %vm753, %v6838, %v6840
      %v6852 = vsel %vm753, %v6840, %v6842
      %v6853 = vsel %vm753, %v6844, %v6846
      %v6854 = vsel %vm753, %v6846, %v6848
      %v6873 = vunpack.c.l.b16 %v5820
      %v6874 = vunpack.c.h.b16 %v5820
      %v6875 = vunpack.c.l.b16 %v5821
      %v6876 = vunpack.c.l.b16 %v5822
      %v6877 = vunpack.c.h.b16 %v5822
      %v6878 = vunpack.c.l.b16 %v5823
      %v6879 = vunpack.c.l.b16 %v5824
      %v6880 = vunpack.c.h.b16 %v5824
      %v6881 = vunpack.c.l.b16 %v5825
      %v6882 = vunpack.c.l.b16 %v5826
      %v6883 = vunpack.c.h.b16 %v5826
      %v6884 = vunpack.c.l.b16 %v5827
      %v6885 = vunpack.c.l.b16 %v5828
      %v6886 = vunpack.c.h.b16 %v5828
      %v6887 = vunpack.c.l.b16 %v5829
      %v6888 = vunpack.c.l.b16 %v5830
      %v6889 = vunpack.c.h.b16 %v5830
      %v6890 = vunpack.c.l.b16 %v5831
      %v6891 = vpack.c.b16 %v6876, %v6873
      %v6892 = vpack.c.b16 %v6877, %v6874
      %v6893 = vpack.c.b16 %v6878, %v6875
      %v6894 = vpack.c.b16 %v6882, %v6879
      %v6895 = vpack.c.b16 %v6883, %v6880
      %v6896 = vpack.c.b16 %v6884, %v6881
      %v6897 = vpack.c.b16 %v6888, %v6885
      %v6898 = vpack.c.b16 %v6889, %v6886
      %v6899 = vpack.c.b16 %v6890, %v6887
      %6900 = vrot.lane.b32.xlu0 %v6891, 95
      %v6901 = vpop.permute.xlu0 %6900
      %6902 = vrot.lane.b32.xlu0 %v6892, 95
      %v6903 = vpop.permute.xlu0 %6902
      %6904 = vrot.lane.b32.xlu0 %v6893, 95
      %v6905 = vpop.permute.xlu0 %6904
      %6906 = vrot.lane.b32.xlu0 %v6894, 95
      %v6907 = vpop.permute.xlu0 %6906
      %6908 = vrot.lane.b32.xlu0 %v6895, 95
      %v6909 = vpop.permute.xlu0 %6908
      %6910 = vrot.lane.b32.xlu0 %v6896, 95
      %v6911 = vpop.permute.xlu0 %6910
      %6912 = vrot.lane.b32.xlu0 %v6897, 95
      %v6913 = vpop.permute.xlu0 %6912
      %6914 = vrot.lane.b32.xlu0 %v6898, 95
      %v6915 = vpop.permute.xlu0 %6914
      %6916 = vrot.lane.b32.xlu0 %v6899, 95
      %v6917 = vpop.permute.xlu0 %6916
      %v6918 = vsel %vm765, %v6901, %v6903
      %v6919 = vsel %vm765, %v6903, %v6905
      %v6920 = vsel %vm765, %v6907, %v6909
      %v6921 = vsel %vm765, %v6909, %v6911
      %v6922 = vsel %vm765, %v6913, %v6915
      %v6923 = vsel %vm765, %v6915, %v6917
      %6930 = vrot.lane.b32.xlu0 %v5435, 94
      %v6931 = vpop.permute.xlu0 %6930
      %6932 = vrot.lane.b32.xlu0 %v5428, 94
      %v6933 = vpop.permute.xlu0 %6932
      %6934 = vrot.lane.b32.xlu0 %v5444, 94
      %v6935 = vpop.permute.xlu0 %6934
      %6936 = vrot.lane.b32.xlu0 %v5438, 94
      %v6937 = vpop.permute.xlu0 %6936
      %6938 = vrot.lane.b32.xlu0 %v5429, 94
      %v6939 = vpop.permute.xlu0 %6938
      %6940 = vrot.lane.b32.xlu0 %v5447, 94
      %v6941 = vpop.permute.xlu0 %6940
      %6942 = vrot.lane.b32.xlu0 %v5441, 94
      %v6943 = vpop.permute.xlu0 %6942
      %6944 = vrot.lane.b32.xlu0 %v5430, 94
      %v6945 = vpop.permute.xlu0 %6944
      %6946 = vrot.lane.b32.xlu0 %v5450, 94
      %v6947 = vpop.permute.xlu0 %6946
      %v6948 = vsel %vm782, %v6931, %v6933
      %v6949 = vsel %vm782, %v6933, %v6935
      %v6950 = vsel %vm782, %v6937, %v6939
      %v6951 = vsel %vm782, %v6939, %v6941
      %v6952 = vsel %vm782, %v6943, %v6945
      %v6953 = vsel %vm782, %v6945, %v6947
      %v6972 = vunpack.c.l.b16 %v5858
      %v6973 = vunpack.c.h.b16 %v5858
      %v6974 = vunpack.c.l.b16 %v5859
      %v6975 = vunpack.c.l.b16 %v5860
      %v6976 = vunpack.c.h.b16 %v5860
      %v6977 = vunpack.c.l.b16 %v5861
      %v6978 = vunpack.c.l.b16 %v5862
      %v6979 = vunpack.c.h.b16 %v5862
      %v6980 = vunpack.c.l.b16 %v5863
      %v6981 = vunpack.c.l.b16 %v5864
      %v6982 = vunpack.c.h.b16 %v5864
      %v6983 = vunpack.c.l.b16 %v5865
      %v6984 = vunpack.c.l.b16 %v5866
      %v6985 = vunpack.c.h.b16 %v5866
      %v6986 = vunpack.c.l.b16 %v5867
      %v6987 = vunpack.c.l.b16 %v5868
      %v6988 = vunpack.c.h.b16 %v5868
      %v6989 = vunpack.c.l.b16 %v5869
      %v6990 = vpack.c.b16 %v6975, %v6972
      %v6991 = vpack.c.b16 %v6976, %v6973
      %v6992 = vpack.c.b16 %v6977, %v6974
      %v6993 = vpack.c.b16 %v6981, %v6978
      %v6994 = vpack.c.b16 %v6982, %v6979
      %v6995 = vpack.c.b16 %v6983, %v6980
      %v6996 = vpack.c.b16 %v6987, %v6984
      %v6997 = vpack.c.b16 %v6988, %v6985
      %v6998 = vpack.c.b16 %v6989, %v6986
      %6999 = vrot.lane.b32.xlu0 %v6990, 93
      %v7000 = vpop.permute.xlu0 %6999
      %7001 = vrot.lane.b32.xlu0 %v6991, 93
      %v7002 = vpop.permute.xlu0 %7001
      %7003 = vrot.lane.b32.xlu0 %v6992, 93
      %v7004 = vpop.permute.xlu0 %7003
      %7005 = vrot.lane.b32.xlu0 %v6993, 93
      %v7006 = vpop.permute.xlu0 %7005
      %7007 = vrot.lane.b32.xlu0 %v6994, 93
      %v7008 = vpop.permute.xlu0 %7007
      %7009 = vrot.lane.b32.xlu0 %v6995, 93
      %v7010 = vpop.permute.xlu0 %7009
      %7011 = vrot.lane.b32.xlu0 %v6996, 93
      %v7012 = vpop.permute.xlu0 %7011
      %7013 = vrot.lane.b32.xlu0 %v6997, 93
      %v7014 = vpop.permute.xlu0 %7013
      %7015 = vrot.lane.b32.xlu0 %v6998, 93
      %v7016 = vpop.permute.xlu0 %7015
      %vm7017 = vcmask 760832
      %v7018 = vsel %vm7017, %v7000, %v7002
      %v7019 = vsel %vm7017, %v7002, %v7004
      %v7020 = vsel %vm7017, %v7006, %v7008
      %v7021 = vsel %vm7017, %v7008, %v7010
      %v7022 = vsel %vm7017, %v7012, %v7014
      %v7023 = vsel %vm7017, %v7014, %v7016
      %v7042 = vunpack.c.l.b16 %v5896
      %v7043 = vunpack.c.h.b16 %v5896
      %v7044 = vunpack.c.l.b16 %v5897
      %v7045 = vunpack.c.l.b16 %v5898
      %v7046 = vunpack.c.h.b16 %v5898
      %v7047 = vunpack.c.l.b16 %v5899
      %v7048 = vunpack.c.l.b16 %v5900
      %v7049 = vunpack.c.h.b16 %v5900
      %v7050 = vunpack.c.l.b16 %v5901
      %v7051 = vunpack.c.l.b16 %v5902
      %v7052 = vunpack.c.h.b16 %v5902
      %v7053 = vunpack.c.l.b16 %v5903
      %v7054 = vunpack.c.l.b16 %v5904
      %v7055 = vunpack.c.h.b16 %v5904
      %v7056 = vunpack.c.l.b16 %v5905
      %v7057 = vunpack.c.l.b16 %v5906
      %v7058 = vunpack.c.h.b16 %v5906
      %v7059 = vunpack.c.l.b16 %v5907
      %v7060 = vpack.c.b16 %v7045, %v7042
      %v7061 = vpack.c.b16 %v7046, %v7043
      %v7062 = vpack.c.b16 %v7047, %v7044
      %v7063 = vpack.c.b16 %v7051, %v7048
      %v7064 = vpack.c.b16 %v7052, %v7049
      %v7065 = vpack.c.b16 %v7053, %v7050
      %v7066 = vpack.c.b16 %v7057, %v7054
      %v7067 = vpack.c.b16 %v7058, %v7055
      %v7068 = vpack.c.b16 %v7059, %v7056
      %7069 = vrot.lane.b32.xlu0 %v7060, 92
      %v7070 = vpop.permute.xlu0 %7069
      %7071 = vrot.lane.b32.xlu0 %v7061, 92
      %v7072 = vpop.permute.xlu0 %7071
      %7073 = vrot.lane.b32.xlu0 %v7062, 92
      %v7074 = vpop.permute.xlu0 %7073
      %7075 = vrot.lane.b32.xlu0 %v7063, 92
      %v7076 = vpop.permute.xlu0 %7075
      %7077 = vrot.lane.b32.xlu0 %v7064, 92
      %v7078 = vpop.permute.xlu0 %7077
      %7079 = vrot.lane.b32.xlu0 %v7065, 92
      %v7080 = vpop.permute.xlu0 %7079
      %7081 = vrot.lane.b32.xlu0 %v7066, 92
      %v7082 = vpop.permute.xlu0 %7081
      %7083 = vrot.lane.b32.xlu0 %v7067, 92
      %v7084 = vpop.permute.xlu0 %7083
      %7085 = vrot.lane.b32.xlu0 %v7068, 92
      %v7086 = vpop.permute.xlu0 %7085
      %vm7087 = vcmask 752640
      %v7088 = vsel %vm7087, %v7070, %v7072
      %v7089 = vsel %vm7087, %v7072, %v7074
      %v7090 = vsel %vm7087, %v7076, %v7078
      %v7091 = vsel %vm7087, %v7078, %v7080
      %v7092 = vsel %vm7087, %v7082, %v7084
      %v7093 = vsel %vm7087, %v7084, %v7086
      %v7112 = vunpack.c.l.b16 %v5934
      %v7113 = vunpack.c.h.b16 %v5934
      %v7114 = vunpack.c.l.b16 %v5935
      %v7115 = vunpack.c.l.b16 %v5936
      %v7116 = vunpack.c.h.b16 %v5936
      %v7117 = vunpack.c.l.b16 %v5937
      %v7118 = vunpack.c.l.b16 %v5938
      %v7119 = vunpack.c.h.b16 %v5938
      %v7120 = vunpack.c.l.b16 %v5939
      %v7121 = vunpack.c.l.b16 %v5940
      %v7122 = vunpack.c.h.b16 %v5940
      %v7123 = vunpack.c.l.b16 %v5941
      %v7124 = vunpack.c.l.b16 %v5942
      %v7125 = vunpack.c.h.b16 %v5942
      %v7126 = vunpack.c.l.b16 %v5943
      %v7127 = vunpack.c.l.b16 %v5944
      %v7128 = vunpack.c.h.b16 %v5944
      %v7129 = vunpack.c.l.b16 %v5945
      %v7130 = vpack.c.b16 %v7115, %v7112
      %v7131 = vpack.c.b16 %v7116, %v7113
      %v7132 = vpack.c.b16 %v7117, %v7114
      %v7133 = vpack.c.b16 %v7121, %v7118
      %v7134 = vpack.c.b16 %v7122, %v7119
      %v7135 = vpack.c.b16 %v7123, %v7120
      %v7136 = vpack.c.b16 %v7127, %v7124
      %v7137 = vpack.c.b16 %v7128, %v7125
      %v7138 = vpack.c.b16 %v7129, %v7126
      %7139 = vrot.lane.b32.xlu0 %v7130, 80
      %v7140 = vpop.permute.xlu0 %7139
      %7141 = vrot.lane.b32.xlu0 %v7131, 80
      %v7142 = vpop.permute.xlu0 %7141
      %7143 = vrot.lane.b32.xlu0 %v7132, 80
      %v7144 = vpop.permute.xlu0 %7143
      %7145 = vrot.lane.b32.xlu0 %v7133, 80
      %v7146 = vpop.permute.xlu0 %7145
      %7147 = vrot.lane.b32.xlu0 %v7134, 80
      %v7148 = vpop.permute.xlu0 %7147
      %7149 = vrot.lane.b32.xlu0 %v7135, 80
      %v7150 = vpop.permute.xlu0 %7149
      %7151 = vrot.lane.b32.xlu0 %v7136, 80
      %v7152 = vpop.permute.xlu0 %7151
      %7153 = vrot.lane.b32.xlu0 %v7137, 80
      %v7154 = vpop.permute.xlu0 %7153
      %7155 = vrot.lane.b32.xlu0 %v7138, 80
      %v7156 = vpop.permute.xlu0 %7155
      %vm7157 = vcmask 654336
      %v7158 = vsel %vm7157, %v7140, %v7142
      %v7159 = vsel %vm7157, %v7142, %v7144
      %v7160 = vsel %vm7157, %v7146, %v7148
      %v7161 = vsel %vm7157, %v7148, %v7150
      %v7162 = vsel %vm7157, %v7152, %v7154
      %v7163 = vsel %vm7157, %v7154, %v7156
      %v7182 = vunpack.c.l.b16 %v5972
      %v7183 = vunpack.c.h.b16 %v5972
      %v7184 = vunpack.c.l.b16 %v5973
      %v7185 = vunpack.c.l.b16 %v5974
      %v7186 = vunpack.c.h.b16 %v5974
      %v7187 = vunpack.c.l.b16 %v5975
      %v7188 = vunpack.c.l.b16 %v5976
      %v7189 = vunpack.c.h.b16 %v5976
      %v7190 = vunpack.c.l.b16 %v5977
      %v7191 = vunpack.c.l.b16 %v5978
      %v7192 = vunpack.c.h.b16 %v5978
      %v7193 = vunpack.c.l.b16 %v5979
      %v7194 = vunpack.c.l.b16 %v5980
      %v7195 = vunpack.c.h.b16 %v5980
      %v7196 = vunpack.c.l.b16 %v5981
      %v7197 = vunpack.c.l.b16 %v5982
      %v7198 = vunpack.c.h.b16 %v5982
      %v7199 = vunpack.c.l.b16 %v5983
      %v7200 = vpack.c.b16 %v7185, %v7182
      %v7201 = vpack.c.b16 %v7186, %v7183
      %v7202 = vpack.c.b16 %v7187, %v7184
      %v7203 = vpack.c.b16 %v7191, %v7188
      %v7204 = vpack.c.b16 %v7192, %v7189
      %v7205 = vpack.c.b16 %v7193, %v7190
      %v7206 = vpack.c.b16 %v7197, %v7194
      %v7207 = vpack.c.b16 %v7198, %v7195
      %v7208 = vpack.c.b16 %v7199, %v7196
      %7209 = vrot.lane.b32.xlu0 %v5435, 127
      %v7210 = vpop.permute.xlu0 %7209
      %7211 = vrot.lane.b32.xlu0 %v5428, 127
      %v7212 = vpop.permute.xlu0 %7211
      %7213 = vrot.lane.b32.xlu0 %v5444, 127
      %v7214 = vpop.permute.xlu0 %7213
      %7215 = vrot.lane.b32.xlu0 %v5438, 127
      %v7216 = vpop.permute.xlu0 %7215
      %7217 = vrot.lane.b32.xlu0 %v5429, 127
      %v7218 = vpop.permute.xlu0 %7217
      %7219 = vrot.lane.b32.xlu0 %v5447, 127
      %v7220 = vpop.permute.xlu0 %7219
      %7221 = vrot.lane.b32.xlu0 %v5441, 127
      %v7222 = vpop.permute.xlu0 %7221
      %7223 = vrot.lane.b32.xlu0 %v5430, 127
      %v7224 = vpop.permute.xlu0 %7223
      %7225 = vrot.lane.b32.xlu0 %v5450, 127
      %v7226 = vpop.permute.xlu0 %7225
      %v7227 = vsel %vm670, %v7210, %v7212
      %v7228 = vsel %vm670, %v7212, %v7214
      %v7229 = vsel %vm670, %v7216, %v7218
      %v7230 = vsel %vm670, %v7218, %v7220
      %v7231 = vsel %vm670, %v7222, %v7224
      %v7232 = vsel %vm670, %v7224, %v7226
      %v7245 = vunpack.c.l.b16 %v6010
      %v7246 = vunpack.c.h.b16 %v6010
      %v7247 = vunpack.c.l.b16 %v6011
      %v7248 = vunpack.c.l.b16 %v6012
      %v7249 = vunpack.c.h.b16 %v6012
      %v7250 = vunpack.c.l.b16 %v6013
      %v7251 = vunpack.c.l.b16 %v6014
      %v7252 = vunpack.c.h.b16 %v6014
      %v7253 = vunpack.c.l.b16 %v6015
      %v7254 = vunpack.c.l.b16 %v6016
      %v7255 = vunpack.c.h.b16 %v6016
      %v7256 = vunpack.c.l.b16 %v6017
      %v7257 = vunpack.c.l.b16 %v6018
      %v7258 = vunpack.c.h.b16 %v6018
      %v7259 = vunpack.c.l.b16 %v6019
      %v7260 = vunpack.c.l.b16 %v6020
      %v7261 = vunpack.c.h.b16 %v6020
      %v7262 = vunpack.c.l.b16 %v6021
      %v7263 = vpack.c.b16 %v7248, %v7245
      %v7264 = vpack.c.b16 %v7249, %v7246
      %v7265 = vpack.c.b16 %v7250, %v7247
      %v7266 = vpack.c.b16 %v7254, %v7251
      %v7267 = vpack.c.b16 %v7255, %v7252
      %v7268 = vpack.c.b16 %v7256, %v7253
      %v7269 = vpack.c.b16 %v7260, %v7257
      %v7270 = vpack.c.b16 %v7261, %v7258
      %v7271 = vpack.c.b16 %v7262, %v7259
      %7272 = vrot.lane.b32.xlu0 %v7263, 126
      %v7273 = vpop.permute.xlu0 %7272
      %7274 = vrot.lane.b32.xlu0 %v7264, 126
      %v7275 = vpop.permute.xlu0 %7274
      %7276 = vrot.lane.b32.xlu0 %v7265, 126
      %v7277 = vpop.permute.xlu0 %7276
      %7278 = vrot.lane.b32.xlu0 %v7266, 126
      %v7279 = vpop.permute.xlu0 %7278
      %7280 = vrot.lane.b32.xlu0 %v7267, 126
      %v7281 = vpop.permute.xlu0 %7280
      %7282 = vrot.lane.b32.xlu0 %v7268, 126
      %v7283 = vpop.permute.xlu0 %7282
      %7284 = vrot.lane.b32.xlu0 %v7269, 126
      %v7285 = vpop.permute.xlu0 %7284
      %7286 = vrot.lane.b32.xlu0 %v7270, 126
      %v7287 = vpop.permute.xlu0 %7286
      %7288 = vrot.lane.b32.xlu0 %v7271, 126
      %v7289 = vpop.permute.xlu0 %7288
      %v7290 = vsel %vm687, %v7273, %v7275
      %v7291 = vsel %vm687, %v7275, %v7277
      %v7292 = vsel %vm687, %v7279, %v7281
      %v7293 = vsel %vm687, %v7281, %v7283
      %v7294 = vsel %vm687, %v7285, %v7287
      %v7295 = vsel %vm687, %v7287, %v7289
      %v7308 = vunpack.c.l.b16 %v6049
      %v7309 = vunpack.c.h.b16 %v6049
      %v7310 = vunpack.c.l.b16 %v6050
      %v7311 = vunpack.c.l.b16 %v6051
      %v7312 = vunpack.c.h.b16 %v6051
      %v7313 = vunpack.c.l.b16 %v6052
      %v7314 = vunpack.c.l.b16 %v6053
      %v7315 = vunpack.c.h.b16 %v6053
      %v7316 = vunpack.c.l.b16 %v6054
      %v7317 = vunpack.c.l.b16 %v6055
      %v7318 = vunpack.c.h.b16 %v6055
      %v7319 = vunpack.c.l.b16 %v6056
      %v7320 = vunpack.c.l.b16 %v6057
      %v7321 = vunpack.c.h.b16 %v6057
      %v7322 = vunpack.c.l.b16 %v6058
      %v7323 = vunpack.c.l.b16 %v6059
      %v7324 = vunpack.c.h.b16 %v6059
      %v7325 = vunpack.c.l.b16 %v6060
      %v7326 = vpack.c.b16 %v7311, %v7308
      %v7327 = vpack.c.b16 %v7312, %v7309
      %v7328 = vpack.c.b16 %v7313, %v7310
      %v7329 = vpack.c.b16 %v7317, %v7314
      %v7330 = vpack.c.b16 %v7318, %v7315
      %v7331 = vpack.c.b16 %v7319, %v7316
      %v7332 = vpack.c.b16 %v7323, %v7320
      %v7333 = vpack.c.b16 %v7324, %v7321
      %v7334 = vpack.c.b16 %v7325, %v7322
      %7335 = vrot.lane.b32.xlu0 %v7326, 125
      %v7336 = vpop.permute.xlu0 %7335
      %7337 = vrot.lane.b32.xlu0 %v7327, 125
      %v7338 = vpop.permute.xlu0 %7337
      %7339 = vrot.lane.b32.xlu0 %v7328, 125
      %v7340 = vpop.permute.xlu0 %7339
      %7341 = vrot.lane.b32.xlu0 %v7329, 125
      %v7342 = vpop.permute.xlu0 %7341
      %7343 = vrot.lane.b32.xlu0 %v7330, 125
      %v7344 = vpop.permute.xlu0 %7343
      %7345 = vrot.lane.b32.xlu0 %v7331, 125
      %v7346 = vpop.permute.xlu0 %7345
      %7347 = vrot.lane.b32.xlu0 %v7332, 125
      %v7348 = vpop.permute.xlu0 %7347
      %7349 = vrot.lane.b32.xlu0 %v7333, 125
      %v7350 = vpop.permute.xlu0 %7349
      %7351 = vrot.lane.b32.xlu0 %v7334, 125
      %v7352 = vpop.permute.xlu0 %7351
      %v7353 = vsel %vm2443, %v7336, %v7338
      %v7354 = vsel %vm2443, %v7338, %v7340
      %v7355 = vsel %vm2443, %v7342, %v7344
      %v7356 = vsel %vm2443, %v7344, %v7346
      %v7357 = vsel %vm2443, %v7348, %v7350
      %v7358 = vsel %vm2443, %v7350, %v7352
      %v7371 = vunpack.c.l.b16 %v6087
      %v7372 = vunpack.c.h.b16 %v6087
      %v7373 = vunpack.c.l.b16 %v6088
      %v7374 = vunpack.c.l.b16 %v6089
      %v7375 = vunpack.c.h.b16 %v6089
      %v7376 = vunpack.c.l.b16 %v6090
      %v7377 = vunpack.c.l.b16 %v6091
      %v7378 = vunpack.c.h.b16 %v6091
      %v7379 = vunpack.c.l.b16 %v6092
      %v7380 = vunpack.c.l.b16 %v6093
      %v7381 = vunpack.c.h.b16 %v6093
      %v7382 = vunpack.c.l.b16 %v6094
      %v7383 = vunpack.c.l.b16 %v6095
      %v7384 = vunpack.c.h.b16 %v6095
      %v7385 = vunpack.c.l.b16 %v6096
      %v7386 = vunpack.c.l.b16 %v6097
      %v7387 = vunpack.c.h.b16 %v6097
      %v7388 = vunpack.c.l.b16 %v6098
      %v7389 = vpack.c.b16 %v7374, %v7371
      %v7390 = vpack.c.b16 %v7375, %v7372
      %v7391 = vpack.c.b16 %v7376, %v7373
      %v7392 = vpack.c.b16 %v7380, %v7377
      %v7393 = vpack.c.b16 %v7381, %v7378
      %v7394 = vpack.c.b16 %v7382, %v7379
      %v7395 = vpack.c.b16 %v7386, %v7383
      %v7396 = vpack.c.b16 %v7387, %v7384
      %v7397 = vpack.c.b16 %v7388, %v7385
      %7398 = vrot.lane.b32.xlu0 %v7389, 113
      %v7399 = vpop.permute.xlu0 %7398
      %7400 = vrot.lane.b32.xlu0 %v7390, 113
      %v7401 = vpop.permute.xlu0 %7400
      %7402 = vrot.lane.b32.xlu0 %v7391, 113
      %v7403 = vpop.permute.xlu0 %7402
      %7404 = vrot.lane.b32.xlu0 %v7392, 113
      %v7405 = vpop.permute.xlu0 %7404
      %7406 = vrot.lane.b32.xlu0 %v7393, 113
      %v7407 = vpop.permute.xlu0 %7406
      %7408 = vrot.lane.b32.xlu0 %v7394, 113
      %v7409 = vpop.permute.xlu0 %7408
      %7410 = vrot.lane.b32.xlu0 %v7395, 113
      %v7411 = vpop.permute.xlu0 %7410
      %7412 = vrot.lane.b32.xlu0 %v7396, 113
      %v7413 = vpop.permute.xlu0 %7412
      %7414 = vrot.lane.b32.xlu0 %v7397, 113
      %v7415 = vpop.permute.xlu0 %7414
      %v7416 = vsel %vm2885, %v7399, %v7401
      %v7417 = vsel %vm2885, %v7401, %v7403
      %v7418 = vsel %vm2885, %v7405, %v7407
      %v7419 = vsel %vm2885, %v7407, %v7409
      %v7420 = vsel %vm2885, %v7411, %v7413
      %v7421 = vsel %vm2885, %v7413, %v7415
      %v7434 = vunpack.c.l.b16 %v6125
      %v7435 = vunpack.c.h.b16 %v6125
      %v7436 = vunpack.c.l.b16 %v6126
      %v7437 = vunpack.c.l.b16 %v6127
      %v7438 = vunpack.c.h.b16 %v6127
      %v7439 = vunpack.c.l.b16 %v6128
      %v7440 = vunpack.c.l.b16 %v6129
      %v7441 = vunpack.c.h.b16 %v6129
      %v7442 = vunpack.c.l.b16 %v6130
      %v7443 = vunpack.c.l.b16 %v6131
      %v7444 = vunpack.c.h.b16 %v6131
      %v7445 = vunpack.c.l.b16 %v6132
      %v7446 = vunpack.c.l.b16 %v6133
      %v7447 = vunpack.c.h.b16 %v6133
      %v7448 = vunpack.c.l.b16 %v6134
      %v7449 = vunpack.c.l.b16 %v6135
      %v7450 = vunpack.c.h.b16 %v6135
      %v7451 = vunpack.c.l.b16 %v6136
      %v7452 = vpack.c.b16 %v7437, %v7434
      %v7453 = vpack.c.b16 %v7438, %v7435
      %v7454 = vpack.c.b16 %v7439, %v7436
      %v7455 = vpack.c.b16 %v7443, %v7440
      %v7456 = vpack.c.b16 %v7444, %v7441
      %v7457 = vpack.c.b16 %v7445, %v7442
      %v7458 = vpack.c.b16 %v7449, %v7446
      %v7459 = vpack.c.b16 %v7450, %v7447
      %v7460 = vpack.c.b16 %v7451, %v7448
      %7461 = vrot.lane.b32.xlu0 %v7452, 112
      %v7462 = vpop.permute.xlu0 %7461
      %7463 = vrot.lane.b32.xlu0 %v7453, 112
      %v7464 = vpop.permute.xlu0 %7463
      %7465 = vrot.lane.b32.xlu0 %v7454, 112
      %v7466 = vpop.permute.xlu0 %7465
      %7467 = vrot.lane.b32.xlu0 %v7455, 112
      %v7468 = vpop.permute.xlu0 %7467
      %7469 = vrot.lane.b32.xlu0 %v7456, 112
      %v7470 = vpop.permute.xlu0 %7469
      %7471 = vrot.lane.b32.xlu0 %v7457, 112
      %v7472 = vpop.permute.xlu0 %7471
      %7473 = vrot.lane.b32.xlu0 %v7458, 112
      %v7474 = vpop.permute.xlu0 %7473
      %7475 = vrot.lane.b32.xlu0 %v7459, 112
      %v7476 = vpop.permute.xlu0 %7475
      %7477 = vrot.lane.b32.xlu0 %v7460, 112
      %v7478 = vpop.permute.xlu0 %7477
      %v7479 = vsel %vm707, %v7462, %v7464
      %v7480 = vsel %vm707, %v7464, %v7466
      %v7481 = vsel %vm707, %v7468, %v7470
      %v7482 = vsel %vm707, %v7470, %v7472
      %v7483 = vsel %vm707, %v7474, %v7476
      %v7484 = vsel %vm707, %v7476, %v7478
      %7485 = vrot.lane.b32.xlu0 %v5435, 111
      %v7486 = vpop.permute.xlu0 %7485
      %7487 = vrot.lane.b32.xlu0 %v5428, 111
      %v7488 = vpop.permute.xlu0 %7487
      %7489 = vrot.lane.b32.xlu0 %v5444, 111
      %v7490 = vpop.permute.xlu0 %7489
      %7491 = vrot.lane.b32.xlu0 %v5438, 111
      %v7492 = vpop.permute.xlu0 %7491
      %7493 = vrot.lane.b32.xlu0 %v5429, 111
      %v7494 = vpop.permute.xlu0 %7493
      %7495 = vrot.lane.b32.xlu0 %v5447, 111
      %v7496 = vpop.permute.xlu0 %7495
      %7497 = vrot.lane.b32.xlu0 %v5441, 111
      %v7498 = vpop.permute.xlu0 %7497
      %7499 = vrot.lane.b32.xlu0 %v5430, 111
      %v7500 = vpop.permute.xlu0 %7499
      %7501 = vrot.lane.b32.xlu0 %v5450, 111
      %v7502 = vpop.permute.xlu0 %7501
      %v7503 = vsel %vm716, %v7486, %v7488
      %v7504 = vsel %vm716, %v7488, %v7490
      %v7505 = vsel %vm716, %v7492, %v7494
      %v7506 = vsel %vm716, %v7494, %v7496
      %v7507 = vsel %vm716, %v7498, %v7500
      %v7508 = vsel %vm716, %v7500, %v7502
      %v7521 = vunpack.c.l.b16 %v6163
      %v7522 = vunpack.c.h.b16 %v6163
      %v7523 = vunpack.c.l.b16 %v6164
      %v7524 = vunpack.c.l.b16 %v6165
      %v7525 = vunpack.c.h.b16 %v6165
      %v7526 = vunpack.c.l.b16 %v6166
      %v7527 = vunpack.c.l.b16 %v6167
      %v7528 = vunpack.c.h.b16 %v6167
      %v7529 = vunpack.c.l.b16 %v6168
      %v7530 = vunpack.c.l.b16 %v6169
      %v7531 = vunpack.c.h.b16 %v6169
      %v7532 = vunpack.c.l.b16 %v6170
      %v7533 = vunpack.c.l.b16 %v6171
      %v7534 = vunpack.c.h.b16 %v6171
      %v7535 = vunpack.c.l.b16 %v6172
      %v7536 = vunpack.c.l.b16 %v6173
      %v7537 = vunpack.c.h.b16 %v6173
      %v7538 = vunpack.c.l.b16 %v6174
      %v7539 = vpack.c.b16 %v7524, %v7521
      %v7540 = vpack.c.b16 %v7525, %v7522
      %v7541 = vpack.c.b16 %v7526, %v7523
      %v7542 = vpack.c.b16 %v7530, %v7527
      %v7543 = vpack.c.b16 %v7531, %v7528
      %v7544 = vpack.c.b16 %v7532, %v7529
      %v7545 = vpack.c.b16 %v7536, %v7533
      %v7546 = vpack.c.b16 %v7537, %v7534
      %v7547 = vpack.c.b16 %v7538, %v7535
      %7548 = vrot.lane.b32.xlu0 %v7539, 110
      %v7549 = vpop.permute.xlu0 %7548
      %7550 = vrot.lane.b32.xlu0 %v7540, 110
      %v7551 = vpop.permute.xlu0 %7550
      %7552 = vrot.lane.b32.xlu0 %v7541, 110
      %v7553 = vpop.permute.xlu0 %7552
      %7554 = vrot.lane.b32.xlu0 %v7542, 110
      %v7555 = vpop.permute.xlu0 %7554
      %7556 = vrot.lane.b32.xlu0 %v7543, 110
      %v7557 = vpop.permute.xlu0 %7556
      %7558 = vrot.lane.b32.xlu0 %v7544, 110
      %v7559 = vpop.permute.xlu0 %7558
      %7560 = vrot.lane.b32.xlu0 %v7545, 110
      %v7561 = vpop.permute.xlu0 %7560
      %7562 = vrot.lane.b32.xlu0 %v7546, 110
      %v7563 = vpop.permute.xlu0 %7562
      %7564 = vrot.lane.b32.xlu0 %v7547, 110
      %v7565 = vpop.permute.xlu0 %7564
      %v7566 = vsel %vm736, %v7549, %v7551
      %v7567 = vsel %vm736, %v7551, %v7553
      %v7568 = vsel %vm736, %v7555, %v7557
      %v7569 = vsel %vm736, %v7557, %v7559
      %v7570 = vsel %vm736, %v7561, %v7563
      %v7571 = vsel %vm736, %v7563, %v7565
      %v7584 = vunpack.c.l.b16 %v6201
      %v7585 = vunpack.c.h.b16 %v6201
      %v7586 = vunpack.c.l.b16 %v6202
      %v7587 = vunpack.c.l.b16 %v6203
      %v7588 = vunpack.c.h.b16 %v6203
      %v7589 = vunpack.c.l.b16 %v6204
      %v7590 = vunpack.c.l.b16 %v6205
      %v7591 = vunpack.c.h.b16 %v6205
      %v7592 = vunpack.c.l.b16 %v6206
      %v7593 = vunpack.c.l.b16 %v6207
      %v7594 = vunpack.c.h.b16 %v6207
      %v7595 = vunpack.c.l.b16 %v6208
      %v7596 = vunpack.c.l.b16 %v6209
      %v7597 = vunpack.c.h.b16 %v6209
      %v7598 = vunpack.c.l.b16 %v6210
      %v7599 = vunpack.c.l.b16 %v6211
      %v7600 = vunpack.c.h.b16 %v6211
      %v7601 = vunpack.c.l.b16 %v6212
      %v7602 = vpack.c.b16 %v7587, %v7584
      %v7603 = vpack.c.b16 %v7588, %v7585
      %v7604 = vpack.c.b16 %v7589, %v7586
      %v7605 = vpack.c.b16 %v7593, %v7590
      %v7606 = vpack.c.b16 %v7594, %v7591
      %v7607 = vpack.c.b16 %v7595, %v7592
      %v7608 = vpack.c.b16 %v7599, %v7596
      %v7609 = vpack.c.b16 %v7600, %v7597
      %v7610 = vpack.c.b16 %v7601, %v7598
      %7611 = vrot.lane.b32.xlu0 %v7602, 109
      %v7612 = vpop.permute.xlu0 %7611
      %7613 = vrot.lane.b32.xlu0 %v7603, 109
      %v7614 = vpop.permute.xlu0 %7613
      %7615 = vrot.lane.b32.xlu0 %v7604, 109
      %v7616 = vpop.permute.xlu0 %7615
      %7617 = vrot.lane.b32.xlu0 %v7605, 109
      %v7618 = vpop.permute.xlu0 %7617
      %7619 = vrot.lane.b32.xlu0 %v7606, 109
      %v7620 = vpop.permute.xlu0 %7619
      %7621 = vrot.lane.b32.xlu0 %v7607, 109
      %v7622 = vpop.permute.xlu0 %7621
      %7623 = vrot.lane.b32.xlu0 %v7608, 109
      %v7624 = vpop.permute.xlu0 %7623
      %7625 = vrot.lane.b32.xlu0 %v7609, 109
      %v7626 = vpop.permute.xlu0 %7625
      %7627 = vrot.lane.b32.xlu0 %v7610, 109
      %v7628 = vpop.permute.xlu0 %7627
      %v7629 = vsel %vm2608, %v7612, %v7614
      %v7630 = vsel %vm2608, %v7614, %v7616
      %v7631 = vsel %vm2608, %v7618, %v7620
      %v7632 = vsel %vm2608, %v7620, %v7622
      %v7633 = vsel %vm2608, %v7624, %v7626
      %v7634 = vsel %vm2608, %v7626, %v7628
      %7635 = vrot.lane.b32.xlu0 %v7200, 79
      %v7636 = vpop.permute.xlu0 %7635
      %7637 = vrot.lane.b32.xlu0 %v7201, 79
      %v7638 = vpop.permute.xlu0 %7637
      %7639 = vrot.lane.b32.xlu0 %v7202, 79
      %v7640 = vpop.permute.xlu0 %7639
      %7641 = vrot.lane.b32.xlu0 %v7203, 79
      %v7642 = vpop.permute.xlu0 %7641
      %7643 = vrot.lane.b32.xlu0 %v7204, 79
      %v7644 = vpop.permute.xlu0 %7643
      %7645 = vrot.lane.b32.xlu0 %v7205, 79
      %v7646 = vpop.permute.xlu0 %7645
      %7647 = vrot.lane.b32.xlu0 %v7206, 79
      %v7648 = vpop.permute.xlu0 %7647
      %7649 = vrot.lane.b32.xlu0 %v7207, 79
      %v7650 = vpop.permute.xlu0 %7649
      %7651 = vrot.lane.b32.xlu0 %v7208, 79
      %v7652 = vpop.permute.xlu0 %7651
      %7653 = vrot.lane.b32.xlu0 %v7227, 79
      %v7654 = vpop.permute.xlu0 %7653
      %7655 = vrot.lane.b32.xlu0 %v7228, 79
      %v7656 = vpop.permute.xlu0 %7655
      %7657 = vrot.lane.b32.xlu0 %v7214, 79
      %v7658 = vpop.permute.xlu0 %7657
      %7659 = vrot.lane.b32.xlu0 %v7229, 79
      %v7660 = vpop.permute.xlu0 %7659
      %7661 = vrot.lane.b32.xlu0 %v7230, 79
      %v7662 = vpop.permute.xlu0 %7661
      %7663 = vrot.lane.b32.xlu0 %v7220, 79
      %v7664 = vpop.permute.xlu0 %7663
      %7665 = vrot.lane.b32.xlu0 %v7231, 79
      %v7666 = vpop.permute.xlu0 %7665
      %7667 = vrot.lane.b32.xlu0 %v7232, 79
      %v7668 = vpop.permute.xlu0 %7667
      %7669 = vrot.lane.b32.xlu0 %v7226, 79
      %v7670 = vpop.permute.xlu0 %7669
      %7671 = vrot.lane.b32.xlu0 %v7290, 79
      %v7672 = vpop.permute.xlu0 %7671
      %7673 = vrot.lane.b32.xlu0 %v7291, 79
      %v7674 = vpop.permute.xlu0 %7673
      %7675 = vrot.lane.b32.xlu0 %v7277, 79
      %v7676 = vpop.permute.xlu0 %7675
      %7677 = vrot.lane.b32.xlu0 %v7292, 79
      %v7678 = vpop.permute.xlu0 %7677
      %7679 = vrot.lane.b32.xlu0 %v7293, 79
      %v7680 = vpop.permute.xlu0 %7679
      %7681 = vrot.lane.b32.xlu0 %v7283, 79
      %v7682 = vpop.permute.xlu0 %7681
      %7683 = vrot.lane.b32.xlu0 %v7294, 79
      %v7684 = vpop.permute.xlu0 %7683
      %7685 = vrot.lane.b32.xlu0 %v7295, 79
      %v7686 = vpop.permute.xlu0 %7685
      %7687 = vrot.lane.b32.xlu0 %v7289, 79
      %v7688 = vpop.permute.xlu0 %7687
      %7689 = vrot.lane.b32.xlu0 %v7353, 79
      %v7690 = vpop.permute.xlu0 %7689
      %7691 = vrot.lane.b32.xlu0 %v7354, 79
      %v7692 = vpop.permute.xlu0 %7691
      %7693 = vrot.lane.b32.xlu0 %v7340, 79
      %v7694 = vpop.permute.xlu0 %7693
      %7695 = vrot.lane.b32.xlu0 %v7355, 79
      %v7696 = vpop.permute.xlu0 %7695
      %7697 = vrot.lane.b32.xlu0 %v7356, 79
      %v7698 = vpop.permute.xlu0 %7697
      %7699 = vrot.lane.b32.xlu0 %v7346, 79
      %v7700 = vpop.permute.xlu0 %7699
      %7701 = vrot.lane.b32.xlu0 %v7357, 79
      %v7702 = vpop.permute.xlu0 %7701
      %7703 = vrot.lane.b32.xlu0 %v7358, 79
      %v7704 = vpop.permute.xlu0 %7703
      %7705 = vrot.lane.b32.xlu0 %v7352, 79
      %v7706 = vpop.permute.xlu0 %7705
      %7707 = vrot.lane.b32.xlu0 %v7416, 79
      %v7708 = vpop.permute.xlu0 %7707
      %7709 = vrot.lane.b32.xlu0 %v7417, 79
      %v7710 = vpop.permute.xlu0 %7709
      %7711 = vrot.lane.b32.xlu0 %v7403, 79
      %v7712 = vpop.permute.xlu0 %7711
      %7713 = vrot.lane.b32.xlu0 %v7418, 79
      %v7714 = vpop.permute.xlu0 %7713
      %7715 = vrot.lane.b32.xlu0 %v7419, 79
      %v7716 = vpop.permute.xlu0 %7715
      %7717 = vrot.lane.b32.xlu0 %v7409, 79
      %v7718 = vpop.permute.xlu0 %7717
      %7719 = vrot.lane.b32.xlu0 %v7420, 79
      %v7720 = vpop.permute.xlu0 %7719
      %7721 = vrot.lane.b32.xlu0 %v7421, 79
      %v7722 = vpop.permute.xlu0 %7721
      %7723 = vrot.lane.b32.xlu0 %v7415, 79
      %v7724 = vpop.permute.xlu0 %7723
      %7725 = vrot.lane.b32.xlu0 %v7479, 79
      %v7726 = vpop.permute.xlu0 %7725
      %7727 = vrot.lane.b32.xlu0 %v7480, 79
      %v7728 = vpop.permute.xlu0 %7727
      %7729 = vrot.lane.b32.xlu0 %v7466, 79
      %v7730 = vpop.permute.xlu0 %7729
      %7731 = vrot.lane.b32.xlu0 %v7481, 79
      %v7732 = vpop.permute.xlu0 %7731
      %7733 = vrot.lane.b32.xlu0 %v7482, 79
      %v7734 = vpop.permute.xlu0 %7733
      %7735 = vrot.lane.b32.xlu0 %v7472, 79
      %v7736 = vpop.permute.xlu0 %7735
      %7737 = vrot.lane.b32.xlu0 %v7483, 79
      %v7738 = vpop.permute.xlu0 %7737
      %7739 = vrot.lane.b32.xlu0 %v7484, 79
      %v7740 = vpop.permute.xlu0 %7739
      %7741 = vrot.lane.b32.xlu0 %v7478, 79
      %v7742 = vpop.permute.xlu0 %7741
      %7743 = vrot.lane.b32.xlu0 %v7503, 79
      %v7744 = vpop.permute.xlu0 %7743
      %7745 = vrot.lane.b32.xlu0 %v7504, 79
      %v7746 = vpop.permute.xlu0 %7745
      %7747 = vrot.lane.b32.xlu0 %v7490, 79
      %v7748 = vpop.permute.xlu0 %7747
      %7749 = vrot.lane.b32.xlu0 %v7505, 79
      %v7750 = vpop.permute.xlu0 %7749
      %7751 = vrot.lane.b32.xlu0 %v7506, 79
      %v7752 = vpop.permute.xlu0 %7751
      %7753 = vrot.lane.b32.xlu0 %v7496, 79
      %v7754 = vpop.permute.xlu0 %7753
      %7755 = vrot.lane.b32.xlu0 %v7507, 79
      %v7756 = vpop.permute.xlu0 %7755
      %7757 = vrot.lane.b32.xlu0 %v7508, 79
      %v7758 = vpop.permute.xlu0 %7757
      %7759 = vrot.lane.b32.xlu0 %v7502, 79
      %v7760 = vpop.permute.xlu0 %7759
      %7761 = vrot.lane.b32.xlu0 %v7566, 79
      %v7762 = vpop.permute.xlu0 %7761
      %7763 = vrot.lane.b32.xlu0 %v7567, 79
      %v7764 = vpop.permute.xlu0 %7763
      %7765 = vrot.lane.b32.xlu0 %v7553, 79
      %v7766 = vpop.permute.xlu0 %7765
      %7767 = vrot.lane.b32.xlu0 %v7568, 79
      %v7768 = vpop.permute.xlu0 %7767
      %7769 = vrot.lane.b32.xlu0 %v7569, 79
      %v7770 = vpop.permute.xlu0 %7769
      %7771 = vrot.lane.b32.xlu0 %v7559, 79
      %v7772 = vpop.permute.xlu0 %7771
      %7773 = vrot.lane.b32.xlu0 %v7570, 79
      %v7774 = vpop.permute.xlu0 %7773
      %7775 = vrot.lane.b32.xlu0 %v7571, 79
      %v7776 = vpop.permute.xlu0 %7775
      %7777 = vrot.lane.b32.xlu0 %v7565, 79
      %v7778 = vpop.permute.xlu0 %7777
      %7779 = vrot.lane.b32.xlu0 %v7629, 79
      %v7780 = vpop.permute.xlu0 %7779
      %7781 = vrot.lane.b32.xlu0 %v7630, 79
      %v7782 = vpop.permute.xlu0 %7781
      %7783 = vrot.lane.b32.xlu0 %v7616, 79
      %v7784 = vpop.permute.xlu0 %7783
      %7785 = vrot.lane.b32.xlu0 %v7631, 79
      %v7786 = vpop.permute.xlu0 %7785
      %7787 = vrot.lane.b32.xlu0 %v7632, 79
      %v7788 = vpop.permute.xlu0 %7787
      %7789 = vrot.lane.b32.xlu0 %v7622, 79
      %v7790 = vpop.permute.xlu0 %7789
      %7791 = vrot.lane.b32.xlu0 %v7633, 79
      %v7792 = vpop.permute.xlu0 %7791
      %7793 = vrot.lane.b32.xlu0 %v7634, 79
      %v7794 = vpop.permute.xlu0 %7793
      %7795 = vrot.lane.b32.xlu0 %v7628, 79
      %v7796 = vpop.permute.xlu0 %7795
      %vm7797 = vcmask 646144
      %v7798 = vsel %vm7797, %v7636, %v7638
      %v7799 = vsel %vm7797, %v7638, %v7640
      %v7800 = vsel %vm7797, %v7642, %v7644
      %v7801 = vsel %vm7797, %v7644, %v7646
      %v7802 = vsel %vm7797, %v7648, %v7650
      %v7803 = vsel %vm7797, %v7650, %v7652
      %v7804 = vsel %vm7797, %v7654, %v7656
      %v7805 = vsel %vm7797, %v7656, %v7658
      %v7806 = vsel %vm7797, %v7660, %v7662
      %v7807 = vsel %vm7797, %v7662, %v7664
      %v7808 = vsel %vm7797, %v7666, %v7668
      %v7809 = vsel %vm7797, %v7668, %v7670
      %v7810 = vsel %vm7797, %v7672, %v7674
      %v7811 = vsel %vm7797, %v7674, %v7676
      %v7812 = vsel %vm7797, %v7678, %v7680
      %v7813 = vsel %vm7797, %v7680, %v7682
      %v7814 = vsel %vm7797, %v7684, %v7686
      %v7815 = vsel %vm7797, %v7686, %v7688
      %v7816 = vsel %vm7797, %v7690, %v7692
      %v7817 = vsel %vm7797, %v7692, %v7694
      %v7818 = vsel %vm7797, %v7696, %v7698
      %v7819 = vsel %vm7797, %v7698, %v7700
      %v7820 = vsel %vm7797, %v7702, %v7704
      %v7821 = vsel %vm7797, %v7704, %v7706
      %v7822 = vsel %vm7797, %v7708, %v7710
      %v7823 = vsel %vm7797, %v7710, %v7712
      %v7824 = vsel %vm7797, %v7714, %v7716
      %v7825 = vsel %vm7797, %v7716, %v7718
      %v7826 = vsel %vm7797, %v7720, %v7722
      %v7827 = vsel %vm7797, %v7722, %v7724
      %v7828 = vsel %vm7797, %v7726, %v7728
      %v7829 = vsel %vm7797, %v7728, %v7730
      %v7830 = vsel %vm7797, %v7732, %v7734
      %v7831 = vsel %vm7797, %v7734, %v7736
      %v7832 = vsel %vm7797, %v7738, %v7740
      %v7833 = vsel %vm7797, %v7740, %v7742
      %v7834 = vsel %vm7797, %v7744, %v7746
      %v7835 = vsel %vm7797, %v7746, %v7748
      %v7836 = vsel %vm7797, %v7750, %v7752
      %v7837 = vsel %vm7797, %v7752, %v7754
      %v7838 = vsel %vm7797, %v7756, %v7758
      %v7839 = vsel %vm7797, %v7758, %v7760
      %v7840 = vsel %vm7797, %v7762, %v7764
      %v7841 = vsel %vm7797, %v7764, %v7766
      %v7842 = vsel %vm7797, %v7768, %v7770
      %v7843 = vsel %vm7797, %v7770, %v7772
      %v7844 = vsel %vm7797, %v7774, %v7776
      %v7845 = vsel %vm7797, %v7776, %v7778
      %v7846 = vsel %vm7797, %v7780, %v7782
      %v7847 = vsel %vm7797, %v7782, %v7784
      %v7848 = vsel %vm7797, %v7786, %v7788
      %v7849 = vsel %vm7797, %v7788, %v7790
      %v7850 = vsel %vm7797, %v7792, %v7794
      %v7851 = vsel %vm7797, %v7794, %v7796
      %v7906 = vld [vmem:[%s14] sm:$0x77]
      %v7907 = vld [vmem:[%s14 + $0x8] sm:$0x77]
      %v7908 = vld [vmem:[%s14 + $0x10] sm:$0x77]
      %v7909 = vld [vmem:[%s14 + $0x18] sm:$0x77]
      %v7910 = vld [vmem:[%s14 + $0x20] sm:$0x77]
      %v7911 = vld [vmem:[%s15] sm:$0x3f]
      %7913 = vset.pattern.permute.xlu0 0
      %7914 = vperm.xlu0 %7913, %v7911
      %v7915 = vpop.permute.xlu0 %7914
      %v7922 = vunpack.c.l.b16 %v7906
      %v7923 = vunpack.c.h.b16 %v7906
      %v7924 = vunpack.c.l.b16 %v7907
      %v7925 = vunpack.c.h.b16 %v7907
      %v7926 = vunpack.c.l.b16 %v7908
      %v7927 = vunpack.c.h.b16 %v7908
      %v7928 = vunpack.c.l.b16 %v7909
      %v7929 = vunpack.c.h.b16 %v7909
      %v7930 = vunpack.c.l.b16 %v7910
      %v7931 = vunpack.c.h.b16 %v7910
      %v7932 = vpack.c.b16 %v7922, %v7922
      %v7933 = vpack.c.b16 %v7923, %v7923
      %v7934 = vpack.c.b16 %v7924, %v7924
      %v7935 = vpack.c.b16 %v7925, %v7925
      %v7936 = vpack.c.b16 %v7926, %v7926
      %v7937 = vpack.c.b16 %v7927, %v7927
      %v7938 = vpack.c.b16 %v7928, %v7928
      %v7939 = vpack.c.b16 %v7929, %v7929
      %v7940 = vpack.c.b16 %v7930, %v7930
      %v7941 = vpack.c.b16 %v7931, %v7931
      %v7952 = vsel %vm1789, %v7941, 0
      %7954 = vmatpush.bf16.msra.mxu0 %v6338
      %7955 = vmatpush.bf16.msra.mxu0 %v6336
      %7956 = vmatpush.bf16.msra.mxu0 %v6304
      %7957 = vmatpush.bf16.msra.mxu0 %v6302
      %7958 = vmatpush.bf16.msra.mxu0 %v6300
      %7959 = vmatpush.bf16.msra.mxu0 %v6235
      %7960 = vmatpush.bf16.msra.mxu0 %v6233
      %7961 = vmatpush.bf16.msra.mxu0 %v6231
      %7962 = vmatmul.bf16.gmra.mxu0 %v7932
      %v7963 = vpop.f32.mrf.mxu0
      %v7964 = vadd.f32 %v7915, %v7963
      %v7965 = vpop.f32.mrf.mxu0
      %7966 = vdwg.mxu0
      %7967 = vmatpush.bf16.msra.mxu0 %v6543
      %7968 = vmatpush.bf16.msra.mxu0 %v6478
      %7969 = vmatpush.bf16.msra.mxu0 %v6476
      %7970 = vmatpush.bf16.msra.mxu0 %v6474
      %7971 = vmatpush.bf16.msra.mxu0 %v6409
      %7972 = vmatpush.bf16.msra.mxu0 %v6407
      %7973 = vmatpush.bf16.msra.mxu0 %v6405
      %7974 = vmatpush.bf16.msra.mxu0 %v6340
      %7975 = vmatmul.bf16.gmra.mxu0 %v7933
      %v7976 = vpop.f32.mrf.mxu0
      %v7977 = vadd.f32 %v7964, %v7976
      %v7978 = vpop.f32.mrf.mxu0
      %7979 = vdwg.mxu0
      %7980 = vmatpush.bf16.msra.mxu0 %v6646
      %7981 = vmatpush.bf16.msra.mxu0 %v6644
      %7982 = vmatpush.bf16.msra.mxu0 %v6642
      %7983 = vmatpush.bf16.msra.mxu0 %v6616
      %7984 = vmatpush.bf16.msra.mxu0 %v6614
      %7985 = vmatpush.bf16.msra.mxu0 %v6612
      %7986 = vmatpush.bf16.msra.mxu0 %v6547
      %7987 = vmatpush.bf16.msra.mxu0 %v6545
      %7988 = vmatmul.bf16.gmra.mxu0 %v7934
      %v7989 = vpop.f32.mrf.mxu0
      %v7990 = vadd.f32 %v7977, %v7989
      %v7991 = vpop.f32.mrf.mxu0
      %7992 = vdwg.mxu0
      %7993 = vmatpush.bf16.msra.mxu0 %v6851
      %7994 = vmatpush.bf16.msra.mxu0 %v6849
      %7995 = vmatpush.bf16.msra.mxu0 %v6784
      %7996 = vmatpush.bf16.msra.mxu0 %v6782
      %7997 = vmatpush.bf16.msra.mxu0 %v6780
      %7998 = vmatpush.bf16.msra.mxu0 %v6715
      %7999 = vmatpush.bf16.msra.mxu0 %v6713
      %8000 = vmatpush.bf16.msra.mxu0 %v6711
      %8001 = vmatmul.bf16.gmra.mxu0 %v7935
      %v8002 = vpop.f32.mrf.mxu0
      %v8003 = vadd.f32 %v7990, %v8002
      %v8004 = vpop.f32.mrf.mxu0
      %8005 = vdwg.mxu0
      %8006 = vmatpush.bf16.msra.mxu0 %v7018
      %8007 = vmatpush.bf16.msra.mxu0 %v6952
      %8008 = vmatpush.bf16.msra.mxu0 %v6950
      %8009 = vmatpush.bf16.msra.mxu0 %v6948
      %8010 = vmatpush.bf16.msra.mxu0 %v6922
      %8011 = vmatpush.bf16.msra.mxu0 %v6920
      %8012 = vmatpush.bf16.msra.mxu0 %v6918
      %8013 = vmatpush.bf16.msra.mxu0 %v6853
      %8014 = vmatmul.bf16.gmra.mxu0 %v7936
      %v8015 = vpop.f32.mrf.mxu0
      %v8016 = vadd.f32 %v8003, %v8015
      %v8017 = vpop.f32.mrf.mxu0
      %8018 = vdwg.mxu0
      %8019 = vmatpush.bf16.msra.mxu0 %v7162
      %8020 = vmatpush.bf16.msra.mxu0 %v7160
      %8021 = vmatpush.bf16.msra.mxu0 %v7158
      %8022 = vmatpush.bf16.msra.mxu0 %v7092
      %8023 = vmatpush.bf16.msra.mxu0 %v7090
      %8024 = vmatpush.bf16.msra.mxu0 %v7088
      %8025 = vmatpush.bf16.msra.mxu0 %v7022
      %8026 = vmatpush.bf16.msra.mxu0 %v7020
      %8027 = vmatmul.bf16.gmra.mxu0 %v7937
      %v8028 = vpop.f32.mrf.mxu0
      %v8029 = vadd.f32 %v8016, %v8028
      %v8030 = vpop.f32.mrf.mxu0
      %8031 = vdwg.mxu0
      %8032 = vmatpush.bf16.msra.mxu0 %v7812
      %8033 = vmatpush.bf16.msra.mxu0 %v7810
      %8034 = vmatpush.bf16.msra.mxu0 %v7808
      %8035 = vmatpush.bf16.msra.mxu0 %v7806
      %8036 = vmatpush.bf16.msra.mxu0 %v7804
      %8037 = vmatpush.bf16.msra.mxu0 %v7802
      %8038 = vmatpush.bf16.msra.mxu0 %v7800
      %8039 = vmatpush.bf16.msra.mxu0 %v7798
      %8040 = vmatmul.bf16.gmra.mxu0 %v7938
      %v8041 = vpop.f32.mrf.mxu0
      %v8042 = vadd.f32 %v8029, %v8041
      %v8043 = vpop.f32.mrf.mxu0
      %8044 = vdwg.mxu0
      %8045 = vmatpush.bf16.msra.mxu0 %v7828
      %8046 = vmatpush.bf16.msra.mxu0 %v7826
      %8047 = vmatpush.bf16.msra.mxu0 %v7824
      %8048 = vmatpush.bf16.msra.mxu0 %v7822
      %8049 = vmatpush.bf16.msra.mxu0 %v7820
      %8050 = vmatpush.bf16.msra.mxu0 %v7818
      %8051 = vmatpush.bf16.msra.mxu0 %v7816
      %8052 = vmatpush.bf16.msra.mxu0 %v7814
      %8053 = vmatmul.bf16.gmra.mxu0 %v7939
      %v8054 = vpop.f32.mrf.mxu0
      %v8055 = vadd.f32 %v8042, %v8054
      %v8056 = vpop.f32.mrf.mxu0
      %8057 = vdwg.mxu0
      %8058 = vmatpush.bf16.msra.mxu0 %v7844
      %8059 = vmatpush.bf16.msra.mxu0 %v7842
      %8060 = vmatpush.bf16.msra.mxu0 %v7840
      %8061 = vmatpush.bf16.msra.mxu0 %v7838
      %8062 = vmatpush.bf16.msra.mxu0 %v7836
      %8063 = vmatpush.bf16.msra.mxu0 %v7834
      %8064 = vmatpush.bf16.msra.mxu0 %v7832
      %8065 = vmatpush.bf16.msra.mxu0 %v7830
      %8066 = vmatmul.bf16.gmra.mxu0 %v7940
      %v8067 = vpop.f32.mrf.mxu0
      %v8068 = vadd.f32 %v8055, %v8067
      %v8069 = vpop.f32.mrf.mxu0
      %8070 = vdwg.mxu0
      %8071 = vmatpush.bf16.msra.mxu0 0
      %8072 = vmatpush.bf16.msra.mxu0 0
      %8073 = vmatpush.bf16.msra.mxu0 0
      %8074 = vmatpush.bf16.msra.mxu0 0
      %8075 = vmatpush.bf16.msra.mxu0 0
      %8076 = vmatpush.bf16.msra.mxu0 %v7850
      %8077 = vmatpush.bf16.msra.mxu0 %v7848
      %8078 = vmatpush.bf16.msra.mxu0 %v7846
      %8079 = vmatmul.bf16.gmra.mxu0 %v7952
      %v8080 = vpop.f32.mrf.mxu0
      %v8081 = vadd.f32 %v8068, %v8080
      %v8082 = vpop.f32.mrf.mxu0
      %8083 = vdwg.mxu0
      %8084 = vmatpush.bf16.msra.mxu0 %v6339
      %8085 = vmatpush.bf16.msra.mxu0 %v6337
      %8086 = vmatpush.bf16.msra.mxu0 %v6305
      %8087 = vmatpush.bf16.msra.mxu0 %v6303
      %8088 = vmatpush.bf16.msra.mxu0 %v6301
      %8089 = vmatpush.bf16.msra.mxu0 %v6236
      %8090 = vmatpush.bf16.msra.mxu0 %v6234
      %8091 = vmatpush.bf16.msra.mxu0 %v6232
      %8092 = vmatmul.bf16.gmra.mxu0 %v7932
      %v8093 = vpop.f32.mrf.mxu0
      %v8094 = vadd.f32 %v7915, %v8093
      %v8095 = vpop.f32.mrf.mxu0
      %8096 = vdwg.mxu0
      %8097 = vmatpush.bf16.msra.mxu0 %v6544
      %8098 = vmatpush.bf16.msra.mxu0 %v6479
      %8099 = vmatpush.bf16.msra.mxu0 %v6477
      %8100 = vmatpush.bf16.msra.mxu0 %v6475
      %8101 = vmatpush.bf16.msra.mxu0 %v6410
      %8102 = vmatpush.bf16.msra.mxu0 %v6408
      %8103 = vmatpush.bf16.msra.mxu0 %v6406
      %8104 = vmatpush.bf16.msra.mxu0 %v6341
      %8105 = vmatmul.bf16.gmra.mxu0 %v7933
      %v8106 = vpop.f32.mrf.mxu0
      %v8107 = vadd.f32 %v8094, %v8106
      %v8108 = vpop.f32.mrf.mxu0
      %8109 = vdwg.mxu0
      %8110 = vmatpush.bf16.msra.mxu0 %v6647
      %8111 = vmatpush.bf16.msra.mxu0 %v6645
      %8112 = vmatpush.bf16.msra.mxu0 %v6643
      %8113 = vmatpush.bf16.msra.mxu0 %v6617
      %8114 = vmatpush.bf16.msra.mxu0 %v6615
      %8115 = vmatpush.bf16.msra.mxu0 %v6613
      %8116 = vmatpush.bf16.msra.mxu0 %v6548
      %8117 = vmatpush.bf16.msra.mxu0 %v6546
      %8118 = vmatmul.bf16.gmra.mxu0 %v7934
      %v8119 = vpop.f32.mrf.mxu0
      %v8120 = vadd.f32 %v8107, %v8119
      %v8121 = vpop.f32.mrf.mxu0
      %8122 = vdwg.mxu0
      %8123 = vmatpush.bf16.msra.mxu0 %v6852
      %8124 = vmatpush.bf16.msra.mxu0 %v6850
      %8125 = vmatpush.bf16.msra.mxu0 %v6785
      %8126 = vmatpush.bf16.msra.mxu0 %v6783
      %8127 = vmatpush.bf16.msra.mxu0 %v6781
      %8128 = vmatpush.bf16.msra.mxu0 %v6716
      %8129 = vmatpush.bf16.msra.mxu0 %v6714
      %8130 = vmatpush.bf16.msra.mxu0 %v6712
      %8131 = vmatmul.bf16.gmra.mxu0 %v7935
      %v8132 = vpop.f32.mrf.mxu0
      %v8133 = vadd.f32 %v8120, %v8132
      %v8134 = vpop.f32.mrf.mxu0
      %8135 = vdwg.mxu0
      %8136 = vmatpush.bf16.msra.mxu0 %v7019
      %8137 = vmatpush.bf16.msra.mxu0 %v6953
      %8138 = vmatpush.bf16.msra.mxu0 %v6951
      %8139 = vmatpush.bf16.msra.mxu0 %v6949
      %8140 = vmatpush.bf16.msra.mxu0 %v6923
      %8141 = vmatpush.bf16.msra.mxu0 %v6921
      %8142 = vmatpush.bf16.msra.mxu0 %v6919
      %8143 = vmatpush.bf16.msra.mxu0 %v6854
      %8144 = vmatmul.bf16.gmra.mxu0 %v7936
      %v8145 = vpop.f32.mrf.mxu0
      %v8146 = vadd.f32 %v8133, %v8145
      %v8147 = vpop.f32.mrf.mxu0
      %8148 = vdwg.mxu0
      %8149 = vmatpush.bf16.msra.mxu0 %v7163
      %8150 = vmatpush.bf16.msra.mxu0 %v7161
      %8151 = vmatpush.bf16.msra.mxu0 %v7159
      %8152 = vmatpush.bf16.msra.mxu0 %v7093
      %8153 = vmatpush.bf16.msra.mxu0 %v7091
      %8154 = vmatpush.bf16.msra.mxu0 %v7089
      %8155 = vmatpush.bf16.msra.mxu0 %v7023
      %8156 = vmatpush.bf16.msra.mxu0 %v7021
      %8157 = vmatmul.bf16.gmra.mxu0 %v7937
      %v8158 = vpop.f32.mrf.mxu0
      %v8159 = vadd.f32 %v8146, %v8158
      %v8160 = vpop.f32.mrf.mxu0
      %8161 = vdwg.mxu0
      %8162 = vmatpush.bf16.msra.mxu0 %v7813
      %8163 = vmatpush.bf16.msra.mxu0 %v7811
      %8164 = vmatpush.bf16.msra.mxu0 %v7809
      %8165 = vmatpush.bf16.msra.mxu0 %v7807
      %8166 = vmatpush.bf16.msra.mxu0 %v7805
      %8167 = vmatpush.bf16.msra.mxu0 %v7803
      %8168 = vmatpush.bf16.msra.mxu0 %v7801
      %8169 = vmatpush.bf16.msra.mxu0 %v7799
      %8170 = vmatmul.bf16.gmra.mxu0 %v7938
      %v8171 = vpop.f32.mrf.mxu0
      %v8172 = vadd.f32 %v8159, %v8171
      %v8173 = vpop.f32.mrf.mxu0
      %8174 = vdwg.mxu0
      %8175 = vmatpush.bf16.msra.mxu0 %v7829
      %8176 = vmatpush.bf16.msra.mxu0 %v7827
      %8177 = vmatpush.bf16.msra.mxu0 %v7825
      %8178 = vmatpush.bf16.msra.mxu0 %v7823
      %8179 = vmatpush.bf16.msra.mxu0 %v7821
      %8180 = vmatpush.bf16.msra.mxu0 %v7819
      %8181 = vmatpush.bf16.msra.mxu0 %v7817
      %8182 = vmatpush.bf16.msra.mxu0 %v7815
      %8183 = vmatmul.bf16.gmra.mxu0 %v7939
      %v8184 = vpop.f32.mrf.mxu0
      %v8185 = vadd.f32 %v8172, %v8184
      %v8186 = vpop.f32.mrf.mxu0
      %8187 = vdwg.mxu0
      %8188 = vmatpush.bf16.msra.mxu0 %v7845
      %8189 = vmatpush.bf16.msra.mxu0 %v7843
      %8190 = vmatpush.bf16.msra.mxu0 %v7841
      %8191 = vmatpush.bf16.msra.mxu0 %v7839
      %8192 = vmatpush.bf16.msra.mxu0 %v7837
      %8193 = vmatpush.bf16.msra.mxu0 %v7835
      %8194 = vmatpush.bf16.msra.mxu0 %v7833
      %8195 = vmatpush.bf16.msra.mxu0 %v7831
      %8196 = vmatmul.bf16.gmra.mxu0 %v7940
      %v8197 = vpop.f32.mrf.mxu0
      %v8198 = vadd.f32 %v8185, %v8197
      %v8199 = vpop.f32.mrf.mxu0
      %8200 = vdwg.mxu0
      %8201 = vmatpush.bf16.msra.mxu0 0
      %8202 = vmatpush.bf16.msra.mxu0 0
      %8203 = vmatpush.bf16.msra.mxu0 0
      %8204 = vmatpush.bf16.msra.mxu0 0
      %8205 = vmatpush.bf16.msra.mxu0 0
      %8206 = vmatpush.bf16.msra.mxu0 %v7851
      %8207 = vmatpush.bf16.msra.mxu0 %v7849
      %8208 = vmatpush.bf16.msra.mxu0 %v7847
      %8209 = vmatmul.bf16.gmra.mxu0 %v7952
      %v8210 = vpop.f32.mrf.mxu0
      %v8211 = vadd.f32 %v8198, %v8210
      %v8212 = vpop.f32.mrf.mxu0
      %8213 = vdwg.mxu0
      %v8214 = vadd.f32 %v1390, %v8081
      %v8215 = vadd.f32 %v1391, %v8211
      %8216 = vst [vmem:[%s521] sm:$0x3f] %v8214
      %8217 = vst [vmem:[%s521 + $0x8] sm:$0x3f] %v8215
      %p8218 = scmp.lt.s32.totalorder %s27, 1
      %s8219 = scalar_select %p8218, %s27, 1
      %s8220 = smul.addr %s8219, 2
      %s8221 = smul.addr %s8220, 8
      %s8222 = scalar_lea.vmem %s16, %s8221
      // Predicated region
      $region85: #{hyperreconnet_forward.1} parent=83 // pred_check
        %p8223 = pneg %p386
      $region86: #{hyperreconnet_forward.1} parent=83 // pred_check_branch
        %8225 = sbr.rel (%p8223) target = $region88
      $region87: #{hyperreconnet_forward.1} parent=83 // pred_region
        _
      $region88: #{hyperreconnet_forward.1} parent=83 // pred_fallthru
        _
    $region84: #{hyperreconnet_forward.1} parent=5 // pred_fallthru
      _
    %p8226 = scmp.le.s32.totalorder 2, %s22
    // Predicated region
    $region89: #{hyperreconnet_forward.1} parent=5 // pred_check
      %p8227 = pneg %p8226
    $region90: #{hyperreconnet_forward.1} parent=5 // pred_check_branch
      %8229 = sbr.rel (%p8227) target = $region92
    $region91: #{hyperreconnet_forward.1} parent=5 // pred_region
      %s8230 = ssub.s32 %s22, 2
      // Predicated region
      $region93: #{hyperreconnet_forward.1} parent=91 // pred_check
        %p8231 = pneg %p392
      $region94: #{hyperreconnet_forward.1} parent=91 // pred_check_branch
        %8233 = sbr.rel (%p8231) target = $region96
      $region95: #{hyperreconnet_forward.1} parent=91 // pred_region
        %p8234 = scmp.lt.s32.totalorder %s28, 1
        %s8235 = scalar_select %p8234, %s28, 1
        %s8236 = smul.addr %s8235, 2
        %s8237 = smul.addr %s8236, 8
        %s8238 = scalar_lea.vmem %s16, %s8237
      $region96: #{hyperreconnet_forward.1} parent=91 // pred_fallthru
        _
    $region92: #{hyperreconnet_forward.1} parent=5 // pred_fallthru
      _
  $region6: #{hyperreconnet_forward.1} parent=0 // loop_footer
    %s26 = sadd.s32 1, %s22
  $region7: #{hyperreconnet_forward.1} parent=0 // loop_footer_branch
    %21 = sbr.rel target = $region3
  $region8: #{hyperreconnet_forward.1} parent=0 // loop_exit
    _

</llo_original>
